<compile_context>
chip_gen: v7x
topology: tpu7x:2x2x1
jax: 0.10.0
libtpu: 0.0.40
codegen_flags: <defaults>
</compile_context>

<pallas_src>
import functools

import jax
import jax.numpy as jnp
from jax.experimental import pallas as pl
from jax.experimental.pallas import tpu as pltpu


_VMEM_LIMIT = 32 * 1024 * 1024  # safe scoped-VMEM budget on v5e/v6e/v7x


def _round_up(x, m):
    return ((x + m - 1) // m) * m


# ----------------------------------------------------------------------------
# Fused matmul kernels (bf16 inputs, f32 accumulation, fused bias + epilogue)
# ----------------------------------------------------------------------------
def _mm_kernel(a_ref, b_ref, bias_ref, o_ref, *, act):
    acc = jnp.dot(a_ref[...], b_ref[...], preferred_element_type=jnp.float32)
    acc = acc + bias_ref[...]
    if act == "relu":
        acc = jnp.maximum(acc, 0.0)
    o_ref[...] = acc


def _mm_tanh_relu_kernel(a_ref, b_ref, bias_ref, o_ref, *, split):
    # cnet_proj: relu everywhere, then tanh on the first `split` (hidden) cols.
    acc = jnp.dot(a_ref[...], b_ref[...], preferred_element_type=jnp.float32)
    acc = jnp.maximum(acc + bias_ref[...], 0.0)
    col = jax.lax.broadcasted_iota(jnp.int32, acc.shape, 1)
    o_ref[...] = jnp.where(col < split, jnp.tanh(acc), acc)


def _mm_zr_kernel(a_ref, b_ref, bias_ref, h_ref, o_ref, *, split):
    # fused convz|convr: cols [0, split) -> raw z_pre, cols [split, ..) ->
    # sigmoid(r_pre) * h   (h is the GRU hidden state, duplicated per half).
    acc = jnp.dot(a_ref[...], b_ref[...], preferred_element_type=jnp.float32)
    acc = acc + bias_ref[...]
    col = jax.lax.broadcasted_iota(jnp.int32, acc.shape, 1)
    o_ref[...] = jnp.where(col < split, acc, jax.nn.sigmoid(acc) * h_ref[...])


def _mm_gru_kernel(a_ref, b_ref, bias_ref, z_ref, h_ref, o_ref):
    # convq + full GRU update: h_new = (1 - sigmoid(z)) * h + sigmoid(z)*tanh(q)
    q = jnp.dot(a_ref[...], b_ref[...], preferred_element_type=jnp.float32)
    q = jnp.tanh(q + bias_ref[...])
    z = jax.nn.sigmoid(z_ref[...])
    o_ref[...] = (1.0 - z) * h_ref[...] + z * q


def pallas_matmul_fused(a, b, bias, *, epilogue="none", split=0, extras=()):
    """[M,K] @ [K,N] + bias with a fused epilogue, lane-dense padded output."""
    M, K = a.shape
    K2, N = b.shape
    assert K == K2
    Npad = max(128, _round_up(N, 128))
    if M >= 4096:
        TM = 512
    elif M >= 1024:
        TM = 256
    else:
        TM = 128
    Mpad = _round_up(M, TM)

    a_p = jnp.pad(a.astype(jnp.bfloat16), ((0, Mpad - M), (0, 0)))
    b_p = jnp.pad(b.astype(jnp.bfloat16), ((0, 0), (0, Npad - N)))
    bias_p = jnp.pad(bias.astype(jnp.float32), (0, Npad - N)).reshape(1, Npad)
    ex_p = [jnp.pad(e.astype(jnp.float32),
                    ((0, Mpad - M), (0, Npad - e.shape[1]))) for e in extras]

    if epilogue in ("none", "relu"):
        kernel = functools.partial(_mm_kernel, act=epilogue)
    elif epilogue == "tanh_relu":
        kernel = functools.partial(_mm_tanh_relu_kernel, split=split)
    elif epilogue == "zr":
        kernel = functools.partial(_mm_zr_kernel, split=split)
    elif epilogue == "gru":
        kernel = _mm_gru_kernel
    else:
        raise ValueError(epilogue)

    grid = (Mpad // TM,)
    in_specs = [
        pl.BlockSpec((TM, K), lambda i: (i, 0)),
        pl.BlockSpec((K, Npad), lambda i: (0, 0)),
        pl.BlockSpec((1, Npad), lambda i: (0, 0)),
    ] + [pl.BlockSpec((TM, Npad), lambda i: (i, 0)) for _ in ex_p]

    flops = int(2 * Mpad * K * Npad)
    trans = int(Mpad * Npad) if epilogue in ("tanh_relu", "zr", "gru") else 0
    bytes_accessed = int(Mpad * K * 2 + K * Npad * 2 + Npad * 4
                         + Mpad * Npad * 4 * (1 + len(ex_p)))

    out = pl.pallas_call(
        kernel,
        out_shape=jax.ShapeDtypeStruct((Mpad, Npad), jnp.float32),
        grid=grid,
        in_specs=in_specs,
        out_specs=pl.BlockSpec((TM, Npad), lambda i: (i, 0)),
        compiler_params=pltpu.CompilerParams(
            dimension_semantics=("parallel",),
            vmem_limit_bytes=_VMEM_LIMIT),
        cost_estimate=pl.CostEstimate(flops=flops, transcendentals=trans,
                                      bytes_accessed=bytes_accessed),
    )(a_p, b_p, bias_p, *ex_p)
    return out[:M, :N]


# ----------------------------------------------------------------------------
# Correlation kernel: batched rows of (b, h) per grid step
# ----------------------------------------------------------------------------
def _corr_kernel(a_ref, b_ref, o_ref, *, scale):
    o_ref[...] = jnp.einsum(
        "bwc,bvc->bwv", a_ref[...], b_ref[...],
        preferred_element_type=jnp.float32) * scale


def pallas_corr(fmap1, fmap2):
    """corr[b,h,w1,w2] = sum_c f1[b,h,w1,c] * f2[b,h,w2,c] / sqrt(C)  (NHWC)."""
    B, H, W, C = fmap1.shape
    R = B * H
    TB = 8
    Rpad = _round_up(R, TB)
    a = jnp.pad(fmap1.reshape(R, W, C).astype(jnp.bfloat16),
                ((0, Rpad - R), (0, 0), (0, 0)))
    b = jnp.pad(fmap2.reshape(R, W, C).astype(jnp.bfloat16),
                ((0, Rpad - R), (0, 0), (0, 0)))
    kernel = functools.partial(_corr_kernel, scale=1.0 / float(C) ** 0.5)
    out = pl.pallas_call(
        kernel,
        out_shape=jax.ShapeDtypeStruct((Rpad, W, W), jnp.float32),
        grid=(Rpad // TB,),
        in_specs=[pl.BlockSpec((TB, W, C), lambda i: (i, 0, 0)),
                  pl.BlockSpec((TB, W, C), lambda i: (i, 0, 0))],
        out_specs=pl.BlockSpec((TB, W, W), lambda i: (i, 0, 0)),
        compiler_params=pltpu.CompilerParams(
            dimension_semantics=("parallel",),
            vmem_limit_bytes=_VMEM_LIMIT),
        cost_estimate=pl.CostEstimate(
            flops=int(2 * Rpad * W * W * C), transcendentals=0,
            bytes_accessed=int(2 * Rpad * W * C * 2 + Rpad * W * W * 4)),
    )(a, b)
    return out[:R].reshape(B, H, W, W)


# ----------------------------------------------------------------------------
# Convex-upsample kernel: per-pixel softmax over 9 taps, rate*rate outputs
# ----------------------------------------------------------------------------
def _upsample_kernel(m_ref, p_ref, o_ref, *, rr):
    m = m_ref[...]                       # (TM, 9*rr)  channel = k*rr + (i*r + j)
    p = p_ref[...]                       # (TM, 9)     flow 3x3 neighbourhood
    mk = [m[:, k * rr:(k + 1) * rr] for k in range(9)]
    mx = mk[0]
    for k in range(1, 9):
        mx = jnp.maximum(mx, mk[k])
    num = jnp.zeros_like(mx)
    den = jnp.zeros_like(mx)
    for k in range(9):
        e = jnp.exp(mk[k] - mx)
        den = den + e
        num = num + e * p[:, k:k + 1]
    o_ref[...] = num * pl.reciprocal(den, approx=True)


def pallas_convex_upsample(mask2d, patch2d, rr):
    M = mask2d.shape[0]
    TM = 256 if M >= 1024 else 128
    Mpad = _round_up(M, TM)
    m_p = jnp.pad(mask2d.astype(jnp.float32), ((0, Mpad - M), (0, 0)))
    p_p = jnp.pad(patch2d.astype(jnp.float32), ((0, Mpad - M), (0, 0)))
    out = pl.pallas_call(
        functools.partial(_upsample_kernel, rr=rr),
        out_shape=jax.ShapeDtypeStruct((Mpad, rr), jnp.float32),
        grid=(Mpad // TM,),
        in_specs=[pl.BlockSpec((TM, 9 * rr), lambda i: (i, 0)),
                  pl.BlockSpec((TM, 9), lambda i: (i, 0))],
        out_specs=pl.BlockSpec((TM, rr), lambda i: (i, 0)),
        compiler_params=pltpu.CompilerParams(
            dimension_semantics=("parallel",),
            vmem_limit_bytes=_VMEM_LIMIT),
        cost_estimate=pl.CostEstimate(
            flops=int(Mpad * rr * 30), transcendentals=int(Mpad * rr * 10),
            bytes_accessed=int(Mpad * (9 * rr + 9 + rr) * 4)),
    )(m_p, p_p)
    return out[:M]


# ----------------------------------------------------------------------------
# Conv2d = NHWC im2col (XLA glue) + fused Pallas matmul
# ----------------------------------------------------------------------------
def conv2d_nhwc(x, w, b, stride=1, padding=0, epilogue="none", split=0, extras=()):
    """x: [N,H,W,Cin]; w: [Cout,Cin,kh,kw] (PyTorch layout); b: [Cout]."""
    N, H, W, Cin = x.shape
    Cout, Cin2, kh, kw = w.shape
    assert Cin == Cin2
    Ho = (H + 2 * padding - kh) // stride + 1
    Wo = (W + 2 * padding - kw) // stride + 1
    if kh == 1 and kw == 1 and stride == 1 and padding == 0:
        col = x.reshape(N * H * W, Cin)
        wmat = w.reshape(Cout, Cin).T
    else:
        xp = jnp.pad(x, ((0, 0), (padding, padding), (padding, padding), (0, 0)))
        cols = [xp[:, i:i + stride * Ho:stride, j:j + stride * Wo:stride, :]
                for i in range(kh) for j in range(kw)]
        col = jnp.concatenate(cols, axis=-1).reshape(N * Ho * Wo, kh * kw * Cin)
        wmat = jnp.transpose(w, (2, 3, 1, 0)).reshape(kh * kw * Cin, Cout)
    out = pallas_matmul_fused(col, wmat, b, epilogue=epilogue, split=split,
                              extras=extras)
    return out.reshape(N, Ho, Wo, Cout)


# ----------------------------------------------------------------------------
# RAFT-Stereo model
# ----------------------------------------------------------------------------
class RAFTStereoPallas:
    def __init__(self, key, iters=2, fnet_dim=32, hidden_dim=16, context_dim=16,
                 corr_levels=2, corr_radius=2):
        self.iters = iters
        self.fnet_dim = fnet_dim
        self.hidden_dim = hidden_dim
        self.context_dim = context_dim
        self.corr_levels = corr_levels
        self.corr_radius = corr_radius
        self.fnet_ds = 4                      # synthetic fnet downsamples by 4

        corr_ch = corr_levels * (2 * corr_radius + 1)
        mdim = 24
        gru_in = context_dim + mdim
        shapes = {
            "fnet1": (16, 3, 3, 3),
            "fnet2": (fnet_dim, 16, 3, 3),
            "cnet_proj": (context_dim + hidden_dim, fnet_dim, 3, 3),
            "enc_corr": (24, corr_ch, 1, 1),
            "enc_flow": (8, 1, 3, 3),
            "enc_out": (mdim - 1, 24 + 8, 3, 3),
            "convzr": (2 * hidden_dim, hidden_dim + gru_in, 3, 3),   # convz|convr
            "convq": (hidden_dim, hidden_dim + gru_in, 3, 3),
            "flowmask1": (64, hidden_dim, 3, 3),                     # flow1|mask1
            "flow2": (1, 32, 3, 3),
            "mask2": (9 * self.fnet_ds * self.fnet_ds, 32, 1, 1),
        }
        keys = jax.random.split(key, len(shapes))
        self.params = {}
        for k_rng, (name, shp) in zip(keys, shapes.items()):
            fan_in = shp[1] * shp[2] * shp[3]
            w = jax.random.normal(k_rng, shp, dtype=jnp.float32) * (0.5 / fan_in ** 0.5)
            b = jnp.zeros((shp[0],), dtype=jnp.float32)
            self.params[name] = (w, b)

    # ---- helpers ------------------------------------------------------------
    def _conv(self, name, x, stride=1, padding=1, epilogue="none", split=0,
              extras=()):
        w, b = self.params[name]
        return conv2d_nhwc(x, w, b, stride=stride, padding=padding,
                           epilogue=epilogue, split=split, extras=extras)

    def forward_fnet(self, x1, x2):
        def fnet(x):
            x = self._conv("fnet1", x, stride=2, padding=1, epilogue="relu")
            x = self._conv("fnet2", x, stride=2, padding=1, epilogue="relu")
            return x
        fmap1 = fnet(x1)
        fmap2 = fnet(x2)
        # cnet_proj: ReLU everywhere, then tanh fused on the first hidden_dim
        # channels (matches relu -> split -> tanh(net)/relu(inp) of the spec).
        cnet1 = self._conv("cnet_proj", fmap1, padding=1,
                           epilogue="tanh_relu", split=self.hidden_dim)
        return fmap1, fmap2, cnet1

    def initialize_coords(self, fmap1):
        B, H, W, _ = fmap1.shape
        coords = jnp.arange(W, dtype=jnp.float32)
        return jnp.broadcast_to(coords[None, None, :, None], (B, H, W, 1))

    def build_corr_pyramid(self, fmap1, fmap2):
        corr = pallas_corr(fmap1, fmap2)          # [B, H, W1, W2]
        pyramid = [corr]
        for _ in range(self.corr_levels - 1):
            B, H, W1, W2 = corr.shape
            corr = corr[..., :(W2 // 2) * 2].reshape(B, H, W1, W2 // 2, 2).mean(-1)
            pyramid.append(corr)
        return pyramid

    def sample_corr(self, pyramid, coords):
        # TODO(synk): data-dependent 1-D linear-interp gather kept in JAX glue
        # (grid_sample-style indexing has no clean Pallas BlockSpec form).
        r = self.corr_radius
        dx = jnp.linspace(-r, r, 2 * r + 1, dtype=jnp.float32)
        outs = []
        for lvl, corr in enumerate(pyramid):
            W2 = corr.shape[-1]
            x = coords[..., 0:1] / (2.0 ** lvl) + dx          # [B,H,W1,2r+1]
            x0 = jnp.floor(x)
            frac = x - x0
            i0 = x0.astype(jnp.int32)
            i1 = i0 + 1
            v0 = jnp.take_along_axis(corr, jnp.clip(i0, 0, W2 - 1), axis=-1)
            v1 = jnp.take_along_axis(corr, jnp.clip(i1, 0, W2 - 1), axis=-1)
            v0 = jnp.where((i0 >= 0) & (i0 <= W2 - 1), v0, 0.0)
            v1 = jnp.where((i1 >= 0) & (i1 <= W2 - 1), v1, 0.0)
            outs.append(v0 * (1.0 - frac) + v1 * frac)
        return jnp.concatenate(outs, axis=-1)     # [B, H, W1, levels*(2r+1)]

    def update_block(self, net, inp, corr, flow):
        hd = self.hidden_dim
        N, H, W, _ = net.shape
        M = N * H * W
        net2d = net.reshape(M, hd)

        cor = self._conv("enc_corr", corr, padding=0, epilogue="relu")
        flo = self._conv("enc_flow", flow, padding=1, epilogue="relu")
        mot = self._conv("enc_out", jnp.concatenate([cor, flo], axis=-1),
                         padding=1, epilogue="relu")
        mot = jnp.concatenate([mot, flow], axis=-1)
        x = jnp.concatenate([inp, mot], axis=-1)
        hx = jnp.concatenate([net, x], axis=-1)

        # Fused convz|convr; epilogue emits [z_pre | sigmoid(r_pre) * net].
        zr = self._conv("convzr", hx, padding=1, epilogue="zr", split=hd,
                        extras=(jnp.concatenate([net2d, net2d], axis=-1),))
        z_pre = zr[..., :hd]
        rh = zr[..., hd:]

        # convq with fused GRU update epilogue.
        net = self._conv("convq", jnp.concatenate([rh, x], axis=-1), padding=1,
                         epilogue="gru",
                         extras=(z_pre.reshape(M, hd), net2d))

        # Fused flow1|mask1 head.
        dm = self._conv("flowmask1", net, padding=1, epilogue="relu")
        d = dm[..., :32]
        m = dm[..., 32:]
        delta_disp = self._conv("flow2", d, padding=1)
        w_m2, b_m2 = self.params["mask2"]          # fold the 0.25 scale in.
        mask = conv2d_nhwc(m, 0.25 * w_m2, 0.25 * b_m2, padding=0)
        return net, mask, delta_disp

    def convex_upsample(self, flow, mask, rate=4):
        """flow [N,H,W,1], mask [N,H,W,9*rate*rate] -> [N,1,rate*H,rate*W]."""
        N, H, W, _ = flow.shape
        rr = rate * rate
        f = rate * flow[..., 0]
        fp = jnp.pad(f, ((0, 0), (1, 1), (1, 1)))
        patches = jnp.stack([fp[:, i:i + H, j:j + W]
                             for i in range(3) for j in range(3)], axis=-1)
        out = pallas_convex_upsample(mask.reshape(N * H * W, 9 * rr),
                                     patches.reshape(N * H * W, 9), rr)
        out = out.reshape(N, H, W, rate, rate)
        out = out.transpose(0, 1, 3, 2, 4).reshape(N, rate * H, rate * W)
        return out[:, None]

    # ---- forward ------------------------------------------------------------
    def __call__(self, frame1, frame2):
        # External API keeps the PyTorch NCHW convention.
        x1 = jnp.transpose(frame1, (0, 2, 3, 1)).astype(jnp.float32)
        x2 = jnp.transpose(frame2, (0, 2, 3, 1)).astype(jnp.float32)
        fmap1, fmap2, cnet1 = self.forward_fnet(x1, x2)
        fnet_ds = frame1.shape[-1] // fmap1.shape[2]
        net = cnet1[..., :self.hidden_dim]                         # tanh fused
        inp = cnet1[..., self.hidden_dim:self.hidden_dim + self.context_dim]
        pyramid = self.build_corr_pyramid(fmap1, fmap2)
        coords1 = self.initialize_coords(fmap1)
        org_coords = self.initialize_coords(fmap1)
        m_outputs = []
        for _ in range(self.iters):
            sampled_corr = self.sample_corr(pyramid, coords1)
            net, mask, delta_disp = self.update_block(
                net, inp, sampled_corr, coords1 - org_coords)
            coords1 = coords1 + delta_disp
            disp = coords1 - org_coords
            up_disp = self.convex_upsample(disp, mask, rate=fnet_ds)
            m_outputs.append({"up_disp": up_disp})
        return m_outputs


if __name__ == "__main__":
    key = jax.random.PRNGKey(0)
    kparam, k1, k2 = jax.random.split(key, 3)
    model = RAFTStereoPallas(kparam, iters=2, fnet_dim=32, hidden_dim=16,
                             context_dim=16, corr_levels=2, corr_radius=2)
    frame1 = jax.random.normal(k1, (1, 3, 32, 32), dtype=jnp.float32)
    frame2 = jax.random.normal(k2, (1, 3, 32, 32), dtype=jnp.float32)

    fwd = jax.jit(lambda a, b: model(a, b))
    outputs = fwd(frame1, frame2)
    for o in outputs:
        jax.block_until_ready(o["up_disp"])
    assert outputs[-1]["up_disp"].shape == (1, 1, 32, 32)
    assert bool(jnp.all(jnp.isfinite(outputs[-1]["up_disp"])))
    print("KERNEL_OK")
</pallas_src>

<mosaic_0001>
module attributes {stable_mosaic.version = 11 : i64} {
  func.func @_mm_kernel(%arg0: i32, %arg1: memref<128x27xbf16, #tpu.memory_space<vmem>>, %arg2: memref<27x128xbf16, #tpu.memory_space<vmem>>, %arg3: memref<1x128xf32, #tpu.memory_space<vmem>>, %arg4: memref<128x128xf32, #tpu.memory_space<vmem>>) attributes {dimension_semantics = [#tpu.dimension_semantics<parallel>], iteration_bounds = array<i64: 2>, scalar_prefetch = 0 : i64, scratch_operands = 0 : i64, tpu.core_type = #tpu.core_type<tc>, window_params = [{transform_indices = @transform_0, window_bounds = array<i64: 128, 27>}, {pipeline_mode = #tpu.pipeline_mode<synchronous>, transform_indices = @transform_1, window_bounds = array<i64: 27, 128>}, {pipeline_mode = #tpu.pipeline_mode<synchronous>, transform_indices = @transform_2, window_bounds = array<i64: 1, 128>}, {transform_indices = @transform_3, window_bounds = array<i64: 128, 128>}]} {
    %c0 = arith.constant 0 : index
    %c0_0 = arith.constant 0 : index
    %0 = vector.load %arg1[%c0, %c0_0] : memref<128x27xbf16, #tpu.memory_space<vmem>>, vector<128x27xbf16>
    %c0_1 = arith.constant 0 : index
    %c0_2 = arith.constant 0 : index
    %1 = vector.load %arg2[%c0_1, %c0_2] : memref<27x128xbf16, #tpu.memory_space<vmem>>, vector<27x128xbf16>
    %cst = arith.constant dense<0.000000e+00> : vector<128x128xf32>
    %2 = tpu.matmul %0, %1, %cst {dimension_numbers = #tpu.dot_dimension_numbers<[1], [0], [0], [1], [0, 0, 1, 1], [], []>} : vector<128x27xbf16>, vector<27x128xbf16>, vector<128x128xf32> -> vector<128x128xf32>
    %c0_3 = arith.constant 0 : index
    %c0_4 = arith.constant 0 : index
    %3 = vector.load %arg3[%c0_3, %c0_4] : memref<1x128xf32, #tpu.memory_space<vmem>>, vector<1x128xf32>
    %4 = vector.broadcast %3 : vector<1x128xf32> to vector<128x128xf32>
    %5 = arith.addf %2, %4 : vector<128x128xf32>
    %cst_5 = arith.constant 0.000000e+00 : f32
    %6 = vector.broadcast %cst_5 : f32 to vector<128x128xf32>
    %7 = arith.maximumf %5, %6 : vector<128x128xf32>
    %c0_6 = arith.constant 0 : index
    %c0_7 = arith.constant 0 : index
    %8 = vector.load %arg4[%c0_6, %c0_7] : memref<128x128xf32, #tpu.memory_space<vmem>>, vector<128x128xf32>
    tpu.vector_store %arg4[%c0_6, %c0_7], %7 {strides = array<i32>} : memref<128x128xf32, #tpu.memory_space<vmem>>, vector<128x128xf32>,
    return
  }
  func.func @transform_0(%arg0: i32) -> (i32, i32) {
    %c0_i32 = arith.constant 0 : i32
    %c0_i32_0 = arith.constant 0 : i32
    return %arg0, %c0_i32 : i32, i32
  }
  func.func @transform_1(%arg0: i32) -> (i32, i32) {
    %c0_i32 = arith.constant 0 : i32
    %c0_i32_0 = arith.constant 0 : i32
    %c0_i32_1 = arith.constant 0 : i32
    return %c0_i32, %c0_i32_0 : i32, i32
  }
  func.func @transform_2(%arg0: i32) -> (i32, i32) {
    %c0_i32 = arith.constant 0 : i32
    %c0_i32_0 = arith.constant 0 : i32
    %c0_i32_1 = arith.constant 0 : i32
    return %c0_i32, %c0_i32_0 : i32, i32
  }
  func.func @transform_3(%arg0: i32) -> (i32, i32) {
    %c0_i32 = arith.constant 0 : i32
    %c0_i32_0 = arith.constant 0 : i32
    return %arg0, %c0_i32 : i32, i32
  }
}

module attributes {stable_mosaic.version = 11 : i64} {
  func.func @_mm_kernel(%arg0: i32, %arg1: memref<128x144xbf16, #tpu.memory_space<vmem>>, %arg2: memref<144x128xbf16, #tpu.memory_space<vmem>>, %arg3: memref<1x128xf32, #tpu.memory_space<vmem>>, %arg4: memref<128x128xf32, #tpu.memory_space<vmem>>) attributes {dimension_semantics = [#tpu.dimension_semantics<parallel>], iteration_bounds = array<i64: 1>, scalar_prefetch = 0 : i64, scratch_operands = 0 : i64, tpu.core_type = #tpu.core_type<tc>, window_params = [{transform_indices = @transform_0, window_bounds = array<i64: 128, 144>}, {pipeline_mode = #tpu.pipeline_mode<synchronous>, transform_indices = @transform_1, window_bounds = array<i64: 144, 128>}, {pipeline_mode = #tpu.pipeline_mode<synchronous>, transform_indices = @transform_2, window_bounds = array<i64: 1, 128>}, {transform_indices = @transform_3, window_bounds = array<i64: 128, 128>}]} {
    %c0 = arith.constant 0 : index
    %c0_0 = arith.constant 0 : index
    %0 = vector.load %arg1[%c0, %c0_0] : memref<128x144xbf16, #tpu.memory_space<vmem>>, vector<128x144xbf16>
    %c0_1 = arith.constant 0 : index
    %c0_2 = arith.constant 0 : index
    %1 = vector.load %arg2[%c0_1, %c0_2] : memref<144x128xbf16, #tpu.memory_space<vmem>>, vector<144x128xbf16>
    %cst = arith.constant dense<0.000000e+00> : vector<128x128xf32>
    %2 = tpu.matmul %0, %1, %cst {dimension_numbers = #tpu.dot_dimension_numbers<[1], [0], [0], [1], [0, 0, 1, 1], [], []>} : vector<128x144xbf16>, vector<144x128xbf16>, vector<128x128xf32> -> vector<128x128xf32>
    %c0_3 = arith.constant 0 : index
    %c0_4 = arith.constant 0 : index
    %3 = vector.load %arg3[%c0_3, %c0_4] : memref<1x128xf32, #tpu.memory_space<vmem>>, vector<1x128xf32>
    %4 = vector.broadcast %3 : vector<1x128xf32> to vector<128x128xf32>
    %5 = arith.addf %2, %4 : vector<128x128xf32>
    %cst_5 = arith.constant 0.000000e+00 : f32
    %6 = vector.broadcast %cst_5 : f32 to vector<128x128xf32>
    %7 = arith.maximumf %5, %6 : vector<128x128xf32>
    %c0_6 = arith.constant 0 : index
    %c0_7 = arith.constant 0 : index
    %8 = vector.load %arg4[%c0_6, %c0_7] : memref<128x128xf32, #tpu.memory_space<vmem>>, vector<128x128xf32>
    tpu.vector_store %arg4[%c0_6, %c0_7], %7 {strides = array<i32>} : memref<128x128xf32, #tpu.memory_space<vmem>>, vector<128x128xf32>,
    return
  }
  func.func @transform_0(%arg0: i32) -> (i32, i32) {
    %c0_i32 = arith.constant 0 : i32
    %c0_i32_0 = arith.constant 0 : i32
    return %arg0, %c0_i32 : i32, i32
  }
  func.func @transform_1(%arg0: i32) -> (i32, i32) {
    %c0_i32 = arith.constant 0 : i32
    %c0_i32_0 = arith.constant 0 : i32
    %c0_i32_1 = arith.constant 0 : i32
    return %c0_i32, %c0_i32_0 : i32, i32
  }
  func.func @transform_2(%arg0: i32) -> (i32, i32) {
    %c0_i32 = arith.constant 0 : i32
    %c0_i32_0 = arith.constant 0 : i32
    %c0_i32_1 = arith.constant 0 : i32
    return %c0_i32, %c0_i32_0 : i32, i32
  }
  func.func @transform_3(%arg0: i32) -> (i32, i32) {
    %c0_i32 = arith.constant 0 : i32
    %c0_i32_0 = arith.constant 0 : i32
    return %arg0, %c0_i32 : i32, i32
  }
}

module attributes {stable_mosaic.version = 11 : i64} {
  func.func @_corr_kernel(%arg0: i32, %arg1: memref<8x8x32xbf16, #tpu.memory_space<vmem>>, %arg2: memref<8x8x32xbf16, #tpu.memory_space<vmem>>, %arg3: memref<8x8x8xf32, #tpu.memory_space<vmem>>) attributes {dimension_semantics = [#tpu.dimension_semantics<parallel>], iteration_bounds = array<i64: 1>, scalar_prefetch = 0 : i64, scratch_operands = 0 : i64, tpu.core_type = #tpu.core_type<tc>, window_params = [{transform_indices = @transform_0, window_bounds = array<i64: 8, 8, 32>}, {transform_indices = @transform_1, window_bounds = array<i64: 8, 8, 32>}, {transform_indices = @transform_2, window_bounds = array<i64: 8, 8, 8>}]} {
    %c0 = arith.constant 0 : index
    %c0_0 = arith.constant 0 : index
    %c0_1 = arith.constant 0 : index
    %0 = vector.load %arg1[%c0, %c0_0, %c0_1] : memref<8x8x32xbf16, #tpu.memory_space<vmem>>, vector<8x8x32xbf16>
    %c0_2 = arith.constant 0 : index
    %c0_3 = arith.constant 0 : index
    %c0_4 = arith.constant 0 : index
    %1 = vector.load %arg2[%c0_2, %c0_3, %c0_4] : memref<8x8x32xbf16, #tpu.memory_space<vmem>>, vector<8x8x32xbf16>
    "tpu.trace_start"() <{level = 10 : i32, message = "bwc,bvc->bwv"}> : () -> ()
    %cst = arith.constant dense<0.000000e+00> : vector<8x8x8xf32>
    %2 = tpu.matmul %0, %1, %cst {dimension_numbers = #tpu.dot_dimension_numbers<[2], [2], [1], [1], [0, 0, 0, 1, 1, 1], [0], [0]>} : vector<8x8x32xbf16>, vector<8x8x32xbf16>, vector<8x8x8xf32> -> vector<8x8x8xf32>
    "tpu.trace_stop"() : () -> ()
    %cst_5 = arith.constant 0.176776692 : f32
    %3 = vector.broadcast %cst_5 : f32 to vector<8x8x8xf32>
    %4 = arith.mulf %2, %3 : vector<8x8x8xf32>
    %c0_6 = arith.constant 0 : index
    %c0_7 = arith.constant 0 : index
    %c0_8 = arith.constant 0 : index
    %5 = vector.load %arg3[%c0_6, %c0_7, %c0_8] : memref<8x8x8xf32, #tpu.memory_space<vmem>>, vector<8x8x8xf32>
    tpu.vector_store %arg3[%c0_6, %c0_7, %c0_8], %4 {strides = array<i32>} : memref<8x8x8xf32, #tpu.memory_space<vmem>>, vector<8x8x8xf32>,
    return
  }
  func.func @transform_0(%arg0: i32) -> (i32, i32, i32) {
    %c0_i32 = arith.constant 0 : i32
    %c0_i32_0 = arith.constant 0 : i32
    %c0_i32_1 = arith.constant 0 : i32
    return %arg0, %c0_i32, %c0_i32_0 : i32, i32, i32
  }
  func.func @transform_1(%arg0: i32) -> (i32, i32, i32) {
    %c0_i32 = arith.constant 0 : i32
    %c0_i32_0 = arith.constant 0 : i32
    %c0_i32_1 = arith.constant 0 : i32
    return %arg0, %c0_i32, %c0_i32_0 : i32, i32, i32
  }
  func.func @transform_2(%arg0: i32) -> (i32, i32, i32) {
    %c0_i32 = arith.constant 0 : i32
    %c0_i32_0 = arith.constant 0 : i32
    %c0_i32_1 = arith.constant 0 : i32
    return %arg0, %c0_i32, %c0_i32_0 : i32, i32, i32
  }
}

module attributes {stable_mosaic.version = 11 : i64} {
  func.func @_mm_kernel(%arg0: i32, %arg1: memref<128x10xbf16, #tpu.memory_space<vmem>>, %arg2: memref<10x128xbf16, #tpu.memory_space<vmem>>, %arg3: memref<1x128xf32, #tpu.memory_space<vmem>>, %arg4: memref<128x128xf32, #tpu.memory_space<vmem>>) attributes {dimension_semantics = [#tpu.dimension_semantics<parallel>], iteration_bounds = array<i64: 1>, scalar_prefetch = 0 : i64, scratch_operands = 0 : i64, tpu.core_type = #tpu.core_type<tc>, window_params = [{transform_indices = @transform_0, window_bounds = array<i64: 128, 10>}, {pipeline_mode = #tpu.pipeline_mode<synchronous>, transform_indices = @transform_1, window_bounds = array<i64: 10, 128>}, {pipeline_mode = #tpu.pipeline_mode<synchronous>, transform_indices = @transform_2, window_bounds = array<i64: 1, 128>}, {transform_indices = @transform_3, window_bounds = array<i64: 128, 128>}]} {
    %c0 = arith.constant 0 : index
    %c0_0 = arith.constant 0 : index
    %0 = vector.load %arg1[%c0, %c0_0] : memref<128x10xbf16, #tpu.memory_space<vmem>>, vector<128x10xbf16>
    %c0_1 = arith.constant 0 : index
    %c0_2 = arith.constant 0 : index
    %1 = vector.load %arg2[%c0_1, %c0_2] : memref<10x128xbf16, #tpu.memory_space<vmem>>, vector<10x128xbf16>
    %cst = arith.constant dense<0.000000e+00> : vector<128x128xf32>
    %2 = tpu.matmul %0, %1, %cst {dimension_numbers = #tpu.dot_dimension_numbers<[1], [0], [0], [1], [0, 0, 1, 1], [], []>} : vector<128x10xbf16>, vector<10x128xbf16>, vector<128x128xf32> -> vector<128x128xf32>
    %c0_3 = arith.constant 0 : index
    %c0_4 = arith.constant 0 : index
    %3 = vector.load %arg3[%c0_3, %c0_4] : memref<1x128xf32, #tpu.memory_space<vmem>>, vector<1x128xf32>
    %4 = vector.broadcast %3 : vector<1x128xf32> to vector<128x128xf32>
    %5 = arith.addf %2, %4 : vector<128x128xf32>
    %cst_5 = arith.constant 0.000000e+00 : f32
    %6 = vector.broadcast %cst_5 : f32 to vector<128x128xf32>
    %7 = arith.maximumf %5, %6 : vector<128x128xf32>
    %c0_6 = arith.constant 0 : index
    %c0_7 = arith.constant 0 : index
    %8 = vector.load %arg4[%c0_6, %c0_7] : memref<128x128xf32, #tpu.memory_space<vmem>>, vector<128x128xf32>
    tpu.vector_store %arg4[%c0_6, %c0_7], %7 {strides = array<i32>} : memref<128x128xf32, #tpu.memory_space<vmem>>, vector<128x128xf32>,
    return
  }
  func.func @transform_0(%arg0: i32) -> (i32, i32) {
    %c0_i32 = arith.constant 0 : i32
    %c0_i32_0 = arith.constant 0 : i32
    return %arg0, %c0_i32 : i32, i32
  }
  func.func @transform_1(%arg0: i32) -> (i32, i32) {
    %c0_i32 = arith.constant 0 : i32
    %c0_i32_0 = arith.constant 0 : i32
    %c0_i32_1 = arith.constant 0 : i32
    return %c0_i32, %c0_i32_0 : i32, i32
  }
  func.func @transform_2(%arg0: i32) -> (i32, i32) {
    %c0_i32 = arith.constant 0 : i32
    %c0_i32_0 = arith.constant 0 : i32
    %c0_i32_1 = arith.constant 0 : i32
    return %c0_i32, %c0_i32_0 : i32, i32
  }
  func.func @transform_3(%arg0: i32) -> (i32, i32) {
    %c0_i32 = arith.constant 0 : i32
    %c0_i32_0 = arith.constant 0 : i32
    return %arg0, %c0_i32 : i32, i32
  }
}

module attributes {stable_mosaic.version = 11 : i64} {
  func.func @_mm_kernel(%arg0: i32, %arg1: memref<128x9xbf16, #tpu.memory_space<vmem>>, %arg2: memref<9x128xbf16, #tpu.memory_space<vmem>>, %arg3: memref<1x128xf32, #tpu.memory_space<vmem>>, %arg4: memref<128x128xf32, #tpu.memory_space<vmem>>) attributes {dimension_semantics = [#tpu.dimension_semantics<parallel>], iteration_bounds = array<i64: 1>, scalar_prefetch = 0 : i64, scratch_operands = 0 : i64, tpu.core_type = #tpu.core_type<tc>, window_params = [{transform_indices = @transform_0, window_bounds = array<i64: 128, 9>}, {pipeline_mode = #tpu.pipeline_mode<synchronous>, transform_indices = @transform_1, window_bounds = array<i64: 9, 128>}, {pipeline_mode = #tpu.pipeline_mode<synchronous>, transform_indices = @transform_2, window_bounds = array<i64: 1, 128>}, {transform_indices = @transform_3, window_bounds = array<i64: 128, 128>}]} {
    %c0 = arith.constant 0 : index
    %c0_0 = arith.constant 0 : index
    %0 = vector.load %arg1[%c0, %c0_0] : memref<128x9xbf16, #tpu.memory_space<vmem>>, vector<128x9xbf16>
    %c0_1 = arith.constant 0 : index
    %c0_2 = arith.constant 0 : index
    %1 = vector.load %arg2[%c0_1, %c0_2] : memref<9x128xbf16, #tpu.memory_space<vmem>>, vector<9x128xbf16>
    %cst = arith.constant dense<0.000000e+00> : vector<128x128xf32>
    %2 = tpu.matmul %0, %1, %cst {dimension_numbers = #tpu.dot_dimension_numbers<[1], [0], [0], [1], [0, 0, 1, 1], [], []>} : vector<128x9xbf16>, vector<9x128xbf16>, vector<128x128xf32> -> vector<128x128xf32>
    %c0_3 = arith.constant 0 : index
    %c0_4 = arith.constant 0 : index
    %3 = vector.load %arg3[%c0_3, %c0_4] : memref<1x128xf32, #tpu.memory_space<vmem>>, vector<1x128xf32>
    %4 = vector.broadcast %3 : vector<1x128xf32> to vector<128x128xf32>
    %5 = arith.addf %2, %4 : vector<128x128xf32>
    %cst_5 = arith.constant 0.000000e+00 : f32
    %6 = vector.broadcast %cst_5 : f32 to vector<128x128xf32>
    %7 = arith.maximumf %5, %6 : vector<128x128xf32>
    %c0_6 = arith.constant 0 : index
    %c0_7 = arith.constant 0 : index
    %8 = vector.load %arg4[%c0_6, %c0_7] : memref<128x128xf32, #tpu.memory_space<vmem>>, vector<128x128xf32>
    tpu.vector_store %arg4[%c0_6, %c0_7], %7 {strides = array<i32>} : memref<128x128xf32, #tpu.memory_space<vmem>>, vector<128x128xf32>,
    return
  }
  func.func @transform_0(%arg0: i32) -> (i32, i32) {
    %c0_i32 = arith.constant 0 : i32
    %c0_i32_0 = arith.constant 0 : i32
    return %arg0, %c0_i32 : i32, i32
  }
  func.func @transform_1(%arg0: i32) -> (i32, i32) {
    %c0_i32 = arith.constant 0 : i32
    %c0_i32_0 = arith.constant 0 : i32
    %c0_i32_1 = arith.constant 0 : i32
    return %c0_i32, %c0_i32_0 : i32, i32
  }
  func.func @transform_2(%arg0: i32) -> (i32, i32) {
    %c0_i32 = arith.constant 0 : i32
    %c0_i32_0 = arith.constant 0 : i32
    %c0_i32_1 = arith.constant 0 : i32
    return %c0_i32, %c0_i32_0 : i32, i32
  }
  func.func @transform_3(%arg0: i32) -> (i32, i32) {
    %c0_i32 = arith.constant 0 : i32
    %c0_i32_0 = arith.constant 0 : i32
    return %arg0, %c0_i32 : i32, i32
  }
}

module attributes {stable_mosaic.version = 11 : i64} {
  func.func @_mm_tanh_relu_kernel(%arg0: i32, %arg1: memref<128x288xbf16, #tpu.memory_space<vmem>>, %arg2: memref<288x128xbf16, #tpu.memory_space<vmem>>, %arg3: memref<1x128xf32, #tpu.memory_space<vmem>>, %arg4: memref<128x128xf32, #tpu.memory_space<vmem>>) attributes {dimension_semantics = [#tpu.dimension_semantics<parallel>], iteration_bounds = array<i64: 1>, scalar_prefetch = 0 : i64, scratch_operands = 0 : i64, tpu.core_type = #tpu.core_type<tc>, window_params = [{transform_indices = @transform_0, window_bounds = array<i64: 128, 288>}, {pipeline_mode = #tpu.pipeline_mode<synchronous>, transform_indices = @transform_1, window_bounds = array<i64: 288, 128>}, {pipeline_mode = #tpu.pipeline_mode<synchronous>, transform_indices = @transform_2, window_bounds = array<i64: 1, 128>}, {transform_indices = @transform_3, window_bounds = array<i64: 128, 128>}]} {
    %c0 = arith.constant 0 : index
    %c0_0 = arith.constant 0 : index
    %0 = vector.load %arg1[%c0, %c0_0] : memref<128x288xbf16, #tpu.memory_space<vmem>>, vector<128x288xbf16>
    %c0_1 = arith.constant 0 : index
    %c0_2 = arith.constant 0 : index
    %1 = vector.load %arg2[%c0_1, %c0_2] : memref<288x128xbf16, #tpu.memory_space<vmem>>, vector<288x128xbf16>
    %cst = arith.constant dense<0.000000e+00> : vector<128x128xf32>
    %2 = tpu.matmul %0, %1, %cst {dimension_numbers = #tpu.dot_dimension_numbers<[1], [0], [0], [1], [0, 0, 1, 1], [], []>} : vector<128x288xbf16>, vector<288x128xbf16>, vector<128x128xf32> -> vector<128x128xf32>
    %c0_3 = arith.constant 0 : index
    %c0_4 = arith.constant 0 : index
    %3 = vector.load %arg3[%c0_3, %c0_4] : memref<1x128xf32, #tpu.memory_space<vmem>>, vector<1x128xf32>
    %4 = vector.broadcast %3 : vector<1x128xf32> to vector<128x128xf32>
    %5 = arith.addf %2, %4 : vector<128x128xf32>
    %cst_5 = arith.constant 0.000000e+00 : f32
    %6 = vector.broadcast %cst_5 : f32 to vector<128x128xf32>
    %7 = arith.maximumf %5, %6 : vector<128x128xf32>
    %8 = tpu.iota {dimensions = array<i32: 1>} : vector<128x128xi32>
    %c16_i32 = arith.constant 16 : i32
    %9 = vector.broadcast %c16_i32 : i32 to vector<128x128xi32>
    %10 = arith.cmpi slt, %8, %9 : vector<128x128xi32>
    %11 = math.tanh %7 : vector<128x128xf32>
    %12 = arith.select %10, %11, %7 : vector<128x128xi1>, vector<128x128xf32>
    %c0_6 = arith.constant 0 : index
    %c0_7 = arith.constant 0 : index
    %13 = vector.load %arg4[%c0_6, %c0_7] : memref<128x128xf32, #tpu.memory_space<vmem>>, vector<128x128xf32>
    tpu.vector_store %arg4[%c0_6, %c0_7], %12 {strides = array<i32>} : memref<128x128xf32, #tpu.memory_space<vmem>>, vector<128x128xf32>,
    return
  }
  func.func @transform_0(%arg0: i32) -> (i32, i32) {
    %c0_i32 = arith.constant 0 : i32
    %c0_i32_0 = arith.constant 0 : i32
    return %arg0, %c0_i32 : i32, i32
  }
  func.func @transform_1(%arg0: i32) -> (i32, i32) {
    %c0_i32 = arith.constant 0 : i32
    %c0_i32_0 = arith.constant 0 : i32
    %c0_i32_1 = arith.constant 0 : i32
    return %c0_i32, %c0_i32_0 : i32, i32
  }
  func.func @transform_2(%arg0: i32) -> (i32, i32) {
    %c0_i32 = arith.constant 0 : i32
    %c0_i32_0 = arith.constant 0 : i32
    %c0_i32_1 = arith.constant 0 : i32
    return %c0_i32, %c0_i32_0 : i32, i32
  }
  func.func @transform_3(%arg0: i32) -> (i32, i32) {
    %c0_i32 = arith.constant 0 : i32
    %c0_i32_0 = arith.constant 0 : i32
    return %arg0, %c0_i32 : i32, i32
  }
}

module attributes {stable_mosaic.version = 11 : i64} {
  func.func @_mm_kernel(%arg0: i32, %arg1: memref<128x288xbf16, #tpu.memory_space<vmem>>, %arg2: memref<288x128xbf16, #tpu.memory_space<vmem>>, %arg3: memref<1x128xf32, #tpu.memory_space<vmem>>, %arg4: memref<128x128xf32, #tpu.memory_space<vmem>>) attributes {dimension_semantics = [#tpu.dimension_semantics<parallel>], iteration_bounds = array<i64: 1>, scalar_prefetch = 0 : i64, scratch_operands = 0 : i64, tpu.core_type = #tpu.core_type<tc>, window_params = [{transform_indices = @transform_0, window_bounds = array<i64: 128, 288>}, {pipeline_mode = #tpu.pipeline_mode<synchronous>, transform_indices = @transform_1, window_bounds = array<i64: 288, 128>}, {pipeline_mode = #tpu.pipeline_mode<synchronous>, transform_indices = @transform_2, window_bounds = array<i64: 1, 128>}, {transform_indices = @transform_3, window_bounds = array<i64: 128, 128>}]} {
    %c0 = arith.constant 0 : index
    %c0_0 = arith.constant 0 : index
    %0 = vector.load %arg1[%c0, %c0_0] : memref<128x288xbf16, #tpu.memory_space<vmem>>, vector<128x288xbf16>
    %c0_1 = arith.constant 0 : index
    %c0_2 = arith.constant 0 : index
    %1 = vector.load %arg2[%c0_1, %c0_2] : memref<288x128xbf16, #tpu.memory_space<vmem>>, vector<288x128xbf16>
    %cst = arith.constant dense<0.000000e+00> : vector<128x128xf32>
    %2 = tpu.matmul %0, %1, %cst {dimension_numbers = #tpu.dot_dimension_numbers<[1], [0], [0], [1], [0, 0, 1, 1], [], []>} : vector<128x288xbf16>, vector<288x128xbf16>, vector<128x128xf32> -> vector<128x128xf32>
    %c0_3 = arith.constant 0 : index
    %c0_4 = arith.constant 0 : index
    %3 = vector.load %arg3[%c0_3, %c0_4] : memref<1x128xf32, #tpu.memory_space<vmem>>, vector<1x128xf32>
    %4 = vector.broadcast %3 : vector<1x128xf32> to vector<128x128xf32>
    %5 = arith.addf %2, %4 : vector<128x128xf32>
    %cst_5 = arith.constant 0.000000e+00 : f32
    %6 = vector.broadcast %cst_5 : f32 to vector<128x128xf32>
    %7 = arith.maximumf %5, %6 : vector<128x128xf32>
    %c0_6 = arith.constant 0 : index
    %c0_7 = arith.constant 0 : index
    %8 = vector.load %arg4[%c0_6, %c0_7] : memref<128x128xf32, #tpu.memory_space<vmem>>, vector<128x128xf32>
    tpu.vector_store %arg4[%c0_6, %c0_7], %7 {strides = array<i32>} : memref<128x128xf32, #tpu.memory_space<vmem>>, vector<128x128xf32>,
    return
  }
  func.func @transform_0(%arg0: i32) -> (i32, i32) {
    %c0_i32 = arith.constant 0 : i32
    %c0_i32_0 = arith.constant 0 : i32
    return %arg0, %c0_i32 : i32, i32
  }
  func.func @transform_1(%arg0: i32) -> (i32, i32) {
    %c0_i32 = arith.constant 0 : i32
    %c0_i32_0 = arith.constant 0 : i32
    %c0_i32_1 = arith.constant 0 : i32
    return %c0_i32, %c0_i32_0 : i32, i32
  }
  func.func @transform_2(%arg0: i32) -> (i32, i32) {
    %c0_i32 = arith.constant 0 : i32
    %c0_i32_0 = arith.constant 0 : i32
    %c0_i32_1 = arith.constant 0 : i32
    return %c0_i32, %c0_i32_0 : i32, i32
  }
  func.func @transform_3(%arg0: i32) -> (i32, i32) {
    %c0_i32 = arith.constant 0 : i32
    %c0_i32_0 = arith.constant 0 : i32
    return %arg0, %c0_i32 : i32, i32
  }
}

module attributes {stable_mosaic.version = 11 : i64} {
  func.func @_mm_zr_kernel(%arg0: i32, %arg1: memref<128x504xbf16, #tpu.memory_space<vmem>>, %arg2: memref<504x128xbf16, #tpu.memory_space<vmem>>, %arg3: memref<1x128xf32, #tpu.memory_space<vmem>>, %arg4: memref<128x128xf32, #tpu.memory_space<vmem>>, %arg5: memref<128x128xf32, #tpu.memory_space<vmem>>) attributes {dimension_semantics = [#tpu.dimension_semantics<parallel>], iteration_bounds = array<i64: 1>, scalar_prefetch = 0 : i64, scratch_operands = 0 : i64, tpu.core_type = #tpu.core_type<tc>, window_params = [{transform_indices = @transform_0, window_bounds = array<i64: 128, 504>}, {pipeline_mode = #tpu.pipeline_mode<synchronous>, transform_indices = @transform_1, window_bounds = array<i64: 504, 128>}, {pipeline_mode = #tpu.pipeline_mode<synchronous>, transform_indices = @transform_2, window_bounds = array<i64: 1, 128>}, {transform_indices = @transform_3, window_bounds = array<i64: 128, 128>}, {transform_indices = @transform_4, window_bounds = array<i64: 128, 128>}]} {
    %c0 = arith.constant 0 : index
    %c0_0 = arith.constant 0 : index
    %0 = vector.load %arg1[%c0, %c0_0] : memref<128x504xbf16, #tpu.memory_space<vmem>>, vector<128x504xbf16>
    %c0_1 = arith.constant 0 : index
    %c0_2 = arith.constant 0 : index
    %1 = vector.load %arg2[%c0_1, %c0_2] : memref<504x128xbf16, #tpu.memory_space<vmem>>, vector<504x128xbf16>
    %cst = arith.constant dense<0.000000e+00> : vector<128x128xf32>
    %2 = tpu.matmul %0, %1, %cst {dimension_numbers = #tpu.dot_dimension_numbers<[1], [0], [0], [1], [0, 0, 1, 1], [], []>} : vector<128x504xbf16>, vector<504x128xbf16>, vector<128x128xf32> -> vector<128x128xf32>
    %c0_3 = arith.constant 0 : index
    %c0_4 = arith.constant 0 : index
    %3 = vector.load %arg3[%c0_3, %c0_4] : memref<1x128xf32, #tpu.memory_space<vmem>>, vector<1x128xf32>
    %4 = vector.broadcast %3 : vector<1x128xf32> to vector<128x128xf32>
    %5 = arith.addf %2, %4 : vector<128x128xf32>
    %6 = tpu.iota {dimensions = array<i32: 1>} : vector<128x128xi32>
    %c16_i32 = arith.constant 16 : i32
    %7 = vector.broadcast %c16_i32 : i32 to vector<128x128xi32>
    %8 = arith.cmpi slt, %6, %7 : vector<128x128xi32>
    %9 = arith.negf %5 : vector<128x128xf32>
    %10 = math.exp %9 : vector<128x128xf32>
    %cst_5 = arith.constant 1.000000e+00 : f32
    %11 = vector.broadcast %cst_5 : f32 to vector<128x128xf32>
    %12 = arith.addf %11, %10 : vector<128x128xf32>
    %13 = arith.divf %11, %12 : vector<128x128xf32>
    %c0_6 = arith.constant 0 : index
    %c0_7 = arith.constant 0 : index
    %14 = vector.load %arg4[%c0_6, %c0_7] : memref<128x128xf32, #tpu.memory_space<vmem>>, vector<128x128xf32>
    %15 = arith.mulf %13, %14 : vector<128x128xf32>
    %16 = arith.select %8, %5, %15 : vector<128x128xi1>, vector<128x128xf32>
    %c0_8 = arith.constant 0 : index
    %c0_9 = arith.constant 0 : index
    %17 = vector.load %arg5[%c0_8, %c0_9] : memref<128x128xf32, #tpu.memory_space<vmem>>, vector<128x128xf32>
    tpu.vector_store %arg5[%c0_8, %c0_9], %16 {strides = array<i32>} : memref<128x128xf32, #tpu.memory_space<vmem>>, vector<128x128xf32>,
    return
  }
  func.func @transform_0(%arg0: i32) -> (i32, i32) {
    %c0_i32 = arith.constant 0 : i32
    %c0_i32_0 = arith.constant 0 : i32
    return %arg0, %c0_i32 : i32, i32
  }
  func.func @transform_1(%arg0: i32) -> (i32, i32) {
    %c0_i32 = arith.constant 0 : i32
    %c0_i32_0 = arith.constant 0 : i32
    %c0_i32_1 = arith.constant 0 : i32
    return %c0_i32, %c0_i32_0 : i32, i32
  }
  func.func @transform_2(%arg0: i32) -> (i32, i32) {
    %c0_i32 = arith.constant 0 : i32
    %c0_i32_0 = arith.constant 0 : i32
    %c0_i32_1 = arith.constant 0 : i32
    return %c0_i32, %c0_i32_0 : i32, i32
  }
  func.func @transform_3(%arg0: i32) -> (i32, i32) {
    %c0_i32 = arith.constant 0 : i32
    %c0_i32_0 = arith.constant 0 : i32
    return %arg0, %c0_i32 : i32, i32
  }
  func.func @transform_4(%arg0: i32) -> (i32, i32) {
    %c0_i32 = arith.constant 0 : i32
    %c0_i32_0 = arith.constant 0 : i32
    return %arg0, %c0_i32 : i32, i32
  }
}

module attributes {stable_mosaic.version = 11 : i64} {
  func.func @_mm_gru_kernel(%arg0: i32, %arg1: memref<128x504xbf16, #tpu.memory_space<vmem>>, %arg2: memref<504x128xbf16, #tpu.memory_space<vmem>>, %arg3: memref<1x128xf32, #tpu.memory_space<vmem>>, %arg4: memref<128x128xf32, #tpu.memory_space<vmem>>, %arg5: memref<128x128xf32, #tpu.memory_space<vmem>>, %arg6: memref<128x128xf32, #tpu.memory_space<vmem>>) attributes {dimension_semantics = [#tpu.dimension_semantics<parallel>], iteration_bounds = array<i64: 1>, scalar_prefetch = 0 : i64, scratch_operands = 0 : i64, tpu.core_type = #tpu.core_type<tc>, window_params = [{transform_indices = @transform_0, window_bounds = array<i64: 128, 504>}, {pipeline_mode = #tpu.pipeline_mode<synchronous>, transform_indices = @transform_1, window_bounds = array<i64: 504, 128>}, {pipeline_mode = #tpu.pipeline_mode<synchronous>, transform_indices = @transform_2, window_bounds = array<i64: 1, 128>}, {transform_indices = @transform_3, window_bounds = array<i64: 128, 128>}, {transform_indices = @transform_4, window_bounds = array<i64: 128, 128>}, {transform_indices = @transform_5, window_bounds = array<i64: 128, 128>}]} {
    %c0 = arith.constant 0 : index
    %c0_0 = arith.constant 0 : index
    %0 = vector.load %arg1[%c0, %c0_0] : memref<128x504xbf16, #tpu.memory_space<vmem>>, vector<128x504xbf16>
    %c0_1 = arith.constant 0 : index
    %c0_2 = arith.constant 0 : index
    %1 = vector.load %arg2[%c0_1, %c0_2] : memref<504x128xbf16, #tpu.memory_space<vmem>>, vector<504x128xbf16>
    %cst = arith.constant dense<0.000000e+00> : vector<128x128xf32>
    %2 = tpu.matmul %0, %1, %cst {dimension_numbers = #tpu.dot_dimension_numbers<[1], [0], [0], [1], [0, 0, 1, 1], [], []>} : vector<128x504xbf16>, vector<504x128xbf16>, vector<128x128xf32> -> vector<128x128xf32>
    %c0_3 = arith.constant 0 : index
    %c0_4 = arith.constant 0 : index
    %3 = vector.load %arg3[%c0_3, %c0_4] : memref<1x128xf32, #tpu.memory_space<vmem>>, vector<1x128xf32>
    %4 = vector.broadcast %3 : vector<1x128xf32> to vector<128x128xf32>
    %5 = arith.addf %2, %4 : vector<128x128xf32>
    %6 = math.tanh %5 : vector<128x128xf32>
    %c0_5 = arith.constant 0 : index
    %c0_6 = arith.constant 0 : index
    %7 = vector.load %arg4[%c0_5, %c0_6] : memref<128x128xf32, #tpu.memory_space<vmem>>, vector<128x128xf32>
    %8 = arith.negf %7 : vector<128x128xf32>
    %9 = math.exp %8 : vector<128x128xf32>
    %cst_7 = arith.constant 1.000000e+00 : f32
    %10 = vector.broadcast %cst_7 : f32 to vector<128x128xf32>
    %11 = arith.addf %10, %9 : vector<128x128xf32>
    %12 = arith.divf %10, %11 : vector<128x128xf32>
    %cst_8 = arith.constant 1.000000e+00 : f32
    %13 = vector.broadcast %cst_8 : f32 to vector<128x128xf32>
    %14 = arith.subf %13, %12 : vector<128x128xf32>
    %c0_9 = arith.constant 0 : index
    %c0_10 = arith.constant 0 : index
    %15 = vector.load %arg5[%c0_9, %c0_10] : memref<128x128xf32, #tpu.memory_space<vmem>>, vector<128x128xf32>
    %16 = arith.mulf %14, %15 : vector<128x128xf32>
    %17 = arith.mulf %12, %6 : vector<128x128xf32>
    %18 = arith.addf %16, %17 : vector<128x128xf32>
    %c0_11 = arith.constant 0 : index
    %c0_12 = arith.constant 0 : index
    %19 = vector.load %arg6[%c0_11, %c0_12] : memref<128x128xf32, #tpu.memory_space<vmem>>, vector<128x128xf32>
    tpu.vector_store %arg6[%c0_11, %c0_12], %18 {strides = array<i32>} : memref<128x128xf32, #tpu.memory_space<vmem>>, vector<128x128xf32>,
    return
  }
  func.func @transform_0(%arg0: i32) -> (i32, i32) {
    %c0_i32 = arith.constant 0 : i32
    %c0_i32_0 = arith.constant 0 : i32
    return %arg0, %c0_i32 : i32, i32
  }
  func.func @transform_1(%arg0: i32) -> (i32, i32) {
    %c0_i32 = arith.constant 0 : i32
    %c0_i32_0 = arith.constant 0 : i32
    %c0_i32_1 = arith.constant 0 : i32
    return %c0_i32, %c0_i32_0 : i32, i32
  }
  func.func @transform_2(%arg0: i32) -> (i32, i32) {
    %c0_i32 = arith.constant 0 : i32
    %c0_i32_0 = arith.constant 0 : i32
    %c0_i32_1 = arith.constant 0 : i32
    return %c0_i32, %c0_i32_0 : i32, i32
  }
  func.func @transform_3(%arg0: i32) -> (i32, i32) {
    %c0_i32 = arith.constant 0 : i32
    %c0_i32_0 = arith.constant 0 : i32
    return %arg0, %c0_i32 : i32, i32
  }
  func.func @transform_4(%arg0: i32) -> (i32, i32) {
    %c0_i32 = arith.constant 0 : i32
    %c0_i32_0 = arith.constant 0 : i32
    return %arg0, %c0_i32 : i32, i32
  }
  func.func @transform_5(%arg0: i32) -> (i32, i32) {
    %c0_i32 = arith.constant 0 : i32
    %c0_i32_0 = arith.constant 0 : i32
    return %arg0, %c0_i32 : i32, i32
  }
}

module attributes {stable_mosaic.version = 11 : i64} {
  func.func @_mm_kernel(%arg0: i32, %arg1: memref<128x288xbf16, #tpu.memory_space<vmem>>, %arg2: memref<288x128xbf16, #tpu.memory_space<vmem>>, %arg3: memref<1x128xf32, #tpu.memory_space<vmem>>, %arg4: memref<128x128xf32, #tpu.memory_space<vmem>>) attributes {dimension_semantics = [#tpu.dimension_semantics<parallel>], iteration_bounds = array<i64: 1>, scalar_prefetch = 0 : i64, scratch_operands = 0 : i64, tpu.core_type = #tpu.core_type<tc>, window_params = [{transform_indices = @transform_0, window_bounds = array<i64: 128, 288>}, {pipeline_mode = #tpu.pipeline_mode<synchronous>, transform_indices = @transform_1, window_bounds = array<i64: 288, 128>}, {pipeline_mode = #tpu.pipeline_mode<synchronous>, transform_indices = @transform_2, window_bounds = array<i64: 1, 128>}, {transform_indices = @transform_3, window_bounds = array<i64: 128, 128>}]} {
    %c0 = arith.constant 0 : index
    %c0_0 = arith.constant 0 : index
    %0 = vector.load %arg1[%c0, %c0_0] : memref<128x288xbf16, #tpu.memory_space<vmem>>, vector<128x288xbf16>
    %c0_1 = arith.constant 0 : index
    %c0_2 = arith.constant 0 : index
    %1 = vector.load %arg2[%c0_1, %c0_2] : memref<288x128xbf16, #tpu.memory_space<vmem>>, vector<288x128xbf16>
    %cst = arith.constant dense<0.000000e+00> : vector<128x128xf32>
    %2 = tpu.matmul %0, %1, %cst {dimension_numbers = #tpu.dot_dimension_numbers<[1], [0], [0], [1], [0, 0, 1, 1], [], []>} : vector<128x288xbf16>, vector<288x128xbf16>, vector<128x128xf32> -> vector<128x128xf32>
    %c0_3 = arith.constant 0 : index
    %c0_4 = arith.constant 0 : index
    %3 = vector.load %arg3[%c0_3, %c0_4] : memref<1x128xf32, #tpu.memory_space<vmem>>, vector<1x128xf32>
    %4 = vector.broadcast %3 : vector<1x128xf32> to vector<128x128xf32>
    %5 = arith.addf %2, %4 : vector<128x128xf32>
    %c0_5 = arith.constant 0 : index
    %c0_6 = arith.constant 0 : index
    %6 = vector.load %arg4[%c0_5, %c0_6] : memref<128x128xf32, #tpu.memory_space<vmem>>, vector<128x128xf32>
    tpu.vector_store %arg4[%c0_5, %c0_6], %5 {strides = array<i32>} : memref<128x128xf32, #tpu.memory_space<vmem>>, vector<128x128xf32>,
    return
  }
  func.func @transform_0(%arg0: i32) -> (i32, i32) {
    %c0_i32 = arith.constant 0 : i32
    %c0_i32_0 = arith.constant 0 : i32
    return %arg0, %c0_i32 : i32, i32
  }
  func.func @transform_1(%arg0: i32) -> (i32, i32) {
    %c0_i32 = arith.constant 0 : i32
    %c0_i32_0 = arith.constant 0 : i32
    %c0_i32_1 = arith.constant 0 : i32
    return %c0_i32, %c0_i32_0 : i32, i32
  }
  func.func @transform_2(%arg0: i32) -> (i32, i32) {
    %c0_i32 = arith.constant 0 : i32
    %c0_i32_0 = arith.constant 0 : i32
    %c0_i32_1 = arith.constant 0 : i32
    return %c0_i32, %c0_i32_0 : i32, i32
  }
  func.func @transform_3(%arg0: i32) -> (i32, i32) {
    %c0_i32 = arith.constant 0 : i32
    %c0_i32_0 = arith.constant 0 : i32
    return %arg0, %c0_i32 : i32, i32
  }
}

module attributes {stable_mosaic.version = 11 : i64} {
  func.func @_upsample_kernel(%arg0: i32, %arg1: memref<128x144xf32, #tpu.memory_space<vmem>>, %arg2: memref<128x9xf32, #tpu.memory_space<vmem>>, %arg3: memref<128x16xf32, #tpu.memory_space<vmem>>) attributes {dimension_semantics = [#tpu.dimension_semantics<parallel>], iteration_bounds = array<i64: 1>, scalar_prefetch = 0 : i64, scratch_operands = 0 : i64, tpu.core_type = #tpu.core_type<tc>, window_params = [{transform_indices = @transform_0, window_bounds = array<i64: 128, 144>}, {transform_indices = @transform_1, window_bounds = array<i64: 128, 9>}, {transform_indices = @transform_2, window_bounds = array<i64: 128, 16>}]} {
    %c0 = arith.constant 0 : index
    %c0_0 = arith.constant 0 : index
    %0 = vector.load %arg1[%c0, %c0_0] : memref<128x144xf32, #tpu.memory_space<vmem>>, vector<128x144xf32>
    %c0_1 = arith.constant 0 : index
    %c0_2 = arith.constant 0 : index
    %1 = vector.load %arg2[%c0_1, %c0_2] : memref<128x9xf32, #tpu.memory_space<vmem>>, vector<128x9xf32>
    %2 = vector.extract_strided_slice %0 {offsets = [0, 0], sizes = [128, 16], strides = [1, 1]} : vector<128x144xf32> to vector<128x16xf32>
    %3 = vector.extract_strided_slice %0 {offsets = [0, 16], sizes = [128, 16], strides = [1, 1]} : vector<128x144xf32> to vector<128x16xf32>
    %4 = vector.extract_strided_slice %0 {offsets = [0, 32], sizes = [128, 16], strides = [1, 1]} : vector<128x144xf32> to vector<128x16xf32>
    %5 = vector.extract_strided_slice %0 {offsets = [0, 48], sizes = [128, 16], strides = [1, 1]} : vector<128x144xf32> to vector<128x16xf32>
    %6 = vector.extract_strided_slice %0 {offsets = [0, 64], sizes = [128, 16], strides = [1, 1]} : vector<128x144xf32> to vector<128x16xf32>
    %7 = vector.extract_strided_slice %0 {offsets = [0, 80], sizes = [128, 16], strides = [1, 1]} : vector<128x144xf32> to vector<128x16xf32>
    %8 = vector.extract_strided_slice %0 {offsets = [0, 96], sizes = [128, 16], strides = [1, 1]} : vector<128x144xf32> to vector<128x16xf32>
    %9 = vector.extract_strided_slice %0 {offsets = [0, 112], sizes = [128, 16], strides = [1, 1]} : vector<128x144xf32> to vector<128x16xf32>
    %10 = vector.extract_strided_slice %0 {offsets = [0, 128], sizes = [128, 16], strides = [1, 1]} : vector<128x144xf32> to vector<128x16xf32>
    %11 = arith.maximumf %2, %3 : vector<128x16xf32>
    %12 = arith.maximumf %11, %4 : vector<128x16xf32>
    %13 = arith.maximumf %12, %5 : vector<128x16xf32>
    %14 = arith.maximumf %13, %6 : vector<128x16xf32>
    %15 = arith.maximumf %14, %7 : vector<128x16xf32>
    %16 = arith.maximumf %15, %8 : vector<128x16xf32>
    %17 = arith.maximumf %16, %9 : vector<128x16xf32>
    %18 = arith.maximumf %17, %10 : vector<128x16xf32>
    %cst = arith.constant 0.000000e+00 : f32
    %19 = vector.broadcast %cst : f32 to vector<128x16xf32>
    %cst_3 = arith.constant 0.000000e+00 : f32
    %20 = vector.broadcast %cst_3 : f32 to vector<128x16xf32>
    %21 = arith.subf %2, %18 : vector<128x16xf32>
    %22 = math.exp %21 : vector<128x16xf32>
    %23 = arith.addf %20, %22 : vector<128x16xf32>
    %24 = vector.extract_strided_slice %1 {offsets = [0, 0], sizes = [128, 1], strides = [1, 1]} : vector<128x9xf32> to vector<128x1xf32>
    %25 = vector.broadcast %24 : vector<128x1xf32> to vector<128x16xf32>
    %26 = arith.mulf %22, %25 : vector<128x16xf32>
    %27 = arith.addf %19, %26 : vector<128x16xf32>
    %28 = arith.subf %3, %18 : vector<128x16xf32>
    %29 = math.exp %28 : vector<128x16xf32>
    %30 = arith.addf %23, %29 : vector<128x16xf32>
    %31 = vector.extract_strided_slice %1 {offsets = [0, 1], sizes = [128, 1], strides = [1, 1]} : vector<128x9xf32> to vector<128x1xf32>
    %32 = vector.broadcast %31 : vector<128x1xf32> to vector<128x16xf32>
    %33 = arith.mulf %29, %32 : vector<128x16xf32>
    %34 = arith.addf %27, %33 : vector<128x16xf32>
    %35 = arith.subf %4, %18 : vector<128x16xf32>
    %36 = math.exp %35 : vector<128x16xf32>
    %37 = arith.addf %30, %36 : vector<128x16xf32>
    %38 = vector.extract_strided_slice %1 {offsets = [0, 2], sizes = [128, 1], strides = [1, 1]} : vector<128x9xf32> to vector<128x1xf32>
    %39 = vector.broadcast %38 : vector<128x1xf32> to vector<128x16xf32>
    %40 = arith.mulf %36, %39 : vector<128x16xf32>
    %41 = arith.addf %34, %40 : vector<128x16xf32>
    %42 = arith.subf %5, %18 : vector<128x16xf32>
    %43 = math.exp %42 : vector<128x16xf32>
    %44 = arith.addf %37, %43 : vector<128x16xf32>
    %45 = vector.extract_strided_slice %1 {offsets = [0, 3], sizes = [128, 1], strides = [1, 1]} : vector<128x9xf32> to vector<128x1xf32>
    %46 = vector.broadcast %45 : vector<128x1xf32> to vector<128x16xf32>
    %47 = arith.mulf %43, %46 : vector<128x16xf32>
    %48 = arith.addf %41, %47 : vector<128x16xf32>
    %49 = arith.subf %6, %18 : vector<128x16xf32>
    %50 = math.exp %49 : vector<128x16xf32>
    %51 = arith.addf %44, %50 : vector<128x16xf32>
    %52 = vector.extract_strided_slice %1 {offsets = [0, 4], sizes = [128, 1], strides = [1, 1]} : vector<128x9xf32> to vector<128x1xf32>
    %53 = vector.broadcast %52 : vector<128x1xf32> to vector<128x16xf32>
    %54 = arith.mulf %50, %53 : vector<128x16xf32>
    %55 = arith.addf %48, %54 : vector<128x16xf32>
    %56 = arith.subf %7, %18 : vector<128x16xf32>
    %57 = math.exp %56 : vector<128x16xf32>
    %58 = arith.addf %51, %57 : vector<128x16xf32>
    %59 = vector.extract_strided_slice %1 {offsets = [0, 5], sizes = [128, 1], strides = [1, 1]} : vector<128x9xf32> to vector<128x1xf32>
    %60 = vector.broadcast %59 : vector<128x1xf32> to vector<128x16xf32>
    %61 = arith.mulf %57, %60 : vector<128x16xf32>
    %62 = arith.addf %55, %61 : vector<128x16xf32>
    %63 = arith.subf %8, %18 : vector<128x16xf32>
    %64 = math.exp %63 : vector<128x16xf32>
    %65 = arith.addf %58, %64 : vector<128x16xf32>
    %66 = vector.extract_strided_slice %1 {offsets = [0, 6], sizes = [128, 1], strides = [1, 1]} : vector<128x9xf32> to vector<128x1xf32>
    %67 = vector.broadcast %66 : vector<128x1xf32> to vector<128x16xf32>
    %68 = arith.mulf %64, %67 : vector<128x16xf32>
    %69 = arith.addf %62, %68 : vector<128x16xf32>
    %70 = arith.subf %9, %18 : vector<128x16xf32>
    %71 = math.exp %70 : vector<128x16xf32>
    %72 = arith.addf %65, %71 : vector<128x16xf32>
    %73 = vector.extract_strided_slice %1 {offsets = [0, 7], sizes = [128, 1], strides = [1, 1]} : vector<128x9xf32> to vector<128x1xf32>
    %74 = vector.broadcast %73 : vector<128x1xf32> to vector<128x16xf32>
    %75 = arith.mulf %71, %74 : vector<128x16xf32>
    %76 = arith.addf %69, %75 : vector<128x16xf32>
    %77 = arith.subf %10, %18 : vector<128x16xf32>
    %78 = math.exp %77 : vector<128x16xf32>
    %79 = arith.addf %72, %78 : vector<128x16xf32>
    %80 = vector.extract_strided_slice %1 {offsets = [0, 8], sizes = [128, 1], strides = [1, 1]} : vector<128x9xf32> to vector<128x1xf32>
    %81 = vector.broadcast %80 : vector<128x1xf32> to vector<128x16xf32>
    %82 = arith.mulf %78, %81 : vector<128x16xf32>
    %83 = arith.addf %76, %82 : vector<128x16xf32>
    %84 = tpu.reciprocal %79 {approx = true} : vector<128x16xf32> -> vector<128x16xf32>
    %85 = arith.mulf %83, %84 : vector<128x16xf32>
    %c0_4 = arith.constant 0 : index
    %c0_5 = arith.constant 0 : index
    %86 = vector.load %arg3[%c0_4, %c0_5] : memref<128x16xf32, #tpu.memory_space<vmem>>, vector<128x16xf32>
    tpu.vector_store %arg3[%c0_4, %c0_5], %85 {strides = array<i32>} : memref<128x16xf32, #tpu.memory_space<vmem>>, vector<128x16xf32>,
    return
  }
  func.func @transform_0(%arg0: i32) -> (i32, i32) {
    %c0_i32 = arith.constant 0 : i32
    %c0_i32_0 = arith.constant 0 : i32
    return %arg0, %c0_i32 : i32, i32
  }
  func.func @transform_1(%arg0: i32) -> (i32, i32) {
    %c0_i32 = arith.constant 0 : i32
    %c0_i32_0 = arith.constant 0 : i32
    return %arg0, %c0_i32 : i32, i32
  }
  func.func @transform_2(%arg0: i32) -> (i32, i32) {
    %c0_i32 = arith.constant 0 : i32
    %c0_i32_0 = arith.constant 0 : i32
    return %arg0, %c0_i32 : i32, i32
  }
}

module attributes {stable_mosaic.version = 11 : i64} {
  func.func @_mm_kernel(%arg0: i32, %arg1: memref<128x32xbf16, #tpu.memory_space<vmem>>, %arg2: memref<32x256xbf16, #tpu.memory_space<vmem>>, %arg3: memref<1x256xf32, #tpu.memory_space<vmem>>, %arg4: memref<128x256xf32, #tpu.memory_space<vmem>>) attributes {dimension_semantics = [#tpu.dimension_semantics<parallel>], iteration_bounds = array<i64: 1>, scalar_prefetch = 0 : i64, scratch_operands = 0 : i64, tpu.core_type = #tpu.core_type<tc>, window_params = [{transform_indices = @transform_0, window_bounds = array<i64: 128, 32>}, {pipeline_mode = #tpu.pipeline_mode<synchronous>, transform_indices = @transform_1, window_bounds = array<i64: 32, 256>}, {pipeline_mode = #tpu.pipeline_mode<synchronous>, transform_indices = @transform_2, window_bounds = array<i64: 1, 256>}, {transform_indices = @transform_3, window_bounds = array<i64: 128, 256>}]} {
    %c0 = arith.constant 0 : index
    %c0_0 = arith.constant 0 : index
    %0 = vector.load %arg1[%c0, %c0_0] : memref<128x32xbf16, #tpu.memory_space<vmem>>, vector<128x32xbf16>
    %c0_1 = arith.constant 0 : index
    %c0_2 = arith.constant 0 : index
    %1 = vector.load %arg2[%c0_1, %c0_2] : memref<32x256xbf16, #tpu.memory_space<vmem>>, vector<32x256xbf16>
    %cst = arith.constant dense<0.000000e+00> : vector<128x256xf32>
    %2 = tpu.matmul %0, %1, %cst {dimension_numbers = #tpu.dot_dimension_numbers<[1], [0], [0], [1], [0, 0, 1, 1], [], []>} : vector<128x32xbf16>, vector<32x256xbf16>, vector<128x256xf32> -> vector<128x256xf32>
    %c0_3 = arith.constant 0 : index
    %c0_4 = arith.constant 0 : index
    %3 = vector.load %arg3[%c0_3, %c0_4] : memref<1x256xf32, #tpu.memory_space<vmem>>, vector<1x256xf32>
    %4 = vector.broadcast %3 : vector<1x256xf32> to vector<128x256xf32>
    %5 = arith.addf %2, %4 : vector<128x256xf32>
    %c0_5 = arith.constant 0 : index
    %c0_6 = arith.constant 0 : index
    %6 = vector.load %arg4[%c0_5, %c0_6] : memref<128x256xf32, #tpu.memory_space<vmem>>, vector<128x256xf32>
    tpu.vector_store %arg4[%c0_5, %c0_6], %5 {strides = array<i32>} : memref<128x256xf32, #tpu.memory_space<vmem>>, vector<128x256xf32>,
    return
  }
  func.func @transform_0(%arg0: i32) -> (i32, i32) {
    %c0_i32 = arith.constant 0 : i32
    %c0_i32_0 = arith.constant 0 : i32
    return %arg0, %c0_i32 : i32, i32
  }
  func.func @transform_1(%arg0: i32) -> (i32, i32) {
    %c0_i32 = arith.constant 0 : i32
    %c0_i32_0 = arith.constant 0 : i32
    %c0_i32_1 = arith.constant 0 : i32
    return %c0_i32, %c0_i32_0 : i32, i32
  }
  func.func @transform_2(%arg0: i32) -> (i32, i32) {
    %c0_i32 = arith.constant 0 : i32
    %c0_i32_0 = arith.constant 0 : i32
    %c0_i32_1 = arith.constant 0 : i32
    return %c0_i32, %c0_i32_0 : i32, i32
  }
  func.func @transform_3(%arg0: i32) -> (i32, i32) {
    %c0_i32 = arith.constant 0 : i32
    %c0_i32_0 = arith.constant 0 : i32
    return %arg0, %c0_i32 : i32, i32
  }
}

</mosaic_0001>

<llo_original>
// kernel: _lambda_.26
$region0: #{_lambda_.26}
  #allocation0 [shape = 'u32[]', space=smem, size = 0x4, offset = 0x4, fixed_abs, tag = 'smem constant byte address 0x4 - core index']
  #allocation1 [shape = 'u32[144,128]{1,0:T(1,128)}', space=vmem, size = 0x12000, scoped, tag = 'internal scratch']
  %s0 = inlined_call_operand.vmem [shape: bf16[256,27], index: 0, kind: input, shape index: {}]
  %s1 = inlined_call_operand.vmem [shape: bf16[27,128], index: 1, kind: input, shape index: {}]
  %s2 = inlined_call_operand.vmem [shape: f32[1,128], index: 2, kind: input, shape index: {}]
  %s3 = inlined_call_operand.vmem [shape: f32[256,128], index: 3, kind: output, shape index: {}]
  %s4 = sld [smem:[#allocation0]]
  $region45: #{_lambda_.26} parent=0
    _
  %s6 = ssub.s32 1, %s4
  %s7 = scalar_select 0, %s6, %s4
  loop: start=0, step=1, limit=4
  $region2: #{_lambda_.26} parent=0 // loop_pre_header
    _
  $region3: #{_lambda_.26} parent=0 // loop_header
    %s9 = sphi 0, %s13
    %p10 = scmp.ge.s32.totalorder %s9, 4
    %s19 = sphi 0, %s21
    %s22 = sphi 0, %s19
    %s23 = sphi 0, %s22
    %s39 = sphi 0, %s23
    %s43 = sphi 0, %s43
    %s45 = sphi 0, %s43
    %s46 = sphi 0, %s45
    %s60 = sphi 0, %s46
    %s64 = sphi 0, %s64
    %s66 = sphi 0, %s64
    %s67 = sphi 0, %s66
    %s81 = sphi 0, %s67
    %s87 = sphi 0, %s89
    %s90 = sphi 0, %s87
    %s91 = sphi 0, %s90
    %s107 = sphi 0, %s91
  $region4: #{_lambda_.26} parent=0 // loop_header_branch
    %12 = sbr.rel (%p10) target = $region8
  $region5: #{_lambda_.26} parent=0 // loop_body
    %s14 = ssub.s32 %s9, 1
    %s15 = ssub.s32 %s9, 2
    %s16 = sadd.s32 %s9, 1
    %s17 = ssub.s32 %s9, %s16
    %p18 = scmp.eq.s32.totalorder %s17, 0
    %s20 = sadd.s32 %s19, 1
    %s21 = scalar_select %p18, %s19, %s20
    %p24 = pneg %p18
    %p25 = scmp.eq.s32.totalorder %s9, 1
    %p26 = por %p24, %p25
    %p27 = scmp.ne.s32.totalorder %s19, %s22
    %p28 = scmp.eq.s32.totalorder %s9, 0
    %p29 = por %p27, %p28
    %p30 = scmp.ne.s32.totalorder %s19, %s22
    %p31 = scmp.eq.s32.totalorder %s14, 1
    %p32 = por %p30, %p31
    %p33 = scmp.ne.s32.totalorder %s22, %s23
    %p34 = scmp.eq.s32.totalorder %s14, 0
    %p35 = por %p33, %p34
    %p36 = scmp.ne.s32.totalorder %s22, %s23
    %p37 = scmp.eq.s32.totalorder %s15, 1
    %p38 = por %p36, %p37
    %p40 = scmp.ne.s32.totalorder %s23, %s39
    %p41 = scmp.eq.s32.totalorder %s15, 0
    %p42 = por %p40, %p41
    %s44 = sadd.s32 %s43, 1
    %p47 = scmp.eq.s32.totalorder %s9, 1
    %p48 = scmp.ne.s32.totalorder %s43, %s45
    %p49 = scmp.eq.s32.totalorder %s9, 0
    %p50 = por %p48, %p49
    %p51 = scmp.ne.s32.totalorder %s43, %s45
    %p52 = scmp.eq.s32.totalorder %s14, 1
    %p53 = por %p51, %p52
    %p54 = scmp.ne.s32.totalorder %s45, %s46
    %p55 = scmp.eq.s32.totalorder %s14, 0
    %p56 = por %p54, %p55
    %p57 = scmp.ne.s32.totalorder %s45, %s46
    %p58 = scmp.eq.s32.totalorder %s15, 1
    %p59 = por %p57, %p58
    %p61 = scmp.ne.s32.totalorder %s46, %s60
    %p62 = scmp.eq.s32.totalorder %s15, 0
    %p63 = por %p61, %p62
    %s65 = sadd.s32 %s64, 1
    %p68 = scmp.eq.s32.totalorder %s9, 1
    %p69 = scmp.ne.s32.totalorder %s64, %s66
    %p70 = scmp.eq.s32.totalorder %s9, 0
    %p71 = por %p69, %p70
    %p72 = scmp.ne.s32.totalorder %s64, %s66
    %p73 = scmp.eq.s32.totalorder %s14, 1
    %p74 = por %p72, %p73
    %p75 = scmp.ne.s32.totalorder %s66, %s67
    %p76 = scmp.eq.s32.totalorder %s14, 0
    %p77 = por %p75, %p76
    %p78 = scmp.ne.s32.totalorder %s66, %s67
    %p79 = scmp.eq.s32.totalorder %s15, 1
    %p80 = por %p78, %p79
    %p82 = scmp.ne.s32.totalorder %s67, %s81
    %p83 = scmp.eq.s32.totalorder %s15, 0
    %p84 = por %p82, %p83
    %s85 = ssub.s32 %s9, %s16
    %p86 = scmp.eq.s32.totalorder %s85, 0
    %s88 = sadd.s32 %s87, 1
    %s89 = scalar_select %p86, %s87, %s88
    %p92 = pneg %p86
    %p93 = scmp.eq.s32.totalorder %s9, 1
    %p94 = por %p92, %p93
    %p95 = scmp.ne.s32.totalorder %s87, %s90
    %p96 = scmp.eq.s32.totalorder %s9, 0
    %p97 = por %p95, %p96
    %p98 = scmp.ne.s32.totalorder %s87, %s90
    %p99 = scmp.eq.s32.totalorder %s14, 1
    %p100 = por %p98, %p99
    %p101 = scmp.ne.s32.totalorder %s90, %s91
    %p102 = scmp.eq.s32.totalorder %s14, 0
    %p103 = por %p101, %p102
    %p104 = scmp.ne.s32.totalorder %s90, %s91
    %p105 = scmp.eq.s32.totalorder %s15, 1
    %p106 = por %p104, %p105
    %p108 = scmp.ne.s32.totalorder %s91, %s107
    %p109 = scmp.eq.s32.totalorder %s15, 0
    %p110 = por %p108, %p109
    %p111 = scmp.le.s32.totalorder 1, %s9
    %p112 = scmp.lt.s32.totalorder %s9, 3
    %p113 = pnand %p111, %p112
    %p114 = pneg %p113
    // Predicated region
    $region9: #{_lambda_.26} parent=5 // pred_check
      _
    $region10: #{_lambda_.26} parent=5 // pred_check_branch
      %116 = sbr.rel (%p113) target = $region12
    $region11: #{_lambda_.26} parent=5 // pred_region
      %s117 = ssub.s32 %s9, 1
      // Predicated region
      $region13: #{_lambda_.26} parent=11 // pred_check
        %p118 = pneg %p56
      $region14: #{_lambda_.26} parent=11 // pred_check_branch
        %120 = sbr.rel (%p118) target = $region16
      $region15: #{_lambda_.26} parent=11 // pred_region
        _
      $region16: #{_lambda_.26} parent=11 // pred_fallthru
        _
      // Predicated region
      $region17: #{_lambda_.26} parent=11 // pred_check
        %p121 = pneg %p77
      $region18: #{_lambda_.26} parent=11 // pred_check_branch
        %123 = sbr.rel (%p121) target = $region20
      $region19: #{_lambda_.26} parent=11 // pred_region
        _
      $region20: #{_lambda_.26} parent=11 // pred_fallthru
        _
    $region12: #{_lambda_.26} parent=5 // pred_fallthru
      _
    %p124 = scmp.lt.s32.totalorder %s9, 2
    // Predicated region
    $region21: #{_lambda_.26} parent=5 // pred_check
      %p125 = pneg %p124
    $region22: #{_lambda_.26} parent=5 // pred_check_branch
      %127 = sbr.rel (%p125) target = $region24
    $region23: #{_lambda_.26} parent=5 // pred_region
      // Predicated region
      $region25: #{_lambda_.26} parent=23 // pred_check
        %p128 = pneg %p29
      $region26: #{_lambda_.26} parent=23 // pred_check_branch
        %130 = sbr.rel (%p128) target = $region28
      $region27: #{_lambda_.26} parent=23 // pred_region
        %s131 = smul.u32 16, %s9
        %p132 = scmp.lt.s32.totalorder %s131, 31
        %s133 = scalar_select %p132, %s131, 31
        %s134 = smul.addr %s133, 4
        %s135 = scalar_lea.vmem %s0, %s134
        %s136 = smul.u32 16, %s9
      $region28: #{_lambda_.26} parent=23 // pred_fallthru
        _
    $region24: #{_lambda_.26} parent=5 // pred_fallthru
      _
    %p137 = scmp.le.s32.totalorder 1, %s9
    %p138 = scmp.lt.s32.totalorder %s9, 3
    %p139 = pnand %p137, %p138
    %p140 = pneg %p139
    // Predicated region
    $region29: #{_lambda_.26} parent=5 // pred_check
      _
    $region30: #{_lambda_.26} parent=5 // pred_check_branch
      %142 = sbr.rel (%p139) target = $region32
    $region31: #{_lambda_.26} parent=5 // pred_region
      %s143 = ssub.s32 %s9, 1
      %s144 = smul.u32 16, %s14
      %p145 = scmp.lt.s32.totalorder %s144, 31
      %s146 = scalar_select %p145, %s144, 31
      %s147 = smul.addr %s146, 4
      %s148 = scalar_lea.vmem %s0, %s147
      %p149 = pneg %p35
      %p150 = pneg %p32
      %p151 = pneg %p56
      %p152 = pneg %p53
      %p153 = pneg %p77
      %p154 = pneg %p74
      %p155 = pneg %p103
      %p156 = pneg %p100
      %s157 = smul.u32 16, %s14
      %p158 = scmp.lt.s32.totalorder %s157, 31
      %s159 = scalar_select %p158, %s157, 31
      %s160 = smul.addr %s159, 8
      %s161 = scalar_lea.vmem %s3, %s160
      %s162 = smul.u32 16, %s14
      %p163 = scmp.lt.s32.totalorder %s162, 31
      %s164 = scalar_select %p163, %s162, 31
      %s165 = smul.addr %s164, 4
      %s166 = scalar_lea.vmem %s0, %s165
      %s167 = smul.u32 16, %s14
      %s168 = smul.u32 16, %s14
      %p169 = scmp.lt.s32.totalorder %s168, 31
      %s170 = scalar_select %p169, %s168, 31
      %s171 = smul.addr %s170, 8
      %s172 = scalar_lea.vmem %s3, %s171
      %s173 = smul.u32 16, %s14
      %v175 = vld [vmem:[%s166] sm:$0xf]
      %v176 = vld [vmem:[%s166 + $0x4] sm:$0xf]
      %v177 = vld [vmem:[%s166 + $0x8] sm:$0xf]
      %v178 = vld [vmem:[%s166 + $0xc] sm:$0xf]
      %v179 = vld [vmem:[%s166 + $0x10] sm:$0xf]
      %v180 = vld [vmem:[%s166 + $0x14] sm:$0xf]
      %v181 = vld [vmem:[%s166 + $0x18] sm:$0xf]
      %v182 = vld [vmem:[%s166 + $0x1c] sm:$0xf]
      %v183 = vld [vmem:[%s166 + $0x20] sm:$0xf]
      %v184 = vld [vmem:[%s166 + $0x24] sm:$0xf]
      %v185 = vld [vmem:[%s166 + $0x28] sm:$0xf]
      %v186 = vld [vmem:[%s166 + $0x2c] sm:$0xf]
      %v187 = vld [vmem:[%s166 + $0x30] sm:$0xf]
      %v188 = vld [vmem:[%s166 + $0x34] sm:$0xf]
      %v189 = vld [vmem:[%s166 + $0x38] sm:$0xf]
      %v190 = vld [vmem:[%s166 + $0x3c] sm:$0xf]
      %v191 = vld [vmem:[%s1] sm:$0xf]
      %v192 = vld [vmem:[%s1 + $0x4] sm:$0xf]
      %v193 = vld [vmem:[%s1 + $0x8] sm:$0xf]
      %v194 = vld [vmem:[%s1 + $0xc] sm:$0x3]
      %v195 = vld [vmem:[%s2] sm:$0x1]
      %v197 = vlaneseq
      %v198 = vshrl.u32 %v197, 7
      %v199 = vsub.s32 0, %v198
      %v200 = vrot.slane %v195, %v199
      %v218 = vunpack.c.l.b16 %v175
      %v219 = vunpack.c.l.b16 %v176
      %v220 = vunpack.c.l.b16 %v177
      %v221 = vunpack.c.l.b16 %v178
      %v222 = vunpack.c.l.b16 %v179
      %v223 = vunpack.c.l.b16 %v180
      %v224 = vunpack.c.l.b16 %v181
      %v225 = vunpack.c.l.b16 %v182
      %v226 = vunpack.c.l.b16 %v183
      %v227 = vunpack.c.l.b16 %v184
      %v228 = vunpack.c.l.b16 %v185
      %v229 = vunpack.c.l.b16 %v186
      %v230 = vunpack.c.l.b16 %v187
      %v231 = vunpack.c.l.b16 %v188
      %v232 = vunpack.c.l.b16 %v189
      %v233 = vunpack.c.l.b16 %v190
      %v234 = vpack.c.b16 %v219, %v218
      %v235 = vpack.c.b16 %v221, %v220
      %v236 = vpack.c.b16 %v223, %v222
      %v237 = vpack.c.b16 %v225, %v224
      %v238 = vpack.c.b16 %v227, %v226
      %v239 = vpack.c.b16 %v229, %v228
      %v240 = vpack.c.b16 %v231, %v230
      %v241 = vpack.c.b16 %v233, %v232
      %v246 = vunpack.c.l.b16 %v191
      %v247 = vunpack.c.l.b16 %v192
      %v248 = vunpack.c.l.b16 %v193
      %v249 = vunpack.c.l.b16 %v194
      %v250 = vpack.c.b16 %v247, %v246
      %v251 = vpack.c.b16 %v249, %v248
      %vm253 = vcmask 220160
      %v255 = vsel %vm253, %v234, 0
      %v258 = vsel %vm253, %v235, 0
      %v261 = vsel %vm253, %v236, 0
      %v264 = vsel %vm253, %v237, 0
      %v267 = vsel %vm253, %v238, 0
      %v270 = vsel %vm253, %v239, 0
      %v273 = vsel %vm253, %v240, 0
      %v276 = vsel %vm253, %v241, 0
      %vm278 = vcmask 1044480
      %vm279 = vcmask 1045504
      %v280 = vsel %vm278, 4294967295, 65535
      %v281 = vsel %vm279, %v280, 0
      %v283 = vand.u32 %v251, %v281
      %285 = vmatprep.subr.bf16.mxu0 0
      %286 = vmatpush1.bf16.msra.mxu0 %v250
      %287 = vmatprep.subr.bf16.mxu0 0
      %288 = vmatpush1.bf16.msra.mxu0 %v283
      %289 = vmatprep.subr.bf16.mxu0 0
      %290 = vmatpush1.bf16.msra.mxu0 0
      %291 = vmatprep.subr.bf16.mxu0 0
      %292 = vmatpush1.bf16.msra.mxu0 0
      %293 = vmatprep.subr.bf16.mxu0 0
      %294 = vmatpush1.bf16.msra.mxu0 0
      %295 = vmatprep.subr.bf16.mxu0 0
      %296 = vmatpush1.bf16.msra.mxu0 0
      %297 = vmatprep.subr.bf16.mxu0 0
      %298 = vmatpush1.bf16.msra.mxu0 0
      %299 = vmatprep.subr.bf16.mxu0 0
      %300 = vmatpush1.bf16.msra.mxu0 0
      %301 = vmatprep.subr.bf16.mxu0 0
      %302 = vmatpush1.bf16.msra.mxu0 0
      %303 = vmatprep.subr.bf16.mxu0 0
      %304 = vmatpush1.bf16.msra.mxu0 0
      %305 = vmatprep.subr.bf16.mxu0 0
      %306 = vmatpush1.bf16.msra.mxu0 0
      %307 = vmatprep.subr.bf16.mxu0 0
      %308 = vmatpush1.bf16.msra.mxu0 0
      %309 = vmatprep.subr.bf16.mxu0 0
      %310 = vmatpush1.bf16.msra.mxu0 0
      %311 = vmatprep.subr.bf16.mxu0 0
      %312 = vmatpush1.bf16.msra.mxu0 0
      %313 = vmatprep.subr.bf16.mxu0 0
      %314 = vmatpush1.bf16.msra.mxu0 0
      %315 = vmatprep.subr.bf16.mxu0 0
      %316 = vmatpush1.bf16.msra.mxu0 0
      %317 = vmatprep.mubr.bf16.mxu0 0
      %318 = vmatmul.mubr.bf16.gmra.mrb[0].mxu0 %v255
      %v319 = vpop.f32.mrb[0].mxu0
      %v320 = vadd.f32 %v200, %v319
      %v321 = vpop.f32.mrb[0].mxu0
      %v322 = vpop.f32.mrb[0].mxu0
      %v323 = vadd.f32 %v200, %v322
      %v324 = vpop.f32.mrb[0].mxu0
      %325 = vmatprep.mubr.bf16.mxu0 0
      %326 = vmatmul.mubr.bf16.gmra.mrb[0].mxu0 %v258
      %v327 = vpop.f32.mrb[0].mxu0
      %v328 = vadd.f32 %v200, %v327
      %v329 = vpop.f32.mrb[0].mxu0
      %v330 = vpop.f32.mrb[0].mxu0
      %v331 = vadd.f32 %v200, %v330
      %v332 = vpop.f32.mrb[0].mxu0
      %333 = vmatprep.mubr.bf16.mxu0 0
      %334 = vmatmul.mubr.bf16.gmra.mrb[0].mxu0 %v261
      %v335 = vpop.f32.mrb[0].mxu0
      %v336 = vadd.f32 %v200, %v335
      %v337 = vpop.f32.mrb[0].mxu0
      %v338 = vpop.f32.mrb[0].mxu0
      %v339 = vadd.f32 %v200, %v338
      %v340 = vpop.f32.mrb[0].mxu0
      %341 = vmatprep.mubr.bf16.mxu0 0
      %342 = vmatmul.mubr.bf16.gmra.mrb[0].mxu0 %v264
      %v343 = vpop.f32.mrb[0].mxu0
      %v344 = vadd.f32 %v200, %v343
      %v345 = vpop.f32.mrb[0].mxu0
      %v346 = vpop.f32.mrb[0].mxu0
      %v347 = vadd.f32 %v200, %v346
      %v348 = vpop.f32.mrb[0].mxu0
      %349 = vmatprep.mubr.bf16.mxu0 0
      %350 = vmatmul.mubr.bf16.gmra.mrb[0].mxu0 %v267
      %v351 = vpop.f32.mrb[0].mxu0
      %v352 = vadd.f32 %v200, %v351
      %v353 = vpop.f32.mrb[0].mxu0
      %v354 = vpop.f32.mrb[0].mxu0
      %v355 = vadd.f32 %v200, %v354
      %v356 = vpop.f32.mrb[0].mxu0
      %357 = vmatprep.mubr.bf16.mxu0 0
      %358 = vmatmul.mubr.bf16.gmra.mrb[0].mxu0 %v270
      %v359 = vpop.f32.mrb[0].mxu0
      %v360 = vadd.f32 %v200, %v359
      %v361 = vpop.f32.mrb[0].mxu0
      %v362 = vpop.f32.mrb[0].mxu0
      %v363 = vadd.f32 %v200, %v362
      %v364 = vpop.f32.mrb[0].mxu0
      %365 = vmatprep.mubr.bf16.mxu0 0
      %366 = vmatmul.mubr.bf16.gmra.mrb[0].mxu0 %v273
      %v367 = vpop.f32.mrb[0].mxu0
      %v368 = vadd.f32 %v200, %v367
      %v369 = vpop.f32.mrb[0].mxu0
      %v370 = vpop.f32.mrb[0].mxu0
      %v371 = vadd.f32 %v200, %v370
      %v372 = vpop.f32.mrb[0].mxu0
      %373 = vmatprep.mubr.bf16.mxu0 0
      %374 = vmatmul.mubr.bf16.gmra.mrb[0].mxu0 %v276
      %v375 = vpop.f32.mrb[0].mxu0
      %v376 = vadd.f32 %v200, %v375
      %v377 = vpop.f32.mrb[0].mxu0
      %v378 = vpop.f32.mrb[0].mxu0
      %v379 = vadd.f32 %v200, %v378
      %v380 = vpop.f32.mrb[0].mxu0
      %381 = vdwg.mxu0
      %v382 = vmax.f32 %v320, 0.0
      %v383 = vmax.f32 %v323, 0.0
      %v384 = vmax.f32 %v328, 0.0
      %v385 = vmax.f32 %v331, 0.0
      %v386 = vmax.f32 %v336, 0.0
      %v387 = vmax.f32 %v339, 0.0
      %v388 = vmax.f32 %v344, 0.0
      %v389 = vmax.f32 %v347, 0.0
      %v390 = vmax.f32 %v352, 0.0
      %v391 = vmax.f32 %v355, 0.0
      %v392 = vmax.f32 %v360, 0.0
      %v393 = vmax.f32 %v363, 0.0
      %v394 = vmax.f32 %v368, 0.0
      %v395 = vmax.f32 %v371, 0.0
      %v396 = vmax.f32 %v376, 0.0
      %v397 = vmax.f32 %v379, 0.0
      %398 = vst [vmem:[%s172] sm:$0xff] %v382
      %399 = vst [vmem:[%s172 + $0x8] sm:$0xff] %v383
      %400 = vst [vmem:[%s172 + $0x10] sm:$0xff] %v384
      %401 = vst [vmem:[%s172 + $0x18] sm:$0xff] %v385
      %402 = vst [vmem:[%s172 + $0x20] sm:$0xff] %v386
      %403 = vst [vmem:[%s172 + $0x28] sm:$0xff] %v387
      %404 = vst [vmem:[%s172 + $0x30] sm:$0xff] %v388
      %405 = vst [vmem:[%s172 + $0x38] sm:$0xff] %v389
      %406 = vst [vmem:[%s172 + $0x40] sm:$0xff] %v390
      %407 = vst [vmem:[%s172 + $0x48] sm:$0xff] %v391
      %408 = vst [vmem:[%s172 + $0x50] sm:$0xff] %v392
      %409 = vst [vmem:[%s172 + $0x58] sm:$0xff] %v393
      %410 = vst [vmem:[%s172 + $0x60] sm:$0xff] %v394
      %411 = vst [vmem:[%s172 + $0x68] sm:$0xff] %v395
      %412 = vst [vmem:[%s172 + $0x70] sm:$0xff] %v396
      %413 = vst [vmem:[%s172 + $0x78] sm:$0xff] %v397
      %s414 = smul.u32 16, %s14
      %p415 = scmp.lt.s32.totalorder %s414, 31
      %s416 = scalar_select %p415, %s414, 31
      %s417 = smul.addr %s416, 8
      %s418 = scalar_lea.vmem %s3, %s417
      // Predicated region
      $region33: #{_lambda_.26} parent=31 // pred_check
        %p419 = pneg %p100
      $region34: #{_lambda_.26} parent=31 // pred_check_branch
        %421 = sbr.rel (%p419) target = $region36
      $region35: #{_lambda_.26} parent=31 // pred_region
        %s422 = smul.u32 16, %s14
      $region36: #{_lambda_.26} parent=31 // pred_fallthru
        _
    $region32: #{_lambda_.26} parent=5 // pred_fallthru
      _
    %p423 = scmp.le.s32.totalorder 2, %s9
    // Predicated region
    $region37: #{_lambda_.26} parent=5 // pred_check
      %p424 = pneg %p423
    $region38: #{_lambda_.26} parent=5 // pred_check_branch
      %426 = sbr.rel (%p424) target = $region40
    $region39: #{_lambda_.26} parent=5 // pred_region
      %s427 = ssub.s32 %s9, 2
      // Predicated region
      $region41: #{_lambda_.26} parent=39 // pred_check
        %p428 = pneg %p106
      $region42: #{_lambda_.26} parent=39 // pred_check_branch
        %430 = sbr.rel (%p428) target = $region44
      $region43: #{_lambda_.26} parent=39 // pred_region
        %s431 = smul.u32 16, %s15
        %p432 = scmp.lt.s32.totalorder %s431, 31
        %s433 = scalar_select %p432, %s431, 31
        %s434 = smul.addr %s433, 8
        %s435 = scalar_lea.vmem %s3, %s434
      $region44: #{_lambda_.26} parent=39 // pred_fallthru
        _
    $region40: #{_lambda_.26} parent=5 // pred_fallthru
      _
  $region6: #{_lambda_.26} parent=0 // loop_footer
    %s13 = sadd.s32 1, %s9
  $region7: #{_lambda_.26} parent=0 // loop_footer_branch
    %8 = sbr.rel target = $region3
  $region8: #{_lambda_.26} parent=0 // loop_exit
    _

// kernel: _lambda_.27
$region0: #{_lambda_.27}
  #allocation0 [shape = 'u32[]', space=smem, size = 0x4, offset = 0x4, fixed_abs, tag = 'smem constant byte address 0x4 - core index']
  #allocation1 [shape = 'u32[144,128]{1,0:T(1,128)}', space=vmem, size = 0x12000, scoped, tag = 'internal scratch']
  %s0 = inlined_call_operand.vmem [shape: bf16[128,144], index: 0, kind: input, shape index: {}]
  %s1 = inlined_call_operand.vmem [shape: bf16[144,128], index: 1, kind: input, shape index: {}]
  %s2 = inlined_call_operand.vmem [shape: f32[1,128], index: 2, kind: input, shape index: {}]
  %s3 = inlined_call_operand.vmem [shape: f32[128,128], index: 3, kind: output, shape index: {}]
  %s4 = sld [smem:[#allocation0]]
  $region22: #{_lambda_.27} parent=0
    _
  %s6 = ssub.s32 1, %s4
  %s7 = scalar_select 0, %s6, %s4
  // Predicated region
  $region2: #{_lambda_.27} parent=0 // pred_check
    _
  $region3: #{_lambda_.27} parent=0 // pred_check_branch
    %9 = sbr.rel (0) target = $region5
  $region4: #{_lambda_.27} parent=0 // pred_region
    _
  $region5: #{_lambda_.27} parent=0 // pred_fallthru
    _
  // Predicated region
  $region6: #{_lambda_.27} parent=0 // pred_check
    _
  $region7: #{_lambda_.27} parent=0 // pred_check_branch
    %11 = sbr.rel (0) target = $region9
  $region8: #{_lambda_.27} parent=0 // pred_region
    _
  $region9: #{_lambda_.27} parent=0 // pred_fallthru
    _
  // Predicated region
  $region10: #{_lambda_.27} parent=0 // pred_check
    _
  $region11: #{_lambda_.27} parent=0 // pred_check_branch
    %13 = sbr.rel (0) target = $region13
  $region12: #{_lambda_.27} parent=0 // pred_region
    _
  $region13: #{_lambda_.27} parent=0 // pred_fallthru
    _
  %v15 = vld [vmem:[%s0] sm:$0xff]
  %v16 = vld [vmem:[%s0 + $0x8] sm:$0xff]
  %v17 = vld [vmem:[%s0 + $0x10] sm:$0xff]
  %v18 = vld [vmem:[%s0 + $0x18] sm:$0xff]
  %v19 = vld [vmem:[%s0 + $0x20] sm:$0xff]
  %v20 = vld [vmem:[%s0 + $0x28] sm:$0xff]
  %v21 = vld [vmem:[%s0 + $0x30] sm:$0xff]
  %v22 = vld [vmem:[%s0 + $0x38] sm:$0xff]
  %v23 = vld [vmem:[%s0 + $0x40] sm:$0xff]
  %v24 = vld [vmem:[%s0 + $0x48] sm:$0xff]
  %v25 = vld [vmem:[%s0 + $0x50] sm:$0xff]
  %v26 = vld [vmem:[%s0 + $0x58] sm:$0xff]
  %v27 = vld [vmem:[%s0 + $0x60] sm:$0xff]
  %v28 = vld [vmem:[%s0 + $0x68] sm:$0xff]
  %v29 = vld [vmem:[%s0 + $0x70] sm:$0xff]
  %v30 = vld [vmem:[%s0 + $0x78] sm:$0xff]
  %v31 = vld [vmem:[%s1] sm:$0xf]
  %v32 = vld [vmem:[%s1 + $0x4] sm:$0xf]
  %v33 = vld [vmem:[%s1 + $0x8] sm:$0xf]
  %v34 = vld [vmem:[%s1 + $0xc] sm:$0xf]
  %v35 = vld [vmem:[%s1 + $0x10] sm:$0xf]
  %v36 = vld [vmem:[%s1 + $0x14] sm:$0xf]
  %v37 = vld [vmem:[%s1 + $0x18] sm:$0xf]
  %v38 = vld [vmem:[%s1 + $0x1c] sm:$0xf]
  %v39 = vld [vmem:[%s1 + $0x20] sm:$0xf]
  %v40 = vld [vmem:[%s1 + $0x24] sm:$0xf]
  %v41 = vld [vmem:[%s1 + $0x28] sm:$0xf]
  %v42 = vld [vmem:[%s1 + $0x2c] sm:$0xf]
  %v43 = vld [vmem:[%s1 + $0x30] sm:$0xf]
  %v44 = vld [vmem:[%s1 + $0x34] sm:$0xf]
  %v45 = vld [vmem:[%s1 + $0x38] sm:$0xf]
  %v46 = vld [vmem:[%s1 + $0x3c] sm:$0xf]
  %v47 = vld [vmem:[%s1 + $0x40] sm:$0xf]
  %v48 = vld [vmem:[%s1 + $0x44] sm:$0xf]
  %v49 = vld [vmem:[%s2] sm:$0x1]
  %v51 = vlaneseq
  %v52 = vshrl.u32 %v51, 7
  %v53 = vsub.s32 0, %v52
  %v54 = vrot.slane %v49, %v53
  %v72 = vunpack.c.l.b16 %v15
  %v73 = vunpack.c.h.b16 %v15
  %v74 = vunpack.c.l.b16 %v16
  %v75 = vunpack.c.h.b16 %v16
  %v76 = vunpack.c.l.b16 %v17
  %v77 = vunpack.c.h.b16 %v17
  %v78 = vunpack.c.l.b16 %v18
  %v79 = vunpack.c.h.b16 %v18
  %v80 = vunpack.c.l.b16 %v19
  %v81 = vunpack.c.h.b16 %v19
  %v82 = vunpack.c.l.b16 %v20
  %v83 = vunpack.c.h.b16 %v20
  %v84 = vunpack.c.l.b16 %v21
  %v85 = vunpack.c.h.b16 %v21
  %v86 = vunpack.c.l.b16 %v22
  %v87 = vunpack.c.h.b16 %v22
  %v88 = vunpack.c.l.b16 %v23
  %v89 = vunpack.c.h.b16 %v23
  %v90 = vunpack.c.l.b16 %v24
  %v91 = vunpack.c.h.b16 %v24
  %v92 = vunpack.c.l.b16 %v25
  %v93 = vunpack.c.h.b16 %v25
  %v94 = vunpack.c.l.b16 %v26
  %v95 = vunpack.c.h.b16 %v26
  %v96 = vunpack.c.l.b16 %v27
  %v97 = vunpack.c.h.b16 %v27
  %v98 = vunpack.c.l.b16 %v28
  %v99 = vunpack.c.h.b16 %v28
  %v100 = vunpack.c.l.b16 %v29
  %v101 = vunpack.c.h.b16 %v29
  %v102 = vunpack.c.l.b16 %v30
  %v103 = vunpack.c.h.b16 %v30
  %v104 = vpack.c.b16 %v74, %v72
  %v105 = vpack.c.b16 %v75, %v73
  %v106 = vpack.c.b16 %v78, %v76
  %v107 = vpack.c.b16 %v79, %v77
  %v108 = vpack.c.b16 %v82, %v80
  %v109 = vpack.c.b16 %v83, %v81
  %v110 = vpack.c.b16 %v86, %v84
  %v111 = vpack.c.b16 %v87, %v85
  %v112 = vpack.c.b16 %v90, %v88
  %v113 = vpack.c.b16 %v91, %v89
  %v114 = vpack.c.b16 %v94, %v92
  %v115 = vpack.c.b16 %v95, %v93
  %v116 = vpack.c.b16 %v98, %v96
  %v117 = vpack.c.b16 %v99, %v97
  %v118 = vpack.c.b16 %v102, %v100
  %v119 = vpack.c.b16 %v103, %v101
  %v146 = vunpack.c.l.b16 %v31
  %v147 = vunpack.c.l.b16 %v32
  %v148 = vunpack.c.l.b16 %v33
  %v149 = vunpack.c.l.b16 %v34
  %v150 = vunpack.c.l.b16 %v35
  %v151 = vunpack.c.l.b16 %v36
  %v152 = vunpack.c.l.b16 %v37
  %v153 = vunpack.c.l.b16 %v38
  %v154 = vunpack.c.l.b16 %v39
  %v155 = vunpack.c.l.b16 %v40
  %v156 = vunpack.c.l.b16 %v41
  %v157 = vunpack.c.l.b16 %v42
  %v158 = vunpack.c.l.b16 %v43
  %v159 = vunpack.c.l.b16 %v44
  %v160 = vunpack.c.l.b16 %v45
  %v161 = vunpack.c.l.b16 %v46
  %v162 = vunpack.c.l.b16 %v47
  %v163 = vunpack.c.l.b16 %v48
  %v164 = vpack.c.b16 %v147, %v146
  %v165 = vpack.c.b16 %v149, %v148
  %v166 = vpack.c.b16 %v151, %v150
  %v167 = vpack.c.b16 %v153, %v152
  %v168 = vpack.c.b16 %v155, %v154
  %v169 = vpack.c.b16 %v157, %v156
  %v170 = vpack.c.b16 %v159, %v158
  %v171 = vpack.c.b16 %v161, %v160
  %v172 = vpack.c.b16 %v163, %v162
  %vm182 = vcmask 130048
  %v184 = vsel %vm182, %v105, 0
  %v187 = vsel %vm182, %v107, 0
  %v190 = vsel %vm182, %v109, 0
  %v193 = vsel %vm182, %v111, 0
  %v196 = vsel %vm182, %v113, 0
  %v199 = vsel %vm182, %v115, 0
  %v202 = vsel %vm182, %v117, 0
  %v205 = vsel %vm182, %v119, 0
  %207 = vmatprep.subr.bf16.mxu0 0
  %208 = vmatpush1.bf16.msra.mxu0 %v164
  %209 = vmatprep.subr.bf16.mxu0 0
  %210 = vmatpush1.bf16.msra.mxu0 %v165
  %211 = vmatprep.subr.bf16.mxu0 0
  %212 = vmatpush1.bf16.msra.mxu0 %v166
  %213 = vmatprep.subr.bf16.mxu0 0
  %214 = vmatpush1.bf16.msra.mxu0 %v167
  %215 = vmatprep.subr.bf16.mxu0 0
  %216 = vmatpush1.bf16.msra.mxu0 %v168
  %217 = vmatprep.subr.bf16.mxu0 0
  %218 = vmatpush1.bf16.msra.mxu0 %v169
  %219 = vmatprep.subr.bf16.mxu0 0
  %220 = vmatpush1.bf16.msra.mxu0 %v170
  %221 = vmatprep.subr.bf16.mxu0 0
  %222 = vmatpush1.bf16.msra.mxu0 %v171
  %223 = vmatprep.subr.bf16.mxu0 0
  %224 = vmatpush1.bf16.msra.mxu0 %v172
  %225 = vmatprep.subr.bf16.mxu0 0
  %226 = vmatpush1.bf16.msra.mxu0 0
  %227 = vmatprep.subr.bf16.mxu0 0
  %228 = vmatpush1.bf16.msra.mxu0 0
  %229 = vmatprep.subr.bf16.mxu0 0
  %230 = vmatpush1.bf16.msra.mxu0 0
  %231 = vmatprep.subr.bf16.mxu0 0
  %232 = vmatpush1.bf16.msra.mxu0 0
  %233 = vmatprep.subr.bf16.mxu0 0
  %234 = vmatpush1.bf16.msra.mxu0 0
  %235 = vmatprep.subr.bf16.mxu0 0
  %236 = vmatpush1.bf16.msra.mxu0 0
  %237 = vmatprep.subr.bf16.mxu0 0
  %238 = vmatpush1.bf16.msra.mxu0 0
  %239 = vmatprep.mubr.bf16.mxu0 %v184
  %240 = vmatmul.mubr.bf16.gmra.mrb[0].mxu0 %v104
  %v241 = vpop.f32.mrb[0].mxu0
  %v242 = vadd.f32 %v54, %v241
  %v243 = vpop.f32.mrb[0].mxu0
  %v244 = vpop.f32.mrb[0].mxu0
  %v245 = vadd.f32 %v54, %v244
  %v246 = vpop.f32.mrb[0].mxu0
  %247 = vmatprep.mubr.bf16.mxu0 %v187
  %248 = vmatmul.mubr.bf16.gmra.mrb[0].mxu0 %v106
  %v249 = vpop.f32.mrb[0].mxu0
  %v250 = vadd.f32 %v54, %v249
  %v251 = vpop.f32.mrb[0].mxu0
  %v252 = vpop.f32.mrb[0].mxu0
  %v253 = vadd.f32 %v54, %v252
  %v254 = vpop.f32.mrb[0].mxu0
  %255 = vmatprep.mubr.bf16.mxu0 %v190
  %256 = vmatmul.mubr.bf16.gmra.mrb[0].mxu0 %v108
  %v257 = vpop.f32.mrb[0].mxu0
  %v258 = vadd.f32 %v54, %v257
  %v259 = vpop.f32.mrb[0].mxu0
  %v260 = vpop.f32.mrb[0].mxu0
  %v261 = vadd.f32 %v54, %v260
  %v262 = vpop.f32.mrb[0].mxu0
  %263 = vmatprep.mubr.bf16.mxu0 %v193
  %264 = vmatmul.mubr.bf16.gmra.mrb[0].mxu0 %v110
  %v265 = vpop.f32.mrb[0].mxu0
  %v266 = vadd.f32 %v54, %v265
  %v267 = vpop.f32.mrb[0].mxu0
  %v268 = vpop.f32.mrb[0].mxu0
  %v269 = vadd.f32 %v54, %v268
  %v270 = vpop.f32.mrb[0].mxu0
  %271 = vmatprep.mubr.bf16.mxu0 %v196
  %272 = vmatmul.mubr.bf16.gmra.mrb[0].mxu0 %v112
  %v273 = vpop.f32.mrb[0].mxu0
  %v274 = vadd.f32 %v54, %v273
  %v275 = vpop.f32.mrb[0].mxu0
  %v276 = vpop.f32.mrb[0].mxu0
  %v277 = vadd.f32 %v54, %v276
  %v278 = vpop.f32.mrb[0].mxu0
  %279 = vmatprep.mubr.bf16.mxu0 %v199
  %280 = vmatmul.mubr.bf16.gmra.mrb[0].mxu0 %v114
  %v281 = vpop.f32.mrb[0].mxu0
  %v282 = vadd.f32 %v54, %v281
  %v283 = vpop.f32.mrb[0].mxu0
  %v284 = vpop.f32.mrb[0].mxu0
  %v285 = vadd.f32 %v54, %v284
  %v286 = vpop.f32.mrb[0].mxu0
  %287 = vmatprep.mubr.bf16.mxu0 %v202
  %288 = vmatmul.mubr.bf16.gmra.mrb[0].mxu0 %v116
  %v289 = vpop.f32.mrb[0].mxu0
  %v290 = vadd.f32 %v54, %v289
  %v291 = vpop.f32.mrb[0].mxu0
  %v292 = vpop.f32.mrb[0].mxu0
  %v293 = vadd.f32 %v54, %v292
  %v294 = vpop.f32.mrb[0].mxu0
  %295 = vmatprep.mubr.bf16.mxu0 %v205
  %296 = vmatmul.mubr.bf16.gmra.mrb[0].mxu0 %v118
  %v297 = vpop.f32.mrb[0].mxu0
  %v298 = vadd.f32 %v54, %v297
  %v299 = vpop.f32.mrb[0].mxu0
  %v300 = vpop.f32.mrb[0].mxu0
  %v301 = vadd.f32 %v54, %v300
  %v302 = vpop.f32.mrb[0].mxu0
  %303 = vdwg.mxu0
  %v304 = vmax.f32 %v242, 0.0
  %v305 = vmax.f32 %v245, 0.0
  %v306 = vmax.f32 %v250, 0.0
  %v307 = vmax.f32 %v253, 0.0
  %v308 = vmax.f32 %v258, 0.0
  %v309 = vmax.f32 %v261, 0.0
  %v310 = vmax.f32 %v266, 0.0
  %v311 = vmax.f32 %v269, 0.0
  %v312 = vmax.f32 %v274, 0.0
  %v313 = vmax.f32 %v277, 0.0
  %v314 = vmax.f32 %v282, 0.0
  %v315 = vmax.f32 %v285, 0.0
  %v316 = vmax.f32 %v290, 0.0
  %v317 = vmax.f32 %v293, 0.0
  %v318 = vmax.f32 %v298, 0.0
  %v319 = vmax.f32 %v301, 0.0
  %320 = vst [vmem:[%s3] sm:$0xff] %v304
  %321 = vst [vmem:[%s3 + $0x8] sm:$0xff] %v305
  %322 = vst [vmem:[%s3 + $0x10] sm:$0xff] %v306
  %323 = vst [vmem:[%s3 + $0x18] sm:$0xff] %v307
  %324 = vst [vmem:[%s3 + $0x20] sm:$0xff] %v308
  %325 = vst [vmem:[%s3 + $0x28] sm:$0xff] %v309
  %326 = vst [vmem:[%s3 + $0x30] sm:$0xff] %v310
  %327 = vst [vmem:[%s3 + $0x38] sm:$0xff] %v311
  %328 = vst [vmem:[%s3 + $0x40] sm:$0xff] %v312
  %329 = vst [vmem:[%s3 + $0x48] sm:$0xff] %v313
  %330 = vst [vmem:[%s3 + $0x50] sm:$0xff] %v314
  %331 = vst [vmem:[%s3 + $0x58] sm:$0xff] %v315
  %332 = vst [vmem:[%s3 + $0x60] sm:$0xff] %v316
  %333 = vst [vmem:[%s3 + $0x68] sm:$0xff] %v317
  %334 = vst [vmem:[%s3 + $0x70] sm:$0xff] %v318
  %335 = vst [vmem:[%s3 + $0x78] sm:$0xff] %v319
  // Predicated region
  $region14: #{_lambda_.27} parent=0 // pred_check
    _
  $region15: #{_lambda_.27} parent=0 // pred_check_branch
    %337 = sbr.rel (0) target = $region17
  $region16: #{_lambda_.27} parent=0 // pred_region
    _
  $region17: #{_lambda_.27} parent=0 // pred_fallthru
    _
  // Predicated region
  $region18: #{_lambda_.27} parent=0 // pred_check
    _
  $region19: #{_lambda_.27} parent=0 // pred_check_branch
    %339 = sbr.rel (0) target = $region21
  $region20: #{_lambda_.27} parent=0 // pred_region
    _
  $region21: #{_lambda_.27} parent=0 // pred_fallthru
    _

// kernel: _lambda_.29
$region0: #{_lambda_.29}
  #allocation0 [shape = 'u32[]', space=smem, size = 0x4, offset = 0x4, fixed_abs, tag = 'smem constant byte address 0x4 - core index']
  #allocation1 [shape = 'u32[144,128]{1,0:T(1,128)}', space=vmem, size = 0x12000, scoped, tag = 'internal scratch']
  %s0 = inlined_call_operand.vmem [shape: bf16[8,8,32], index: 0, kind: input, shape index: {}]
  %s1 = inlined_call_operand.vmem [shape: bf16[8,8,32], index: 1, kind: input, shape index: {}]
  %s2 = inlined_call_operand.vmem [shape: f32[8,8,8], index: 2, kind: output, shape index: {}]
  %s3 = sld [smem:[#allocation0]]
  $region18: #{_lambda_.29} parent=0
    _
  %s5 = ssub.s32 1, %s3
  %s6 = scalar_select 0, %s5, %s3
  // Predicated region
  $region2: #{_lambda_.29} parent=0 // pred_check
    _
  $region3: #{_lambda_.29} parent=0 // pred_check_branch
    %8 = sbr.rel (0) target = $region5
  $region4: #{_lambda_.29} parent=0 // pred_region
    _
  $region5: #{_lambda_.29} parent=0 // pred_fallthru
    _
  // Predicated region
  $region6: #{_lambda_.29} parent=0 // pred_check
    _
  $region7: #{_lambda_.29} parent=0 // pred_check_branch
    %10 = sbr.rel (0) target = $region9
  $region8: #{_lambda_.29} parent=0 // pred_region
    _
  $region9: #{_lambda_.29} parent=0 // pred_fallthru
    _
  %v12 = vld [vmem:[%s0] sm:$0xf]
  %v13 = vld [vmem:[%s0 + $0x4] sm:$0xf]
  %v14 = vld [vmem:[%s0 + $0x8] sm:$0xf]
  %v15 = vld [vmem:[%s0 + $0xc] sm:$0xf]
  %v16 = vld [vmem:[%s0 + $0x10] sm:$0xf]
  %v17 = vld [vmem:[%s0 + $0x14] sm:$0xf]
  %v18 = vld [vmem:[%s0 + $0x18] sm:$0xf]
  %v19 = vld [vmem:[%s0 + $0x1c] sm:$0xf]
  %v20 = vld [vmem:[%s1] sm:$0xf]
  %v21 = vld [vmem:[%s1 + $0x4] sm:$0xf]
  %v22 = vld [vmem:[%s1 + $0x8] sm:$0xf]
  %v23 = vld [vmem:[%s1 + $0xc] sm:$0xf]
  %v24 = vld [vmem:[%s1 + $0x10] sm:$0xf]
  %v25 = vld [vmem:[%s1 + $0x14] sm:$0xf]
  %v26 = vld [vmem:[%s1 + $0x18] sm:$0xf]
  %v27 = vld [vmem:[%s1 + $0x1c] sm:$0xf]
  %vm28 = vcmask 261120
  %v30 = vsel %vm28, %v12, 0
  %v33 = vsel %vm28, %v20, 0
  %35 = vmatprep.subr.bf16.mxu0 0
  %36 = vmatpush1.bf16.xpose.msra.mxu0 %v33
  %37 = vmatprep.subr.bf16.mxu0 0
  %38 = vmatpush1.bf16.xpose.msra.mxu0 0
  %39 = vmatprep.subr.bf16.mxu0 0
  %40 = vmatpush1.bf16.xpose.msra.mxu0 0
  %41 = vmatprep.subr.bf16.mxu0 0
  %42 = vmatpush1.bf16.xpose.msra.mxu0 0
  %43 = vmatprep.subr.bf16.mxu0 0
  %44 = vmatpush1.bf16.xpose.msra.mxu0 0
  %45 = vmatprep.subr.bf16.mxu0 0
  %46 = vmatpush1.bf16.xpose.msra.mxu0 0
  %47 = vmatprep.subr.bf16.mxu0 0
  %48 = vmatpush1.bf16.xpose.msra.mxu0 0
  %49 = vmatprep.subr.bf16.mxu0 0
  %50 = vmatpush1.bf16.xpose.msra.mxu0 0
  %51 = vmatprep.subr.bf16.mxu0 0
  %52 = vmatpush1.bf16.xpose.msra.mxu0 0
  %53 = vmatprep.subr.bf16.mxu0 0
  %54 = vmatpush1.bf16.xpose.msra.mxu0 0
  %55 = vmatprep.subr.bf16.mxu0 0
  %56 = vmatpush1.bf16.xpose.msra.mxu0 0
  %57 = vmatprep.subr.bf16.mxu0 0
  %58 = vmatpush1.bf16.xpose.msra.mxu0 0
  %59 = vmatprep.subr.bf16.mxu0 0
  %60 = vmatpush1.bf16.xpose.msra.mxu0 0
  %61 = vmatprep.subr.bf16.mxu0 0
  %62 = vmatpush1.bf16.xpose.msra.mxu0 0
  %63 = vmatprep.subr.bf16.mxu0 0
  %64 = vmatpush1.bf16.xpose.msra.mxu0 0
  %65 = vmatprep.subr.bf16.mxu0 0
  %66 = vmatpush1.bf16.xpose.msra.mxu0 0
  %67 = vmatprep.mubr.bf16.mxu0 0
  %68 = vmatmul.mubr.bf16.gmra.mrb[0].mxu0 %v30
  %v69 = vpop.f32.mrb[0].mxu0
  %v70 = vadd.f32 0.0, %v69
  %v71 = vpop.f32.mrb[0].mxu0
  %v72 = vpop.f32.mrb[0].mxu0
  %v73 = vpop.f32.mrb[0].mxu0
  %74 = vdwg.mxu0
  %v76 = vsel %vm28, %v13, 0
  %v79 = vsel %vm28, %v21, 0
  %81 = vmatprep.subr.bf16.mxu0 0
  %82 = vmatpush1.bf16.xpose.msra.mxu0 %v79
  %83 = vmatprep.subr.bf16.mxu0 0
  %84 = vmatpush1.bf16.xpose.msra.mxu0 0
  %85 = vmatprep.subr.bf16.mxu0 0
  %86 = vmatpush1.bf16.xpose.msra.mxu0 0
  %87 = vmatprep.subr.bf16.mxu0 0
  %88 = vmatpush1.bf16.xpose.msra.mxu0 0
  %89 = vmatprep.subr.bf16.mxu0 0
  %90 = vmatpush1.bf16.xpose.msra.mxu0 0
  %91 = vmatprep.subr.bf16.mxu0 0
  %92 = vmatpush1.bf16.xpose.msra.mxu0 0
  %93 = vmatprep.subr.bf16.mxu0 0
  %94 = vmatpush1.bf16.xpose.msra.mxu0 0
  %95 = vmatprep.subr.bf16.mxu0 0
  %96 = vmatpush1.bf16.xpose.msra.mxu0 0
  %97 = vmatprep.subr.bf16.mxu0 0
  %98 = vmatpush1.bf16.xpose.msra.mxu0 0
  %99 = vmatprep.subr.bf16.mxu0 0
  %100 = vmatpush1.bf16.xpose.msra.mxu0 0
  %101 = vmatprep.subr.bf16.mxu0 0
  %102 = vmatpush1.bf16.xpose.msra.mxu0 0
  %103 = vmatprep.subr.bf16.mxu0 0
  %104 = vmatpush1.bf16.xpose.msra.mxu0 0
  %105 = vmatprep.subr.bf16.mxu0 0
  %106 = vmatpush1.bf16.xpose.msra.mxu0 0
  %107 = vmatprep.subr.bf16.mxu0 0
  %108 = vmatpush1.bf16.xpose.msra.mxu0 0
  %109 = vmatprep.subr.bf16.mxu0 0
  %110 = vmatpush1.bf16.xpose.msra.mxu0 0
  %111 = vmatprep.subr.bf16.mxu0 0
  %112 = vmatpush1.bf16.xpose.msra.mxu0 0
  %113 = vmatprep.mubr.bf16.mxu0 0
  %114 = vmatmul.mubr.bf16.gmra.mrb[0].mxu0 %v76
  %v115 = vpop.f32.mrb[0].mxu0
  %v116 = vadd.f32 0.0, %v115
  %v117 = vpop.f32.mrb[0].mxu0
  %v118 = vpop.f32.mrb[0].mxu0
  %v119 = vpop.f32.mrb[0].mxu0
  %120 = vdwg.mxu0
  %v122 = vsel %vm28, %v14, 0
  %v125 = vsel %vm28, %v22, 0
  %127 = vmatprep.subr.bf16.mxu0 0
  %128 = vmatpush1.bf16.xpose.msra.mxu0 %v125
  %129 = vmatprep.subr.bf16.mxu0 0
  %130 = vmatpush1.bf16.xpose.msra.mxu0 0
  %131 = vmatprep.subr.bf16.mxu0 0
  %132 = vmatpush1.bf16.xpose.msra.mxu0 0
  %133 = vmatprep.subr.bf16.mxu0 0
  %134 = vmatpush1.bf16.xpose.msra.mxu0 0
  %135 = vmatprep.subr.bf16.mxu0 0
  %136 = vmatpush1.bf16.xpose.msra.mxu0 0
  %137 = vmatprep.subr.bf16.mxu0 0
  %138 = vmatpush1.bf16.xpose.msra.mxu0 0
  %139 = vmatprep.subr.bf16.mxu0 0
  %140 = vmatpush1.bf16.xpose.msra.mxu0 0
  %141 = vmatprep.subr.bf16.mxu0 0
  %142 = vmatpush1.bf16.xpose.msra.mxu0 0
  %143 = vmatprep.subr.bf16.mxu0 0
  %144 = vmatpush1.bf16.xpose.msra.mxu0 0
  %145 = vmatprep.subr.bf16.mxu0 0
  %146 = vmatpush1.bf16.xpose.msra.mxu0 0
  %147 = vmatprep.subr.bf16.mxu0 0
  %148 = vmatpush1.bf16.xpose.msra.mxu0 0
  %149 = vmatprep.subr.bf16.mxu0 0
  %150 = vmatpush1.bf16.xpose.msra.mxu0 0
  %151 = vmatprep.subr.bf16.mxu0 0
  %152 = vmatpush1.bf16.xpose.msra.mxu0 0
  %153 = vmatprep.subr.bf16.mxu0 0
  %154 = vmatpush1.bf16.xpose.msra.mxu0 0
  %155 = vmatprep.subr.bf16.mxu0 0
  %156 = vmatpush1.bf16.xpose.msra.mxu0 0
  %157 = vmatprep.subr.bf16.mxu0 0
  %158 = vmatpush1.bf16.xpose.msra.mxu0 0
  %159 = vmatprep.mubr.bf16.mxu0 0
  %160 = vmatmul.mubr.bf16.gmra.mrb[0].mxu0 %v122
  %v161 = vpop.f32.mrb[0].mxu0
  %v162 = vadd.f32 0.0, %v161
  %v163 = vpop.f32.mrb[0].mxu0
  %v164 = vpop.f32.mrb[0].mxu0
  %v165 = vpop.f32.mrb[0].mxu0
  %166 = vdwg.mxu0
  %v168 = vsel %vm28, %v15, 0
  %v171 = vsel %vm28, %v23, 0
  %173 = vmatprep.subr.bf16.mxu0 0
  %174 = vmatpush1.bf16.xpose.msra.mxu0 %v171
  %175 = vmatprep.subr.bf16.mxu0 0
  %176 = vmatpush1.bf16.xpose.msra.mxu0 0
  %177 = vmatprep.subr.bf16.mxu0 0
  %178 = vmatpush1.bf16.xpose.msra.mxu0 0
  %179 = vmatprep.subr.bf16.mxu0 0
  %180 = vmatpush1.bf16.xpose.msra.mxu0 0
  %181 = vmatprep.subr.bf16.mxu0 0
  %182 = vmatpush1.bf16.xpose.msra.mxu0 0
  %183 = vmatprep.subr.bf16.mxu0 0
  %184 = vmatpush1.bf16.xpose.msra.mxu0 0
  %185 = vmatprep.subr.bf16.mxu0 0
  %186 = vmatpush1.bf16.xpose.msra.mxu0 0
  %187 = vmatprep.subr.bf16.mxu0 0
  %188 = vmatpush1.bf16.xpose.msra.mxu0 0
  %189 = vmatprep.subr.bf16.mxu0 0
  %190 = vmatpush1.bf16.xpose.msra.mxu0 0
  %191 = vmatprep.subr.bf16.mxu0 0
  %192 = vmatpush1.bf16.xpose.msra.mxu0 0
  %193 = vmatprep.subr.bf16.mxu0 0
  %194 = vmatpush1.bf16.xpose.msra.mxu0 0
  %195 = vmatprep.subr.bf16.mxu0 0
  %196 = vmatpush1.bf16.xpose.msra.mxu0 0
  %197 = vmatprep.subr.bf16.mxu0 0
  %198 = vmatpush1.bf16.xpose.msra.mxu0 0
  %199 = vmatprep.subr.bf16.mxu0 0
  %200 = vmatpush1.bf16.xpose.msra.mxu0 0
  %201 = vmatprep.subr.bf16.mxu0 0
  %202 = vmatpush1.bf16.xpose.msra.mxu0 0
  %203 = vmatprep.subr.bf16.mxu0 0
  %204 = vmatpush1.bf16.xpose.msra.mxu0 0
  %205 = vmatprep.mubr.bf16.mxu0 0
  %206 = vmatmul.mubr.bf16.gmra.mrb[0].mxu0 %v168
  %v207 = vpop.f32.mrb[0].mxu0
  %v208 = vadd.f32 0.0, %v207
  %v209 = vpop.f32.mrb[0].mxu0
  %v210 = vpop.f32.mrb[0].mxu0
  %v211 = vpop.f32.mrb[0].mxu0
  %212 = vdwg.mxu0
  %v214 = vsel %vm28, %v16, 0
  %v217 = vsel %vm28, %v24, 0
  %219 = vmatprep.subr.bf16.mxu0 0
  %220 = vmatpush1.bf16.xpose.msra.mxu0 %v217
  %221 = vmatprep.subr.bf16.mxu0 0
  %222 = vmatpush1.bf16.xpose.msra.mxu0 0
  %223 = vmatprep.subr.bf16.mxu0 0
  %224 = vmatpush1.bf16.xpose.msra.mxu0 0
  %225 = vmatprep.subr.bf16.mxu0 0
  %226 = vmatpush1.bf16.xpose.msra.mxu0 0
  %227 = vmatprep.subr.bf16.mxu0 0
  %228 = vmatpush1.bf16.xpose.msra.mxu0 0
  %229 = vmatprep.subr.bf16.mxu0 0
  %230 = vmatpush1.bf16.xpose.msra.mxu0 0
  %231 = vmatprep.subr.bf16.mxu0 0
  %232 = vmatpush1.bf16.xpose.msra.mxu0 0
  %233 = vmatprep.subr.bf16.mxu0 0
  %234 = vmatpush1.bf16.xpose.msra.mxu0 0
  %235 = vmatprep.subr.bf16.mxu0 0
  %236 = vmatpush1.bf16.xpose.msra.mxu0 0
  %237 = vmatprep.subr.bf16.mxu0 0
  %238 = vmatpush1.bf16.xpose.msra.mxu0 0
  %239 = vmatprep.subr.bf16.mxu0 0
  %240 = vmatpush1.bf16.xpose.msra.mxu0 0
  %241 = vmatprep.subr.bf16.mxu0 0
  %242 = vmatpush1.bf16.xpose.msra.mxu0 0
  %243 = vmatprep.subr.bf16.mxu0 0
  %244 = vmatpush1.bf16.xpose.msra.mxu0 0
  %245 = vmatprep.subr.bf16.mxu0 0
  %246 = vmatpush1.bf16.xpose.msra.mxu0 0
  %247 = vmatprep.subr.bf16.mxu0 0
  %248 = vmatpush1.bf16.xpose.msra.mxu0 0
  %249 = vmatprep.subr.bf16.mxu0 0
  %250 = vmatpush1.bf16.xpose.msra.mxu0 0
  %251 = vmatprep.mubr.bf16.mxu0 0
  %252 = vmatmul.mubr.bf16.gmra.mrb[0].mxu0 %v214
  %v253 = vpop.f32.mrb[0].mxu0
  %v254 = vadd.f32 0.0, %v253
  %v255 = vpop.f32.mrb[0].mxu0
  %v256 = vpop.f32.mrb[0].mxu0
  %v257 = vpop.f32.mrb[0].mxu0
  %258 = vdwg.mxu0
  %v260 = vsel %vm28, %v17, 0
  %v263 = vsel %vm28, %v25, 0
  %265 = vmatprep.subr.bf16.mxu0 0
  %266 = vmatpush1.bf16.xpose.msra.mxu0 %v263
  %267 = vmatprep.subr.bf16.mxu0 0
  %268 = vmatpush1.bf16.xpose.msra.mxu0 0
  %269 = vmatprep.subr.bf16.mxu0 0
  %270 = vmatpush1.bf16.xpose.msra.mxu0 0
  %271 = vmatprep.subr.bf16.mxu0 0
  %272 = vmatpush1.bf16.xpose.msra.mxu0 0
  %273 = vmatprep.subr.bf16.mxu0 0
  %274 = vmatpush1.bf16.xpose.msra.mxu0 0
  %275 = vmatprep.subr.bf16.mxu0 0
  %276 = vmatpush1.bf16.xpose.msra.mxu0 0
  %277 = vmatprep.subr.bf16.mxu0 0
  %278 = vmatpush1.bf16.xpose.msra.mxu0 0
  %279 = vmatprep.subr.bf16.mxu0 0
  %280 = vmatpush1.bf16.xpose.msra.mxu0 0
  %281 = vmatprep.subr.bf16.mxu0 0
  %282 = vmatpush1.bf16.xpose.msra.mxu0 0
  %283 = vmatprep.subr.bf16.mxu0 0
  %284 = vmatpush1.bf16.xpose.msra.mxu0 0
  %285 = vmatprep.subr.bf16.mxu0 0
  %286 = vmatpush1.bf16.xpose.msra.mxu0 0
  %287 = vmatprep.subr.bf16.mxu0 0
  %288 = vmatpush1.bf16.xpose.msra.mxu0 0
  %289 = vmatprep.subr.bf16.mxu0 0
  %290 = vmatpush1.bf16.xpose.msra.mxu0 0
  %291 = vmatprep.subr.bf16.mxu0 0
  %292 = vmatpush1.bf16.xpose.msra.mxu0 0
  %293 = vmatprep.subr.bf16.mxu0 0
  %294 = vmatpush1.bf16.xpose.msra.mxu0 0
  %295 = vmatprep.subr.bf16.mxu0 0
  %296 = vmatpush1.bf16.xpose.msra.mxu0 0
  %297 = vmatprep.mubr.bf16.mxu0 0
  %298 = vmatmul.mubr.bf16.gmra.mrb[0].mxu0 %v260
  %v299 = vpop.f32.mrb[0].mxu0
  %v300 = vadd.f32 0.0, %v299
  %v301 = vpop.f32.mrb[0].mxu0
  %v302 = vpop.f32.mrb[0].mxu0
  %v303 = vpop.f32.mrb[0].mxu0
  %304 = vdwg.mxu0
  %v306 = vsel %vm28, %v18, 0
  %v309 = vsel %vm28, %v26, 0
  %311 = vmatprep.subr.bf16.mxu0 0
  %312 = vmatpush1.bf16.xpose.msra.mxu0 %v309
  %313 = vmatprep.subr.bf16.mxu0 0
  %314 = vmatpush1.bf16.xpose.msra.mxu0 0
  %315 = vmatprep.subr.bf16.mxu0 0
  %316 = vmatpush1.bf16.xpose.msra.mxu0 0
  %317 = vmatprep.subr.bf16.mxu0 0
  %318 = vmatpush1.bf16.xpose.msra.mxu0 0
  %319 = vmatprep.subr.bf16.mxu0 0
  %320 = vmatpush1.bf16.xpose.msra.mxu0 0
  %321 = vmatprep.subr.bf16.mxu0 0
  %322 = vmatpush1.bf16.xpose.msra.mxu0 0
  %323 = vmatprep.subr.bf16.mxu0 0
  %324 = vmatpush1.bf16.xpose.msra.mxu0 0
  %325 = vmatprep.subr.bf16.mxu0 0
  %326 = vmatpush1.bf16.xpose.msra.mxu0 0
  %327 = vmatprep.subr.bf16.mxu0 0
  %328 = vmatpush1.bf16.xpose.msra.mxu0 0
  %329 = vmatprep.subr.bf16.mxu0 0
  %330 = vmatpush1.bf16.xpose.msra.mxu0 0
  %331 = vmatprep.subr.bf16.mxu0 0
  %332 = vmatpush1.bf16.xpose.msra.mxu0 0
  %333 = vmatprep.subr.bf16.mxu0 0
  %334 = vmatpush1.bf16.xpose.msra.mxu0 0
  %335 = vmatprep.subr.bf16.mxu0 0
  %336 = vmatpush1.bf16.xpose.msra.mxu0 0
  %337 = vmatprep.subr.bf16.mxu0 0
  %338 = vmatpush1.bf16.xpose.msra.mxu0 0
  %339 = vmatprep.subr.bf16.mxu0 0
  %340 = vmatpush1.bf16.xpose.msra.mxu0 0
  %341 = vmatprep.subr.bf16.mxu0 0
  %342 = vmatpush1.bf16.xpose.msra.mxu0 0
  %343 = vmatprep.mubr.bf16.mxu0 0
  %344 = vmatmul.mubr.bf16.gmra.mrb[0].mxu0 %v306
  %v345 = vpop.f32.mrb[0].mxu0
  %v346 = vadd.f32 0.0, %v345
  %v347 = vpop.f32.mrb[0].mxu0
  %v348 = vpop.f32.mrb[0].mxu0
  %v349 = vpop.f32.mrb[0].mxu0
  %350 = vdwg.mxu0
  %v352 = vsel %vm28, %v19, 0
  %v355 = vsel %vm28, %v27, 0
  %357 = vmatprep.subr.bf16.mxu0 0
  %358 = vmatpush1.bf16.xpose.msra.mxu0 %v355
  %359 = vmatprep.subr.bf16.mxu0 0
  %360 = vmatpush1.bf16.xpose.msra.mxu0 0
  %361 = vmatprep.subr.bf16.mxu0 0
  %362 = vmatpush1.bf16.xpose.msra.mxu0 0
  %363 = vmatprep.subr.bf16.mxu0 0
  %364 = vmatpush1.bf16.xpose.msra.mxu0 0
  %365 = vmatprep.subr.bf16.mxu0 0
  %366 = vmatpush1.bf16.xpose.msra.mxu0 0
  %367 = vmatprep.subr.bf16.mxu0 0
  %368 = vmatpush1.bf16.xpose.msra.mxu0 0
  %369 = vmatprep.subr.bf16.mxu0 0
  %370 = vmatpush1.bf16.xpose.msra.mxu0 0
  %371 = vmatprep.subr.bf16.mxu0 0
  %372 = vmatpush1.bf16.xpose.msra.mxu0 0
  %373 = vmatprep.subr.bf16.mxu0 0
  %374 = vmatpush1.bf16.xpose.msra.mxu0 0
  %375 = vmatprep.subr.bf16.mxu0 0
  %376 = vmatpush1.bf16.xpose.msra.mxu0 0
  %377 = vmatprep.subr.bf16.mxu0 0
  %378 = vmatpush1.bf16.xpose.msra.mxu0 0
  %379 = vmatprep.subr.bf16.mxu0 0
  %380 = vmatpush1.bf16.xpose.msra.mxu0 0
  %381 = vmatprep.subr.bf16.mxu0 0
  %382 = vmatpush1.bf16.xpose.msra.mxu0 0
  %383 = vmatprep.subr.bf16.mxu0 0
  %384 = vmatpush1.bf16.xpose.msra.mxu0 0
  %385 = vmatprep.subr.bf16.mxu0 0
  %386 = vmatpush1.bf16.xpose.msra.mxu0 0
  %387 = vmatprep.subr.bf16.mxu0 0
  %388 = vmatpush1.bf16.xpose.msra.mxu0 0
  %389 = vmatprep.mubr.bf16.mxu0 0
  %390 = vmatmul.mubr.bf16.gmra.mrb[0].mxu0 %v352
  %v391 = vpop.f32.mrb[0].mxu0
  %v392 = vadd.f32 0.0, %v391
  %v393 = vpop.f32.mrb[0].mxu0
  %v394 = vpop.f32.mrb[0].mxu0
  %v395 = vpop.f32.mrb[0].mxu0
  %396 = vdwg.mxu0
  %v397 = vmul.f32 %v70, 0.17677669
  %v398 = vmul.f32 %v116, 0.17677669
  %v399 = vmul.f32 %v162, 0.17677669
  %v400 = vmul.f32 %v208, 0.17677669
  %v401 = vmul.f32 %v254, 0.17677669
  %v402 = vmul.f32 %v300, 0.17677669
  %v403 = vmul.f32 %v346, 0.17677669
  %v404 = vmul.f32 %v392, 0.17677669
  %vm405 = vcmask 64512
  %406 = vst.msk [vmem:[%s2] sm:$0xff] %vm405, %v397
  %407 = vst.msk [vmem:[%s2 + $0x8] sm:$0xff] %vm405, %v398
  %408 = vst.msk [vmem:[%s2 + $0x10] sm:$0xff] %vm405, %v399
  %409 = vst.msk [vmem:[%s2 + $0x18] sm:$0xff] %vm405, %v400
  %410 = vst.msk [vmem:[%s2 + $0x20] sm:$0xff] %vm405, %v401
  %411 = vst.msk [vmem:[%s2 + $0x28] sm:$0xff] %vm405, %v402
  %412 = vst.msk [vmem:[%s2 + $0x30] sm:$0xff] %vm405, %v403
  %413 = vst.msk [vmem:[%s2 + $0x38] sm:$0xff] %vm405, %v404
  // Predicated region
  $region10: #{_lambda_.29} parent=0 // pred_check
    _
  $region11: #{_lambda_.29} parent=0 // pred_check_branch
    %415 = sbr.rel (0) target = $region13
  $region12: #{_lambda_.29} parent=0 // pred_region
    _
  $region13: #{_lambda_.29} parent=0 // pred_fallthru
    _
  // Predicated region
  $region14: #{_lambda_.29} parent=0 // pred_check
    _
  $region15: #{_lambda_.29} parent=0 // pred_check_branch
    %417 = sbr.rel (0) target = $region17
  $region16: #{_lambda_.29} parent=0 // pred_region
    _
  $region17: #{_lambda_.29} parent=0 // pred_fallthru
    _

// kernel: _lambda_.30
$region0: #{_lambda_.30}
  #allocation0 [shape = 'u32[]', space=smem, size = 0x4, offset = 0x4, fixed_abs, tag = 'smem constant byte address 0x4 - core index']
  #allocation1 [shape = 'u32[144,128]{1,0:T(1,128)}', space=vmem, size = 0x12000, scoped, tag = 'internal scratch']
  %s0 = inlined_call_operand.vmem [shape: bf16[128,10], index: 0, kind: input, shape index: {}]
  %s1 = inlined_call_operand.vmem [shape: bf16[10,128], index: 1, kind: input, shape index: {}]
  %s2 = inlined_call_operand.vmem [shape: f32[1,128], index: 2, kind: input, shape index: {}]
  %s3 = inlined_call_operand.vmem [shape: f32[128,128], index: 3, kind: output, shape index: {}]
  %s4 = sld [smem:[#allocation0]]
  $region22: #{_lambda_.30} parent=0
    _
  %s6 = ssub.s32 1, %s4
  %s7 = scalar_select 0, %s6, %s4
  // Predicated region
  $region2: #{_lambda_.30} parent=0 // pred_check
    _
  $region3: #{_lambda_.30} parent=0 // pred_check_branch
    %9 = sbr.rel (0) target = $region5
  $region4: #{_lambda_.30} parent=0 // pred_region
    _
  $region5: #{_lambda_.30} parent=0 // pred_fallthru
    _
  // Predicated region
  $region6: #{_lambda_.30} parent=0 // pred_check
    _
  $region7: #{_lambda_.30} parent=0 // pred_check_branch
    %11 = sbr.rel (0) target = $region9
  $region8: #{_lambda_.30} parent=0 // pred_region
    _
  $region9: #{_lambda_.30} parent=0 // pred_fallthru
    _
  // Predicated region
  $region10: #{_lambda_.30} parent=0 // pred_check
    _
  $region11: #{_lambda_.30} parent=0 // pred_check_branch
    %13 = sbr.rel (0) target = $region13
  $region12: #{_lambda_.30} parent=0 // pred_region
    _
  $region13: #{_lambda_.30} parent=0 // pred_fallthru
    _
  %v15 = vld [vmem:[%s0] sm:$0xf]
  %v16 = vld [vmem:[%s0 + $0x4] sm:$0xf]
  %v17 = vld [vmem:[%s0 + $0x8] sm:$0xf]
  %v18 = vld [vmem:[%s0 + $0xc] sm:$0xf]
  %v19 = vld [vmem:[%s0 + $0x10] sm:$0xf]
  %v20 = vld [vmem:[%s0 + $0x14] sm:$0xf]
  %v21 = vld [vmem:[%s0 + $0x18] sm:$0xf]
  %v22 = vld [vmem:[%s0 + $0x1c] sm:$0xf]
  %v23 = vld [vmem:[%s0 + $0x20] sm:$0xf]
  %v24 = vld [vmem:[%s0 + $0x24] sm:$0xf]
  %v25 = vld [vmem:[%s0 + $0x28] sm:$0xf]
  %v26 = vld [vmem:[%s0 + $0x2c] sm:$0xf]
  %v27 = vld [vmem:[%s0 + $0x30] sm:$0xf]
  %v28 = vld [vmem:[%s0 + $0x34] sm:$0xf]
  %v29 = vld [vmem:[%s0 + $0x38] sm:$0xf]
  %v30 = vld [vmem:[%s0 + $0x3c] sm:$0xf]
  %v31 = vld [vmem:[%s1] sm:$0xf]
  %v32 = vld [vmem:[%s1 + $0x4] sm:$0x1]
  %v33 = vld [vmem:[%s2] sm:$0x1]
  %v35 = vlaneseq
  %v36 = vshrl.u32 %v35, 7
  %v37 = vsub.s32 0, %v36
  %v38 = vrot.slane %v33, %v37
  %v56 = vunpack.c.l.b16 %v15
  %v57 = vunpack.c.l.b16 %v16
  %v58 = vunpack.c.l.b16 %v17
  %v59 = vunpack.c.l.b16 %v18
  %v60 = vunpack.c.l.b16 %v19
  %v61 = vunpack.c.l.b16 %v20
  %v62 = vunpack.c.l.b16 %v21
  %v63 = vunpack.c.l.b16 %v22
  %v64 = vunpack.c.l.b16 %v23
  %v65 = vunpack.c.l.b16 %v24
  %v66 = vunpack.c.l.b16 %v25
  %v67 = vunpack.c.l.b16 %v26
  %v68 = vunpack.c.l.b16 %v27
  %v69 = vunpack.c.l.b16 %v28
  %v70 = vunpack.c.l.b16 %v29
  %v71 = vunpack.c.l.b16 %v30
  %v72 = vpack.c.b16 %v57, %v56
  %v73 = vpack.c.b16 %v59, %v58
  %v74 = vpack.c.b16 %v61, %v60
  %v75 = vpack.c.b16 %v63, %v62
  %v76 = vpack.c.b16 %v65, %v64
  %v77 = vpack.c.b16 %v67, %v66
  %v78 = vpack.c.b16 %v69, %v68
  %v79 = vpack.c.b16 %v71, %v70
  %v82 = vunpack.c.l.b16 %v31
  %v83 = vunpack.c.l.b16 %v32
  %v84 = vpack.c.b16 %v83, %v82
  %vm85 = vcmask 80896
  %v87 = vsel %vm85, %v72, 0
  %v90 = vsel %vm85, %v73, 0
  %v93 = vsel %vm85, %v74, 0
  %v96 = vsel %vm85, %v75, 0
  %v99 = vsel %vm85, %v76, 0
  %v102 = vsel %vm85, %v77, 0
  %v105 = vsel %vm85, %v78, 0
  %v108 = vsel %vm85, %v79, 0
  %vm110 = vcmask 1044480
  %v112 = vsel %vm110, %v84, 0
  %114 = vmatprep.subr.bf16.mxu0 0
  %115 = vmatpush1.bf16.msra.mxu0 %v112
  %116 = vmatprep.subr.bf16.mxu0 0
  %117 = vmatpush1.bf16.msra.mxu0 0
  %118 = vmatprep.subr.bf16.mxu0 0
  %119 = vmatpush1.bf16.msra.mxu0 0
  %120 = vmatprep.subr.bf16.mxu0 0
  %121 = vmatpush1.bf16.msra.mxu0 0
  %122 = vmatprep.subr.bf16.mxu0 0
  %123 = vmatpush1.bf16.msra.mxu0 0
  %124 = vmatprep.subr.bf16.mxu0 0
  %125 = vmatpush1.bf16.msra.mxu0 0
  %126 = vmatprep.subr.bf16.mxu0 0
  %127 = vmatpush1.bf16.msra.mxu0 0
  %128 = vmatprep.subr.bf16.mxu0 0
  %129 = vmatpush1.bf16.msra.mxu0 0
  %130 = vmatprep.subr.bf16.mxu0 0
  %131 = vmatpush1.bf16.msra.mxu0 0
  %132 = vmatprep.subr.bf16.mxu0 0
  %133 = vmatpush1.bf16.msra.mxu0 0
  %134 = vmatprep.subr.bf16.mxu0 0
  %135 = vmatpush1.bf16.msra.mxu0 0
  %136 = vmatprep.subr.bf16.mxu0 0
  %137 = vmatpush1.bf16.msra.mxu0 0
  %138 = vmatprep.subr.bf16.mxu0 0
  %139 = vmatpush1.bf16.msra.mxu0 0
  %140 = vmatprep.subr.bf16.mxu0 0
  %141 = vmatpush1.bf16.msra.mxu0 0
  %142 = vmatprep.subr.bf16.mxu0 0
  %143 = vmatpush1.bf16.msra.mxu0 0
  %144 = vmatprep.subr.bf16.mxu0 0
  %145 = vmatpush1.bf16.msra.mxu0 0
  %146 = vmatprep.mubr.bf16.mxu0 0
  %147 = vmatmul.mubr.bf16.gmra.mrb[0].mxu0 %v87
  %v148 = vpop.f32.mrb[0].mxu0
  %v149 = vadd.f32 %v38, %v148
  %v150 = vpop.f32.mrb[0].mxu0
  %v151 = vpop.f32.mrb[0].mxu0
  %v152 = vadd.f32 %v38, %v151
  %v153 = vpop.f32.mrb[0].mxu0
  %154 = vmatprep.mubr.bf16.mxu0 0
  %155 = vmatmul.mubr.bf16.gmra.mrb[0].mxu0 %v90
  %v156 = vpop.f32.mrb[0].mxu0
  %v157 = vadd.f32 %v38, %v156
  %v158 = vpop.f32.mrb[0].mxu0
  %v159 = vpop.f32.mrb[0].mxu0
  %v160 = vadd.f32 %v38, %v159
  %v161 = vpop.f32.mrb[0].mxu0
  %162 = vmatprep.mubr.bf16.mxu0 0
  %163 = vmatmul.mubr.bf16.gmra.mrb[0].mxu0 %v93
  %v164 = vpop.f32.mrb[0].mxu0
  %v165 = vadd.f32 %v38, %v164
  %v166 = vpop.f32.mrb[0].mxu0
  %v167 = vpop.f32.mrb[0].mxu0
  %v168 = vadd.f32 %v38, %v167
  %v169 = vpop.f32.mrb[0].mxu0
  %170 = vmatprep.mubr.bf16.mxu0 0
  %171 = vmatmul.mubr.bf16.gmra.mrb[0].mxu0 %v96
  %v172 = vpop.f32.mrb[0].mxu0
  %v173 = vadd.f32 %v38, %v172
  %v174 = vpop.f32.mrb[0].mxu0
  %v175 = vpop.f32.mrb[0].mxu0
  %v176 = vadd.f32 %v38, %v175
  %v177 = vpop.f32.mrb[0].mxu0
  %178 = vmatprep.mubr.bf16.mxu0 0
  %179 = vmatmul.mubr.bf16.gmra.mrb[0].mxu0 %v99
  %v180 = vpop.f32.mrb[0].mxu0
  %v181 = vadd.f32 %v38, %v180
  %v182 = vpop.f32.mrb[0].mxu0
  %v183 = vpop.f32.mrb[0].mxu0
  %v184 = vadd.f32 %v38, %v183
  %v185 = vpop.f32.mrb[0].mxu0
  %186 = vmatprep.mubr.bf16.mxu0 0
  %187 = vmatmul.mubr.bf16.gmra.mrb[0].mxu0 %v102
  %v188 = vpop.f32.mrb[0].mxu0
  %v189 = vadd.f32 %v38, %v188
  %v190 = vpop.f32.mrb[0].mxu0
  %v191 = vpop.f32.mrb[0].mxu0
  %v192 = vadd.f32 %v38, %v191
  %v193 = vpop.f32.mrb[0].mxu0
  %194 = vmatprep.mubr.bf16.mxu0 0
  %195 = vmatmul.mubr.bf16.gmra.mrb[0].mxu0 %v105
  %v196 = vpop.f32.mrb[0].mxu0
  %v197 = vadd.f32 %v38, %v196
  %v198 = vpop.f32.mrb[0].mxu0
  %v199 = vpop.f32.mrb[0].mxu0
  %v200 = vadd.f32 %v38, %v199
  %v201 = vpop.f32.mrb[0].mxu0
  %202 = vmatprep.mubr.bf16.mxu0 0
  %203 = vmatmul.mubr.bf16.gmra.mrb[0].mxu0 %v108
  %v204 = vpop.f32.mrb[0].mxu0
  %v205 = vadd.f32 %v38, %v204
  %v206 = vpop.f32.mrb[0].mxu0
  %v207 = vpop.f32.mrb[0].mxu0
  %v208 = vadd.f32 %v38, %v207
  %v209 = vpop.f32.mrb[0].mxu0
  %210 = vdwg.mxu0
  %v211 = vmax.f32 %v149, 0.0
  %v212 = vmax.f32 %v152, 0.0
  %v213 = vmax.f32 %v157, 0.0
  %v214 = vmax.f32 %v160, 0.0
  %v215 = vmax.f32 %v165, 0.0
  %v216 = vmax.f32 %v168, 0.0
  %v217 = vmax.f32 %v173, 0.0
  %v218 = vmax.f32 %v176, 0.0
  %v219 = vmax.f32 %v181, 0.0
  %v220 = vmax.f32 %v184, 0.0
  %v221 = vmax.f32 %v189, 0.0
  %v222 = vmax.f32 %v192, 0.0
  %v223 = vmax.f32 %v197, 0.0
  %v224 = vmax.f32 %v200, 0.0
  %v225 = vmax.f32 %v205, 0.0
  %v226 = vmax.f32 %v208, 0.0
  %227 = vst [vmem:[%s3] sm:$0xff] %v211
  %228 = vst [vmem:[%s3 + $0x8] sm:$0xff] %v212
  %229 = vst [vmem:[%s3 + $0x10] sm:$0xff] %v213
  %230 = vst [vmem:[%s3 + $0x18] sm:$0xff] %v214
  %231 = vst [vmem:[%s3 + $0x20] sm:$0xff] %v215
  %232 = vst [vmem:[%s3 + $0x28] sm:$0xff] %v216
  %233 = vst [vmem:[%s3 + $0x30] sm:$0xff] %v217
  %234 = vst [vmem:[%s3 + $0x38] sm:$0xff] %v218
  %235 = vst [vmem:[%s3 + $0x40] sm:$0xff] %v219
  %236 = vst [vmem:[%s3 + $0x48] sm:$0xff] %v220
  %237 = vst [vmem:[%s3 + $0x50] sm:$0xff] %v221
  %238 = vst [vmem:[%s3 + $0x58] sm:$0xff] %v222
  %239 = vst [vmem:[%s3 + $0x60] sm:$0xff] %v223
  %240 = vst [vmem:[%s3 + $0x68] sm:$0xff] %v224
  %241 = vst [vmem:[%s3 + $0x70] sm:$0xff] %v225
  %242 = vst [vmem:[%s3 + $0x78] sm:$0xff] %v226
  // Predicated region
  $region14: #{_lambda_.30} parent=0 // pred_check
    _
  $region15: #{_lambda_.30} parent=0 // pred_check_branch
    %244 = sbr.rel (0) target = $region17
  $region16: #{_lambda_.30} parent=0 // pred_region
    _
  $region17: #{_lambda_.30} parent=0 // pred_fallthru
    _
  // Predicated region
  $region18: #{_lambda_.30} parent=0 // pred_check
    _
  $region19: #{_lambda_.30} parent=0 // pred_check_branch
    %246 = sbr.rel (0) target = $region21
  $region20: #{_lambda_.30} parent=0 // pred_region
    _
  $region21: #{_lambda_.30} parent=0 // pred_fallthru
    _

// kernel: _lambda_.31
$region0: #{_lambda_.31}
  #allocation0 [shape = 'u32[]', space=smem, size = 0x4, offset = 0x4, fixed_abs, tag = 'smem constant byte address 0x4 - core index']
  #allocation1 [shape = 'u32[144,128]{1,0:T(1,128)}', space=vmem, size = 0x12000, scoped, tag = 'internal scratch']
  %s0 = inlined_call_operand.vmem [shape: bf16[128,9], index: 0, kind: input, shape index: {}]
  %s1 = inlined_call_operand.vmem [shape: bf16[9,128], index: 1, kind: input, shape index: {}]
  %s2 = inlined_call_operand.vmem [shape: f32[1,128], index: 2, kind: input, shape index: {}]
  %s3 = inlined_call_operand.vmem [shape: f32[128,128], index: 3, kind: output, shape index: {}]
  %s4 = sld [smem:[#allocation0]]
  $region22: #{_lambda_.31} parent=0
    _
  %s6 = ssub.s32 1, %s4
  %s7 = scalar_select 0, %s6, %s4
  // Predicated region
  $region2: #{_lambda_.31} parent=0 // pred_check
    _
  $region3: #{_lambda_.31} parent=0 // pred_check_branch
    %9 = sbr.rel (0) target = $region5
  $region4: #{_lambda_.31} parent=0 // pred_region
    _
  $region5: #{_lambda_.31} parent=0 // pred_fallthru
    _
  // Predicated region
  $region6: #{_lambda_.31} parent=0 // pred_check
    _
  $region7: #{_lambda_.31} parent=0 // pred_check_branch
    %11 = sbr.rel (0) target = $region9
  $region8: #{_lambda_.31} parent=0 // pred_region
    _
  $region9: #{_lambda_.31} parent=0 // pred_fallthru
    _
  // Predicated region
  $region10: #{_lambda_.31} parent=0 // pred_check
    _
  $region11: #{_lambda_.31} parent=0 // pred_check_branch
    %13 = sbr.rel (0) target = $region13
  $region12: #{_lambda_.31} parent=0 // pred_region
    _
  $region13: #{_lambda_.31} parent=0 // pred_fallthru
    _
  %v15 = vld [vmem:[%s0] sm:$0xf]
  %v16 = vld [vmem:[%s0 + $0x4] sm:$0xf]
  %v17 = vld [vmem:[%s0 + $0x8] sm:$0xf]
  %v18 = vld [vmem:[%s0 + $0xc] sm:$0xf]
  %v19 = vld [vmem:[%s0 + $0x10] sm:$0xf]
  %v20 = vld [vmem:[%s0 + $0x14] sm:$0xf]
  %v21 = vld [vmem:[%s0 + $0x18] sm:$0xf]
  %v22 = vld [vmem:[%s0 + $0x1c] sm:$0xf]
  %v23 = vld [vmem:[%s0 + $0x20] sm:$0xf]
  %v24 = vld [vmem:[%s0 + $0x24] sm:$0xf]
  %v25 = vld [vmem:[%s0 + $0x28] sm:$0xf]
  %v26 = vld [vmem:[%s0 + $0x2c] sm:$0xf]
  %v27 = vld [vmem:[%s0 + $0x30] sm:$0xf]
  %v28 = vld [vmem:[%s0 + $0x34] sm:$0xf]
  %v29 = vld [vmem:[%s0 + $0x38] sm:$0xf]
  %v30 = vld [vmem:[%s0 + $0x3c] sm:$0xf]
  %v31 = vld [vmem:[%s1] sm:$0xf]
  %v32 = vld [vmem:[%s1 + $0x4] sm:$0x1]
  %v33 = vld [vmem:[%s2] sm:$0x1]
  %v35 = vlaneseq
  %v36 = vshrl.u32 %v35, 7
  %v37 = vsub.s32 0, %v36
  %v38 = vrot.slane %v33, %v37
  %v56 = vunpack.c.l.b16 %v15
  %v57 = vunpack.c.l.b16 %v16
  %v58 = vunpack.c.l.b16 %v17
  %v59 = vunpack.c.l.b16 %v18
  %v60 = vunpack.c.l.b16 %v19
  %v61 = vunpack.c.l.b16 %v20
  %v62 = vunpack.c.l.b16 %v21
  %v63 = vunpack.c.l.b16 %v22
  %v64 = vunpack.c.l.b16 %v23
  %v65 = vunpack.c.l.b16 %v24
  %v66 = vunpack.c.l.b16 %v25
  %v67 = vunpack.c.l.b16 %v26
  %v68 = vunpack.c.l.b16 %v27
  %v69 = vunpack.c.l.b16 %v28
  %v70 = vunpack.c.l.b16 %v29
  %v71 = vunpack.c.l.b16 %v30
  %v72 = vpack.c.b16 %v57, %v56
  %v73 = vpack.c.b16 %v59, %v58
  %v74 = vpack.c.b16 %v61, %v60
  %v75 = vpack.c.b16 %v63, %v62
  %v76 = vpack.c.b16 %v65, %v64
  %v77 = vpack.c.b16 %v67, %v66
  %v78 = vpack.c.b16 %v69, %v68
  %v79 = vpack.c.b16 %v71, %v70
  %v82 = vunpack.c.l.b16 %v31
  %v83 = vunpack.c.l.b16 %v32
  %v84 = vpack.c.b16 %v83, %v82
  %vm85 = vcmask 72704
  %v87 = vsel %vm85, %v72, 0
  %v90 = vsel %vm85, %v73, 0
  %v93 = vsel %vm85, %v74, 0
  %v96 = vsel %vm85, %v75, 0
  %v99 = vsel %vm85, %v76, 0
  %v102 = vsel %vm85, %v77, 0
  %v105 = vsel %vm85, %v78, 0
  %v108 = vsel %vm85, %v79, 0
  %vm110 = vcmask 1043456
  %vm111 = vcmask 1044480
  %v112 = vsel %vm110, 4294967295, 65535
  %v113 = vsel %vm111, %v112, 0
  %v115 = vand.u32 %v84, %v113
  %117 = vmatprep.subr.bf16.mxu0 0
  %118 = vmatpush1.bf16.msra.mxu0 %v115
  %119 = vmatprep.subr.bf16.mxu0 0
  %120 = vmatpush1.bf16.msra.mxu0 0
  %121 = vmatprep.subr.bf16.mxu0 0
  %122 = vmatpush1.bf16.msra.mxu0 0
  %123 = vmatprep.subr.bf16.mxu0 0
  %124 = vmatpush1.bf16.msra.mxu0 0
  %125 = vmatprep.subr.bf16.mxu0 0
  %126 = vmatpush1.bf16.msra.mxu0 0
  %127 = vmatprep.subr.bf16.mxu0 0
  %128 = vmatpush1.bf16.msra.mxu0 0
  %129 = vmatprep.subr.bf16.mxu0 0
  %130 = vmatpush1.bf16.msra.mxu0 0
  %131 = vmatprep.subr.bf16.mxu0 0
  %132 = vmatpush1.bf16.msra.mxu0 0
  %133 = vmatprep.subr.bf16.mxu0 0
  %134 = vmatpush1.bf16.msra.mxu0 0
  %135 = vmatprep.subr.bf16.mxu0 0
  %136 = vmatpush1.bf16.msra.mxu0 0
  %137 = vmatprep.subr.bf16.mxu0 0
  %138 = vmatpush1.bf16.msra.mxu0 0
  %139 = vmatprep.subr.bf16.mxu0 0
  %140 = vmatpush1.bf16.msra.mxu0 0
  %141 = vmatprep.subr.bf16.mxu0 0
  %142 = vmatpush1.bf16.msra.mxu0 0
  %143 = vmatprep.subr.bf16.mxu0 0
  %144 = vmatpush1.bf16.msra.mxu0 0
  %145 = vmatprep.subr.bf16.mxu0 0
  %146 = vmatpush1.bf16.msra.mxu0 0
  %147 = vmatprep.subr.bf16.mxu0 0
  %148 = vmatpush1.bf16.msra.mxu0 0
  %149 = vmatprep.mubr.bf16.mxu0 0
  %150 = vmatmul.mubr.bf16.gmra.mrb[0].mxu0 %v87
  %v151 = vpop.f32.mrb[0].mxu0
  %v152 = vadd.f32 %v38, %v151
  %v153 = vpop.f32.mrb[0].mxu0
  %v154 = vpop.f32.mrb[0].mxu0
  %v155 = vadd.f32 %v38, %v154
  %v156 = vpop.f32.mrb[0].mxu0
  %157 = vmatprep.mubr.bf16.mxu0 0
  %158 = vmatmul.mubr.bf16.gmra.mrb[0].mxu0 %v90
  %v159 = vpop.f32.mrb[0].mxu0
  %v160 = vadd.f32 %v38, %v159
  %v161 = vpop.f32.mrb[0].mxu0
  %v162 = vpop.f32.mrb[0].mxu0
  %v163 = vadd.f32 %v38, %v162
  %v164 = vpop.f32.mrb[0].mxu0
  %165 = vmatprep.mubr.bf16.mxu0 0
  %166 = vmatmul.mubr.bf16.gmra.mrb[0].mxu0 %v93
  %v167 = vpop.f32.mrb[0].mxu0
  %v168 = vadd.f32 %v38, %v167
  %v169 = vpop.f32.mrb[0].mxu0
  %v170 = vpop.f32.mrb[0].mxu0
  %v171 = vadd.f32 %v38, %v170
  %v172 = vpop.f32.mrb[0].mxu0
  %173 = vmatprep.mubr.bf16.mxu0 0
  %174 = vmatmul.mubr.bf16.gmra.mrb[0].mxu0 %v96
  %v175 = vpop.f32.mrb[0].mxu0
  %v176 = vadd.f32 %v38, %v175
  %v177 = vpop.f32.mrb[0].mxu0
  %v178 = vpop.f32.mrb[0].mxu0
  %v179 = vadd.f32 %v38, %v178
  %v180 = vpop.f32.mrb[0].mxu0
  %181 = vmatprep.mubr.bf16.mxu0 0
  %182 = vmatmul.mubr.bf16.gmra.mrb[0].mxu0 %v99
  %v183 = vpop.f32.mrb[0].mxu0
  %v184 = vadd.f32 %v38, %v183
  %v185 = vpop.f32.mrb[0].mxu0
  %v186 = vpop.f32.mrb[0].mxu0
  %v187 = vadd.f32 %v38, %v186
  %v188 = vpop.f32.mrb[0].mxu0
  %189 = vmatprep.mubr.bf16.mxu0 0
  %190 = vmatmul.mubr.bf16.gmra.mrb[0].mxu0 %v102
  %v191 = vpop.f32.mrb[0].mxu0
  %v192 = vadd.f32 %v38, %v191
  %v193 = vpop.f32.mrb[0].mxu0
  %v194 = vpop.f32.mrb[0].mxu0
  %v195 = vadd.f32 %v38, %v194
  %v196 = vpop.f32.mrb[0].mxu0
  %197 = vmatprep.mubr.bf16.mxu0 0
  %198 = vmatmul.mubr.bf16.gmra.mrb[0].mxu0 %v105
  %v199 = vpop.f32.mrb[0].mxu0
  %v200 = vadd.f32 %v38, %v199
  %v201 = vpop.f32.mrb[0].mxu0
  %v202 = vpop.f32.mrb[0].mxu0
  %v203 = vadd.f32 %v38, %v202
  %v204 = vpop.f32.mrb[0].mxu0
  %205 = vmatprep.mubr.bf16.mxu0 0
  %206 = vmatmul.mubr.bf16.gmra.mrb[0].mxu0 %v108
  %v207 = vpop.f32.mrb[0].mxu0
  %v208 = vadd.f32 %v38, %v207
  %v209 = vpop.f32.mrb[0].mxu0
  %v210 = vpop.f32.mrb[0].mxu0
  %v211 = vadd.f32 %v38, %v210
  %v212 = vpop.f32.mrb[0].mxu0
  %213 = vdwg.mxu0
  %v214 = vmax.f32 %v152, 0.0
  %v215 = vmax.f32 %v155, 0.0
  %v216 = vmax.f32 %v160, 0.0
  %v217 = vmax.f32 %v163, 0.0
  %v218 = vmax.f32 %v168, 0.0
  %v219 = vmax.f32 %v171, 0.0
  %v220 = vmax.f32 %v176, 0.0
  %v221 = vmax.f32 %v179, 0.0
  %v222 = vmax.f32 %v184, 0.0
  %v223 = vmax.f32 %v187, 0.0
  %v224 = vmax.f32 %v192, 0.0
  %v225 = vmax.f32 %v195, 0.0
  %v226 = vmax.f32 %v200, 0.0
  %v227 = vmax.f32 %v203, 0.0
  %v228 = vmax.f32 %v208, 0.0
  %v229 = vmax.f32 %v211, 0.0
  %230 = vst [vmem:[%s3] sm:$0xff] %v214
  %231 = vst [vmem:[%s3 + $0x8] sm:$0xff] %v215
  %232 = vst [vmem:[%s3 + $0x10] sm:$0xff] %v216
  %233 = vst [vmem:[%s3 + $0x18] sm:$0xff] %v217
  %234 = vst [vmem:[%s3 + $0x20] sm:$0xff] %v218
  %235 = vst [vmem:[%s3 + $0x28] sm:$0xff] %v219
  %236 = vst [vmem:[%s3 + $0x30] sm:$0xff] %v220
  %237 = vst [vmem:[%s3 + $0x38] sm:$0xff] %v221
  %238 = vst [vmem:[%s3 + $0x40] sm:$0xff] %v222
  %239 = vst [vmem:[%s3 + $0x48] sm:$0xff] %v223
  %240 = vst [vmem:[%s3 + $0x50] sm:$0xff] %v224
  %241 = vst [vmem:[%s3 + $0x58] sm:$0xff] %v225
  %242 = vst [vmem:[%s3 + $0x60] sm:$0xff] %v226
  %243 = vst [vmem:[%s3 + $0x68] sm:$0xff] %v227
  %244 = vst [vmem:[%s3 + $0x70] sm:$0xff] %v228
  %245 = vst [vmem:[%s3 + $0x78] sm:$0xff] %v229
  // Predicated region
  $region14: #{_lambda_.31} parent=0 // pred_check
    _
  $region15: #{_lambda_.31} parent=0 // pred_check_branch
    %247 = sbr.rel (0) target = $region17
  $region16: #{_lambda_.31} parent=0 // pred_region
    _
  $region17: #{_lambda_.31} parent=0 // pred_fallthru
    _
  // Predicated region
  $region18: #{_lambda_.31} parent=0 // pred_check
    _
  $region19: #{_lambda_.31} parent=0 // pred_check_branch
    %249 = sbr.rel (0) target = $region21
  $region20: #{_lambda_.31} parent=0 // pred_region
    _
  $region21: #{_lambda_.31} parent=0 // pred_fallthru
    _

// kernel: _lambda_.28
$region0: #{_lambda_.28}
  #allocation0 [shape = 'u32[]', space=smem, size = 0x4, offset = 0x4, fixed_abs, tag = 'smem constant byte address 0x4 - core index']
  #allocation1 [shape = 'u32[144,128]{1,0:T(1,128)}', space=vmem, size = 0x12000, scoped, tag = 'internal scratch']
  %s0 = inlined_call_operand.vmem [shape: bf16[128,288], index: 0, kind: input, shape index: {}]
  %s1 = inlined_call_operand.vmem [shape: bf16[288,128], index: 1, kind: input, shape index: {}]
  %s2 = inlined_call_operand.vmem [shape: f32[1,128], index: 2, kind: input, shape index: {}]
  %s3 = inlined_call_operand.vmem [shape: f32[128,128], index: 3, kind: output, shape index: {}]
  %s4 = sld [smem:[#allocation0]]
  $region22: #{_lambda_.28} parent=0
    _
  %s6 = ssub.s32 1, %s4
  %s7 = scalar_select 0, %s6, %s4
  // Predicated region
  $region2: #{_lambda_.28} parent=0 // pred_check
    _
  $region3: #{_lambda_.28} parent=0 // pred_check_branch
    %9 = sbr.rel (0) target = $region5
  $region4: #{_lambda_.28} parent=0 // pred_region
    _
  $region5: #{_lambda_.28} parent=0 // pred_fallthru
    _
  // Predicated region
  $region6: #{_lambda_.28} parent=0 // pred_check
    _
  $region7: #{_lambda_.28} parent=0 // pred_check_branch
    %11 = sbr.rel (0) target = $region9
  $region8: #{_lambda_.28} parent=0 // pred_region
    _
  $region9: #{_lambda_.28} parent=0 // pred_fallthru
    _
  // Predicated region
  $region10: #{_lambda_.28} parent=0 // pred_check
    _
  $region11: #{_lambda_.28} parent=0 // pred_check_branch
    %13 = sbr.rel (0) target = $region13
  $region12: #{_lambda_.28} parent=0 // pred_region
    _
  $region13: #{_lambda_.28} parent=0 // pred_fallthru
    _
  %v15 = vld [vmem:[%s0] sm:$0xff]
  %v16 = vld [vmem:[%s0 + $0x8] sm:$0xf]
  %v17 = vld [vmem:[%s0 + $0xc] sm:$0xff]
  %v18 = vld [vmem:[%s0 + $0x14] sm:$0xf]
  %v19 = vld [vmem:[%s0 + $0x18] sm:$0xff]
  %v20 = vld [vmem:[%s0 + $0x20] sm:$0xf]
  %v21 = vld [vmem:[%s0 + $0x24] sm:$0xff]
  %v22 = vld [vmem:[%s0 + $0x2c] sm:$0xf]
  %v23 = vld [vmem:[%s0 + $0x30] sm:$0xff]
  %v24 = vld [vmem:[%s0 + $0x38] sm:$0xf]
  %v25 = vld [vmem:[%s0 + $0x3c] sm:$0xff]
  %v26 = vld [vmem:[%s0 + $0x44] sm:$0xf]
  %v27 = vld [vmem:[%s0 + $0x48] sm:$0xff]
  %v28 = vld [vmem:[%s0 + $0x50] sm:$0xf]
  %v29 = vld [vmem:[%s0 + $0x54] sm:$0xff]
  %v30 = vld [vmem:[%s0 + $0x5c] sm:$0xf]
  %v31 = vld [vmem:[%s0 + $0x60] sm:$0xff]
  %v32 = vld [vmem:[%s0 + $0x68] sm:$0xf]
  %v33 = vld [vmem:[%s0 + $0x6c] sm:$0xff]
  %v34 = vld [vmem:[%s0 + $0x74] sm:$0xf]
  %v35 = vld [vmem:[%s0 + $0x78] sm:$0xff]
  %v36 = vld [vmem:[%s0 + $0x80] sm:$0xf]
  %v37 = vld [vmem:[%s0 + $0x84] sm:$0xff]
  %v38 = vld [vmem:[%s0 + $0x8c] sm:$0xf]
  %v39 = vld [vmem:[%s0 + $0x90] sm:$0xff]
  %v40 = vld [vmem:[%s0 + $0x98] sm:$0xf]
  %v41 = vld [vmem:[%s0 + $0x9c] sm:$0xff]
  %v42 = vld [vmem:[%s0 + $0xa4] sm:$0xf]
  %v43 = vld [vmem:[%s0 + $0xa8] sm:$0xff]
  %v44 = vld [vmem:[%s0 + $0xb0] sm:$0xf]
  %v45 = vld [vmem:[%s0 + $0xb4] sm:$0xff]
  %v46 = vld [vmem:[%s0 + $0xbc] sm:$0xf]
  %v47 = vld [vmem:[%s1] sm:$0xf]
  %v48 = vld [vmem:[%s1 + $0x4] sm:$0xf]
  %v49 = vld [vmem:[%s1 + $0x8] sm:$0xf]
  %v50 = vld [vmem:[%s1 + $0xc] sm:$0xf]
  %v51 = vld [vmem:[%s1 + $0x10] sm:$0xf]
  %v52 = vld [vmem:[%s1 + $0x14] sm:$0xf]
  %v53 = vld [vmem:[%s1 + $0x18] sm:$0xf]
  %v54 = vld [vmem:[%s1 + $0x1c] sm:$0xf]
  %v55 = vld [vmem:[%s1 + $0x20] sm:$0xf]
  %v56 = vld [vmem:[%s1 + $0x24] sm:$0xf]
  %v57 = vld [vmem:[%s1 + $0x28] sm:$0xf]
  %v58 = vld [vmem:[%s1 + $0x2c] sm:$0xf]
  %v59 = vld [vmem:[%s1 + $0x30] sm:$0xf]
  %v60 = vld [vmem:[%s1 + $0x34] sm:$0xf]
  %v61 = vld [vmem:[%s1 + $0x38] sm:$0xf]
  %v62 = vld [vmem:[%s1 + $0x3c] sm:$0xf]
  %v63 = vld [vmem:[%s1 + $0x40] sm:$0xf]
  %v64 = vld [vmem:[%s1 + $0x44] sm:$0xf]
  %v65 = vld [vmem:[%s1 + $0x48] sm:$0xf]
  %v66 = vld [vmem:[%s1 + $0x4c] sm:$0xf]
  %v67 = vld [vmem:[%s1 + $0x50] sm:$0xf]
  %v68 = vld [vmem:[%s1 + $0x54] sm:$0xf]
  %v69 = vld [vmem:[%s1 + $0x58] sm:$0xf]
  %v70 = vld [vmem:[%s1 + $0x5c] sm:$0xf]
  %v71 = vld [vmem:[%s1 + $0x60] sm:$0xf]
  %v72 = vld [vmem:[%s1 + $0x64] sm:$0xf]
  %v73 = vld [vmem:[%s1 + $0x68] sm:$0xf]
  %v74 = vld [vmem:[%s1 + $0x6c] sm:$0xf]
  %v75 = vld [vmem:[%s1 + $0x70] sm:$0xf]
  %v76 = vld [vmem:[%s1 + $0x74] sm:$0xf]
  %v77 = vld [vmem:[%s1 + $0x78] sm:$0xf]
  %v78 = vld [vmem:[%s1 + $0x7c] sm:$0xf]
  %v79 = vld [vmem:[%s1 + $0x80] sm:$0xf]
  %v80 = vld [vmem:[%s1 + $0x84] sm:$0xf]
  %v81 = vld [vmem:[%s1 + $0x88] sm:$0xf]
  %v82 = vld [vmem:[%s1 + $0x8c] sm:$0xf]
  %v83 = vld [vmem:[%s2] sm:$0x1]
  %v85 = vlaneseq
  %v86 = vshrl.u32 %v85, 7
  %v87 = vsub.s32 0, %v86
  %v88 = vrot.slane %v83, %v87
  %v122 = vunpack.c.l.b16 %v15
  %v123 = vunpack.c.h.b16 %v15
  %v124 = vunpack.c.l.b16 %v16
  %v125 = vunpack.c.l.b16 %v17
  %v126 = vunpack.c.h.b16 %v17
  %v127 = vunpack.c.l.b16 %v18
  %v128 = vunpack.c.l.b16 %v19
  %v129 = vunpack.c.h.b16 %v19
  %v130 = vunpack.c.l.b16 %v20
  %v131 = vunpack.c.l.b16 %v21
  %v132 = vunpack.c.h.b16 %v21
  %v133 = vunpack.c.l.b16 %v22
  %v134 = vunpack.c.l.b16 %v23
  %v135 = vunpack.c.h.b16 %v23
  %v136 = vunpack.c.l.b16 %v24
  %v137 = vunpack.c.l.b16 %v25
  %v138 = vunpack.c.h.b16 %v25
  %v139 = vunpack.c.l.b16 %v26
  %v140 = vunpack.c.l.b16 %v27
  %v141 = vunpack.c.h.b16 %v27
  %v142 = vunpack.c.l.b16 %v28
  %v143 = vunpack.c.l.b16 %v29
  %v144 = vunpack.c.h.b16 %v29
  %v145 = vunpack.c.l.b16 %v30
  %v146 = vunpack.c.l.b16 %v31
  %v147 = vunpack.c.h.b16 %v31
  %v148 = vunpack.c.l.b16 %v32
  %v149 = vunpack.c.l.b16 %v33
  %v150 = vunpack.c.h.b16 %v33
  %v151 = vunpack.c.l.b16 %v34
  %v152 = vunpack.c.l.b16 %v35
  %v153 = vunpack.c.h.b16 %v35
  %v154 = vunpack.c.l.b16 %v36
  %v155 = vunpack.c.l.b16 %v37
  %v156 = vunpack.c.h.b16 %v37
  %v157 = vunpack.c.l.b16 %v38
  %v158 = vunpack.c.l.b16 %v39
  %v159 = vunpack.c.h.b16 %v39
  %v160 = vunpack.c.l.b16 %v40
  %v161 = vunpack.c.l.b16 %v41
  %v162 = vunpack.c.h.b16 %v41
  %v163 = vunpack.c.l.b16 %v42
  %v164 = vunpack.c.l.b16 %v43
  %v165 = vunpack.c.h.b16 %v43
  %v166 = vunpack.c.l.b16 %v44
  %v167 = vunpack.c.l.b16 %v45
  %v168 = vunpack.c.h.b16 %v45
  %v169 = vunpack.c.l.b16 %v46
  %v170 = vpack.c.b16 %v125, %v122
  %v171 = vpack.c.b16 %v126, %v123
  %v172 = vpack.c.b16 %v127, %v124
  %v173 = vpack.c.b16 %v131, %v128
  %v174 = vpack.c.b16 %v132, %v129
  %v175 = vpack.c.b16 %v133, %v130
  %v176 = vpack.c.b16 %v137, %v134
  %v177 = vpack.c.b16 %v138, %v135
  %v178 = vpack.c.b16 %v139, %v136
  %v179 = vpack.c.b16 %v143, %v140
  %v180 = vpack.c.b16 %v144, %v141
  %v181 = vpack.c.b16 %v145, %v142
  %v182 = vpack.c.b16 %v149, %v146
  %v183 = vpack.c.b16 %v150, %v147
  %v184 = vpack.c.b16 %v151, %v148
  %v185 = vpack.c.b16 %v155, %v152
  %v186 = vpack.c.b16 %v156, %v153
  %v187 = vpack.c.b16 %v157, %v154
  %v188 = vpack.c.b16 %v161, %v158
  %v189 = vpack.c.b16 %v162, %v159
  %v190 = vpack.c.b16 %v163, %v160
  %v191 = vpack.c.b16 %v167, %v164
  %v192 = vpack.c.b16 %v168, %v165
  %v193 = vpack.c.b16 %v169, %v166
  %v246 = vunpack.c.l.b16 %v47
  %v247 = vunpack.c.l.b16 %v48
  %v248 = vunpack.c.l.b16 %v49
  %v249 = vunpack.c.l.b16 %v50
  %v250 = vunpack.c.l.b16 %v51
  %v251 = vunpack.c.l.b16 %v52
  %v252 = vunpack.c.l.b16 %v53
  %v253 = vunpack.c.l.b16 %v54
  %v254 = vunpack.c.l.b16 %v55
  %v255 = vunpack.c.l.b16 %v56
  %v256 = vunpack.c.l.b16 %v57
  %v257 = vunpack.c.l.b16 %v58
  %v258 = vunpack.c.l.b16 %v59
  %v259 = vunpack.c.l.b16 %v60
  %v260 = vunpack.c.l.b16 %v61
  %v261 = vunpack.c.l.b16 %v62
  %v262 = vunpack.c.l.b16 %v63
  %v263 = vunpack.c.l.b16 %v64
  %v264 = vunpack.c.l.b16 %v65
  %v265 = vunpack.c.l.b16 %v66
  %v266 = vunpack.c.l.b16 %v67
  %v267 = vunpack.c.l.b16 %v68
  %v268 = vunpack.c.l.b16 %v69
  %v269 = vunpack.c.l.b16 %v70
  %v270 = vunpack.c.l.b16 %v71
  %v271 = vunpack.c.l.b16 %v72
  %v272 = vunpack.c.l.b16 %v73
  %v273 = vunpack.c.l.b16 %v74
  %v274 = vunpack.c.l.b16 %v75
  %v275 = vunpack.c.l.b16 %v76
  %v276 = vunpack.c.l.b16 %v77
  %v277 = vunpack.c.l.b16 %v78
  %v278 = vunpack.c.l.b16 %v79
  %v279 = vunpack.c.l.b16 %v80
  %v280 = vunpack.c.l.b16 %v81
  %v281 = vunpack.c.l.b16 %v82
  %v282 = vpack.c.b16 %v247, %v246
  %v283 = vpack.c.b16 %v249, %v248
  %v284 = vpack.c.b16 %v251, %v250
  %v285 = vpack.c.b16 %v253, %v252
  %v286 = vpack.c.b16 %v255, %v254
  %v287 = vpack.c.b16 %v257, %v256
  %v288 = vpack.c.b16 %v259, %v258
  %v289 = vpack.c.b16 %v261, %v260
  %v290 = vpack.c.b16 %v263, %v262
  %v291 = vpack.c.b16 %v265, %v264
  %v292 = vpack.c.b16 %v267, %v266
  %v293 = vpack.c.b16 %v269, %v268
  %v294 = vpack.c.b16 %v271, %v270
  %v295 = vpack.c.b16 %v273, %v272
  %v296 = vpack.c.b16 %v275, %v274
  %v297 = vpack.c.b16 %v277, %v276
  %v298 = vpack.c.b16 %v279, %v278
  %v299 = vpack.c.b16 %v281, %v280
  %vm318 = vcmask 261120
  %v320 = vsel %vm318, %v172, 0
  %v323 = vsel %vm318, %v175, 0
  %v326 = vsel %vm318, %v178, 0
  %v329 = vsel %vm318, %v181, 0
  %v332 = vsel %vm318, %v184, 0
  %v335 = vsel %vm318, %v187, 0
  %v338 = vsel %vm318, %v190, 0
  %v341 = vsel %vm318, %v193, 0
  %343 = vmatprep.subr.bf16.mxu0 0
  %344 = vmatpush1.bf16.msra.mxu0 %v282
  %345 = vmatprep.subr.bf16.mxu0 0
  %346 = vmatpush1.bf16.msra.mxu0 %v283
  %347 = vmatprep.subr.bf16.mxu0 0
  %348 = vmatpush1.bf16.msra.mxu0 %v284
  %349 = vmatprep.subr.bf16.mxu0 0
  %350 = vmatpush1.bf16.msra.mxu0 %v285
  %351 = vmatprep.subr.bf16.mxu0 0
  %352 = vmatpush1.bf16.msra.mxu0 %v286
  %353 = vmatprep.subr.bf16.mxu0 0
  %354 = vmatpush1.bf16.msra.mxu0 %v287
  %355 = vmatprep.subr.bf16.mxu0 0
  %356 = vmatpush1.bf16.msra.mxu0 %v288
  %357 = vmatprep.subr.bf16.mxu0 0
  %358 = vmatpush1.bf16.msra.mxu0 %v289
  %359 = vmatprep.subr.bf16.mxu0 0
  %360 = vmatpush1.bf16.msra.mxu0 %v290
  %361 = vmatprep.subr.bf16.mxu0 0
  %362 = vmatpush1.bf16.msra.mxu0 %v291
  %363 = vmatprep.subr.bf16.mxu0 0
  %364 = vmatpush1.bf16.msra.mxu0 %v292
  %365 = vmatprep.subr.bf16.mxu0 0
  %366 = vmatpush1.bf16.msra.mxu0 %v293
  %367 = vmatprep.subr.bf16.mxu0 0
  %368 = vmatpush1.bf16.msra.mxu0 %v294
  %369 = vmatprep.subr.bf16.mxu0 0
  %370 = vmatpush1.bf16.msra.mxu0 %v295
  %371 = vmatprep.subr.bf16.mxu0 0
  %372 = vmatpush1.bf16.msra.mxu0 %v296
  %373 = vmatprep.subr.bf16.mxu0 0
  %374 = vmatpush1.bf16.msra.mxu0 %v297
  %375 = vmatprep.mubr.bf16.mxu0 %v171
  %376 = vmatmul.mubr.bf16.gmra.mrb[0].mxu0 %v170
  %v377 = vpop.f32.mrb[0].mxu0
  %v378 = vadd.f32 %v88, %v377
  %v379 = vpop.f32.mrb[0].mxu0
  %v380 = vpop.f32.mrb[0].mxu0
  %v381 = vadd.f32 %v88, %v380
  %v382 = vpop.f32.mrb[0].mxu0
  %383 = vmatprep.mubr.bf16.mxu0 %v174
  %384 = vmatmul.mubr.bf16.gmra.mrb[0].mxu0 %v173
  %v385 = vpop.f32.mrb[0].mxu0
  %v386 = vadd.f32 %v88, %v385
  %v387 = vpop.f32.mrb[0].mxu0
  %v388 = vpop.f32.mrb[0].mxu0
  %v389 = vadd.f32 %v88, %v388
  %v390 = vpop.f32.mrb[0].mxu0
  %391 = vmatprep.mubr.bf16.mxu0 %v177
  %392 = vmatmul.mubr.bf16.gmra.mrb[0].mxu0 %v176
  %v393 = vpop.f32.mrb[0].mxu0
  %v394 = vadd.f32 %v88, %v393
  %v395 = vpop.f32.mrb[0].mxu0
  %v396 = vpop.f32.mrb[0].mxu0
  %v397 = vadd.f32 %v88, %v396
  %v398 = vpop.f32.mrb[0].mxu0
  %399 = vmatprep.mubr.bf16.mxu0 %v180
  %400 = vmatmul.mubr.bf16.gmra.mrb[0].mxu0 %v179
  %v401 = vpop.f32.mrb[0].mxu0
  %v402 = vadd.f32 %v88, %v401
  %v403 = vpop.f32.mrb[0].mxu0
  %v404 = vpop.f32.mrb[0].mxu0
  %v405 = vadd.f32 %v88, %v404
  %v406 = vpop.f32.mrb[0].mxu0
  %407 = vmatprep.mubr.bf16.mxu0 %v183
  %408 = vmatmul.mubr.bf16.gmra.mrb[0].mxu0 %v182
  %v409 = vpop.f32.mrb[0].mxu0
  %v410 = vadd.f32 %v88, %v409
  %v411 = vpop.f32.mrb[0].mxu0
  %v412 = vpop.f32.mrb[0].mxu0
  %v413 = vadd.f32 %v88, %v412
  %v414 = vpop.f32.mrb[0].mxu0
  %415 = vmatprep.mubr.bf16.mxu0 %v186
  %416 = vmatmul.mubr.bf16.gmra.mrb[0].mxu0 %v185
  %v417 = vpop.f32.mrb[0].mxu0
  %v418 = vadd.f32 %v88, %v417
  %v419 = vpop.f32.mrb[0].mxu0
  %v420 = vpop.f32.mrb[0].mxu0
  %v421 = vadd.f32 %v88, %v420
  %v422 = vpop.f32.mrb[0].mxu0
  %423 = vmatprep.mubr.bf16.mxu0 %v189
  %424 = vmatmul.mubr.bf16.gmra.mrb[0].mxu0 %v188
  %v425 = vpop.f32.mrb[0].mxu0
  %v426 = vadd.f32 %v88, %v425
  %v427 = vpop.f32.mrb[0].mxu0
  %v428 = vpop.f32.mrb[0].mxu0
  %v429 = vadd.f32 %v88, %v428
  %v430 = vpop.f32.mrb[0].mxu0
  %431 = vmatprep.mubr.bf16.mxu0 %v192
  %432 = vmatmul.mubr.bf16.gmra.mrb[0].mxu0 %v191
  %v433 = vpop.f32.mrb[0].mxu0
  %v434 = vadd.f32 %v88, %v433
  %v435 = vpop.f32.mrb[0].mxu0
  %v436 = vpop.f32.mrb[0].mxu0
  %v437 = vadd.f32 %v88, %v436
  %v438 = vpop.f32.mrb[0].mxu0
  %439 = vdwg.mxu0
  %440 = vmatprep.subr.bf16.mxu0 0
  %441 = vmatpush1.bf16.msra.mxu0 %v298
  %442 = vmatprep.subr.bf16.mxu0 0
  %443 = vmatpush1.bf16.msra.mxu0 %v299
  %444 = vmatprep.subr.bf16.mxu0 0
  %445 = vmatpush1.bf16.msra.mxu0 0
  %446 = vmatprep.subr.bf16.mxu0 0
  %447 = vmatpush1.bf16.msra.mxu0 0
  %448 = vmatprep.subr.bf16.mxu0 0
  %449 = vmatpush1.bf16.msra.mxu0 0
  %450 = vmatprep.subr.bf16.mxu0 0
  %451 = vmatpush1.bf16.msra.mxu0 0
  %452 = vmatprep.subr.bf16.mxu0 0
  %453 = vmatpush1.bf16.msra.mxu0 0
  %454 = vmatprep.subr.bf16.mxu0 0
  %455 = vmatpush1.bf16.msra.mxu0 0
  %456 = vmatprep.subr.bf16.mxu0 0
  %457 = vmatpush1.bf16.msra.mxu0 0
  %458 = vmatprep.subr.bf16.mxu0 0
  %459 = vmatpush1.bf16.msra.mxu0 0
  %460 = vmatprep.subr.bf16.mxu0 0
  %461 = vmatpush1.bf16.msra.mxu0 0
  %462 = vmatprep.subr.bf16.mxu0 0
  %463 = vmatpush1.bf16.msra.mxu0 0
  %464 = vmatprep.subr.bf16.mxu0 0
  %465 = vmatpush1.bf16.msra.mxu0 0
  %466 = vmatprep.subr.bf16.mxu0 0
  %467 = vmatpush1.bf16.msra.mxu0 0
  %468 = vmatprep.subr.bf16.mxu0 0
  %469 = vmatpush1.bf16.msra.mxu0 0
  %470 = vmatprep.subr.bf16.mxu0 0
  %471 = vmatpush1.bf16.msra.mxu0 0
  %472 = vmatprep.mubr.bf16.mxu0 0
  %473 = vmatmul.mubr.bf16.gmra.mrb[0].mxu0 %v320
  %v474 = vpop.f32.mrb[0].mxu0
  %v475 = vadd.f32 %v378, %v474
  %v476 = vpop.f32.mrb[0].mxu0
  %v477 = vpop.f32.mrb[0].mxu0
  %v478 = vadd.f32 %v381, %v477
  %v479 = vpop.f32.mrb[0].mxu0
  %480 = vmatprep.mubr.bf16.mxu0 0
  %481 = vmatmul.mubr.bf16.gmra.mrb[0].mxu0 %v323
  %v482 = vpop.f32.mrb[0].mxu0
  %v483 = vadd.f32 %v386, %v482
  %v484 = vpop.f32.mrb[0].mxu0
  %v485 = vpop.f32.mrb[0].mxu0
  %v486 = vadd.f32 %v389, %v485
  %v487 = vpop.f32.mrb[0].mxu0
  %488 = vmatprep.mubr.bf16.mxu0 0
  %489 = vmatmul.mubr.bf16.gmra.mrb[0].mxu0 %v326
  %v490 = vpop.f32.mrb[0].mxu0
  %v491 = vadd.f32 %v394, %v490
  %v492 = vpop.f32.mrb[0].mxu0
  %v493 = vpop.f32.mrb[0].mxu0
  %v494 = vadd.f32 %v397, %v493
  %v495 = vpop.f32.mrb[0].mxu0
  %496 = vmatprep.mubr.bf16.mxu0 0
  %497 = vmatmul.mubr.bf16.gmra.mrb[0].mxu0 %v329
  %v498 = vpop.f32.mrb[0].mxu0
  %v499 = vadd.f32 %v402, %v498
  %v500 = vpop.f32.mrb[0].mxu0
  %v501 = vpop.f32.mrb[0].mxu0
  %v502 = vadd.f32 %v405, %v501
  %v503 = vpop.f32.mrb[0].mxu0
  %504 = vmatprep.mubr.bf16.mxu0 0
  %505 = vmatmul.mubr.bf16.gmra.mrb[0].mxu0 %v332
  %v506 = vpop.f32.mrb[0].mxu0
  %v507 = vadd.f32 %v410, %v506
  %v508 = vpop.f32.mrb[0].mxu0
  %v509 = vpop.f32.mrb[0].mxu0
  %v510 = vadd.f32 %v413, %v509
  %v511 = vpop.f32.mrb[0].mxu0
  %512 = vmatprep.mubr.bf16.mxu0 0
  %513 = vmatmul.mubr.bf16.gmra.mrb[0].mxu0 %v335
  %v514 = vpop.f32.mrb[0].mxu0
  %v515 = vadd.f32 %v418, %v514
  %v516 = vpop.f32.mrb[0].mxu0
  %v517 = vpop.f32.mrb[0].mxu0
  %v518 = vadd.f32 %v421, %v517
  %v519 = vpop.f32.mrb[0].mxu0
  %520 = vmatprep.mubr.bf16.mxu0 0
  %521 = vmatmul.mubr.bf16.gmra.mrb[0].mxu0 %v338
  %v522 = vpop.f32.mrb[0].mxu0
  %v523 = vadd.f32 %v426, %v522
  %v524 = vpop.f32.mrb[0].mxu0
  %v525 = vpop.f32.mrb[0].mxu0
  %v526 = vadd.f32 %v429, %v525
  %v527 = vpop.f32.mrb[0].mxu0
  %528 = vmatprep.mubr.bf16.mxu0 0
  %529 = vmatmul.mubr.bf16.gmra.mrb[0].mxu0 %v341
  %v530 = vpop.f32.mrb[0].mxu0
  %v531 = vadd.f32 %v434, %v530
  %v532 = vpop.f32.mrb[0].mxu0
  %v533 = vpop.f32.mrb[0].mxu0
  %v534 = vadd.f32 %v437, %v533
  %v535 = vpop.f32.mrb[0].mxu0
  %536 = vdwg.mxu0
  %v537 = vmax.f32 %v475, 0.0
  %v538 = vmax.f32 %v478, 0.0
  %v539 = vmax.f32 %v483, 0.0
  %v540 = vmax.f32 %v486, 0.0
  %v541 = vmax.f32 %v491, 0.0
  %v542 = vmax.f32 %v494, 0.0
  %v543 = vmax.f32 %v499, 0.0
  %v544 = vmax.f32 %v502, 0.0
  %v545 = vmax.f32 %v507, 0.0
  %v546 = vmax.f32 %v510, 0.0
  %v547 = vmax.f32 %v515, 0.0
  %v548 = vmax.f32 %v518, 0.0
  %v549 = vmax.f32 %v523, 0.0
  %v550 = vmax.f32 %v526, 0.0
  %v551 = vmax.f32 %v531, 0.0
  %v552 = vmax.f32 %v534, 0.0
  %v553 = vlaneseq
  %v554 = vand.u32 %v553, 127
  %vm555 = vcmp.lt.s32.totalorder %v554, 16
  %v556 = vtanh.pop %v537
  %v557 = vtanh.pop %v538
  %v558 = vtanh.pop %v539
  %v559 = vtanh.pop %v540
  %v560 = vtanh.pop %v541
  %v561 = vtanh.pop %v542
  %v562 = vtanh.pop %v543
  %v563 = vtanh.pop %v544
  %v564 = vtanh.pop %v545
  %v565 = vtanh.pop %v546
  %v566 = vtanh.pop %v547
  %v567 = vtanh.pop %v548
  %v568 = vtanh.pop %v549
  %v569 = vtanh.pop %v550
  %v570 = vtanh.pop %v551
  %v571 = vtanh.pop %v552
  %v572 = vsel %vm555, %v556, %v537
  %v573 = vsel %vm555, %v557, %v538
  %v574 = vsel %vm555, %v558, %v539
  %v575 = vsel %vm555, %v559, %v540
  %v576 = vsel %vm555, %v560, %v541
  %v577 = vsel %vm555, %v561, %v542
  %v578 = vsel %vm555, %v562, %v543
  %v579 = vsel %vm555, %v563, %v544
  %v580 = vsel %vm555, %v564, %v545
  %v581 = vsel %vm555, %v565, %v546
  %v582 = vsel %vm555, %v566, %v547
  %v583 = vsel %vm555, %v567, %v548
  %v584 = vsel %vm555, %v568, %v549
  %v585 = vsel %vm555, %v569, %v550
  %v586 = vsel %vm555, %v570, %v551
  %v587 = vsel %vm555, %v571, %v552
  %588 = vst [vmem:[%s3] sm:$0xff] %v572
  %589 = vst [vmem:[%s3 + $0x8] sm:$0xff] %v573
  %590 = vst [vmem:[%s3 + $0x10] sm:$0xff] %v574
  %591 = vst [vmem:[%s3 + $0x18] sm:$0xff] %v575
  %592 = vst [vmem:[%s3 + $0x20] sm:$0xff] %v576
  %593 = vst [vmem:[%s3 + $0x28] sm:$0xff] %v577
  %594 = vst [vmem:[%s3 + $0x30] sm:$0xff] %v578
  %595 = vst [vmem:[%s3 + $0x38] sm:$0xff] %v579
  %596 = vst [vmem:[%s3 + $0x40] sm:$0xff] %v580
  %597 = vst [vmem:[%s3 + $0x48] sm:$0xff] %v581
  %598 = vst [vmem:[%s3 + $0x50] sm:$0xff] %v582
  %599 = vst [vmem:[%s3 + $0x58] sm:$0xff] %v583
  %600 = vst [vmem:[%s3 + $0x60] sm:$0xff] %v584
  %601 = vst [vmem:[%s3 + $0x68] sm:$0xff] %v585
  %602 = vst [vmem:[%s3 + $0x70] sm:$0xff] %v586
  %603 = vst [vmem:[%s3 + $0x78] sm:$0xff] %v587
  // Predicated region
  $region14: #{_lambda_.28} parent=0 // pred_check
    _
  $region15: #{_lambda_.28} parent=0 // pred_check_branch
    %605 = sbr.rel (0) target = $region17
  $region16: #{_lambda_.28} parent=0 // pred_region
    _
  $region17: #{_lambda_.28} parent=0 // pred_fallthru
    _
  // Predicated region
  $region18: #{_lambda_.28} parent=0 // pred_check
    _
  $region19: #{_lambda_.28} parent=0 // pred_check_branch
    %607 = sbr.rel (0) target = $region21
  $region20: #{_lambda_.28} parent=0 // pred_region
    _
  $region21: #{_lambda_.28} parent=0 // pred_fallthru
    _

// kernel: _lambda_.32
$region0: #{_lambda_.32}
  #allocation0 [shape = 'u32[]', space=smem, size = 0x4, offset = 0x4, fixed_abs, tag = 'smem constant byte address 0x4 - core index']
  #allocation1 [shape = 'u32[144,128]{1,0:T(1,128)}', space=vmem, size = 0x12000, scoped, tag = 'internal scratch']
  %s0 = inlined_call_operand.vmem [shape: bf16[128,288], index: 0, kind: input, shape index: {}]
  %s1 = inlined_call_operand.vmem [shape: bf16[288,128], index: 1, kind: input, shape index: {}]
  %s2 = inlined_call_operand.vmem [shape: f32[1,128], index: 2, kind: input, shape index: {}]
  %s3 = inlined_call_operand.vmem [shape: f32[128,128], index: 3, kind: output, shape index: {}]
  %s4 = sld [smem:[#allocation0]]
  $region22: #{_lambda_.32} parent=0
    _
  %s6 = ssub.s32 1, %s4
  %s7 = scalar_select 0, %s6, %s4
  // Predicated region
  $region2: #{_lambda_.32} parent=0 // pred_check
    _
  $region3: #{_lambda_.32} parent=0 // pred_check_branch
    %9 = sbr.rel (0) target = $region5
  $region4: #{_lambda_.32} parent=0 // pred_region
    _
  $region5: #{_lambda_.32} parent=0 // pred_fallthru
    _
  // Predicated region
  $region6: #{_lambda_.32} parent=0 // pred_check
    _
  $region7: #{_lambda_.32} parent=0 // pred_check_branch
    %11 = sbr.rel (0) target = $region9
  $region8: #{_lambda_.32} parent=0 // pred_region
    _
  $region9: #{_lambda_.32} parent=0 // pred_fallthru
    _
  // Predicated region
  $region10: #{_lambda_.32} parent=0 // pred_check
    _
  $region11: #{_lambda_.32} parent=0 // pred_check_branch
    %13 = sbr.rel (0) target = $region13
  $region12: #{_lambda_.32} parent=0 // pred_region
    _
  $region13: #{_lambda_.32} parent=0 // pred_fallthru
    _
  %v15 = vld [vmem:[%s0] sm:$0xff]
  %v16 = vld [vmem:[%s0 + $0x8] sm:$0xf]
  %v17 = vld [vmem:[%s0 + $0xc] sm:$0xff]
  %v18 = vld [vmem:[%s0 + $0x14] sm:$0xf]
  %v19 = vld [vmem:[%s0 + $0x18] sm:$0xff]
  %v20 = vld [vmem:[%s0 + $0x20] sm:$0xf]
  %v21 = vld [vmem:[%s0 + $0x24] sm:$0xff]
  %v22 = vld [vmem:[%s0 + $0x2c] sm:$0xf]
  %v23 = vld [vmem:[%s0 + $0x30] sm:$0xff]
  %v24 = vld [vmem:[%s0 + $0x38] sm:$0xf]
  %v25 = vld [vmem:[%s0 + $0x3c] sm:$0xff]
  %v26 = vld [vmem:[%s0 + $0x44] sm:$0xf]
  %v27 = vld [vmem:[%s0 + $0x48] sm:$0xff]
  %v28 = vld [vmem:[%s0 + $0x50] sm:$0xf]
  %v29 = vld [vmem:[%s0 + $0x54] sm:$0xff]
  %v30 = vld [vmem:[%s0 + $0x5c] sm:$0xf]
  %v31 = vld [vmem:[%s0 + $0x60] sm:$0xff]
  %v32 = vld [vmem:[%s0 + $0x68] sm:$0xf]
  %v33 = vld [vmem:[%s0 + $0x6c] sm:$0xff]
  %v34 = vld [vmem:[%s0 + $0x74] sm:$0xf]
  %v35 = vld [vmem:[%s0 + $0x78] sm:$0xff]
  %v36 = vld [vmem:[%s0 + $0x80] sm:$0xf]
  %v37 = vld [vmem:[%s0 + $0x84] sm:$0xff]
  %v38 = vld [vmem:[%s0 + $0x8c] sm:$0xf]
  %v39 = vld [vmem:[%s0 + $0x90] sm:$0xff]
  %v40 = vld [vmem:[%s0 + $0x98] sm:$0xf]
  %v41 = vld [vmem:[%s0 + $0x9c] sm:$0xff]
  %v42 = vld [vmem:[%s0 + $0xa4] sm:$0xf]
  %v43 = vld [vmem:[%s0 + $0xa8] sm:$0xff]
  %v44 = vld [vmem:[%s0 + $0xb0] sm:$0xf]
  %v45 = vld [vmem:[%s0 + $0xb4] sm:$0xff]
  %v46 = vld [vmem:[%s0 + $0xbc] sm:$0xf]
  %v47 = vld [vmem:[%s1] sm:$0xf]
  %v48 = vld [vmem:[%s1 + $0x4] sm:$0xf]
  %v49 = vld [vmem:[%s1 + $0x8] sm:$0xf]
  %v50 = vld [vmem:[%s1 + $0xc] sm:$0xf]
  %v51 = vld [vmem:[%s1 + $0x10] sm:$0xf]
  %v52 = vld [vmem:[%s1 + $0x14] sm:$0xf]
  %v53 = vld [vmem:[%s1 + $0x18] sm:$0xf]
  %v54 = vld [vmem:[%s1 + $0x1c] sm:$0xf]
  %v55 = vld [vmem:[%s1 + $0x20] sm:$0xf]
  %v56 = vld [vmem:[%s1 + $0x24] sm:$0xf]
  %v57 = vld [vmem:[%s1 + $0x28] sm:$0xf]
  %v58 = vld [vmem:[%s1 + $0x2c] sm:$0xf]
  %v59 = vld [vmem:[%s1 + $0x30] sm:$0xf]
  %v60 = vld [vmem:[%s1 + $0x34] sm:$0xf]
  %v61 = vld [vmem:[%s1 + $0x38] sm:$0xf]
  %v62 = vld [vmem:[%s1 + $0x3c] sm:$0xf]
  %v63 = vld [vmem:[%s1 + $0x40] sm:$0xf]
  %v64 = vld [vmem:[%s1 + $0x44] sm:$0xf]
  %v65 = vld [vmem:[%s1 + $0x48] sm:$0xf]
  %v66 = vld [vmem:[%s1 + $0x4c] sm:$0xf]
  %v67 = vld [vmem:[%s1 + $0x50] sm:$0xf]
  %v68 = vld [vmem:[%s1 + $0x54] sm:$0xf]
  %v69 = vld [vmem:[%s1 + $0x58] sm:$0xf]
  %v70 = vld [vmem:[%s1 + $0x5c] sm:$0xf]
  %v71 = vld [vmem:[%s1 + $0x60] sm:$0xf]
  %v72 = vld [vmem:[%s1 + $0x64] sm:$0xf]
  %v73 = vld [vmem:[%s1 + $0x68] sm:$0xf]
  %v74 = vld [vmem:[%s1 + $0x6c] sm:$0xf]
  %v75 = vld [vmem:[%s1 + $0x70] sm:$0xf]
  %v76 = vld [vmem:[%s1 + $0x74] sm:$0xf]
  %v77 = vld [vmem:[%s1 + $0x78] sm:$0xf]
  %v78 = vld [vmem:[%s1 + $0x7c] sm:$0xf]
  %v79 = vld [vmem:[%s1 + $0x80] sm:$0xf]
  %v80 = vld [vmem:[%s1 + $0x84] sm:$0xf]
  %v81 = vld [vmem:[%s1 + $0x88] sm:$0xf]
  %v82 = vld [vmem:[%s1 + $0x8c] sm:$0xf]
  %v83 = vld [vmem:[%s2] sm:$0x1]
  %v85 = vlaneseq
  %v86 = vshrl.u32 %v85, 7
  %v87 = vsub.s32 0, %v86
  %v88 = vrot.slane %v83, %v87
  %v122 = vunpack.c.l.b16 %v15
  %v123 = vunpack.c.h.b16 %v15
  %v124 = vunpack.c.l.b16 %v16
  %v125 = vunpack.c.l.b16 %v17
  %v126 = vunpack.c.h.b16 %v17
  %v127 = vunpack.c.l.b16 %v18
  %v128 = vunpack.c.l.b16 %v19
  %v129 = vunpack.c.h.b16 %v19
  %v130 = vunpack.c.l.b16 %v20
  %v131 = vunpack.c.l.b16 %v21
  %v132 = vunpack.c.h.b16 %v21
  %v133 = vunpack.c.l.b16 %v22
  %v134 = vunpack.c.l.b16 %v23
  %v135 = vunpack.c.h.b16 %v23
  %v136 = vunpack.c.l.b16 %v24
  %v137 = vunpack.c.l.b16 %v25
  %v138 = vunpack.c.h.b16 %v25
  %v139 = vunpack.c.l.b16 %v26
  %v140 = vunpack.c.l.b16 %v27
  %v141 = vunpack.c.h.b16 %v27
  %v142 = vunpack.c.l.b16 %v28
  %v143 = vunpack.c.l.b16 %v29
  %v144 = vunpack.c.h.b16 %v29
  %v145 = vunpack.c.l.b16 %v30
  %v146 = vunpack.c.l.b16 %v31
  %v147 = vunpack.c.h.b16 %v31
  %v148 = vunpack.c.l.b16 %v32
  %v149 = vunpack.c.l.b16 %v33
  %v150 = vunpack.c.h.b16 %v33
  %v151 = vunpack.c.l.b16 %v34
  %v152 = vunpack.c.l.b16 %v35
  %v153 = vunpack.c.h.b16 %v35
  %v154 = vunpack.c.l.b16 %v36
  %v155 = vunpack.c.l.b16 %v37
  %v156 = vunpack.c.h.b16 %v37
  %v157 = vunpack.c.l.b16 %v38
  %v158 = vunpack.c.l.b16 %v39
  %v159 = vunpack.c.h.b16 %v39
  %v160 = vunpack.c.l.b16 %v40
  %v161 = vunpack.c.l.b16 %v41
  %v162 = vunpack.c.h.b16 %v41
  %v163 = vunpack.c.l.b16 %v42
  %v164 = vunpack.c.l.b16 %v43
  %v165 = vunpack.c.h.b16 %v43
  %v166 = vunpack.c.l.b16 %v44
  %v167 = vunpack.c.l.b16 %v45
  %v168 = vunpack.c.h.b16 %v45
  %v169 = vunpack.c.l.b16 %v46
  %v170 = vpack.c.b16 %v125, %v122
  %v171 = vpack.c.b16 %v126, %v123
  %v172 = vpack.c.b16 %v127, %v124
  %v173 = vpack.c.b16 %v131, %v128
  %v174 = vpack.c.b16 %v132, %v129
  %v175 = vpack.c.b16 %v133, %v130
  %v176 = vpack.c.b16 %v137, %v134
  %v177 = vpack.c.b16 %v138, %v135
  %v178 = vpack.c.b16 %v139, %v136
  %v179 = vpack.c.b16 %v143, %v140
  %v180 = vpack.c.b16 %v144, %v141
  %v181 = vpack.c.b16 %v145, %v142
  %v182 = vpack.c.b16 %v149, %v146
  %v183 = vpack.c.b16 %v150, %v147
  %v184 = vpack.c.b16 %v151, %v148
  %v185 = vpack.c.b16 %v155, %v152
  %v186 = vpack.c.b16 %v156, %v153
  %v187 = vpack.c.b16 %v157, %v154
  %v188 = vpack.c.b16 %v161, %v158
  %v189 = vpack.c.b16 %v162, %v159
  %v190 = vpack.c.b16 %v163, %v160
  %v191 = vpack.c.b16 %v167, %v164
  %v192 = vpack.c.b16 %v168, %v165
  %v193 = vpack.c.b16 %v169, %v166
  %v246 = vunpack.c.l.b16 %v47
  %v247 = vunpack.c.l.b16 %v48
  %v248 = vunpack.c.l.b16 %v49
  %v249 = vunpack.c.l.b16 %v50
  %v250 = vunpack.c.l.b16 %v51
  %v251 = vunpack.c.l.b16 %v52
  %v252 = vunpack.c.l.b16 %v53
  %v253 = vunpack.c.l.b16 %v54
  %v254 = vunpack.c.l.b16 %v55
  %v255 = vunpack.c.l.b16 %v56
  %v256 = vunpack.c.l.b16 %v57
  %v257 = vunpack.c.l.b16 %v58
  %v258 = vunpack.c.l.b16 %v59
  %v259 = vunpack.c.l.b16 %v60
  %v260 = vunpack.c.l.b16 %v61
  %v261 = vunpack.c.l.b16 %v62
  %v262 = vunpack.c.l.b16 %v63
  %v263 = vunpack.c.l.b16 %v64
  %v264 = vunpack.c.l.b16 %v65
  %v265 = vunpack.c.l.b16 %v66
  %v266 = vunpack.c.l.b16 %v67
  %v267 = vunpack.c.l.b16 %v68
  %v268 = vunpack.c.l.b16 %v69
  %v269 = vunpack.c.l.b16 %v70
  %v270 = vunpack.c.l.b16 %v71
  %v271 = vunpack.c.l.b16 %v72
  %v272 = vunpack.c.l.b16 %v73
  %v273 = vunpack.c.l.b16 %v74
  %v274 = vunpack.c.l.b16 %v75
  %v275 = vunpack.c.l.b16 %v76
  %v276 = vunpack.c.l.b16 %v77
  %v277 = vunpack.c.l.b16 %v78
  %v278 = vunpack.c.l.b16 %v79
  %v279 = vunpack.c.l.b16 %v80
  %v280 = vunpack.c.l.b16 %v81
  %v281 = vunpack.c.l.b16 %v82
  %v282 = vpack.c.b16 %v247, %v246
  %v283 = vpack.c.b16 %v249, %v248
  %v284 = vpack.c.b16 %v251, %v250
  %v285 = vpack.c.b16 %v253, %v252
  %v286 = vpack.c.b16 %v255, %v254
  %v287 = vpack.c.b16 %v257, %v256
  %v288 = vpack.c.b16 %v259, %v258
  %v289 = vpack.c.b16 %v261, %v260
  %v290 = vpack.c.b16 %v263, %v262
  %v291 = vpack.c.b16 %v265, %v264
  %v292 = vpack.c.b16 %v267, %v266
  %v293 = vpack.c.b16 %v269, %v268
  %v294 = vpack.c.b16 %v271, %v270
  %v295 = vpack.c.b16 %v273, %v272
  %v296 = vpack.c.b16 %v275, %v274
  %v297 = vpack.c.b16 %v277, %v276
  %v298 = vpack.c.b16 %v279, %v278
  %v299 = vpack.c.b16 %v281, %v280
  %vm318 = vcmask 261120
  %v320 = vsel %vm318, %v172, 0
  %v323 = vsel %vm318, %v175, 0
  %v326 = vsel %vm318, %v178, 0
  %v329 = vsel %vm318, %v181, 0
  %v332 = vsel %vm318, %v184, 0
  %v335 = vsel %vm318, %v187, 0
  %v338 = vsel %vm318, %v190, 0
  %v341 = vsel %vm318, %v193, 0
  %343 = vmatprep.subr.bf16.mxu0 0
  %344 = vmatpush1.bf16.msra.mxu0 %v282
  %345 = vmatprep.subr.bf16.mxu0 0
  %346 = vmatpush1.bf16.msra.mxu0 %v283
  %347 = vmatprep.subr.bf16.mxu0 0
  %348 = vmatpush1.bf16.msra.mxu0 %v284
  %349 = vmatprep.subr.bf16.mxu0 0
  %350 = vmatpush1.bf16.msra.mxu0 %v285
  %351 = vmatprep.subr.bf16.mxu0 0
  %352 = vmatpush1.bf16.msra.mxu0 %v286
  %353 = vmatprep.subr.bf16.mxu0 0
  %354 = vmatpush1.bf16.msra.mxu0 %v287
  %355 = vmatprep.subr.bf16.mxu0 0
  %356 = vmatpush1.bf16.msra.mxu0 %v288
  %357 = vmatprep.subr.bf16.mxu0 0
  %358 = vmatpush1.bf16.msra.mxu0 %v289
  %359 = vmatprep.subr.bf16.mxu0 0
  %360 = vmatpush1.bf16.msra.mxu0 %v290
  %361 = vmatprep.subr.bf16.mxu0 0
  %362 = vmatpush1.bf16.msra.mxu0 %v291
  %363 = vmatprep.subr.bf16.mxu0 0
  %364 = vmatpush1.bf16.msra.mxu0 %v292
  %365 = vmatprep.subr.bf16.mxu0 0
  %366 = vmatpush1.bf16.msra.mxu0 %v293
  %367 = vmatprep.subr.bf16.mxu0 0
  %368 = vmatpush1.bf16.msra.mxu0 %v294
  %369 = vmatprep.subr.bf16.mxu0 0
  %370 = vmatpush1.bf16.msra.mxu0 %v295
  %371 = vmatprep.subr.bf16.mxu0 0
  %372 = vmatpush1.bf16.msra.mxu0 %v296
  %373 = vmatprep.subr.bf16.mxu0 0
  %374 = vmatpush1.bf16.msra.mxu0 %v297
  %375 = vmatprep.mubr.bf16.mxu0 %v171
  %376 = vmatmul.mubr.bf16.gmra.mrb[0].mxu0 %v170
  %v377 = vpop.f32.mrb[0].mxu0
  %v378 = vadd.f32 %v88, %v377
  %v379 = vpop.f32.mrb[0].mxu0
  %v380 = vpop.f32.mrb[0].mxu0
  %v381 = vadd.f32 %v88, %v380
  %v382 = vpop.f32.mrb[0].mxu0
  %383 = vmatprep.mubr.bf16.mxu0 %v174
  %384 = vmatmul.mubr.bf16.gmra.mrb[0].mxu0 %v173
  %v385 = vpop.f32.mrb[0].mxu0
  %v386 = vadd.f32 %v88, %v385
  %v387 = vpop.f32.mrb[0].mxu0
  %v388 = vpop.f32.mrb[0].mxu0
  %v389 = vadd.f32 %v88, %v388
  %v390 = vpop.f32.mrb[0].mxu0
  %391 = vmatprep.mubr.bf16.mxu0 %v177
  %392 = vmatmul.mubr.bf16.gmra.mrb[0].mxu0 %v176
  %v393 = vpop.f32.mrb[0].mxu0
  %v394 = vadd.f32 %v88, %v393
  %v395 = vpop.f32.mrb[0].mxu0
  %v396 = vpop.f32.mrb[0].mxu0
  %v397 = vadd.f32 %v88, %v396
  %v398 = vpop.f32.mrb[0].mxu0
  %399 = vmatprep.mubr.bf16.mxu0 %v180
  %400 = vmatmul.mubr.bf16.gmra.mrb[0].mxu0 %v179
  %v401 = vpop.f32.mrb[0].mxu0
  %v402 = vadd.f32 %v88, %v401
  %v403 = vpop.f32.mrb[0].mxu0
  %v404 = vpop.f32.mrb[0].mxu0
  %v405 = vadd.f32 %v88, %v404
  %v406 = vpop.f32.mrb[0].mxu0
  %407 = vmatprep.mubr.bf16.mxu0 %v183
  %408 = vmatmul.mubr.bf16.gmra.mrb[0].mxu0 %v182
  %v409 = vpop.f32.mrb[0].mxu0
  %v410 = vadd.f32 %v88, %v409
  %v411 = vpop.f32.mrb[0].mxu0
  %v412 = vpop.f32.mrb[0].mxu0
  %v413 = vadd.f32 %v88, %v412
  %v414 = vpop.f32.mrb[0].mxu0
  %415 = vmatprep.mubr.bf16.mxu0 %v186
  %416 = vmatmul.mubr.bf16.gmra.mrb[0].mxu0 %v185
  %v417 = vpop.f32.mrb[0].mxu0
  %v418 = vadd.f32 %v88, %v417
  %v419 = vpop.f32.mrb[0].mxu0
  %v420 = vpop.f32.mrb[0].mxu0
  %v421 = vadd.f32 %v88, %v420
  %v422 = vpop.f32.mrb[0].mxu0
  %423 = vmatprep.mubr.bf16.mxu0 %v189
  %424 = vmatmul.mubr.bf16.gmra.mrb[0].mxu0 %v188
  %v425 = vpop.f32.mrb[0].mxu0
  %v426 = vadd.f32 %v88, %v425
  %v427 = vpop.f32.mrb[0].mxu0
  %v428 = vpop.f32.mrb[0].mxu0
  %v429 = vadd.f32 %v88, %v428
  %v430 = vpop.f32.mrb[0].mxu0
  %431 = vmatprep.mubr.bf16.mxu0 %v192
  %432 = vmatmul.mubr.bf16.gmra.mrb[0].mxu0 %v191
  %v433 = vpop.f32.mrb[0].mxu0
  %v434 = vadd.f32 %v88, %v433
  %v435 = vpop.f32.mrb[0].mxu0
  %v436 = vpop.f32.mrb[0].mxu0
  %v437 = vadd.f32 %v88, %v436
  %v438 = vpop.f32.mrb[0].mxu0
  %439 = vdwg.mxu0
  %440 = vmatprep.subr.bf16.mxu0 0
  %441 = vmatpush1.bf16.msra.mxu0 %v298
  %442 = vmatprep.subr.bf16.mxu0 0
  %443 = vmatpush1.bf16.msra.mxu0 %v299
  %444 = vmatprep.subr.bf16.mxu0 0
  %445 = vmatpush1.bf16.msra.mxu0 0
  %446 = vmatprep.subr.bf16.mxu0 0
  %447 = vmatpush1.bf16.msra.mxu0 0
  %448 = vmatprep.subr.bf16.mxu0 0
  %449 = vmatpush1.bf16.msra.mxu0 0
  %450 = vmatprep.subr.bf16.mxu0 0
  %451 = vmatpush1.bf16.msra.mxu0 0
  %452 = vmatprep.subr.bf16.mxu0 0
  %453 = vmatpush1.bf16.msra.mxu0 0
  %454 = vmatprep.subr.bf16.mxu0 0
  %455 = vmatpush1.bf16.msra.mxu0 0
  %456 = vmatprep.subr.bf16.mxu0 0
  %457 = vmatpush1.bf16.msra.mxu0 0
  %458 = vmatprep.subr.bf16.mxu0 0
  %459 = vmatpush1.bf16.msra.mxu0 0
  %460 = vmatprep.subr.bf16.mxu0 0
  %461 = vmatpush1.bf16.msra.mxu0 0
  %462 = vmatprep.subr.bf16.mxu0 0
  %463 = vmatpush1.bf16.msra.mxu0 0
  %464 = vmatprep.subr.bf16.mxu0 0
  %465 = vmatpush1.bf16.msra.mxu0 0
  %466 = vmatprep.subr.bf16.mxu0 0
  %467 = vmatpush1.bf16.msra.mxu0 0
  %468 = vmatprep.subr.bf16.mxu0 0
  %469 = vmatpush1.bf16.msra.mxu0 0
  %470 = vmatprep.subr.bf16.mxu0 0
  %471 = vmatpush1.bf16.msra.mxu0 0
  %472 = vmatprep.mubr.bf16.mxu0 0
  %473 = vmatmul.mubr.bf16.gmra.mrb[0].mxu0 %v320
  %v474 = vpop.f32.mrb[0].mxu0
  %v475 = vadd.f32 %v378, %v474
  %v476 = vpop.f32.mrb[0].mxu0
  %v477 = vpop.f32.mrb[0].mxu0
  %v478 = vadd.f32 %v381, %v477
  %v479 = vpop.f32.mrb[0].mxu0
  %480 = vmatprep.mubr.bf16.mxu0 0
  %481 = vmatmul.mubr.bf16.gmra.mrb[0].mxu0 %v323
  %v482 = vpop.f32.mrb[0].mxu0
  %v483 = vadd.f32 %v386, %v482
  %v484 = vpop.f32.mrb[0].mxu0
  %v485 = vpop.f32.mrb[0].mxu0
  %v486 = vadd.f32 %v389, %v485
  %v487 = vpop.f32.mrb[0].mxu0
  %488 = vmatprep.mubr.bf16.mxu0 0
  %489 = vmatmul.mubr.bf16.gmra.mrb[0].mxu0 %v326
  %v490 = vpop.f32.mrb[0].mxu0
  %v491 = vadd.f32 %v394, %v490
  %v492 = vpop.f32.mrb[0].mxu0
  %v493 = vpop.f32.mrb[0].mxu0
  %v494 = vadd.f32 %v397, %v493
  %v495 = vpop.f32.mrb[0].mxu0
  %496 = vmatprep.mubr.bf16.mxu0 0
  %497 = vmatmul.mubr.bf16.gmra.mrb[0].mxu0 %v329
  %v498 = vpop.f32.mrb[0].mxu0
  %v499 = vadd.f32 %v402, %v498
  %v500 = vpop.f32.mrb[0].mxu0
  %v501 = vpop.f32.mrb[0].mxu0
  %v502 = vadd.f32 %v405, %v501
  %v503 = vpop.f32.mrb[0].mxu0
  %504 = vmatprep.mubr.bf16.mxu0 0
  %505 = vmatmul.mubr.bf16.gmra.mrb[0].mxu0 %v332
  %v506 = vpop.f32.mrb[0].mxu0
  %v507 = vadd.f32 %v410, %v506
  %v508 = vpop.f32.mrb[0].mxu0
  %v509 = vpop.f32.mrb[0].mxu0
  %v510 = vadd.f32 %v413, %v509
  %v511 = vpop.f32.mrb[0].mxu0
  %512 = vmatprep.mubr.bf16.mxu0 0
  %513 = vmatmul.mubr.bf16.gmra.mrb[0].mxu0 %v335
  %v514 = vpop.f32.mrb[0].mxu0
  %v515 = vadd.f32 %v418, %v514
  %v516 = vpop.f32.mrb[0].mxu0
  %v517 = vpop.f32.mrb[0].mxu0
  %v518 = vadd.f32 %v421, %v517
  %v519 = vpop.f32.mrb[0].mxu0
  %520 = vmatprep.mubr.bf16.mxu0 0
  %521 = vmatmul.mubr.bf16.gmra.mrb[0].mxu0 %v338
  %v522 = vpop.f32.mrb[0].mxu0
  %v523 = vadd.f32 %v426, %v522
  %v524 = vpop.f32.mrb[0].mxu0
  %v525 = vpop.f32.mrb[0].mxu0
  %v526 = vadd.f32 %v429, %v525
  %v527 = vpop.f32.mrb[0].mxu0
  %528 = vmatprep.mubr.bf16.mxu0 0
  %529 = vmatmul.mubr.bf16.gmra.mrb[0].mxu0 %v341
  %v530 = vpop.f32.mrb[0].mxu0
  %v531 = vadd.f32 %v434, %v530
  %v532 = vpop.f32.mrb[0].mxu0
  %v533 = vpop.f32.mrb[0].mxu0
  %v534 = vadd.f32 %v437, %v533
  %v535 = vpop.f32.mrb[0].mxu0
  %536 = vdwg.mxu0
  %v537 = vmax.f32 %v475, 0.0
  %v538 = vmax.f32 %v478, 0.0
  %v539 = vmax.f32 %v483, 0.0
  %v540 = vmax.f32 %v486, 0.0
  %v541 = vmax.f32 %v491, 0.0
  %v542 = vmax.f32 %v494, 0.0
  %v543 = vmax.f32 %v499, 0.0
  %v544 = vmax.f32 %v502, 0.0
  %v545 = vmax.f32 %v507, 0.0
  %v546 = vmax.f32 %v510, 0.0
  %v547 = vmax.f32 %v515, 0.0
  %v548 = vmax.f32 %v518, 0.0
  %v549 = vmax.f32 %v523, 0.0
  %v550 = vmax.f32 %v526, 0.0
  %v551 = vmax.f32 %v531, 0.0
  %v552 = vmax.f32 %v534, 0.0
  %553 = vst [vmem:[%s3] sm:$0xff] %v537
  %554 = vst [vmem:[%s3 + $0x8] sm:$0xff] %v538
  %555 = vst [vmem:[%s3 + $0x10] sm:$0xff] %v539
  %556 = vst [vmem:[%s3 + $0x18] sm:$0xff] %v540
  %557 = vst [vmem:[%s3 + $0x20] sm:$0xff] %v541
  %558 = vst [vmem:[%s3 + $0x28] sm:$0xff] %v542
  %559 = vst [vmem:[%s3 + $0x30] sm:$0xff] %v543
  %560 = vst [vmem:[%s3 + $0x38] sm:$0xff] %v544
  %561 = vst [vmem:[%s3 + $0x40] sm:$0xff] %v545
  %562 = vst [vmem:[%s3 + $0x48] sm:$0xff] %v546
  %563 = vst [vmem:[%s3 + $0x50] sm:$0xff] %v547
  %564 = vst [vmem:[%s3 + $0x58] sm:$0xff] %v548
  %565 = vst [vmem:[%s3 + $0x60] sm:$0xff] %v549
  %566 = vst [vmem:[%s3 + $0x68] sm:$0xff] %v550
  %567 = vst [vmem:[%s3 + $0x70] sm:$0xff] %v551
  %568 = vst [vmem:[%s3 + $0x78] sm:$0xff] %v552
  // Predicated region
  $region14: #{_lambda_.32} parent=0 // pred_check
    _
  $region15: #{_lambda_.32} parent=0 // pred_check_branch
    %570 = sbr.rel (0) target = $region17
  $region16: #{_lambda_.32} parent=0 // pred_region
    _
  $region17: #{_lambda_.32} parent=0 // pred_fallthru
    _
  // Predicated region
  $region18: #{_lambda_.32} parent=0 // pred_check
    _
  $region19: #{_lambda_.32} parent=0 // pred_check_branch
    %572 = sbr.rel (0) target = $region21
  $region20: #{_lambda_.32} parent=0 // pred_region
    _
  $region21: #{_lambda_.32} parent=0 // pred_fallthru
    _

// kernel: _lambda_.33
$region0: #{_lambda_.33}
  #allocation0 [shape = 'u32[]', space=smem, size = 0x4, offset = 0x4, fixed_abs, tag = 'smem constant byte address 0x4 - core index']
  #allocation1 [shape = 'u32[144,128]{1,0:T(1,128)}', space=vmem, size = 0x12000, scoped, tag = 'internal scratch']
  %s0 = inlined_call_operand.vmem [shape: bf16[128,504], index: 0, kind: input, shape index: {}]
  %s1 = inlined_call_operand.vmem [shape: bf16[504,128], index: 1, kind: input, shape index: {}]
  %s2 = inlined_call_operand.vmem [shape: f32[1,128], index: 2, kind: input, shape index: {}]
  %s3 = inlined_call_operand.vmem [shape: f32[128,128], index: 3, kind: input, shape index: {}]
  %s4 = inlined_call_operand.vmem [shape: f32[128,128], index: 4, kind: output, shape index: {}]
  %s5 = sld [smem:[#allocation0]]
  $region26: #{_lambda_.33} parent=0
    _
  %s7 = ssub.s32 1, %s5
  %s8 = scalar_select 0, %s7, %s5
  // Predicated region
  $region2: #{_lambda_.33} parent=0 // pred_check
    _
  $region3: #{_lambda_.33} parent=0 // pred_check_branch
    %10 = sbr.rel (0) target = $region5
  $region4: #{_lambda_.33} parent=0 // pred_region
    _
  $region5: #{_lambda_.33} parent=0 // pred_fallthru
    _
  // Predicated region
  $region6: #{_lambda_.33} parent=0 // pred_check
    _
  $region7: #{_lambda_.33} parent=0 // pred_check_branch
    %12 = sbr.rel (0) target = $region9
  $region8: #{_lambda_.33} parent=0 // pred_region
    _
  $region9: #{_lambda_.33} parent=0 // pred_fallthru
    _
  // Predicated region
  $region10: #{_lambda_.33} parent=0 // pred_check
    _
  $region11: #{_lambda_.33} parent=0 // pred_check_branch
    %14 = sbr.rel (0) target = $region13
  $region12: #{_lambda_.33} parent=0 // pred_region
    _
  $region13: #{_lambda_.33} parent=0 // pred_fallthru
    _
  // Predicated region
  $region14: #{_lambda_.33} parent=0 // pred_check
    _
  $region15: #{_lambda_.33} parent=0 // pred_check_branch
    %16 = sbr.rel (0) target = $region17
  $region16: #{_lambda_.33} parent=0 // pred_region
    _
  $region17: #{_lambda_.33} parent=0 // pred_fallthru
    _
  %v18 = vld [vmem:[%s0] sm:$0xff]
  %v19 = vld [vmem:[%s0 + $0x8] sm:$0xff]
  %v20 = vld [vmem:[%s0 + $0x10] sm:$0xff]
  %v21 = vld [vmem:[%s0 + $0x18] sm:$0xff]
  %v22 = vld [vmem:[%s0 + $0x20] sm:$0xff]
  %v23 = vld [vmem:[%s0 + $0x28] sm:$0xff]
  %v24 = vld [vmem:[%s0 + $0x30] sm:$0xff]
  %v25 = vld [vmem:[%s0 + $0x38] sm:$0xff]
  %v26 = vld [vmem:[%s0 + $0x40] sm:$0xff]
  %v27 = vld [vmem:[%s0 + $0x48] sm:$0xff]
  %v28 = vld [vmem:[%s0 + $0x50] sm:$0xff]
  %v29 = vld [vmem:[%s0 + $0x58] sm:$0xff]
  %v30 = vld [vmem:[%s0 + $0x60] sm:$0xff]
  %v31 = vld [vmem:[%s0 + $0x68] sm:$0xff]
  %v32 = vld [vmem:[%s0 + $0x70] sm:$0xff]
  %v33 = vld [vmem:[%s0 + $0x78] sm:$0xff]
  %v34 = vld [vmem:[%s0 + $0x80] sm:$0xff]
  %v35 = vld [vmem:[%s0 + $0x88] sm:$0xff]
  %v36 = vld [vmem:[%s0 + $0x90] sm:$0xff]
  %v37 = vld [vmem:[%s0 + $0x98] sm:$0xff]
  %v38 = vld [vmem:[%s0 + $0xa0] sm:$0xff]
  %v39 = vld [vmem:[%s0 + $0xa8] sm:$0xff]
  %v40 = vld [vmem:[%s0 + $0xb0] sm:$0xff]
  %v41 = vld [vmem:[%s0 + $0xb8] sm:$0xff]
  %v42 = vld [vmem:[%s0 + $0xc0] sm:$0xff]
  %v43 = vld [vmem:[%s0 + $0xc8] sm:$0xff]
  %v44 = vld [vmem:[%s0 + $0xd0] sm:$0xff]
  %v45 = vld [vmem:[%s0 + $0xd8] sm:$0xff]
  %v46 = vld [vmem:[%s0 + $0xe0] sm:$0xff]
  %v47 = vld [vmem:[%s0 + $0xe8] sm:$0xff]
  %v48 = vld [vmem:[%s0 + $0xf0] sm:$0xff]
  %v49 = vld [vmem:[%s0 + $0xf8] sm:$0xff]
  %v50 = vld [vmem:[%s1] sm:$0xf]
  %v51 = vld [vmem:[%s1 + $0x4] sm:$0xf]
  %v52 = vld [vmem:[%s1 + $0x8] sm:$0xf]
  %v53 = vld [vmem:[%s1 + $0xc] sm:$0xf]
  %v54 = vld [vmem:[%s1 + $0x10] sm:$0xf]
  %v55 = vld [vmem:[%s1 + $0x14] sm:$0xf]
  %v56 = vld [vmem:[%s1 + $0x18] sm:$0xf]
  %v57 = vld [vmem:[%s1 + $0x1c] sm:$0xf]
  %v58 = vld [vmem:[%s1 + $0x20] sm:$0xf]
  %v59 = vld [vmem:[%s1 + $0x24] sm:$0xf]
  %v60 = vld [vmem:[%s1 + $0x28] sm:$0xf]
  %v61 = vld [vmem:[%s1 + $0x2c] sm:$0xf]
  %v62 = vld [vmem:[%s1 + $0x30] sm:$0xf]
  %v63 = vld [vmem:[%s1 + $0x34] sm:$0xf]
  %v64 = vld [vmem:[%s1 + $0x38] sm:$0xf]
  %v65 = vld [vmem:[%s1 + $0x3c] sm:$0xf]
  %v66 = vld [vmem:[%s1 + $0x40] sm:$0xf]
  %v67 = vld [vmem:[%s1 + $0x44] sm:$0xf]
  %v68 = vld [vmem:[%s1 + $0x48] sm:$0xf]
  %v69 = vld [vmem:[%s1 + $0x4c] sm:$0xf]
  %v70 = vld [vmem:[%s1 + $0x50] sm:$0xf]
  %v71 = vld [vmem:[%s1 + $0x54] sm:$0xf]
  %v72 = vld [vmem:[%s1 + $0x58] sm:$0xf]
  %v73 = vld [vmem:[%s1 + $0x5c] sm:$0xf]
  %v74 = vld [vmem:[%s1 + $0x60] sm:$0xf]
  %v75 = vld [vmem:[%s1 + $0x64] sm:$0xf]
  %v76 = vld [vmem:[%s1 + $0x68] sm:$0xf]
  %v77 = vld [vmem:[%s1 + $0x6c] sm:$0xf]
  %v78 = vld [vmem:[%s1 + $0x70] sm:$0xf]
  %v79 = vld [vmem:[%s1 + $0x74] sm:$0xf]
  %v80 = vld [vmem:[%s1 + $0x78] sm:$0xf]
  %v81 = vld [vmem:[%s1 + $0x7c] sm:$0xf]
  %v82 = vld [vmem:[%s1 + $0x80] sm:$0xf]
  %v83 = vld [vmem:[%s1 + $0x84] sm:$0xf]
  %v84 = vld [vmem:[%s1 + $0x88] sm:$0xf]
  %v85 = vld [vmem:[%s1 + $0x8c] sm:$0xf]
  %v86 = vld [vmem:[%s1 + $0x90] sm:$0xf]
  %v87 = vld [vmem:[%s1 + $0x94] sm:$0xf]
  %v88 = vld [vmem:[%s1 + $0x98] sm:$0xf]
  %v89 = vld [vmem:[%s1 + $0x9c] sm:$0xf]
  %v90 = vld [vmem:[%s1 + $0xa0] sm:$0xf]
  %v91 = vld [vmem:[%s1 + $0xa4] sm:$0xf]
  %v92 = vld [vmem:[%s1 + $0xa8] sm:$0xf]
  %v93 = vld [vmem:[%s1 + $0xac] sm:$0xf]
  %v94 = vld [vmem:[%s1 + $0xb0] sm:$0xf]
  %v95 = vld [vmem:[%s1 + $0xb4] sm:$0xf]
  %v96 = vld [vmem:[%s1 + $0xb8] sm:$0xf]
  %v97 = vld [vmem:[%s1 + $0xbc] sm:$0xf]
  %v98 = vld [vmem:[%s1 + $0xc0] sm:$0xf]
  %v99 = vld [vmem:[%s1 + $0xc4] sm:$0xf]
  %v100 = vld [vmem:[%s1 + $0xc8] sm:$0xf]
  %v101 = vld [vmem:[%s1 + $0xcc] sm:$0xf]
  %v102 = vld [vmem:[%s1 + $0xd0] sm:$0xf]
  %v103 = vld [vmem:[%s1 + $0xd4] sm:$0xf]
  %v104 = vld [vmem:[%s1 + $0xd8] sm:$0xf]
  %v105 = vld [vmem:[%s1 + $0xdc] sm:$0xf]
  %v106 = vld [vmem:[%s1 + $0xe0] sm:$0xf]
  %v107 = vld [vmem:[%s1 + $0xe4] sm:$0xf]
  %v108 = vld [vmem:[%s1 + $0xe8] sm:$0xf]
  %v109 = vld [vmem:[%s1 + $0xec] sm:$0xf]
  %v110 = vld [vmem:[%s1 + $0xf0] sm:$0xf]
  %v111 = vld [vmem:[%s1 + $0xf4] sm:$0xf]
  %v112 = vld [vmem:[%s1 + $0xf8] sm:$0xf]
  %v113 = vld [vmem:[%s2] sm:$0x1]
  %v115 = vlaneseq
  %v116 = vshrl.u32 %v115, 7
  %v117 = vsub.s32 0, %v116
  %v118 = vrot.slane %v113, %v117
  %v152 = vunpack.c.l.b16 %v18
  %v153 = vunpack.c.h.b16 %v18
  %v154 = vunpack.c.l.b16 %v19
  %v155 = vunpack.c.h.b16 %v19
  %v156 = vunpack.c.l.b16 %v20
  %v157 = vunpack.c.h.b16 %v20
  %v158 = vunpack.c.l.b16 %v21
  %v159 = vunpack.c.h.b16 %v21
  %v160 = vunpack.c.l.b16 %v22
  %v161 = vunpack.c.h.b16 %v22
  %v162 = vunpack.c.l.b16 %v23
  %v163 = vunpack.c.h.b16 %v23
  %v164 = vunpack.c.l.b16 %v24
  %v165 = vunpack.c.h.b16 %v24
  %v166 = vunpack.c.l.b16 %v25
  %v167 = vunpack.c.h.b16 %v25
  %v168 = vunpack.c.l.b16 %v26
  %v169 = vunpack.c.h.b16 %v26
  %v170 = vunpack.c.l.b16 %v27
  %v171 = vunpack.c.h.b16 %v27
  %v172 = vunpack.c.l.b16 %v28
  %v173 = vunpack.c.h.b16 %v28
  %v174 = vunpack.c.l.b16 %v29
  %v175 = vunpack.c.h.b16 %v29
  %v176 = vunpack.c.l.b16 %v30
  %v177 = vunpack.c.h.b16 %v30
  %v178 = vunpack.c.l.b16 %v31
  %v179 = vunpack.c.h.b16 %v31
  %v180 = vunpack.c.l.b16 %v32
  %v181 = vunpack.c.h.b16 %v32
  %v182 = vunpack.c.l.b16 %v33
  %v183 = vunpack.c.h.b16 %v33
  %v184 = vunpack.c.l.b16 %v34
  %v185 = vunpack.c.h.b16 %v34
  %v186 = vunpack.c.l.b16 %v35
  %v187 = vunpack.c.h.b16 %v35
  %v188 = vunpack.c.l.b16 %v36
  %v189 = vunpack.c.h.b16 %v36
  %v190 = vunpack.c.l.b16 %v37
  %v191 = vunpack.c.h.b16 %v37
  %v192 = vunpack.c.l.b16 %v38
  %v193 = vunpack.c.h.b16 %v38
  %v194 = vunpack.c.l.b16 %v39
  %v195 = vunpack.c.h.b16 %v39
  %v196 = vunpack.c.l.b16 %v40
  %v197 = vunpack.c.h.b16 %v40
  %v198 = vunpack.c.l.b16 %v41
  %v199 = vunpack.c.h.b16 %v41
  %v200 = vunpack.c.l.b16 %v42
  %v201 = vunpack.c.h.b16 %v42
  %v202 = vunpack.c.l.b16 %v43
  %v203 = vunpack.c.h.b16 %v43
  %v204 = vunpack.c.l.b16 %v44
  %v205 = vunpack.c.h.b16 %v44
  %v206 = vunpack.c.l.b16 %v45
  %v207 = vunpack.c.h.b16 %v45
  %v208 = vunpack.c.l.b16 %v46
  %v209 = vunpack.c.h.b16 %v46
  %v210 = vunpack.c.l.b16 %v47
  %v211 = vunpack.c.h.b16 %v47
  %v212 = vunpack.c.l.b16 %v48
  %v213 = vunpack.c.h.b16 %v48
  %v214 = vunpack.c.l.b16 %v49
  %v215 = vunpack.c.h.b16 %v49
  %v216 = vpack.c.b16 %v156, %v152
  %v217 = vpack.c.b16 %v157, %v153
  %v218 = vpack.c.b16 %v158, %v154
  %v219 = vpack.c.b16 %v159, %v155
  %v220 = vpack.c.b16 %v164, %v160
  %v221 = vpack.c.b16 %v165, %v161
  %v222 = vpack.c.b16 %v166, %v162
  %v223 = vpack.c.b16 %v167, %v163
  %v224 = vpack.c.b16 %v172, %v168
  %v225 = vpack.c.b16 %v173, %v169
  %v226 = vpack.c.b16 %v174, %v170
  %v227 = vpack.c.b16 %v175, %v171
  %v228 = vpack.c.b16 %v180, %v176
  %v229 = vpack.c.b16 %v181, %v177
  %v230 = vpack.c.b16 %v182, %v178
  %v231 = vpack.c.b16 %v183, %v179
  %v232 = vpack.c.b16 %v188, %v184
  %v233 = vpack.c.b16 %v189, %v185
  %v234 = vpack.c.b16 %v190, %v186
  %v235 = vpack.c.b16 %v191, %v187
  %v236 = vpack.c.b16 %v196, %v192
  %v237 = vpack.c.b16 %v197, %v193
  %v238 = vpack.c.b16 %v198, %v194
  %v239 = vpack.c.b16 %v199, %v195
  %v240 = vpack.c.b16 %v204, %v200
  %v241 = vpack.c.b16 %v205, %v201
  %v242 = vpack.c.b16 %v206, %v202
  %v243 = vpack.c.b16 %v207, %v203
  %v244 = vpack.c.b16 %v212, %v208
  %v245 = vpack.c.b16 %v213, %v209
  %v246 = vpack.c.b16 %v214, %v210
  %v247 = vpack.c.b16 %v215, %v211
  %v335 = vunpack.c.l.b16 %v50
  %v336 = vunpack.c.l.b16 %v51
  %v337 = vunpack.c.l.b16 %v52
  %v338 = vunpack.c.l.b16 %v53
  %v339 = vunpack.c.l.b16 %v54
  %v340 = vunpack.c.l.b16 %v55
  %v341 = vunpack.c.l.b16 %v56
  %v342 = vunpack.c.l.b16 %v57
  %v343 = vunpack.c.l.b16 %v58
  %v344 = vunpack.c.l.b16 %v59
  %v345 = vunpack.c.l.b16 %v60
  %v346 = vunpack.c.l.b16 %v61
  %v347 = vunpack.c.l.b16 %v62
  %v348 = vunpack.c.l.b16 %v63
  %v349 = vunpack.c.l.b16 %v64
  %v350 = vunpack.c.l.b16 %v65
  %v351 = vunpack.c.l.b16 %v66
  %v352 = vunpack.c.l.b16 %v67
  %v353 = vunpack.c.l.b16 %v68
  %v354 = vunpack.c.l.b16 %v69
  %v355 = vunpack.c.l.b16 %v70
  %v356 = vunpack.c.l.b16 %v71
  %v357 = vunpack.c.l.b16 %v72
  %v358 = vunpack.c.l.b16 %v73
  %v359 = vunpack.c.l.b16 %v74
  %v360 = vunpack.c.l.b16 %v75
  %v361 = vunpack.c.l.b16 %v76
  %v362 = vunpack.c.l.b16 %v77
  %v363 = vunpack.c.l.b16 %v78
  %v364 = vunpack.c.l.b16 %v79
  %v365 = vunpack.c.l.b16 %v80
  %v366 = vunpack.c.l.b16 %v81
  %v367 = vunpack.c.l.b16 %v82
  %v368 = vunpack.c.l.b16 %v83
  %v369 = vunpack.c.l.b16 %v84
  %v370 = vunpack.c.l.b16 %v85
  %v371 = vunpack.c.l.b16 %v86
  %v372 = vunpack.c.l.b16 %v87
  %v373 = vunpack.c.l.b16 %v88
  %v374 = vunpack.c.l.b16 %v89
  %v375 = vunpack.c.l.b16 %v90
  %v376 = vunpack.c.l.b16 %v91
  %v377 = vunpack.c.l.b16 %v92
  %v378 = vunpack.c.l.b16 %v93
  %v379 = vunpack.c.l.b16 %v94
  %v380 = vunpack.c.l.b16 %v95
  %v381 = vunpack.c.l.b16 %v96
  %v382 = vunpack.c.l.b16 %v97
  %v383 = vunpack.c.l.b16 %v98
  %v384 = vunpack.c.l.b16 %v99
  %v385 = vunpack.c.l.b16 %v100
  %v386 = vunpack.c.l.b16 %v101
  %v387 = vunpack.c.l.b16 %v102
  %v388 = vunpack.c.l.b16 %v103
  %v389 = vunpack.c.l.b16 %v104
  %v390 = vunpack.c.l.b16 %v105
  %v391 = vunpack.c.l.b16 %v106
  %v392 = vunpack.c.l.b16 %v107
  %v393 = vunpack.c.l.b16 %v108
  %v394 = vunpack.c.l.b16 %v109
  %v395 = vunpack.c.l.b16 %v110
  %v396 = vunpack.c.l.b16 %v111
  %v397 = vunpack.c.l.b16 %v112
  %v398 = vpack.c.b16 %v336, %v335
  %v399 = vpack.c.b16 %v338, %v337
  %v400 = vpack.c.b16 %v340, %v339
  %v401 = vpack.c.b16 %v342, %v341
  %v402 = vpack.c.b16 %v344, %v343
  %v403 = vpack.c.b16 %v346, %v345
  %v404 = vpack.c.b16 %v348, %v347
  %v405 = vpack.c.b16 %v350, %v349
  %v406 = vpack.c.b16 %v352, %v351
  %v407 = vpack.c.b16 %v354, %v353
  %v408 = vpack.c.b16 %v356, %v355
  %v409 = vpack.c.b16 %v358, %v357
  %v410 = vpack.c.b16 %v360, %v359
  %v411 = vpack.c.b16 %v362, %v361
  %v412 = vpack.c.b16 %v364, %v363
  %v413 = vpack.c.b16 %v366, %v365
  %v414 = vpack.c.b16 %v368, %v367
  %v415 = vpack.c.b16 %v370, %v369
  %v416 = vpack.c.b16 %v372, %v371
  %v417 = vpack.c.b16 %v374, %v373
  %v418 = vpack.c.b16 %v376, %v375
  %v419 = vpack.c.b16 %v378, %v377
  %v420 = vpack.c.b16 %v380, %v379
  %v421 = vpack.c.b16 %v382, %v381
  %v422 = vpack.c.b16 %v384, %v383
  %v423 = vpack.c.b16 %v386, %v385
  %v424 = vpack.c.b16 %v388, %v387
  %v425 = vpack.c.b16 %v390, %v389
  %v426 = vpack.c.b16 %v392, %v391
  %v427 = vpack.c.b16 %v394, %v393
  %v428 = vpack.c.b16 %v396, %v395
  %v429 = vpack.c.b16 %v397, %v397
  %vm461 = vcmask 982016
  %v463 = vsel %vm461, %v219, 0
  %v466 = vsel %vm461, %v223, 0
  %v469 = vsel %vm461, %v227, 0
  %v472 = vsel %vm461, %v231, 0
  %v475 = vsel %vm461, %v235, 0
  %v478 = vsel %vm461, %v239, 0
  %v481 = vsel %vm461, %v243, 0
  %v484 = vsel %vm461, %v247, 0
  %vm486 = vcmask 1043456
  %v488 = vsel %vm486, %v429, 0
  %490 = vmatprep.subr.bf16.mxu0 0
  %491 = vmatpush1.bf16.msra.mxu0 %v398
  %492 = vmatprep.subr.bf16.mxu0 0
  %493 = vmatpush1.bf16.msra.mxu0 %v399
  %494 = vmatprep.subr.bf16.mxu0 0
  %495 = vmatpush1.bf16.msra.mxu0 %v400
  %496 = vmatprep.subr.bf16.mxu0 0
  %497 = vmatpush1.bf16.msra.mxu0 %v401
  %498 = vmatprep.subr.bf16.mxu0 0
  %499 = vmatpush1.bf16.msra.mxu0 %v402
  %500 = vmatprep.subr.bf16.mxu0 0
  %501 = vmatpush1.bf16.msra.mxu0 %v403
  %502 = vmatprep.subr.bf16.mxu0 0
  %503 = vmatpush1.bf16.msra.mxu0 %v404
  %504 = vmatprep.subr.bf16.mxu0 0
  %505 = vmatpush1.bf16.msra.mxu0 %v405
  %506 = vmatprep.subr.bf16.mxu0 0
  %507 = vmatpush1.bf16.msra.mxu0 %v406
  %508 = vmatprep.subr.bf16.mxu0 0
  %509 = vmatpush1.bf16.msra.mxu0 %v407
  %510 = vmatprep.subr.bf16.mxu0 0
  %511 = vmatpush1.bf16.msra.mxu0 %v408
  %512 = vmatprep.subr.bf16.mxu0 0
  %513 = vmatpush1.bf16.msra.mxu0 %v409
  %514 = vmatprep.subr.bf16.mxu0 0
  %515 = vmatpush1.bf16.msra.mxu0 %v410
  %516 = vmatprep.subr.bf16.mxu0 0
  %517 = vmatpush1.bf16.msra.mxu0 %v411
  %518 = vmatprep.subr.bf16.mxu0 0
  %519 = vmatpush1.bf16.msra.mxu0 %v412
  %520 = vmatprep.subr.bf16.mxu0 0
  %521 = vmatpush1.bf16.msra.mxu0 %v413
  %522 = vmatprep.mubr.bf16.mxu0 %v217
  %523 = vmatmul.mubr.bf16.gmra.mrb[0].mxu0 %v216
  %v524 = vpop.f32.mrb[0].mxu0
  %v525 = vadd.f32 %v118, %v524
  %v526 = vpop.f32.mrb[0].mxu0
  %v527 = vpop.f32.mrb[0].mxu0
  %v528 = vadd.f32 %v118, %v527
  %v529 = vpop.f32.mrb[0].mxu0
  %530 = vmatprep.mubr.bf16.mxu0 %v221
  %531 = vmatmul.mubr.bf16.gmra.mrb[0].mxu0 %v220
  %v532 = vpop.f32.mrb[0].mxu0
  %v533 = vadd.f32 %v118, %v532
  %v534 = vpop.f32.mrb[0].mxu0
  %v535 = vpop.f32.mrb[0].mxu0
  %v536 = vadd.f32 %v118, %v535
  %v537 = vpop.f32.mrb[0].mxu0
  %538 = vmatprep.mubr.bf16.mxu0 %v225
  %539 = vmatmul.mubr.bf16.gmra.mrb[0].mxu0 %v224
  %v540 = vpop.f32.mrb[0].mxu0
  %v541 = vadd.f32 %v118, %v540
  %v542 = vpop.f32.mrb[0].mxu0
  %v543 = vpop.f32.mrb[0].mxu0
  %v544 = vadd.f32 %v118, %v543
  %v545 = vpop.f32.mrb[0].mxu0
  %546 = vmatprep.mubr.bf16.mxu0 %v229
  %547 = vmatmul.mubr.bf16.gmra.mrb[0].mxu0 %v228
  %v548 = vpop.f32.mrb[0].mxu0
  %v549 = vadd.f32 %v118, %v548
  %v550 = vpop.f32.mrb[0].mxu0
  %v551 = vpop.f32.mrb[0].mxu0
  %v552 = vadd.f32 %v118, %v551
  %v553 = vpop.f32.mrb[0].mxu0
  %554 = vmatprep.mubr.bf16.mxu0 %v233
  %555 = vmatmul.mubr.bf16.gmra.mrb[0].mxu0 %v232
  %v556 = vpop.f32.mrb[0].mxu0
  %v557 = vadd.f32 %v118, %v556
  %v558 = vpop.f32.mrb[0].mxu0
  %v559 = vpop.f32.mrb[0].mxu0
  %v560 = vadd.f32 %v118, %v559
  %v561 = vpop.f32.mrb[0].mxu0
  %562 = vmatprep.mubr.bf16.mxu0 %v237
  %563 = vmatmul.mubr.bf16.gmra.mrb[0].mxu0 %v236
  %v564 = vpop.f32.mrb[0].mxu0
  %v565 = vadd.f32 %v118, %v564
  %v566 = vpop.f32.mrb[0].mxu0
  %v567 = vpop.f32.mrb[0].mxu0
  %v568 = vadd.f32 %v118, %v567
  %v569 = vpop.f32.mrb[0].mxu0
  %570 = vmatprep.mubr.bf16.mxu0 %v241
  %571 = vmatmul.mubr.bf16.gmra.mrb[0].mxu0 %v240
  %v572 = vpop.f32.mrb[0].mxu0
  %v573 = vadd.f32 %v118, %v572
  %v574 = vpop.f32.mrb[0].mxu0
  %v575 = vpop.f32.mrb[0].mxu0
  %v576 = vadd.f32 %v118, %v575
  %v577 = vpop.f32.mrb[0].mxu0
  %578 = vmatprep.mubr.bf16.mxu0 %v245
  %579 = vmatmul.mubr.bf16.gmra.mrb[0].mxu0 %v244
  %v580 = vpop.f32.mrb[0].mxu0
  %v581 = vadd.f32 %v118, %v580
  %v582 = vpop.f32.mrb[0].mxu0
  %v583 = vpop.f32.mrb[0].mxu0
  %v584 = vadd.f32 %v118, %v583
  %v585 = vpop.f32.mrb[0].mxu0
  %586 = vdwg.mxu0
  %587 = vmatprep.subr.bf16.mxu0 0
  %588 = vmatpush1.bf16.msra.mxu0 %v414
  %589 = vmatprep.subr.bf16.mxu0 0
  %590 = vmatpush1.bf16.msra.mxu0 %v415
  %591 = vmatprep.subr.bf16.mxu0 0
  %592 = vmatpush1.bf16.msra.mxu0 %v416
  %593 = vmatprep.subr.bf16.mxu0 0
  %594 = vmatpush1.bf16.msra.mxu0 %v417
  %595 = vmatprep.subr.bf16.mxu0 0
  %596 = vmatpush1.bf16.msra.mxu0 %v418
  %597 = vmatprep.subr.bf16.mxu0 0
  %598 = vmatpush1.bf16.msra.mxu0 %v419
  %599 = vmatprep.subr.bf16.mxu0 0
  %600 = vmatpush1.bf16.msra.mxu0 %v420
  %601 = vmatprep.subr.bf16.mxu0 0
  %602 = vmatpush1.bf16.msra.mxu0 %v421
  %603 = vmatprep.subr.bf16.mxu0 0
  %604 = vmatpush1.bf16.msra.mxu0 %v422
  %605 = vmatprep.subr.bf16.mxu0 0
  %606 = vmatpush1.bf16.msra.mxu0 %v423
  %607 = vmatprep.subr.bf16.mxu0 0
  %608 = vmatpush1.bf16.msra.mxu0 %v424
  %609 = vmatprep.subr.bf16.mxu0 0
  %610 = vmatpush1.bf16.msra.mxu0 %v425
  %611 = vmatprep.subr.bf16.mxu0 0
  %612 = vmatpush1.bf16.msra.mxu0 %v426
  %613 = vmatprep.subr.bf16.mxu0 0
  %614 = vmatpush1.bf16.msra.mxu0 %v427
  %615 = vmatprep.subr.bf16.mxu0 0
  %616 = vmatpush1.bf16.msra.mxu0 %v428
  %617 = vmatprep.subr.bf16.mxu0 0
  %618 = vmatpush1.bf16.msra.mxu0 %v488
  %619 = vmatprep.mubr.bf16.mxu0 %v463
  %620 = vmatmul.mubr.bf16.gmra.mrb[0].mxu0 %v218
  %v621 = vpop.f32.mrb[0].mxu0
  %v622 = vadd.f32 %v525, %v621
  %v623 = vpop.f32.mrb[0].mxu0
  %v624 = vpop.f32.mrb[0].mxu0
  %v625 = vadd.f32 %v528, %v624
  %v626 = vpop.f32.mrb[0].mxu0
  %627 = vmatprep.mubr.bf16.mxu0 %v466
  %628 = vmatmul.mubr.bf16.gmra.mrb[0].mxu0 %v222
  %v629 = vpop.f32.mrb[0].mxu0
  %v630 = vadd.f32 %v533, %v629
  %v631 = vpop.f32.mrb[0].mxu0
  %v632 = vpop.f32.mrb[0].mxu0
  %v633 = vadd.f32 %v536, %v632
  %v634 = vpop.f32.mrb[0].mxu0
  %635 = vmatprep.mubr.bf16.mxu0 %v469
  %636 = vmatmul.mubr.bf16.gmra.mrb[0].mxu0 %v226
  %v637 = vpop.f32.mrb[0].mxu0
  %v638 = vadd.f32 %v541, %v637
  %v639 = vpop.f32.mrb[0].mxu0
  %v640 = vpop.f32.mrb[0].mxu0
  %v641 = vadd.f32 %v544, %v640
  %v642 = vpop.f32.mrb[0].mxu0
  %643 = vmatprep.mubr.bf16.mxu0 %v472
  %644 = vmatmul.mubr.bf16.gmra.mrb[0].mxu0 %v230
  %v645 = vpop.f32.mrb[0].mxu0
  %v646 = vadd.f32 %v549, %v645
  %v647 = vpop.f32.mrb[0].mxu0
  %v648 = vpop.f32.mrb[0].mxu0
  %v649 = vadd.f32 %v552, %v648
  %v650 = vpop.f32.mrb[0].mxu0
  %651 = vmatprep.mubr.bf16.mxu0 %v475
  %652 = vmatmul.mubr.bf16.gmra.mrb[0].mxu0 %v234
  %v653 = vpop.f32.mrb[0].mxu0
  %v654 = vadd.f32 %v557, %v653
  %v655 = vpop.f32.mrb[0].mxu0
  %v656 = vpop.f32.mrb[0].mxu0
  %v657 = vadd.f32 %v560, %v656
  %v658 = vpop.f32.mrb[0].mxu0
  %659 = vmatprep.mubr.bf16.mxu0 %v478
  %660 = vmatmul.mubr.bf16.gmra.mrb[0].mxu0 %v238
  %v661 = vpop.f32.mrb[0].mxu0
  %v662 = vadd.f32 %v565, %v661
  %v663 = vpop.f32.mrb[0].mxu0
  %v664 = vpop.f32.mrb[0].mxu0
  %v665 = vadd.f32 %v568, %v664
  %v666 = vpop.f32.mrb[0].mxu0
  %667 = vmatprep.mubr.bf16.mxu0 %v481
  %668 = vmatmul.mubr.bf16.gmra.mrb[0].mxu0 %v242
  %v669 = vpop.f32.mrb[0].mxu0
  %v670 = vadd.f32 %v573, %v669
  %v671 = vpop.f32.mrb[0].mxu0
  %v672 = vpop.f32.mrb[0].mxu0
  %v673 = vadd.f32 %v576, %v672
  %v674 = vpop.f32.mrb[0].mxu0
  %675 = vmatprep.mubr.bf16.mxu0 %v484
  %676 = vmatmul.mubr.bf16.gmra.mrb[0].mxu0 %v246
  %v677 = vpop.f32.mrb[0].mxu0
  %v678 = vadd.f32 %v581, %v677
  %v679 = vpop.f32.mrb[0].mxu0
  %v680 = vpop.f32.mrb[0].mxu0
  %v681 = vadd.f32 %v584, %v680
  %v682 = vpop.f32.mrb[0].mxu0
  %683 = vdwg.mxu0
  %v684 = vlaneseq
  %v685 = vand.u32 %v684, 127
  %vm686 = vcmp.lt.s32.totalorder %v685, 16
  %v687 = vxor.u32 %v622, 2147483648
  %v688 = vxor.u32 %v625, 2147483648
  %v689 = vxor.u32 %v630, 2147483648
  %v690 = vxor.u32 %v633, 2147483648
  %v691 = vxor.u32 %v638, 2147483648
  %v692 = vxor.u32 %v641, 2147483648
  %v693 = vxor.u32 %v646, 2147483648
  %v694 = vxor.u32 %v649, 2147483648
  %v695 = vxor.u32 %v654, 2147483648
  %v696 = vxor.u32 %v657, 2147483648
  %v697 = vxor.u32 %v662, 2147483648
  %v698 = vxor.u32 %v665, 2147483648
  %v699 = vxor.u32 %v670, 2147483648
  %v700 = vxor.u32 %v673, 2147483648
  %v701 = vxor.u32 %v678, 2147483648
  %v702 = vxor.u32 %v681, 2147483648
  %v703 = vmul.f32 %v687, 1.442695
  %v704 = vpow.pop %v703
  %v705 = vmul.f32 %v688, 1.442695
  %v706 = vpow.pop %v705
  %v707 = vmul.f32 %v689, 1.442695
  %v708 = vpow.pop %v707
  %v709 = vmul.f32 %v690, 1.442695
  %v710 = vpow.pop %v709
  %v711 = vmul.f32 %v691, 1.442695
  %v712 = vpow.pop %v711
  %v713 = vmul.f32 %v692, 1.442695
  %v714 = vpow.pop %v713
  %v715 = vmul.f32 %v693, 1.442695
  %v716 = vpow.pop %v715
  %v717 = vmul.f32 %v694, 1.442695
  %v718 = vpow.pop %v717
  %v719 = vmul.f32 %v695, 1.442695
  %v720 = vpow.pop %v719
  %v721 = vmul.f32 %v696, 1.442695
  %v722 = vpow.pop %v721
  %v723 = vmul.f32 %v697, 1.442695
  %v724 = vpow.pop %v723
  %v725 = vmul.f32 %v698, 1.442695
  %v726 = vpow.pop %v725
  %v727 = vmul.f32 %v699, 1.442695
  %v728 = vpow.pop %v727
  %v729 = vmul.f32 %v700, 1.442695
  %v730 = vpow.pop %v729
  %v731 = vmul.f32 %v701, 1.442695
  %v732 = vpow.pop %v731
  %v733 = vmul.f32 %v702, 1.442695
  %v734 = vpow.pop %v733
  %v735 = vadd.f32 %v704, 1.0
  %v736 = vadd.f32 %v706, 1.0
  %v737 = vadd.f32 %v708, 1.0
  %v738 = vadd.f32 %v710, 1.0
  %v739 = vadd.f32 %v712, 1.0
  %v740 = vadd.f32 %v714, 1.0
  %v741 = vadd.f32 %v716, 1.0
  %v742 = vadd.f32 %v718, 1.0
  %v743 = vadd.f32 %v720, 1.0
  %v744 = vadd.f32 %v722, 1.0
  %v745 = vadd.f32 %v724, 1.0
  %v746 = vadd.f32 %v726, 1.0
  %v747 = vadd.f32 %v728, 1.0
  %v748 = vadd.f32 %v730, 1.0
  %v749 = vadd.f32 %v732, 1.0
  %v750 = vadd.f32 %v734, 1.0
  %v751 = vrcp.pop %v735
  %v752 = vmul.f32 1.0, %v751
  %v753 = vrcp.pop %v736
  %v754 = vmul.f32 1.0, %v753
  %v755 = vrcp.pop %v737
  %v756 = vmul.f32 1.0, %v755
  %v757 = vrcp.pop %v738
  %v758 = vmul.f32 1.0, %v757
  %v759 = vrcp.pop %v739
  %v760 = vmul.f32 1.0, %v759
  %v761 = vrcp.pop %v740
  %v762 = vmul.f32 1.0, %v761
  %v763 = vrcp.pop %v741
  %v764 = vmul.f32 1.0, %v763
  %v765 = vrcp.pop %v742
  %v766 = vmul.f32 1.0, %v765
  %v767 = vrcp.pop %v743
  %v768 = vmul.f32 1.0, %v767
  %v769 = vrcp.pop %v744
  %v770 = vmul.f32 1.0, %v769
  %v771 = vrcp.pop %v745
  %v772 = vmul.f32 1.0, %v771
  %v773 = vrcp.pop %v746
  %v774 = vmul.f32 1.0, %v773
  %v775 = vrcp.pop %v747
  %v776 = vmul.f32 1.0, %v775
  %v777 = vrcp.pop %v748
  %v778 = vmul.f32 1.0, %v777
  %v779 = vrcp.pop %v749
  %v780 = vmul.f32 1.0, %v779
  %v781 = vrcp.pop %v750
  %v782 = vmul.f32 1.0, %v781
  %v783 = vld [vmem:[%s3] sm:$0xff]
  %v784 = vld [vmem:[%s3 + $0x8] sm:$0xff]
  %v785 = vld [vmem:[%s3 + $0x10] sm:$0xff]
  %v786 = vld [vmem:[%s3 + $0x18] sm:$0xff]
  %v787 = vld [vmem:[%s3 + $0x20] sm:$0xff]
  %v788 = vld [vmem:[%s3 + $0x28] sm:$0xff]
  %v789 = vld [vmem:[%s3 + $0x30] sm:$0xff]
  %v790 = vld [vmem:[%s3 + $0x38] sm:$0xff]
  %v791 = vld [vmem:[%s3 + $0x40] sm:$0xff]
  %v792 = vld [vmem:[%s3 + $0x48] sm:$0xff]
  %v793 = vld [vmem:[%s3 + $0x50] sm:$0xff]
  %v794 = vld [vmem:[%s3 + $0x58] sm:$0xff]
  %v795 = vld [vmem:[%s3 + $0x60] sm:$0xff]
  %v796 = vld [vmem:[%s3 + $0x68] sm:$0xff]
  %v797 = vld [vmem:[%s3 + $0x70] sm:$0xff]
  %v798 = vld [vmem:[%s3 + $0x78] sm:$0xff]
  %v799 = vmul.f32 %v752, %v783
  %v800 = vmul.f32 %v754, %v784
  %v801 = vmul.f32 %v756, %v785
  %v802 = vmul.f32 %v758, %v786
  %v803 = vmul.f32 %v760, %v787
  %v804 = vmul.f32 %v762, %v788
  %v805 = vmul.f32 %v764, %v789
  %v806 = vmul.f32 %v766, %v790
  %v807 = vmul.f32 %v768, %v791
  %v808 = vmul.f32 %v770, %v792
  %v809 = vmul.f32 %v772, %v793
  %v810 = vmul.f32 %v774, %v794
  %v811 = vmul.f32 %v776, %v795
  %v812 = vmul.f32 %v778, %v796
  %v813 = vmul.f32 %v780, %v797
  %v814 = vmul.f32 %v782, %v798
  %v815 = vsel %vm686, %v622, %v799
  %v816 = vsel %vm686, %v625, %v800
  %v817 = vsel %vm686, %v630, %v801
  %v818 = vsel %vm686, %v633, %v802
  %v819 = vsel %vm686, %v638, %v803
  %v820 = vsel %vm686, %v641, %v804
  %v821 = vsel %vm686, %v646, %v805
  %v822 = vsel %vm686, %v649, %v806
  %v823 = vsel %vm686, %v654, %v807
  %v824 = vsel %vm686, %v657, %v808
  %v825 = vsel %vm686, %v662, %v809
  %v826 = vsel %vm686, %v665, %v810
  %v827 = vsel %vm686, %v670, %v811
  %v828 = vsel %vm686, %v673, %v812
  %v829 = vsel %vm686, %v678, %v813
  %v830 = vsel %vm686, %v681, %v814
  %831 = vst [vmem:[%s4] sm:$0xff] %v815
  %832 = vst [vmem:[%s4 + $0x8] sm:$0xff] %v816
  %833 = vst [vmem:[%s4 + $0x10] sm:$0xff] %v817
  %834 = vst [vmem:[%s4 + $0x18] sm:$0xff] %v818
  %835 = vst [vmem:[%s4 + $0x20] sm:$0xff] %v819
  %836 = vst [vmem:[%s4 + $0x28] sm:$0xff] %v820
  %837 = vst [vmem:[%s4 + $0x30] sm:$0xff] %v821
  %838 = vst [vmem:[%s4 + $0x38] sm:$0xff] %v822
  %839 = vst [vmem:[%s4 + $0x40] sm:$0xff] %v823
  %840 = vst [vmem:[%s4 + $0x48] sm:$0xff] %v824
  %841 = vst [vmem:[%s4 + $0x50] sm:$0xff] %v825
  %842 = vst [vmem:[%s4 + $0x58] sm:$0xff] %v826
  %843 = vst [vmem:[%s4 + $0x60] sm:$0xff] %v827
  %844 = vst [vmem:[%s4 + $0x68] sm:$0xff] %v828
  %845 = vst [vmem:[%s4 + $0x70] sm:$0xff] %v829
  %846 = vst [vmem:[%s4 + $0x78] sm:$0xff] %v830
  // Predicated region
  $region18: #{_lambda_.33} parent=0 // pred_check
    _
  $region19: #{_lambda_.33} parent=0 // pred_check_branch
    %848 = sbr.rel (0) target = $region21
  $region20: #{_lambda_.33} parent=0 // pred_region
    _
  $region21: #{_lambda_.33} parent=0 // pred_fallthru
    _
  // Predicated region
  $region22: #{_lambda_.33} parent=0 // pred_check
    _
  $region23: #{_lambda_.33} parent=0 // pred_check_branch
    %850 = sbr.rel (0) target = $region25
  $region24: #{_lambda_.33} parent=0 // pred_region
    _
  $region25: #{_lambda_.33} parent=0 // pred_fallthru
    _

// kernel: _lambda_.34
$region0: #{_lambda_.34}
  #allocation0 [shape = 'u32[]', space=smem, size = 0x4, offset = 0x4, fixed_abs, tag = 'smem constant byte address 0x4 - core index']
  #allocation1 [shape = 'u32[144,128]{1,0:T(1,128)}', space=vmem, size = 0x12000, scoped, tag = 'internal scratch']
  %s0 = inlined_call_operand.vmem [shape: bf16[128,504], index: 0, kind: input, shape index: {}]
  %s1 = inlined_call_operand.vmem [shape: bf16[504,128], index: 1, kind: input, shape index: {}]
  %s2 = inlined_call_operand.vmem [shape: f32[1,128], index: 2, kind: input, shape index: {}]
  %s3 = inlined_call_operand.vmem [shape: f32[128,128], index: 3, kind: input, shape index: {}]
  %s4 = inlined_call_operand.vmem [shape: f32[128,128], index: 4, kind: input, shape index: {}]
  %s5 = inlined_call_operand.vmem [shape: f32[128,128], index: 5, kind: output, shape index: {}]
  %s6 = sld [smem:[#allocation0]]
  $region30: #{_lambda_.34} parent=0
    _
  %s8 = ssub.s32 1, %s6
  %s9 = scalar_select 0, %s8, %s6
  // Predicated region
  $region2: #{_lambda_.34} parent=0 // pred_check
    _
  $region3: #{_lambda_.34} parent=0 // pred_check_branch
    %11 = sbr.rel (0) target = $region5
  $region4: #{_lambda_.34} parent=0 // pred_region
    _
  $region5: #{_lambda_.34} parent=0 // pred_fallthru
    _
  // Predicated region
  $region6: #{_lambda_.34} parent=0 // pred_check
    _
  $region7: #{_lambda_.34} parent=0 // pred_check_branch
    %13 = sbr.rel (0) target = $region9
  $region8: #{_lambda_.34} parent=0 // pred_region
    _
  $region9: #{_lambda_.34} parent=0 // pred_fallthru
    _
  // Predicated region
  $region10: #{_lambda_.34} parent=0 // pred_check
    _
  $region11: #{_lambda_.34} parent=0 // pred_check_branch
    %15 = sbr.rel (0) target = $region13
  $region12: #{_lambda_.34} parent=0 // pred_region
    _
  $region13: #{_lambda_.34} parent=0 // pred_fallthru
    _
  // Predicated region
  $region14: #{_lambda_.34} parent=0 // pred_check
    _
  $region15: #{_lambda_.34} parent=0 // pred_check_branch
    %17 = sbr.rel (0) target = $region17
  $region16: #{_lambda_.34} parent=0 // pred_region
    _
  $region17: #{_lambda_.34} parent=0 // pred_fallthru
    _
  // Predicated region
  $region18: #{_lambda_.34} parent=0 // pred_check
    _
  $region19: #{_lambda_.34} parent=0 // pred_check_branch
    %19 = sbr.rel (0) target = $region21
  $region20: #{_lambda_.34} parent=0 // pred_region
    _
  $region21: #{_lambda_.34} parent=0 // pred_fallthru
    _
  %v21 = vld [vmem:[%s0] sm:$0xff]
  %v22 = vld [vmem:[%s0 + $0x8] sm:$0xff]
  %v23 = vld [vmem:[%s0 + $0x10] sm:$0xff]
  %v24 = vld [vmem:[%s0 + $0x18] sm:$0xff]
  %v25 = vld [vmem:[%s0 + $0x20] sm:$0xff]
  %v26 = vld [vmem:[%s0 + $0x28] sm:$0xff]
  %v27 = vld [vmem:[%s0 + $0x30] sm:$0xff]
  %v28 = vld [vmem:[%s0 + $0x38] sm:$0xff]
  %v29 = vld [vmem:[%s0 + $0x40] sm:$0xff]
  %v30 = vld [vmem:[%s0 + $0x48] sm:$0xff]
  %v31 = vld [vmem:[%s0 + $0x50] sm:$0xff]
  %v32 = vld [vmem:[%s0 + $0x58] sm:$0xff]
  %v33 = vld [vmem:[%s0 + $0x60] sm:$0xff]
  %v34 = vld [vmem:[%s0 + $0x68] sm:$0xff]
  %v35 = vld [vmem:[%s0 + $0x70] sm:$0xff]
  %v36 = vld [vmem:[%s0 + $0x78] sm:$0xff]
  %v37 = vld [vmem:[%s0 + $0x80] sm:$0xff]
  %v38 = vld [vmem:[%s0 + $0x88] sm:$0xff]
  %v39 = vld [vmem:[%s0 + $0x90] sm:$0xff]
  %v40 = vld [vmem:[%s0 + $0x98] sm:$0xff]
  %v41 = vld [vmem:[%s0 + $0xa0] sm:$0xff]
  %v42 = vld [vmem:[%s0 + $0xa8] sm:$0xff]
  %v43 = vld [vmem:[%s0 + $0xb0] sm:$0xff]
  %v44 = vld [vmem:[%s0 + $0xb8] sm:$0xff]
  %v45 = vld [vmem:[%s0 + $0xc0] sm:$0xff]
  %v46 = vld [vmem:[%s0 + $0xc8] sm:$0xff]
  %v47 = vld [vmem:[%s0 + $0xd0] sm:$0xff]
  %v48 = vld [vmem:[%s0 + $0xd8] sm:$0xff]
  %v49 = vld [vmem:[%s0 + $0xe0] sm:$0xff]
  %v50 = vld [vmem:[%s0 + $0xe8] sm:$0xff]
  %v51 = vld [vmem:[%s0 + $0xf0] sm:$0xff]
  %v52 = vld [vmem:[%s0 + $0xf8] sm:$0xff]
  %v53 = vld [vmem:[%s1] sm:$0xf]
  %v54 = vld [vmem:[%s1 + $0x4] sm:$0xf]
  %v55 = vld [vmem:[%s1 + $0x8] sm:$0xf]
  %v56 = vld [vmem:[%s1 + $0xc] sm:$0xf]
  %v57 = vld [vmem:[%s1 + $0x10] sm:$0xf]
  %v58 = vld [vmem:[%s1 + $0x14] sm:$0xf]
  %v59 = vld [vmem:[%s1 + $0x18] sm:$0xf]
  %v60 = vld [vmem:[%s1 + $0x1c] sm:$0xf]
  %v61 = vld [vmem:[%s1 + $0x20] sm:$0xf]
  %v62 = vld [vmem:[%s1 + $0x24] sm:$0xf]
  %v63 = vld [vmem:[%s1 + $0x28] sm:$0xf]
  %v64 = vld [vmem:[%s1 + $0x2c] sm:$0xf]
  %v65 = vld [vmem:[%s1 + $0x30] sm:$0xf]
  %v66 = vld [vmem:[%s1 + $0x34] sm:$0xf]
  %v67 = vld [vmem:[%s1 + $0x38] sm:$0xf]
  %v68 = vld [vmem:[%s1 + $0x3c] sm:$0xf]
  %v69 = vld [vmem:[%s1 + $0x40] sm:$0xf]
  %v70 = vld [vmem:[%s1 + $0x44] sm:$0xf]
  %v71 = vld [vmem:[%s1 + $0x48] sm:$0xf]
  %v72 = vld [vmem:[%s1 + $0x4c] sm:$0xf]
  %v73 = vld [vmem:[%s1 + $0x50] sm:$0xf]
  %v74 = vld [vmem:[%s1 + $0x54] sm:$0xf]
  %v75 = vld [vmem:[%s1 + $0x58] sm:$0xf]
  %v76 = vld [vmem:[%s1 + $0x5c] sm:$0xf]
  %v77 = vld [vmem:[%s1 + $0x60] sm:$0xf]
  %v78 = vld [vmem:[%s1 + $0x64] sm:$0xf]
  %v79 = vld [vmem:[%s1 + $0x68] sm:$0xf]
  %v80 = vld [vmem:[%s1 + $0x6c] sm:$0xf]
  %v81 = vld [vmem:[%s1 + $0x70] sm:$0xf]
  %v82 = vld [vmem:[%s1 + $0x74] sm:$0xf]
  %v83 = vld [vmem:[%s1 + $0x78] sm:$0xf]
  %v84 = vld [vmem:[%s1 + $0x7c] sm:$0xf]
  %v85 = vld [vmem:[%s1 + $0x80] sm:$0xf]
  %v86 = vld [vmem:[%s1 + $0x84] sm:$0xf]
  %v87 = vld [vmem:[%s1 + $0x88] sm:$0xf]
  %v88 = vld [vmem:[%s1 + $0x8c] sm:$0xf]
  %v89 = vld [vmem:[%s1 + $0x90] sm:$0xf]
  %v90 = vld [vmem:[%s1 + $0x94] sm:$0xf]
  %v91 = vld [vmem:[%s1 + $0x98] sm:$0xf]
  %v92 = vld [vmem:[%s1 + $0x9c] sm:$0xf]
  %v93 = vld [vmem:[%s1 + $0xa0] sm:$0xf]
  %v94 = vld [vmem:[%s1 + $0xa4] sm:$0xf]
  %v95 = vld [vmem:[%s1 + $0xa8] sm:$0xf]
  %v96 = vld [vmem:[%s1 + $0xac] sm:$0xf]
  %v97 = vld [vmem:[%s1 + $0xb0] sm:$0xf]
  %v98 = vld [vmem:[%s1 + $0xb4] sm:$0xf]
  %v99 = vld [vmem:[%s1 + $0xb8] sm:$0xf]
  %v100 = vld [vmem:[%s1 + $0xbc] sm:$0xf]
  %v101 = vld [vmem:[%s1 + $0xc0] sm:$0xf]
  %v102 = vld [vmem:[%s1 + $0xc4] sm:$0xf]
  %v103 = vld [vmem:[%s1 + $0xc8] sm:$0xf]
  %v104 = vld [vmem:[%s1 + $0xcc] sm:$0xf]
  %v105 = vld [vmem:[%s1 + $0xd0] sm:$0xf]
  %v106 = vld [vmem:[%s1 + $0xd4] sm:$0xf]
  %v107 = vld [vmem:[%s1 + $0xd8] sm:$0xf]
  %v108 = vld [vmem:[%s1 + $0xdc] sm:$0xf]
  %v109 = vld [vmem:[%s1 + $0xe0] sm:$0xf]
  %v110 = vld [vmem:[%s1 + $0xe4] sm:$0xf]
  %v111 = vld [vmem:[%s1 + $0xe8] sm:$0xf]
  %v112 = vld [vmem:[%s1 + $0xec] sm:$0xf]
  %v113 = vld [vmem:[%s1 + $0xf0] sm:$0xf]
  %v114 = vld [vmem:[%s1 + $0xf4] sm:$0xf]
  %v115 = vld [vmem:[%s1 + $0xf8] sm:$0xf]
  %v116 = vld [vmem:[%s2] sm:$0x1]
  %v118 = vlaneseq
  %v119 = vshrl.u32 %v118, 7
  %v120 = vsub.s32 0, %v119
  %v121 = vrot.slane %v116, %v120
  %v155 = vunpack.c.l.b16 %v21
  %v156 = vunpack.c.h.b16 %v21
  %v157 = vunpack.c.l.b16 %v22
  %v158 = vunpack.c.h.b16 %v22
  %v159 = vunpack.c.l.b16 %v23
  %v160 = vunpack.c.h.b16 %v23
  %v161 = vunpack.c.l.b16 %v24
  %v162 = vunpack.c.h.b16 %v24
  %v163 = vunpack.c.l.b16 %v25
  %v164 = vunpack.c.h.b16 %v25
  %v165 = vunpack.c.l.b16 %v26
  %v166 = vunpack.c.h.b16 %v26
  %v167 = vunpack.c.l.b16 %v27
  %v168 = vunpack.c.h.b16 %v27
  %v169 = vunpack.c.l.b16 %v28
  %v170 = vunpack.c.h.b16 %v28
  %v171 = vunpack.c.l.b16 %v29
  %v172 = vunpack.c.h.b16 %v29
  %v173 = vunpack.c.l.b16 %v30
  %v174 = vunpack.c.h.b16 %v30
  %v175 = vunpack.c.l.b16 %v31
  %v176 = vunpack.c.h.b16 %v31
  %v177 = vunpack.c.l.b16 %v32
  %v178 = vunpack.c.h.b16 %v32
  %v179 = vunpack.c.l.b16 %v33
  %v180 = vunpack.c.h.b16 %v33
  %v181 = vunpack.c.l.b16 %v34
  %v182 = vunpack.c.h.b16 %v34
  %v183 = vunpack.c.l.b16 %v35
  %v184 = vunpack.c.h.b16 %v35
  %v185 = vunpack.c.l.b16 %v36
  %v186 = vunpack.c.h.b16 %v36
  %v187 = vunpack.c.l.b16 %v37
  %v188 = vunpack.c.h.b16 %v37
  %v189 = vunpack.c.l.b16 %v38
  %v190 = vunpack.c.h.b16 %v38
  %v191 = vunpack.c.l.b16 %v39
  %v192 = vunpack.c.h.b16 %v39
  %v193 = vunpack.c.l.b16 %v40
  %v194 = vunpack.c.h.b16 %v40
  %v195 = vunpack.c.l.b16 %v41
  %v196 = vunpack.c.h.b16 %v41
  %v197 = vunpack.c.l.b16 %v42
  %v198 = vunpack.c.h.b16 %v42
  %v199 = vunpack.c.l.b16 %v43
  %v200 = vunpack.c.h.b16 %v43
  %v201 = vunpack.c.l.b16 %v44
  %v202 = vunpack.c.h.b16 %v44
  %v203 = vunpack.c.l.b16 %v45
  %v204 = vunpack.c.h.b16 %v45
  %v205 = vunpack.c.l.b16 %v46
  %v206 = vunpack.c.h.b16 %v46
  %v207 = vunpack.c.l.b16 %v47
  %v208 = vunpack.c.h.b16 %v47
  %v209 = vunpack.c.l.b16 %v48
  %v210 = vunpack.c.h.b16 %v48
  %v211 = vunpack.c.l.b16 %v49
  %v212 = vunpack.c.h.b16 %v49
  %v213 = vunpack.c.l.b16 %v50
  %v214 = vunpack.c.h.b16 %v50
  %v215 = vunpack.c.l.b16 %v51
  %v216 = vunpack.c.h.b16 %v51
  %v217 = vunpack.c.l.b16 %v52
  %v218 = vunpack.c.h.b16 %v52
  %v219 = vpack.c.b16 %v159, %v155
  %v220 = vpack.c.b16 %v160, %v156
  %v221 = vpack.c.b16 %v161, %v157
  %v222 = vpack.c.b16 %v162, %v158
  %v223 = vpack.c.b16 %v167, %v163
  %v224 = vpack.c.b16 %v168, %v164
  %v225 = vpack.c.b16 %v169, %v165
  %v226 = vpack.c.b16 %v170, %v166
  %v227 = vpack.c.b16 %v175, %v171
  %v228 = vpack.c.b16 %v176, %v172
  %v229 = vpack.c.b16 %v177, %v173
  %v230 = vpack.c.b16 %v178, %v174
  %v231 = vpack.c.b16 %v183, %v179
  %v232 = vpack.c.b16 %v184, %v180
  %v233 = vpack.c.b16 %v185, %v181
  %v234 = vpack.c.b16 %v186, %v182
  %v235 = vpack.c.b16 %v191, %v187
  %v236 = vpack.c.b16 %v192, %v188
  %v237 = vpack.c.b16 %v193, %v189
  %v238 = vpack.c.b16 %v194, %v190
  %v239 = vpack.c.b16 %v199, %v195
  %v240 = vpack.c.b16 %v200, %v196
  %v241 = vpack.c.b16 %v201, %v197
  %v242 = vpack.c.b16 %v202, %v198
  %v243 = vpack.c.b16 %v207, %v203
  %v244 = vpack.c.b16 %v208, %v204
  %v245 = vpack.c.b16 %v209, %v205
  %v246 = vpack.c.b16 %v210, %v206
  %v247 = vpack.c.b16 %v215, %v211
  %v248 = vpack.c.b16 %v216, %v212
  %v249 = vpack.c.b16 %v217, %v213
  %v250 = vpack.c.b16 %v218, %v214
  %v338 = vunpack.c.l.b16 %v53
  %v339 = vunpack.c.l.b16 %v54
  %v340 = vunpack.c.l.b16 %v55
  %v341 = vunpack.c.l.b16 %v56
  %v342 = vunpack.c.l.b16 %v57
  %v343 = vunpack.c.l.b16 %v58
  %v344 = vunpack.c.l.b16 %v59
  %v345 = vunpack.c.l.b16 %v60
  %v346 = vunpack.c.l.b16 %v61
  %v347 = vunpack.c.l.b16 %v62
  %v348 = vunpack.c.l.b16 %v63
  %v349 = vunpack.c.l.b16 %v64
  %v350 = vunpack.c.l.b16 %v65
  %v351 = vunpack.c.l.b16 %v66
  %v352 = vunpack.c.l.b16 %v67
  %v353 = vunpack.c.l.b16 %v68
  %v354 = vunpack.c.l.b16 %v69
  %v355 = vunpack.c.l.b16 %v70
  %v356 = vunpack.c.l.b16 %v71
  %v357 = vunpack.c.l.b16 %v72
  %v358 = vunpack.c.l.b16 %v73
  %v359 = vunpack.c.l.b16 %v74
  %v360 = vunpack.c.l.b16 %v75
  %v361 = vunpack.c.l.b16 %v76
  %v362 = vunpack.c.l.b16 %v77
  %v363 = vunpack.c.l.b16 %v78
  %v364 = vunpack.c.l.b16 %v79
  %v365 = vunpack.c.l.b16 %v80
  %v366 = vunpack.c.l.b16 %v81
  %v367 = vunpack.c.l.b16 %v82
  %v368 = vunpack.c.l.b16 %v83
  %v369 = vunpack.c.l.b16 %v84
  %v370 = vunpack.c.l.b16 %v85
  %v371 = vunpack.c.l.b16 %v86
  %v372 = vunpack.c.l.b16 %v87
  %v373 = vunpack.c.l.b16 %v88
  %v374 = vunpack.c.l.b16 %v89
  %v375 = vunpack.c.l.b16 %v90
  %v376 = vunpack.c.l.b16 %v91
  %v377 = vunpack.c.l.b16 %v92
  %v378 = vunpack.c.l.b16 %v93
  %v379 = vunpack.c.l.b16 %v94
  %v380 = vunpack.c.l.b16 %v95
  %v381 = vunpack.c.l.b16 %v96
  %v382 = vunpack.c.l.b16 %v97
  %v383 = vunpack.c.l.b16 %v98
  %v384 = vunpack.c.l.b16 %v99
  %v385 = vunpack.c.l.b16 %v100
  %v386 = vunpack.c.l.b16 %v101
  %v387 = vunpack.c.l.b16 %v102
  %v388 = vunpack.c.l.b16 %v103
  %v389 = vunpack.c.l.b16 %v104
  %v390 = vunpack.c.l.b16 %v105
  %v391 = vunpack.c.l.b16 %v106
  %v392 = vunpack.c.l.b16 %v107
  %v393 = vunpack.c.l.b16 %v108
  %v394 = vunpack.c.l.b16 %v109
  %v395 = vunpack.c.l.b16 %v110
  %v396 = vunpack.c.l.b16 %v111
  %v397 = vunpack.c.l.b16 %v112
  %v398 = vunpack.c.l.b16 %v113
  %v399 = vunpack.c.l.b16 %v114
  %v400 = vunpack.c.l.b16 %v115
  %v401 = vpack.c.b16 %v339, %v338
  %v402 = vpack.c.b16 %v341, %v340
  %v403 = vpack.c.b16 %v343, %v342
  %v404 = vpack.c.b16 %v345, %v344
  %v405 = vpack.c.b16 %v347, %v346
  %v406 = vpack.c.b16 %v349, %v348
  %v407 = vpack.c.b16 %v351, %v350
  %v408 = vpack.c.b16 %v353, %v352
  %v409 = vpack.c.b16 %v355, %v354
  %v410 = vpack.c.b16 %v357, %v356
  %v411 = vpack.c.b16 %v359, %v358
  %v412 = vpack.c.b16 %v361, %v360
  %v413 = vpack.c.b16 %v363, %v362
  %v414 = vpack.c.b16 %v365, %v364
  %v415 = vpack.c.b16 %v367, %v366
  %v416 = vpack.c.b16 %v369, %v368
  %v417 = vpack.c.b16 %v371, %v370
  %v418 = vpack.c.b16 %v373, %v372
  %v419 = vpack.c.b16 %v375, %v374
  %v420 = vpack.c.b16 %v377, %v376
  %v421 = vpack.c.b16 %v379, %v378
  %v422 = vpack.c.b16 %v381, %v380
  %v423 = vpack.c.b16 %v383, %v382
  %v424 = vpack.c.b16 %v385, %v384
  %v425 = vpack.c.b16 %v387, %v386
  %v426 = vpack.c.b16 %v389, %v388
  %v427 = vpack.c.b16 %v391, %v390
  %v428 = vpack.c.b16 %v393, %v392
  %v429 = vpack.c.b16 %v395, %v394
  %v430 = vpack.c.b16 %v397, %v396
  %v431 = vpack.c.b16 %v399, %v398
  %v432 = vpack.c.b16 %v400, %v400
  %vm464 = vcmask 982016
  %v466 = vsel %vm464, %v222, 0
  %v469 = vsel %vm464, %v226, 0
  %v472 = vsel %vm464, %v230, 0
  %v475 = vsel %vm464, %v234, 0
  %v478 = vsel %vm464, %v238, 0
  %v481 = vsel %vm464, %v242, 0
  %v484 = vsel %vm464, %v246, 0
  %v487 = vsel %vm464, %v250, 0
  %vm489 = vcmask 1043456
  %v491 = vsel %vm489, %v432, 0
  %493 = vmatprep.subr.bf16.mxu0 0
  %494 = vmatpush1.bf16.msra.mxu0 %v401
  %495 = vmatprep.subr.bf16.mxu0 0
  %496 = vmatpush1.bf16.msra.mxu0 %v402
  %497 = vmatprep.subr.bf16.mxu0 0
  %498 = vmatpush1.bf16.msra.mxu0 %v403
  %499 = vmatprep.subr.bf16.mxu0 0
  %500 = vmatpush1.bf16.msra.mxu0 %v404
  %501 = vmatprep.subr.bf16.mxu0 0
  %502 = vmatpush1.bf16.msra.mxu0 %v405
  %503 = vmatprep.subr.bf16.mxu0 0
  %504 = vmatpush1.bf16.msra.mxu0 %v406
  %505 = vmatprep.subr.bf16.mxu0 0
  %506 = vmatpush1.bf16.msra.mxu0 %v407
  %507 = vmatprep.subr.bf16.mxu0 0
  %508 = vmatpush1.bf16.msra.mxu0 %v408
  %509 = vmatprep.subr.bf16.mxu0 0
  %510 = vmatpush1.bf16.msra.mxu0 %v409
  %511 = vmatprep.subr.bf16.mxu0 0
  %512 = vmatpush1.bf16.msra.mxu0 %v410
  %513 = vmatprep.subr.bf16.mxu0 0
  %514 = vmatpush1.bf16.msra.mxu0 %v411
  %515 = vmatprep.subr.bf16.mxu0 0
  %516 = vmatpush1.bf16.msra.mxu0 %v412
  %517 = vmatprep.subr.bf16.mxu0 0
  %518 = vmatpush1.bf16.msra.mxu0 %v413
  %519 = vmatprep.subr.bf16.mxu0 0
  %520 = vmatpush1.bf16.msra.mxu0 %v414
  %521 = vmatprep.subr.bf16.mxu0 0
  %522 = vmatpush1.bf16.msra.mxu0 %v415
  %523 = vmatprep.subr.bf16.mxu0 0
  %524 = vmatpush1.bf16.msra.mxu0 %v416
  %525 = vmatprep.mubr.bf16.mxu0 %v220
  %526 = vmatmul.mubr.bf16.gmra.mrb[0].mxu0 %v219
  %v527 = vpop.f32.mrb[0].mxu0
  %v528 = vadd.f32 %v121, %v527
  %v529 = vpop.f32.mrb[0].mxu0
  %v530 = vpop.f32.mrb[0].mxu0
  %v531 = vadd.f32 %v121, %v530
  %v532 = vpop.f32.mrb[0].mxu0
  %533 = vmatprep.mubr.bf16.mxu0 %v224
  %534 = vmatmul.mubr.bf16.gmra.mrb[0].mxu0 %v223
  %v535 = vpop.f32.mrb[0].mxu0
  %v536 = vadd.f32 %v121, %v535
  %v537 = vpop.f32.mrb[0].mxu0
  %v538 = vpop.f32.mrb[0].mxu0
  %v539 = vadd.f32 %v121, %v538
  %v540 = vpop.f32.mrb[0].mxu0
  %541 = vmatprep.mubr.bf16.mxu0 %v228
  %542 = vmatmul.mubr.bf16.gmra.mrb[0].mxu0 %v227
  %v543 = vpop.f32.mrb[0].mxu0
  %v544 = vadd.f32 %v121, %v543
  %v545 = vpop.f32.mrb[0].mxu0
  %v546 = vpop.f32.mrb[0].mxu0
  %v547 = vadd.f32 %v121, %v546
  %v548 = vpop.f32.mrb[0].mxu0
  %549 = vmatprep.mubr.bf16.mxu0 %v232
  %550 = vmatmul.mubr.bf16.gmra.mrb[0].mxu0 %v231
  %v551 = vpop.f32.mrb[0].mxu0
  %v552 = vadd.f32 %v121, %v551
  %v553 = vpop.f32.mrb[0].mxu0
  %v554 = vpop.f32.mrb[0].mxu0
  %v555 = vadd.f32 %v121, %v554
  %v556 = vpop.f32.mrb[0].mxu0
  %557 = vmatprep.mubr.bf16.mxu0 %v236
  %558 = vmatmul.mubr.bf16.gmra.mrb[0].mxu0 %v235
  %v559 = vpop.f32.mrb[0].mxu0
  %v560 = vadd.f32 %v121, %v559
  %v561 = vpop.f32.mrb[0].mxu0
  %v562 = vpop.f32.mrb[0].mxu0
  %v563 = vadd.f32 %v121, %v562
  %v564 = vpop.f32.mrb[0].mxu0
  %565 = vmatprep.mubr.bf16.mxu0 %v240
  %566 = vmatmul.mubr.bf16.gmra.mrb[0].mxu0 %v239
  %v567 = vpop.f32.mrb[0].mxu0
  %v568 = vadd.f32 %v121, %v567
  %v569 = vpop.f32.mrb[0].mxu0
  %v570 = vpop.f32.mrb[0].mxu0
  %v571 = vadd.f32 %v121, %v570
  %v572 = vpop.f32.mrb[0].mxu0
  %573 = vmatprep.mubr.bf16.mxu0 %v244
  %574 = vmatmul.mubr.bf16.gmra.mrb[0].mxu0 %v243
  %v575 = vpop.f32.mrb[0].mxu0
  %v576 = vadd.f32 %v121, %v575
  %v577 = vpop.f32.mrb[0].mxu0
  %v578 = vpop.f32.mrb[0].mxu0
  %v579 = vadd.f32 %v121, %v578
  %v580 = vpop.f32.mrb[0].mxu0
  %581 = vmatprep.mubr.bf16.mxu0 %v248
  %582 = vmatmul.mubr.bf16.gmra.mrb[0].mxu0 %v247
  %v583 = vpop.f32.mrb[0].mxu0
  %v584 = vadd.f32 %v121, %v583
  %v585 = vpop.f32.mrb[0].mxu0
  %v586 = vpop.f32.mrb[0].mxu0
  %v587 = vadd.f32 %v121, %v586
  %v588 = vpop.f32.mrb[0].mxu0
  %589 = vdwg.mxu0
  %590 = vmatprep.subr.bf16.mxu0 0
  %591 = vmatpush1.bf16.msra.mxu0 %v417
  %592 = vmatprep.subr.bf16.mxu0 0
  %593 = vmatpush1.bf16.msra.mxu0 %v418
  %594 = vmatprep.subr.bf16.mxu0 0
  %595 = vmatpush1.bf16.msra.mxu0 %v419
  %596 = vmatprep.subr.bf16.mxu0 0
  %597 = vmatpush1.bf16.msra.mxu0 %v420
  %598 = vmatprep.subr.bf16.mxu0 0
  %599 = vmatpush1.bf16.msra.mxu0 %v421
  %600 = vmatprep.subr.bf16.mxu0 0
  %601 = vmatpush1.bf16.msra.mxu0 %v422
  %602 = vmatprep.subr.bf16.mxu0 0
  %603 = vmatpush1.bf16.msra.mxu0 %v423
  %604 = vmatprep.subr.bf16.mxu0 0
  %605 = vmatpush1.bf16.msra.mxu0 %v424
  %606 = vmatprep.subr.bf16.mxu0 0
  %607 = vmatpush1.bf16.msra.mxu0 %v425
  %608 = vmatprep.subr.bf16.mxu0 0
  %609 = vmatpush1.bf16.msra.mxu0 %v426
  %610 = vmatprep.subr.bf16.mxu0 0
  %611 = vmatpush1.bf16.msra.mxu0 %v427
  %612 = vmatprep.subr.bf16.mxu0 0
  %613 = vmatpush1.bf16.msra.mxu0 %v428
  %614 = vmatprep.subr.bf16.mxu0 0
  %615 = vmatpush1.bf16.msra.mxu0 %v429
  %616 = vmatprep.subr.bf16.mxu0 0
  %617 = vmatpush1.bf16.msra.mxu0 %v430
  %618 = vmatprep.subr.bf16.mxu0 0
  %619 = vmatpush1.bf16.msra.mxu0 %v431
  %620 = vmatprep.subr.bf16.mxu0 0
  %621 = vmatpush1.bf16.msra.mxu0 %v491
  %622 = vmatprep.mubr.bf16.mxu0 %v466
  %623 = vmatmul.mubr.bf16.gmra.mrb[0].mxu0 %v221
  %v624 = vpop.f32.mrb[0].mxu0
  %v625 = vadd.f32 %v528, %v624
  %v626 = vpop.f32.mrb[0].mxu0
  %v627 = vpop.f32.mrb[0].mxu0
  %v628 = vadd.f32 %v531, %v627
  %v629 = vpop.f32.mrb[0].mxu0
  %630 = vmatprep.mubr.bf16.mxu0 %v469
  %631 = vmatmul.mubr.bf16.gmra.mrb[0].mxu0 %v225
  %v632 = vpop.f32.mrb[0].mxu0
  %v633 = vadd.f32 %v536, %v632
  %v634 = vpop.f32.mrb[0].mxu0
  %v635 = vpop.f32.mrb[0].mxu0
  %v636 = vadd.f32 %v539, %v635
  %v637 = vpop.f32.mrb[0].mxu0
  %638 = vmatprep.mubr.bf16.mxu0 %v472
  %639 = vmatmul.mubr.bf16.gmra.mrb[0].mxu0 %v229
  %v640 = vpop.f32.mrb[0].mxu0
  %v641 = vadd.f32 %v544, %v640
  %v642 = vpop.f32.mrb[0].mxu0
  %v643 = vpop.f32.mrb[0].mxu0
  %v644 = vadd.f32 %v547, %v643
  %v645 = vpop.f32.mrb[0].mxu0
  %646 = vmatprep.mubr.bf16.mxu0 %v475
  %647 = vmatmul.mubr.bf16.gmra.mrb[0].mxu0 %v233
  %v648 = vpop.f32.mrb[0].mxu0
  %v649 = vadd.f32 %v552, %v648
  %v650 = vpop.f32.mrb[0].mxu0
  %v651 = vpop.f32.mrb[0].mxu0
  %v652 = vadd.f32 %v555, %v651
  %v653 = vpop.f32.mrb[0].mxu0
  %654 = vmatprep.mubr.bf16.mxu0 %v478
  %655 = vmatmul.mubr.bf16.gmra.mrb[0].mxu0 %v237
  %v656 = vpop.f32.mrb[0].mxu0
  %v657 = vadd.f32 %v560, %v656
  %v658 = vpop.f32.mrb[0].mxu0
  %v659 = vpop.f32.mrb[0].mxu0
  %v660 = vadd.f32 %v563, %v659
  %v661 = vpop.f32.mrb[0].mxu0
  %662 = vmatprep.mubr.bf16.mxu0 %v481
  %663 = vmatmul.mubr.bf16.gmra.mrb[0].mxu0 %v241
  %v664 = vpop.f32.mrb[0].mxu0
  %v665 = vadd.f32 %v568, %v664
  %v666 = vpop.f32.mrb[0].mxu0
  %v667 = vpop.f32.mrb[0].mxu0
  %v668 = vadd.f32 %v571, %v667
  %v669 = vpop.f32.mrb[0].mxu0
  %670 = vmatprep.mubr.bf16.mxu0 %v484
  %671 = vmatmul.mubr.bf16.gmra.mrb[0].mxu0 %v245
  %v672 = vpop.f32.mrb[0].mxu0
  %v673 = vadd.f32 %v576, %v672
  %v674 = vpop.f32.mrb[0].mxu0
  %v675 = vpop.f32.mrb[0].mxu0
  %v676 = vadd.f32 %v579, %v675
  %v677 = vpop.f32.mrb[0].mxu0
  %678 = vmatprep.mubr.bf16.mxu0 %v487
  %679 = vmatmul.mubr.bf16.gmra.mrb[0].mxu0 %v249
  %v680 = vpop.f32.mrb[0].mxu0
  %v681 = vadd.f32 %v584, %v680
  %v682 = vpop.f32.mrb[0].mxu0
  %v683 = vpop.f32.mrb[0].mxu0
  %v684 = vadd.f32 %v587, %v683
  %v685 = vpop.f32.mrb[0].mxu0
  %686 = vdwg.mxu0
  %v687 = vtanh.pop %v625
  %v688 = vtanh.pop %v628
  %v689 = vtanh.pop %v633
  %v690 = vtanh.pop %v636
  %v691 = vtanh.pop %v641
  %v692 = vtanh.pop %v644
  %v693 = vtanh.pop %v649
  %v694 = vtanh.pop %v652
  %v695 = vtanh.pop %v657
  %v696 = vtanh.pop %v660
  %v697 = vtanh.pop %v665
  %v698 = vtanh.pop %v668
  %v699 = vtanh.pop %v673
  %v700 = vtanh.pop %v676
  %v701 = vtanh.pop %v681
  %v702 = vtanh.pop %v684
  %v703 = vld [vmem:[%s3] sm:$0xff]
  %v704 = vld [vmem:[%s3 + $0x8] sm:$0xff]
  %v705 = vld [vmem:[%s3 + $0x10] sm:$0xff]
  %v706 = vld [vmem:[%s3 + $0x18] sm:$0xff]
  %v707 = vld [vmem:[%s3 + $0x20] sm:$0xff]
  %v708 = vld [vmem:[%s3 + $0x28] sm:$0xff]
  %v709 = vld [vmem:[%s3 + $0x30] sm:$0xff]
  %v710 = vld [vmem:[%s3 + $0x38] sm:$0xff]
  %v711 = vld [vmem:[%s3 + $0x40] sm:$0xff]
  %v712 = vld [vmem:[%s3 + $0x48] sm:$0xff]
  %v713 = vld [vmem:[%s3 + $0x50] sm:$0xff]
  %v714 = vld [vmem:[%s3 + $0x58] sm:$0xff]
  %v715 = vld [vmem:[%s3 + $0x60] sm:$0xff]
  %v716 = vld [vmem:[%s3 + $0x68] sm:$0xff]
  %v717 = vld [vmem:[%s3 + $0x70] sm:$0xff]
  %v718 = vld [vmem:[%s3 + $0x78] sm:$0xff]
  %v719 = vxor.u32 %v703, 2147483648
  %v720 = vxor.u32 %v704, 2147483648
  %v721 = vxor.u32 %v705, 2147483648
  %v722 = vxor.u32 %v706, 2147483648
  %v723 = vxor.u32 %v707, 2147483648
  %v724 = vxor.u32 %v708, 2147483648
  %v725 = vxor.u32 %v709, 2147483648
  %v726 = vxor.u32 %v710, 2147483648
  %v727 = vxor.u32 %v711, 2147483648
  %v728 = vxor.u32 %v712, 2147483648
  %v729 = vxor.u32 %v713, 2147483648
  %v730 = vxor.u32 %v714, 2147483648
  %v731 = vxor.u32 %v715, 2147483648
  %v732 = vxor.u32 %v716, 2147483648
  %v733 = vxor.u32 %v717, 2147483648
  %v734 = vxor.u32 %v718, 2147483648
  %v735 = vmul.f32 %v719, 1.442695
  %v736 = vpow.pop %v735
  %v737 = vmul.f32 %v720, 1.442695
  %v738 = vpow.pop %v737
  %v739 = vmul.f32 %v721, 1.442695
  %v740 = vpow.pop %v739
  %v741 = vmul.f32 %v722, 1.442695
  %v742 = vpow.pop %v741
  %v743 = vmul.f32 %v723, 1.442695
  %v744 = vpow.pop %v743
  %v745 = vmul.f32 %v724, 1.442695
  %v746 = vpow.pop %v745
  %v747 = vmul.f32 %v725, 1.442695
  %v748 = vpow.pop %v747
  %v749 = vmul.f32 %v726, 1.442695
  %v750 = vpow.pop %v749
  %v751 = vmul.f32 %v727, 1.442695
  %v752 = vpow.pop %v751
  %v753 = vmul.f32 %v728, 1.442695
  %v754 = vpow.pop %v753
  %v755 = vmul.f32 %v729, 1.442695
  %v756 = vpow.pop %v755
  %v757 = vmul.f32 %v730, 1.442695
  %v758 = vpow.pop %v757
  %v759 = vmul.f32 %v731, 1.442695
  %v760 = vpow.pop %v759
  %v761 = vmul.f32 %v732, 1.442695
  %v762 = vpow.pop %v761
  %v763 = vmul.f32 %v733, 1.442695
  %v764 = vpow.pop %v763
  %v765 = vmul.f32 %v734, 1.442695
  %v766 = vpow.pop %v765
  %v767 = vadd.f32 %v736, 1.0
  %v768 = vadd.f32 %v738, 1.0
  %v769 = vadd.f32 %v740, 1.0
  %v770 = vadd.f32 %v742, 1.0
  %v771 = vadd.f32 %v744, 1.0
  %v772 = vadd.f32 %v746, 1.0
  %v773 = vadd.f32 %v748, 1.0
  %v774 = vadd.f32 %v750, 1.0
  %v775 = vadd.f32 %v752, 1.0
  %v776 = vadd.f32 %v754, 1.0
  %v777 = vadd.f32 %v756, 1.0
  %v778 = vadd.f32 %v758, 1.0
  %v779 = vadd.f32 %v760, 1.0
  %v780 = vadd.f32 %v762, 1.0
  %v781 = vadd.f32 %v764, 1.0
  %v782 = vadd.f32 %v766, 1.0
  %v783 = vrcp.pop %v767
  %v784 = vmul.f32 1.0, %v783
  %v785 = vrcp.pop %v768
  %v786 = vmul.f32 1.0, %v785
  %v787 = vrcp.pop %v769
  %v788 = vmul.f32 1.0, %v787
  %v789 = vrcp.pop %v770
  %v790 = vmul.f32 1.0, %v789
  %v791 = vrcp.pop %v771
  %v792 = vmul.f32 1.0, %v791
  %v793 = vrcp.pop %v772
  %v794 = vmul.f32 1.0, %v793
  %v795 = vrcp.pop %v773
  %v796 = vmul.f32 1.0, %v795
  %v797 = vrcp.pop %v774
  %v798 = vmul.f32 1.0, %v797
  %v799 = vrcp.pop %v775
  %v800 = vmul.f32 1.0, %v799
  %v801 = vrcp.pop %v776
  %v802 = vmul.f32 1.0, %v801
  %v803 = vrcp.pop %v777
  %v804 = vmul.f32 1.0, %v803
  %v805 = vrcp.pop %v778
  %v806 = vmul.f32 1.0, %v805
  %v807 = vrcp.pop %v779
  %v808 = vmul.f32 1.0, %v807
  %v809 = vrcp.pop %v780
  %v810 = vmul.f32 1.0, %v809
  %v811 = vrcp.pop %v781
  %v812 = vmul.f32 1.0, %v811
  %v813 = vrcp.pop %v782
  %v814 = vmul.f32 1.0, %v813
  %v815 = vsub.f32 1.0, %v784
  %v816 = vsub.f32 1.0, %v786
  %v817 = vsub.f32 1.0, %v788
  %v818 = vsub.f32 1.0, %v790
  %v819 = vsub.f32 1.0, %v792
  %v820 = vsub.f32 1.0, %v794
  %v821 = vsub.f32 1.0, %v796
  %v822 = vsub.f32 1.0, %v798
  %v823 = vsub.f32 1.0, %v800
  %v824 = vsub.f32 1.0, %v802
  %v825 = vsub.f32 1.0, %v804
  %v826 = vsub.f32 1.0, %v806
  %v827 = vsub.f32 1.0, %v808
  %v828 = vsub.f32 1.0, %v810
  %v829 = vsub.f32 1.0, %v812
  %v830 = vsub.f32 1.0, %v814
  %v831 = vld [vmem:[%s4] sm:$0xff]
  %v832 = vld [vmem:[%s4 + $0x8] sm:$0xff]
  %v833 = vld [vmem:[%s4 + $0x10] sm:$0xff]
  %v834 = vld [vmem:[%s4 + $0x18] sm:$0xff]
  %v835 = vld [vmem:[%s4 + $0x20] sm:$0xff]
  %v836 = vld [vmem:[%s4 + $0x28] sm:$0xff]
  %v837 = vld [vmem:[%s4 + $0x30] sm:$0xff]
  %v838 = vld [vmem:[%s4 + $0x38] sm:$0xff]
  %v839 = vld [vmem:[%s4 + $0x40] sm:$0xff]
  %v840 = vld [vmem:[%s4 + $0x48] sm:$0xff]
  %v841 = vld [vmem:[%s4 + $0x50] sm:$0xff]
  %v842 = vld [vmem:[%s4 + $0x58] sm:$0xff]
  %v843 = vld [vmem:[%s4 + $0x60] sm:$0xff]
  %v844 = vld [vmem:[%s4 + $0x68] sm:$0xff]
  %v845 = vld [vmem:[%s4 + $0x70] sm:$0xff]
  %v846 = vld [vmem:[%s4 + $0x78] sm:$0xff]
  %v847 = vmul.f32 %v815, %v831
  %v848 = vmul.f32 %v816, %v832
  %v849 = vmul.f32 %v817, %v833
  %v850 = vmul.f32 %v818, %v834
  %v851 = vmul.f32 %v819, %v835
  %v852 = vmul.f32 %v820, %v836
  %v853 = vmul.f32 %v821, %v837
  %v854 = vmul.f32 %v822, %v838
  %v855 = vmul.f32 %v823, %v839
  %v856 = vmul.f32 %v824, %v840
  %v857 = vmul.f32 %v825, %v841
  %v858 = vmul.f32 %v826, %v842
  %v859 = vmul.f32 %v827, %v843
  %v860 = vmul.f32 %v828, %v844
  %v861 = vmul.f32 %v829, %v845
  %v862 = vmul.f32 %v830, %v846
  %v863 = vmul.f32 %v784, %v687
  %v864 = vmul.f32 %v786, %v688
  %v865 = vmul.f32 %v788, %v689
  %v866 = vmul.f32 %v790, %v690
  %v867 = vmul.f32 %v792, %v691
  %v868 = vmul.f32 %v794, %v692
  %v869 = vmul.f32 %v796, %v693
  %v870 = vmul.f32 %v798, %v694
  %v871 = vmul.f32 %v800, %v695
  %v872 = vmul.f32 %v802, %v696
  %v873 = vmul.f32 %v804, %v697
  %v874 = vmul.f32 %v806, %v698
  %v875 = vmul.f32 %v808, %v699
  %v876 = vmul.f32 %v810, %v700
  %v877 = vmul.f32 %v812, %v701
  %v878 = vmul.f32 %v814, %v702
  %v879 = vadd.f32 %v847, %v863
  %v880 = vadd.f32 %v848, %v864
  %v881 = vadd.f32 %v849, %v865
  %v882 = vadd.f32 %v850, %v866
  %v883 = vadd.f32 %v851, %v867
  %v884 = vadd.f32 %v852, %v868
  %v885 = vadd.f32 %v853, %v869
  %v886 = vadd.f32 %v854, %v870
  %v887 = vadd.f32 %v855, %v871
  %v888 = vadd.f32 %v856, %v872
  %v889 = vadd.f32 %v857, %v873
  %v890 = vadd.f32 %v858, %v874
  %v891 = vadd.f32 %v859, %v875
  %v892 = vadd.f32 %v860, %v876
  %v893 = vadd.f32 %v861, %v877
  %v894 = vadd.f32 %v862, %v878
  %895 = vst [vmem:[%s5] sm:$0xff] %v879
  %896 = vst [vmem:[%s5 + $0x8] sm:$0xff] %v880
  %897 = vst [vmem:[%s5 + $0x10] sm:$0xff] %v881
  %898 = vst [vmem:[%s5 + $0x18] sm:$0xff] %v882
  %899 = vst [vmem:[%s5 + $0x20] sm:$0xff] %v883
  %900 = vst [vmem:[%s5 + $0x28] sm:$0xff] %v884
  %901 = vst [vmem:[%s5 + $0x30] sm:$0xff] %v885
  %902 = vst [vmem:[%s5 + $0x38] sm:$0xff] %v886
  %903 = vst [vmem:[%s5 + $0x40] sm:$0xff] %v887
  %904 = vst [vmem:[%s5 + $0x48] sm:$0xff] %v888
  %905 = vst [vmem:[%s5 + $0x50] sm:$0xff] %v889
  %906 = vst [vmem:[%s5 + $0x58] sm:$0xff] %v890
  %907 = vst [vmem:[%s5 + $0x60] sm:$0xff] %v891
  %908 = vst [vmem:[%s5 + $0x68] sm:$0xff] %v892
  %909 = vst [vmem:[%s5 + $0x70] sm:$0xff] %v893
  %910 = vst [vmem:[%s5 + $0x78] sm:$0xff] %v894
  // Predicated region
  $region22: #{_lambda_.34} parent=0 // pred_check
    _
  $region23: #{_lambda_.34} parent=0 // pred_check_branch
    %912 = sbr.rel (0) target = $region25
  $region24: #{_lambda_.34} parent=0 // pred_region
    _
  $region25: #{_lambda_.34} parent=0 // pred_fallthru
    _
  // Predicated region
  $region26: #{_lambda_.34} parent=0 // pred_check
    _
  $region27: #{_lambda_.34} parent=0 // pred_check_branch
    %914 = sbr.rel (0) target = $region29
  $region28: #{_lambda_.34} parent=0 // pred_region
    _
  $region29: #{_lambda_.34} parent=0 // pred_fallthru
    _

// kernel: _lambda_.36
$region0: #{_lambda_.36}
  #allocation0 [shape = 'u32[]', space=smem, size = 0x4, offset = 0x4, fixed_abs, tag = 'smem constant byte address 0x4 - core index']
  #allocation1 [shape = 'u32[144,128]{1,0:T(1,128)}', space=vmem, size = 0x12000, scoped, tag = 'internal scratch']
  %s0 = inlined_call_operand.vmem [shape: bf16[128,288], index: 0, kind: input, shape index: {}]
  %s1 = inlined_call_operand.vmem [shape: bf16[288,128], index: 1, kind: input, shape index: {}]
  %s2 = inlined_call_operand.vmem [shape: f32[1,128], index: 2, kind: input, shape index: {}]
  %s3 = inlined_call_operand.vmem [shape: f32[128,128], index: 3, kind: output, shape index: {}]
  %s4 = sld [smem:[#allocation0]]
  $region22: #{_lambda_.36} parent=0
    _
  %s6 = ssub.s32 1, %s4
  %s7 = scalar_select 0, %s6, %s4
  // Predicated region
  $region2: #{_lambda_.36} parent=0 // pred_check
    _
  $region3: #{_lambda_.36} parent=0 // pred_check_branch
    %9 = sbr.rel (0) target = $region5
  $region4: #{_lambda_.36} parent=0 // pred_region
    _
  $region5: #{_lambda_.36} parent=0 // pred_fallthru
    _
  // Predicated region
  $region6: #{_lambda_.36} parent=0 // pred_check
    _
  $region7: #{_lambda_.36} parent=0 // pred_check_branch
    %11 = sbr.rel (0) target = $region9
  $region8: #{_lambda_.36} parent=0 // pred_region
    _
  $region9: #{_lambda_.36} parent=0 // pred_fallthru
    _
  // Predicated region
  $region10: #{_lambda_.36} parent=0 // pred_check
    _
  $region11: #{_lambda_.36} parent=0 // pred_check_branch
    %13 = sbr.rel (0) target = $region13
  $region12: #{_lambda_.36} parent=0 // pred_region
    _
  $region13: #{_lambda_.36} parent=0 // pred_fallthru
    _
  %v15 = vld [vmem:[%s0] sm:$0xff]
  %v16 = vld [vmem:[%s0 + $0x8] sm:$0xf]
  %v17 = vld [vmem:[%s0 + $0xc] sm:$0xff]
  %v18 = vld [vmem:[%s0 + $0x14] sm:$0xf]
  %v19 = vld [vmem:[%s0 + $0x18] sm:$0xff]
  %v20 = vld [vmem:[%s0 + $0x20] sm:$0xf]
  %v21 = vld [vmem:[%s0 + $0x24] sm:$0xff]
  %v22 = vld [vmem:[%s0 + $0x2c] sm:$0xf]
  %v23 = vld [vmem:[%s0 + $0x30] sm:$0xff]
  %v24 = vld [vmem:[%s0 + $0x38] sm:$0xf]
  %v25 = vld [vmem:[%s0 + $0x3c] sm:$0xff]
  %v26 = vld [vmem:[%s0 + $0x44] sm:$0xf]
  %v27 = vld [vmem:[%s0 + $0x48] sm:$0xff]
  %v28 = vld [vmem:[%s0 + $0x50] sm:$0xf]
  %v29 = vld [vmem:[%s0 + $0x54] sm:$0xff]
  %v30 = vld [vmem:[%s0 + $0x5c] sm:$0xf]
  %v31 = vld [vmem:[%s0 + $0x60] sm:$0xff]
  %v32 = vld [vmem:[%s0 + $0x68] sm:$0xf]
  %v33 = vld [vmem:[%s0 + $0x6c] sm:$0xff]
  %v34 = vld [vmem:[%s0 + $0x74] sm:$0xf]
  %v35 = vld [vmem:[%s0 + $0x78] sm:$0xff]
  %v36 = vld [vmem:[%s0 + $0x80] sm:$0xf]
  %v37 = vld [vmem:[%s0 + $0x84] sm:$0xff]
  %v38 = vld [vmem:[%s0 + $0x8c] sm:$0xf]
  %v39 = vld [vmem:[%s0 + $0x90] sm:$0xff]
  %v40 = vld [vmem:[%s0 + $0x98] sm:$0xf]
  %v41 = vld [vmem:[%s0 + $0x9c] sm:$0xff]
  %v42 = vld [vmem:[%s0 + $0xa4] sm:$0xf]
  %v43 = vld [vmem:[%s0 + $0xa8] sm:$0xff]
  %v44 = vld [vmem:[%s0 + $0xb0] sm:$0xf]
  %v45 = vld [vmem:[%s0 + $0xb4] sm:$0xff]
  %v46 = vld [vmem:[%s0 + $0xbc] sm:$0xf]
  %v47 = vld [vmem:[%s1] sm:$0xf]
  %v48 = vld [vmem:[%s1 + $0x4] sm:$0xf]
  %v49 = vld [vmem:[%s1 + $0x8] sm:$0xf]
  %v50 = vld [vmem:[%s1 + $0xc] sm:$0xf]
  %v51 = vld [vmem:[%s1 + $0x10] sm:$0xf]
  %v52 = vld [vmem:[%s1 + $0x14] sm:$0xf]
  %v53 = vld [vmem:[%s1 + $0x18] sm:$0xf]
  %v54 = vld [vmem:[%s1 + $0x1c] sm:$0xf]
  %v55 = vld [vmem:[%s1 + $0x20] sm:$0xf]
  %v56 = vld [vmem:[%s1 + $0x24] sm:$0xf]
  %v57 = vld [vmem:[%s1 + $0x28] sm:$0xf]
  %v58 = vld [vmem:[%s1 + $0x2c] sm:$0xf]
  %v59 = vld [vmem:[%s1 + $0x30] sm:$0xf]
  %v60 = vld [vmem:[%s1 + $0x34] sm:$0xf]
  %v61 = vld [vmem:[%s1 + $0x38] sm:$0xf]
  %v62 = vld [vmem:[%s1 + $0x3c] sm:$0xf]
  %v63 = vld [vmem:[%s1 + $0x40] sm:$0xf]
  %v64 = vld [vmem:[%s1 + $0x44] sm:$0xf]
  %v65 = vld [vmem:[%s1 + $0x48] sm:$0xf]
  %v66 = vld [vmem:[%s1 + $0x4c] sm:$0xf]
  %v67 = vld [vmem:[%s1 + $0x50] sm:$0xf]
  %v68 = vld [vmem:[%s1 + $0x54] sm:$0xf]
  %v69 = vld [vmem:[%s1 + $0x58] sm:$0xf]
  %v70 = vld [vmem:[%s1 + $0x5c] sm:$0xf]
  %v71 = vld [vmem:[%s1 + $0x60] sm:$0xf]
  %v72 = vld [vmem:[%s1 + $0x64] sm:$0xf]
  %v73 = vld [vmem:[%s1 + $0x68] sm:$0xf]
  %v74 = vld [vmem:[%s1 + $0x6c] sm:$0xf]
  %v75 = vld [vmem:[%s1 + $0x70] sm:$0xf]
  %v76 = vld [vmem:[%s1 + $0x74] sm:$0xf]
  %v77 = vld [vmem:[%s1 + $0x78] sm:$0xf]
  %v78 = vld [vmem:[%s1 + $0x7c] sm:$0xf]
  %v79 = vld [vmem:[%s1 + $0x80] sm:$0xf]
  %v80 = vld [vmem:[%s1 + $0x84] sm:$0xf]
  %v81 = vld [vmem:[%s1 + $0x88] sm:$0xf]
  %v82 = vld [vmem:[%s1 + $0x8c] sm:$0xf]
  %v83 = vld [vmem:[%s2] sm:$0x1]
  %v85 = vlaneseq
  %v86 = vshrl.u32 %v85, 7
  %v87 = vsub.s32 0, %v86
  %v88 = vrot.slane %v83, %v87
  %v122 = vunpack.c.l.b16 %v15
  %v123 = vunpack.c.h.b16 %v15
  %v124 = vunpack.c.l.b16 %v16
  %v125 = vunpack.c.l.b16 %v17
  %v126 = vunpack.c.h.b16 %v17
  %v127 = vunpack.c.l.b16 %v18
  %v128 = vunpack.c.l.b16 %v19
  %v129 = vunpack.c.h.b16 %v19
  %v130 = vunpack.c.l.b16 %v20
  %v131 = vunpack.c.l.b16 %v21
  %v132 = vunpack.c.h.b16 %v21
  %v133 = vunpack.c.l.b16 %v22
  %v134 = vunpack.c.l.b16 %v23
  %v135 = vunpack.c.h.b16 %v23
  %v136 = vunpack.c.l.b16 %v24
  %v137 = vunpack.c.l.b16 %v25
  %v138 = vunpack.c.h.b16 %v25
  %v139 = vunpack.c.l.b16 %v26
  %v140 = vunpack.c.l.b16 %v27
  %v141 = vunpack.c.h.b16 %v27
  %v142 = vunpack.c.l.b16 %v28
  %v143 = vunpack.c.l.b16 %v29
  %v144 = vunpack.c.h.b16 %v29
  %v145 = vunpack.c.l.b16 %v30
  %v146 = vunpack.c.l.b16 %v31
  %v147 = vunpack.c.h.b16 %v31
  %v148 = vunpack.c.l.b16 %v32
  %v149 = vunpack.c.l.b16 %v33
  %v150 = vunpack.c.h.b16 %v33
  %v151 = vunpack.c.l.b16 %v34
  %v152 = vunpack.c.l.b16 %v35
  %v153 = vunpack.c.h.b16 %v35
  %v154 = vunpack.c.l.b16 %v36
  %v155 = vunpack.c.l.b16 %v37
  %v156 = vunpack.c.h.b16 %v37
  %v157 = vunpack.c.l.b16 %v38
  %v158 = vunpack.c.l.b16 %v39
  %v159 = vunpack.c.h.b16 %v39
  %v160 = vunpack.c.l.b16 %v40
  %v161 = vunpack.c.l.b16 %v41
  %v162 = vunpack.c.h.b16 %v41
  %v163 = vunpack.c.l.b16 %v42
  %v164 = vunpack.c.l.b16 %v43
  %v165 = vunpack.c.h.b16 %v43
  %v166 = vunpack.c.l.b16 %v44
  %v167 = vunpack.c.l.b16 %v45
  %v168 = vunpack.c.h.b16 %v45
  %v169 = vunpack.c.l.b16 %v46
  %v170 = vpack.c.b16 %v125, %v122
  %v171 = vpack.c.b16 %v126, %v123
  %v172 = vpack.c.b16 %v127, %v124
  %v173 = vpack.c.b16 %v131, %v128
  %v174 = vpack.c.b16 %v132, %v129
  %v175 = vpack.c.b16 %v133, %v130
  %v176 = vpack.c.b16 %v137, %v134
  %v177 = vpack.c.b16 %v138, %v135
  %v178 = vpack.c.b16 %v139, %v136
  %v179 = vpack.c.b16 %v143, %v140
  %v180 = vpack.c.b16 %v144, %v141
  %v181 = vpack.c.b16 %v145, %v142
  %v182 = vpack.c.b16 %v149, %v146
  %v183 = vpack.c.b16 %v150, %v147
  %v184 = vpack.c.b16 %v151, %v148
  %v185 = vpack.c.b16 %v155, %v152
  %v186 = vpack.c.b16 %v156, %v153
  %v187 = vpack.c.b16 %v157, %v154
  %v188 = vpack.c.b16 %v161, %v158
  %v189 = vpack.c.b16 %v162, %v159
  %v190 = vpack.c.b16 %v163, %v160
  %v191 = vpack.c.b16 %v167, %v164
  %v192 = vpack.c.b16 %v168, %v165
  %v193 = vpack.c.b16 %v169, %v166
  %v246 = vunpack.c.l.b16 %v47
  %v247 = vunpack.c.l.b16 %v48
  %v248 = vunpack.c.l.b16 %v49
  %v249 = vunpack.c.l.b16 %v50
  %v250 = vunpack.c.l.b16 %v51
  %v251 = vunpack.c.l.b16 %v52
  %v252 = vunpack.c.l.b16 %v53
  %v253 = vunpack.c.l.b16 %v54
  %v254 = vunpack.c.l.b16 %v55
  %v255 = vunpack.c.l.b16 %v56
  %v256 = vunpack.c.l.b16 %v57
  %v257 = vunpack.c.l.b16 %v58
  %v258 = vunpack.c.l.b16 %v59
  %v259 = vunpack.c.l.b16 %v60
  %v260 = vunpack.c.l.b16 %v61
  %v261 = vunpack.c.l.b16 %v62
  %v262 = vunpack.c.l.b16 %v63
  %v263 = vunpack.c.l.b16 %v64
  %v264 = vunpack.c.l.b16 %v65
  %v265 = vunpack.c.l.b16 %v66
  %v266 = vunpack.c.l.b16 %v67
  %v267 = vunpack.c.l.b16 %v68
  %v268 = vunpack.c.l.b16 %v69
  %v269 = vunpack.c.l.b16 %v70
  %v270 = vunpack.c.l.b16 %v71
  %v271 = vunpack.c.l.b16 %v72
  %v272 = vunpack.c.l.b16 %v73
  %v273 = vunpack.c.l.b16 %v74
  %v274 = vunpack.c.l.b16 %v75
  %v275 = vunpack.c.l.b16 %v76
  %v276 = vunpack.c.l.b16 %v77
  %v277 = vunpack.c.l.b16 %v78
  %v278 = vunpack.c.l.b16 %v79
  %v279 = vunpack.c.l.b16 %v80
  %v280 = vunpack.c.l.b16 %v81
  %v281 = vunpack.c.l.b16 %v82
  %v282 = vpack.c.b16 %v247, %v246
  %v283 = vpack.c.b16 %v249, %v248
  %v284 = vpack.c.b16 %v251, %v250
  %v285 = vpack.c.b16 %v253, %v252
  %v286 = vpack.c.b16 %v255, %v254
  %v287 = vpack.c.b16 %v257, %v256
  %v288 = vpack.c.b16 %v259, %v258
  %v289 = vpack.c.b16 %v261, %v260
  %v290 = vpack.c.b16 %v263, %v262
  %v291 = vpack.c.b16 %v265, %v264
  %v292 = vpack.c.b16 %v267, %v266
  %v293 = vpack.c.b16 %v269, %v268
  %v294 = vpack.c.b16 %v271, %v270
  %v295 = vpack.c.b16 %v273, %v272
  %v296 = vpack.c.b16 %v275, %v274
  %v297 = vpack.c.b16 %v277, %v276
  %v298 = vpack.c.b16 %v279, %v278
  %v299 = vpack.c.b16 %v281, %v280
  %vm318 = vcmask 261120
  %v320 = vsel %vm318, %v172, 0
  %v323 = vsel %vm318, %v175, 0
  %v326 = vsel %vm318, %v178, 0
  %v329 = vsel %vm318, %v181, 0
  %v332 = vsel %vm318, %v184, 0
  %v335 = vsel %vm318, %v187, 0
  %v338 = vsel %vm318, %v190, 0
  %v341 = vsel %vm318, %v193, 0
  %343 = vmatprep.subr.bf16.mxu0 0
  %344 = vmatpush1.bf16.msra.mxu0 %v282
  %345 = vmatprep.subr.bf16.mxu0 0
  %346 = vmatpush1.bf16.msra.mxu0 %v283
  %347 = vmatprep.subr.bf16.mxu0 0
  %348 = vmatpush1.bf16.msra.mxu0 %v284
  %349 = vmatprep.subr.bf16.mxu0 0
  %350 = vmatpush1.bf16.msra.mxu0 %v285
  %351 = vmatprep.subr.bf16.mxu0 0
  %352 = vmatpush1.bf16.msra.mxu0 %v286
  %353 = vmatprep.subr.bf16.mxu0 0
  %354 = vmatpush1.bf16.msra.mxu0 %v287
  %355 = vmatprep.subr.bf16.mxu0 0
  %356 = vmatpush1.bf16.msra.mxu0 %v288
  %357 = vmatprep.subr.bf16.mxu0 0
  %358 = vmatpush1.bf16.msra.mxu0 %v289
  %359 = vmatprep.subr.bf16.mxu0 0
  %360 = vmatpush1.bf16.msra.mxu0 %v290
  %361 = vmatprep.subr.bf16.mxu0 0
  %362 = vmatpush1.bf16.msra.mxu0 %v291
  %363 = vmatprep.subr.bf16.mxu0 0
  %364 = vmatpush1.bf16.msra.mxu0 %v292
  %365 = vmatprep.subr.bf16.mxu0 0
  %366 = vmatpush1.bf16.msra.mxu0 %v293
  %367 = vmatprep.subr.bf16.mxu0 0
  %368 = vmatpush1.bf16.msra.mxu0 %v294
  %369 = vmatprep.subr.bf16.mxu0 0
  %370 = vmatpush1.bf16.msra.mxu0 %v295
  %371 = vmatprep.subr.bf16.mxu0 0
  %372 = vmatpush1.bf16.msra.mxu0 %v296
  %373 = vmatprep.subr.bf16.mxu0 0
  %374 = vmatpush1.bf16.msra.mxu0 %v297
  %375 = vmatprep.mubr.bf16.mxu0 %v171
  %376 = vmatmul.mubr.bf16.gmra.mrb[0].mxu0 %v170
  %v377 = vpop.f32.mrb[0].mxu0
  %v378 = vadd.f32 %v88, %v377
  %v379 = vpop.f32.mrb[0].mxu0
  %v380 = vpop.f32.mrb[0].mxu0
  %v381 = vadd.f32 %v88, %v380
  %v382 = vpop.f32.mrb[0].mxu0
  %383 = vmatprep.mubr.bf16.mxu0 %v174
  %384 = vmatmul.mubr.bf16.gmra.mrb[0].mxu0 %v173
  %v385 = vpop.f32.mrb[0].mxu0
  %v386 = vadd.f32 %v88, %v385
  %v387 = vpop.f32.mrb[0].mxu0
  %v388 = vpop.f32.mrb[0].mxu0
  %v389 = vadd.f32 %v88, %v388
  %v390 = vpop.f32.mrb[0].mxu0
  %391 = vmatprep.mubr.bf16.mxu0 %v177
  %392 = vmatmul.mubr.bf16.gmra.mrb[0].mxu0 %v176
  %v393 = vpop.f32.mrb[0].mxu0
  %v394 = vadd.f32 %v88, %v393
  %v395 = vpop.f32.mrb[0].mxu0
  %v396 = vpop.f32.mrb[0].mxu0
  %v397 = vadd.f32 %v88, %v396
  %v398 = vpop.f32.mrb[0].mxu0
  %399 = vmatprep.mubr.bf16.mxu0 %v180
  %400 = vmatmul.mubr.bf16.gmra.mrb[0].mxu0 %v179
  %v401 = vpop.f32.mrb[0].mxu0
  %v402 = vadd.f32 %v88, %v401
  %v403 = vpop.f32.mrb[0].mxu0
  %v404 = vpop.f32.mrb[0].mxu0
  %v405 = vadd.f32 %v88, %v404
  %v406 = vpop.f32.mrb[0].mxu0
  %407 = vmatprep.mubr.bf16.mxu0 %v183
  %408 = vmatmul.mubr.bf16.gmra.mrb[0].mxu0 %v182
  %v409 = vpop.f32.mrb[0].mxu0
  %v410 = vadd.f32 %v88, %v409
  %v411 = vpop.f32.mrb[0].mxu0
  %v412 = vpop.f32.mrb[0].mxu0
  %v413 = vadd.f32 %v88, %v412
  %v414 = vpop.f32.mrb[0].mxu0
  %415 = vmatprep.mubr.bf16.mxu0 %v186
  %416 = vmatmul.mubr.bf16.gmra.mrb[0].mxu0 %v185
  %v417 = vpop.f32.mrb[0].mxu0
  %v418 = vadd.f32 %v88, %v417
  %v419 = vpop.f32.mrb[0].mxu0
  %v420 = vpop.f32.mrb[0].mxu0
  %v421 = vadd.f32 %v88, %v420
  %v422 = vpop.f32.mrb[0].mxu0
  %423 = vmatprep.mubr.bf16.mxu0 %v189
  %424 = vmatmul.mubr.bf16.gmra.mrb[0].mxu0 %v188
  %v425 = vpop.f32.mrb[0].mxu0
  %v426 = vadd.f32 %v88, %v425
  %v427 = vpop.f32.mrb[0].mxu0
  %v428 = vpop.f32.mrb[0].mxu0
  %v429 = vadd.f32 %v88, %v428
  %v430 = vpop.f32.mrb[0].mxu0
  %431 = vmatprep.mubr.bf16.mxu0 %v192
  %432 = vmatmul.mubr.bf16.gmra.mrb[0].mxu0 %v191
  %v433 = vpop.f32.mrb[0].mxu0
  %v434 = vadd.f32 %v88, %v433
  %v435 = vpop.f32.mrb[0].mxu0
  %v436 = vpop.f32.mrb[0].mxu0
  %v437 = vadd.f32 %v88, %v436
  %v438 = vpop.f32.mrb[0].mxu0
  %439 = vdwg.mxu0
  %440 = vmatprep.subr.bf16.mxu0 0
  %441 = vmatpush1.bf16.msra.mxu0 %v298
  %442 = vmatprep.subr.bf16.mxu0 0
  %443 = vmatpush1.bf16.msra.mxu0 %v299
  %444 = vmatprep.subr.bf16.mxu0 0
  %445 = vmatpush1.bf16.msra.mxu0 0
  %446 = vmatprep.subr.bf16.mxu0 0
  %447 = vmatpush1.bf16.msra.mxu0 0
  %448 = vmatprep.subr.bf16.mxu0 0
  %449 = vmatpush1.bf16.msra.mxu0 0
  %450 = vmatprep.subr.bf16.mxu0 0
  %451 = vmatpush1.bf16.msra.mxu0 0
  %452 = vmatprep.subr.bf16.mxu0 0
  %453 = vmatpush1.bf16.msra.mxu0 0
  %454 = vmatprep.subr.bf16.mxu0 0
  %455 = vmatpush1.bf16.msra.mxu0 0
  %456 = vmatprep.subr.bf16.mxu0 0
  %457 = vmatpush1.bf16.msra.mxu0 0
  %458 = vmatprep.subr.bf16.mxu0 0
  %459 = vmatpush1.bf16.msra.mxu0 0
  %460 = vmatprep.subr.bf16.mxu0 0
  %461 = vmatpush1.bf16.msra.mxu0 0
  %462 = vmatprep.subr.bf16.mxu0 0
  %463 = vmatpush1.bf16.msra.mxu0 0
  %464 = vmatprep.subr.bf16.mxu0 0
  %465 = vmatpush1.bf16.msra.mxu0 0
  %466 = vmatprep.subr.bf16.mxu0 0
  %467 = vmatpush1.bf16.msra.mxu0 0
  %468 = vmatprep.subr.bf16.mxu0 0
  %469 = vmatpush1.bf16.msra.mxu0 0
  %470 = vmatprep.subr.bf16.mxu0 0
  %471 = vmatpush1.bf16.msra.mxu0 0
  %472 = vmatprep.mubr.bf16.mxu0 0
  %473 = vmatmul.mubr.bf16.gmra.mrb[0].mxu0 %v320
  %v474 = vpop.f32.mrb[0].mxu0
  %v475 = vadd.f32 %v378, %v474
  %v476 = vpop.f32.mrb[0].mxu0
  %v477 = vpop.f32.mrb[0].mxu0
  %v478 = vadd.f32 %v381, %v477
  %v479 = vpop.f32.mrb[0].mxu0
  %480 = vmatprep.mubr.bf16.mxu0 0
  %481 = vmatmul.mubr.bf16.gmra.mrb[0].mxu0 %v323
  %v482 = vpop.f32.mrb[0].mxu0
  %v483 = vadd.f32 %v386, %v482
  %v484 = vpop.f32.mrb[0].mxu0
  %v485 = vpop.f32.mrb[0].mxu0
  %v486 = vadd.f32 %v389, %v485
  %v487 = vpop.f32.mrb[0].mxu0
  %488 = vmatprep.mubr.bf16.mxu0 0
  %489 = vmatmul.mubr.bf16.gmra.mrb[0].mxu0 %v326
  %v490 = vpop.f32.mrb[0].mxu0
  %v491 = vadd.f32 %v394, %v490
  %v492 = vpop.f32.mrb[0].mxu0
  %v493 = vpop.f32.mrb[0].mxu0
  %v494 = vadd.f32 %v397, %v493
  %v495 = vpop.f32.mrb[0].mxu0
  %496 = vmatprep.mubr.bf16.mxu0 0
  %497 = vmatmul.mubr.bf16.gmra.mrb[0].mxu0 %v329
  %v498 = vpop.f32.mrb[0].mxu0
  %v499 = vadd.f32 %v402, %v498
  %v500 = vpop.f32.mrb[0].mxu0
  %v501 = vpop.f32.mrb[0].mxu0
  %v502 = vadd.f32 %v405, %v501
  %v503 = vpop.f32.mrb[0].mxu0
  %504 = vmatprep.mubr.bf16.mxu0 0
  %505 = vmatmul.mubr.bf16.gmra.mrb[0].mxu0 %v332
  %v506 = vpop.f32.mrb[0].mxu0
  %v507 = vadd.f32 %v410, %v506
  %v508 = vpop.f32.mrb[0].mxu0
  %v509 = vpop.f32.mrb[0].mxu0
  %v510 = vadd.f32 %v413, %v509
  %v511 = vpop.f32.mrb[0].mxu0
  %512 = vmatprep.mubr.bf16.mxu0 0
  %513 = vmatmul.mubr.bf16.gmra.mrb[0].mxu0 %v335
  %v514 = vpop.f32.mrb[0].mxu0
  %v515 = vadd.f32 %v418, %v514
  %v516 = vpop.f32.mrb[0].mxu0
  %v517 = vpop.f32.mrb[0].mxu0
  %v518 = vadd.f32 %v421, %v517
  %v519 = vpop.f32.mrb[0].mxu0
  %520 = vmatprep.mubr.bf16.mxu0 0
  %521 = vmatmul.mubr.bf16.gmra.mrb[0].mxu0 %v338
  %v522 = vpop.f32.mrb[0].mxu0
  %v523 = vadd.f32 %v426, %v522
  %v524 = vpop.f32.mrb[0].mxu0
  %v525 = vpop.f32.mrb[0].mxu0
  %v526 = vadd.f32 %v429, %v525
  %v527 = vpop.f32.mrb[0].mxu0
  %528 = vmatprep.mubr.bf16.mxu0 0
  %529 = vmatmul.mubr.bf16.gmra.mrb[0].mxu0 %v341
  %v530 = vpop.f32.mrb[0].mxu0
  %v531 = vadd.f32 %v434, %v530
  %v532 = vpop.f32.mrb[0].mxu0
  %v533 = vpop.f32.mrb[0].mxu0
  %v534 = vadd.f32 %v437, %v533
  %v535 = vpop.f32.mrb[0].mxu0
  %536 = vdwg.mxu0
  %537 = vst [vmem:[%s3] sm:$0xff] %v475
  %538 = vst [vmem:[%s3 + $0x8] sm:$0xff] %v478
  %539 = vst [vmem:[%s3 + $0x10] sm:$0xff] %v483
  %540 = vst [vmem:[%s3 + $0x18] sm:$0xff] %v486
  %541 = vst [vmem:[%s3 + $0x20] sm:$0xff] %v491
  %542 = vst [vmem:[%s3 + $0x28] sm:$0xff] %v494
  %543 = vst [vmem:[%s3 + $0x30] sm:$0xff] %v499
  %544 = vst [vmem:[%s3 + $0x38] sm:$0xff] %v502
  %545 = vst [vmem:[%s3 + $0x40] sm:$0xff] %v507
  %546 = vst [vmem:[%s3 + $0x48] sm:$0xff] %v510
  %547 = vst [vmem:[%s3 + $0x50] sm:$0xff] %v515
  %548 = vst [vmem:[%s3 + $0x58] sm:$0xff] %v518
  %549 = vst [vmem:[%s3 + $0x60] sm:$0xff] %v523
  %550 = vst [vmem:[%s3 + $0x68] sm:$0xff] %v526
  %551 = vst [vmem:[%s3 + $0x70] sm:$0xff] %v531
  %552 = vst [vmem:[%s3 + $0x78] sm:$0xff] %v534
  // Predicated region
  $region14: #{_lambda_.36} parent=0 // pred_check
    _
  $region15: #{_lambda_.36} parent=0 // pred_check_branch
    %554 = sbr.rel (0) target = $region17
  $region16: #{_lambda_.36} parent=0 // pred_region
    _
  $region17: #{_lambda_.36} parent=0 // pred_fallthru
    _
  // Predicated region
  $region18: #{_lambda_.36} parent=0 // pred_check
    _
  $region19: #{_lambda_.36} parent=0 // pred_check_branch
    %556 = sbr.rel (0) target = $region21
  $region20: #{_lambda_.36} parent=0 // pred_region
    _
  $region21: #{_lambda_.36} parent=0 // pred_fallthru
    _

// kernel: _lambda_.46
$region0: #{_lambda_.46}
  #allocation0 [shape = 'u32[]', space=smem, size = 0x4, offset = 0x4, fixed_abs, tag = 'smem constant byte address 0x4 - core index']
  #allocation1 [shape = 'u32[144,128]{1,0:T(1,128)}', space=vmem, size = 0x12000, scoped, tag = 'internal scratch']
  %s0 = inlined_call_operand.vmem [shape: bf16[128,32], index: 0, kind: input, shape index: {}]
  %s1 = inlined_call_operand.vmem [shape: bf16[32,256], index: 1, kind: input, shape index: {}]
  %s2 = inlined_call_operand.vmem [shape: f32[1,256], index: 2, kind: input, shape index: {}]
  %s3 = inlined_call_operand.vmem [shape: f32[128,256], index: 3, kind: output, shape index: {}]
  %s4 = sld [smem:[#allocation0]]
  $region22: #{_lambda_.46} parent=0
    _
  %s6 = ssub.s32 1, %s4
  %s7 = scalar_select 0, %s6, %s4
  // Predicated region
  $region2: #{_lambda_.46} parent=0 // pred_check
    _
  $region3: #{_lambda_.46} parent=0 // pred_check_branch
    %9 = sbr.rel (0) target = $region5
  $region4: #{_lambda_.46} parent=0 // pred_region
    _
  $region5: #{_lambda_.46} parent=0 // pred_fallthru
    _
  // Predicated region
  $region6: #{_lambda_.46} parent=0 // pred_check
    _
  $region7: #{_lambda_.46} parent=0 // pred_check_branch
    %11 = sbr.rel (0) target = $region9
  $region8: #{_lambda_.46} parent=0 // pred_region
    _
  $region9: #{_lambda_.46} parent=0 // pred_fallthru
    _
  // Predicated region
  $region10: #{_lambda_.46} parent=0 // pred_check
    _
  $region11: #{_lambda_.46} parent=0 // pred_check_branch
    %13 = sbr.rel (0) target = $region13
  $region12: #{_lambda_.46} parent=0 // pred_region
    _
  $region13: #{_lambda_.46} parent=0 // pred_fallthru
    _
  %v15 = vld [vmem:[%s0] sm:$0xf]
  %v16 = vld [vmem:[%s0 + $0x4] sm:$0xf]
  %v17 = vld [vmem:[%s0 + $0x8] sm:$0xf]
  %v18 = vld [vmem:[%s0 + $0xc] sm:$0xf]
  %v19 = vld [vmem:[%s0 + $0x10] sm:$0xf]
  %v20 = vld [vmem:[%s0 + $0x14] sm:$0xf]
  %v21 = vld [vmem:[%s0 + $0x18] sm:$0xf]
  %v22 = vld [vmem:[%s0 + $0x1c] sm:$0xf]
  %v23 = vld [vmem:[%s0 + $0x20] sm:$0xf]
  %v24 = vld [vmem:[%s0 + $0x24] sm:$0xf]
  %v25 = vld [vmem:[%s0 + $0x28] sm:$0xf]
  %v26 = vld [vmem:[%s0 + $0x2c] sm:$0xf]
  %v27 = vld [vmem:[%s0 + $0x30] sm:$0xf]
  %v28 = vld [vmem:[%s0 + $0x34] sm:$0xf]
  %v29 = vld [vmem:[%s0 + $0x38] sm:$0xf]
  %v30 = vld [vmem:[%s0 + $0x3c] sm:$0xf]
  %v31 = vld [vmem:[%s1] sm:$0xff]
  %v32 = vld [vmem:[%s1 + $0x8] sm:$0xff]
  %v33 = vld [vmem:[%s1 + $0x10] sm:$0xff]
  %v34 = vld [vmem:[%s1 + $0x18] sm:$0xff]
  %v35 = vld [vmem:[%s2] sm:$0x3]
  %v37 = vlaneseq
  %v38 = vshrl.u32 %v37, 7
  %v39 = vsub.s32 0, %v38
  %v40 = vrot.slane %v35, %v39
  %v41 = vlaneseq
  %v42 = vshrl.u32 %v41, 7
  %v43 = vsub.s32 1, %v42
  %v44 = vrot.slane %v35, %v43
  %v63 = vunpack.c.l.b16 %v15
  %v64 = vunpack.c.l.b16 %v16
  %v65 = vunpack.c.l.b16 %v17
  %v66 = vunpack.c.l.b16 %v18
  %v67 = vunpack.c.l.b16 %v19
  %v68 = vunpack.c.l.b16 %v20
  %v69 = vunpack.c.l.b16 %v21
  %v70 = vunpack.c.l.b16 %v22
  %v71 = vunpack.c.l.b16 %v23
  %v72 = vunpack.c.l.b16 %v24
  %v73 = vunpack.c.l.b16 %v25
  %v74 = vunpack.c.l.b16 %v26
  %v75 = vunpack.c.l.b16 %v27
  %v76 = vunpack.c.l.b16 %v28
  %v77 = vunpack.c.l.b16 %v29
  %v78 = vunpack.c.l.b16 %v30
  %v79 = vpack.c.b16 %v64, %v63
  %v80 = vpack.c.b16 %v66, %v65
  %v81 = vpack.c.b16 %v68, %v67
  %v82 = vpack.c.b16 %v70, %v69
  %v83 = vpack.c.b16 %v72, %v71
  %v84 = vpack.c.b16 %v74, %v73
  %v85 = vpack.c.b16 %v76, %v75
  %v86 = vpack.c.b16 %v78, %v77
  %v91 = vunpack.c.l.b16 %v31
  %v92 = vunpack.c.h.b16 %v31
  %v93 = vunpack.c.l.b16 %v32
  %v94 = vunpack.c.h.b16 %v32
  %v95 = vunpack.c.l.b16 %v33
  %v96 = vunpack.c.h.b16 %v33
  %v97 = vunpack.c.l.b16 %v34
  %v98 = vunpack.c.h.b16 %v34
  %v99 = vpack.c.b16 %v93, %v91
  %v100 = vpack.c.b16 %v94, %v92
  %v101 = vpack.c.b16 %v97, %v95
  %v102 = vpack.c.b16 %v98, %v96
  %vm107 = vcmask 261120
  %v109 = vsel %vm107, %v79, 0
  %v112 = vsel %vm107, %v80, 0
  %v115 = vsel %vm107, %v81, 0
  %v118 = vsel %vm107, %v82, 0
  %v121 = vsel %vm107, %v83, 0
  %v124 = vsel %vm107, %v84, 0
  %v127 = vsel %vm107, %v85, 0
  %v130 = vsel %vm107, %v86, 0
  %132 = vmatprep.subr.bf16.mxu0 %v100
  %133 = vmatpush1.bf16.msra.mxu0 %v99
  %134 = vmatprep.subr.bf16.mxu0 %v102
  %135 = vmatpush1.bf16.msra.mxu0 %v101
  %136 = vmatprep.subr.bf16.mxu0 0
  %137 = vmatpush1.bf16.msra.mxu0 0
  %138 = vmatprep.subr.bf16.mxu0 0
  %139 = vmatpush1.bf16.msra.mxu0 0
  %140 = vmatprep.subr.bf16.mxu0 0
  %141 = vmatpush1.bf16.msra.mxu0 0
  %142 = vmatprep.subr.bf16.mxu0 0
  %143 = vmatpush1.bf16.msra.mxu0 0
  %144 = vmatprep.subr.bf16.mxu0 0
  %145 = vmatpush1.bf16.msra.mxu0 0
  %146 = vmatprep.subr.bf16.mxu0 0
  %147 = vmatpush1.bf16.msra.mxu0 0
  %148 = vmatprep.subr.bf16.mxu0 0
  %149 = vmatpush1.bf16.msra.mxu0 0
  %150 = vmatprep.subr.bf16.mxu0 0
  %151 = vmatpush1.bf16.msra.mxu0 0
  %152 = vmatprep.subr.bf16.mxu0 0
  %153 = vmatpush1.bf16.msra.mxu0 0
  %154 = vmatprep.subr.bf16.mxu0 0
  %155 = vmatpush1.bf16.msra.mxu0 0
  %156 = vmatprep.subr.bf16.mxu0 0
  %157 = vmatpush1.bf16.msra.mxu0 0
  %158 = vmatprep.subr.bf16.mxu0 0
  %159 = vmatpush1.bf16.msra.mxu0 0
  %160 = vmatprep.subr.bf16.mxu0 0
  %161 = vmatpush1.bf16.msra.mxu0 0
  %162 = vmatprep.subr.bf16.mxu0 0
  %163 = vmatpush1.bf16.msra.mxu0 0
  %164 = vmatprep.mubr.bf16.mxu0 0
  %165 = vmatmul.mubr.bf16.gmra.mrb[0].mxu0 %v109
  %v166 = vpop.f32.mrb[0].mxu0
  %v167 = vadd.f32 %v40, %v166
  %v168 = vpop.f32.mrb[0].mxu0
  %v169 = vadd.f32 %v44, %v168
  %v170 = vpop.f32.mrb[0].mxu0
  %v171 = vadd.f32 %v40, %v170
  %v172 = vpop.f32.mrb[0].mxu0
  %v173 = vadd.f32 %v44, %v172
  %174 = vmatprep.mubr.bf16.mxu0 0
  %175 = vmatmul.mubr.bf16.gmra.mrb[0].mxu0 %v112
  %v176 = vpop.f32.mrb[0].mxu0
  %v177 = vadd.f32 %v40, %v176
  %v178 = vpop.f32.mrb[0].mxu0
  %v179 = vadd.f32 %v44, %v178
  %v180 = vpop.f32.mrb[0].mxu0
  %v181 = vadd.f32 %v40, %v180
  %v182 = vpop.f32.mrb[0].mxu0
  %v183 = vadd.f32 %v44, %v182
  %184 = vmatprep.mubr.bf16.mxu0 0
  %185 = vmatmul.mubr.bf16.gmra.mrb[0].mxu0 %v115
  %v186 = vpop.f32.mrb[0].mxu0
  %v187 = vadd.f32 %v40, %v186
  %v188 = vpop.f32.mrb[0].mxu0
  %v189 = vadd.f32 %v44, %v188
  %v190 = vpop.f32.mrb[0].mxu0
  %v191 = vadd.f32 %v40, %v190
  %v192 = vpop.f32.mrb[0].mxu0
  %v193 = vadd.f32 %v44, %v192
  %194 = vmatprep.mubr.bf16.mxu0 0
  %195 = vmatmul.mubr.bf16.gmra.mrb[0].mxu0 %v118
  %v196 = vpop.f32.mrb[0].mxu0
  %v197 = vadd.f32 %v40, %v196
  %v198 = vpop.f32.mrb[0].mxu0
  %v199 = vadd.f32 %v44, %v198
  %v200 = vpop.f32.mrb[0].mxu0
  %v201 = vadd.f32 %v40, %v200
  %v202 = vpop.f32.mrb[0].mxu0
  %v203 = vadd.f32 %v44, %v202
  %204 = vmatprep.mubr.bf16.mxu0 0
  %205 = vmatmul.mubr.bf16.gmra.mrb[0].mxu0 %v121
  %v206 = vpop.f32.mrb[0].mxu0
  %v207 = vadd.f32 %v40, %v206
  %v208 = vpop.f32.mrb[0].mxu0
  %v209 = vadd.f32 %v44, %v208
  %v210 = vpop.f32.mrb[0].mxu0
  %v211 = vadd.f32 %v40, %v210
  %v212 = vpop.f32.mrb[0].mxu0
  %v213 = vadd.f32 %v44, %v212
  %214 = vmatprep.mubr.bf16.mxu0 0
  %215 = vmatmul.mubr.bf16.gmra.mrb[0].mxu0 %v124
  %v216 = vpop.f32.mrb[0].mxu0
  %v217 = vadd.f32 %v40, %v216
  %v218 = vpop.f32.mrb[0].mxu0
  %v219 = vadd.f32 %v44, %v218
  %v220 = vpop.f32.mrb[0].mxu0
  %v221 = vadd.f32 %v40, %v220
  %v222 = vpop.f32.mrb[0].mxu0
  %v223 = vadd.f32 %v44, %v222
  %224 = vmatprep.mubr.bf16.mxu0 0
  %225 = vmatmul.mubr.bf16.gmra.mrb[0].mxu0 %v127
  %v226 = vpop.f32.mrb[0].mxu0
  %v227 = vadd.f32 %v40, %v226
  %v228 = vpop.f32.mrb[0].mxu0
  %v229 = vadd.f32 %v44, %v228
  %v230 = vpop.f32.mrb[0].mxu0
  %v231 = vadd.f32 %v40, %v230
  %v232 = vpop.f32.mrb[0].mxu0
  %v233 = vadd.f32 %v44, %v232
  %234 = vmatprep.mubr.bf16.mxu0 0
  %235 = vmatmul.mubr.bf16.gmra.mrb[0].mxu0 %v130
  %v236 = vpop.f32.mrb[0].mxu0
  %v237 = vadd.f32 %v40, %v236
  %v238 = vpop.f32.mrb[0].mxu0
  %v239 = vadd.f32 %v44, %v238
  %v240 = vpop.f32.mrb[0].mxu0
  %v241 = vadd.f32 %v40, %v240
  %v242 = vpop.f32.mrb[0].mxu0
  %v243 = vadd.f32 %v44, %v242
  %244 = vdwg.mxu0
  %245 = vst [vmem:[%s3] sm:$0xff] %v167
  %246 = vst [vmem:[%s3 + $0x8] sm:$0xff] %v169
  %247 = vst [vmem:[%s3 + $0x10] sm:$0xff] %v171
  %248 = vst [vmem:[%s3 + $0x18] sm:$0xff] %v173
  %249 = vst [vmem:[%s3 + $0x20] sm:$0xff] %v177
  %250 = vst [vmem:[%s3 + $0x28] sm:$0xff] %v179
  %251 = vst [vmem:[%s3 + $0x30] sm:$0xff] %v181
  %252 = vst [vmem:[%s3 + $0x38] sm:$0xff] %v183
  %253 = vst [vmem:[%s3 + $0x40] sm:$0xff] %v187
  %254 = vst [vmem:[%s3 + $0x48] sm:$0xff] %v189
  %255 = vst [vmem:[%s3 + $0x50] sm:$0xff] %v191
  %256 = vst [vmem:[%s3 + $0x58] sm:$0xff] %v193
  %257 = vst [vmem:[%s3 + $0x60] sm:$0xff] %v197
  %258 = vst [vmem:[%s3 + $0x68] sm:$0xff] %v199
  %259 = vst [vmem:[%s3 + $0x70] sm:$0xff] %v201
  %260 = vst [vmem:[%s3 + $0x78] sm:$0xff] %v203
  %261 = vst [vmem:[%s3 + $0x80] sm:$0xff] %v207
  %262 = vst [vmem:[%s3 + $0x88] sm:$0xff] %v209
  %263 = vst [vmem:[%s3 + $0x90] sm:$0xff] %v211
  %264 = vst [vmem:[%s3 + $0x98] sm:$0xff] %v213
  %265 = vst [vmem:[%s3 + $0xa0] sm:$0xff] %v217
  %266 = vst [vmem:[%s3 + $0xa8] sm:$0xff] %v219
  %267 = vst [vmem:[%s3 + $0xb0] sm:$0xff] %v221
  %268 = vst [vmem:[%s3 + $0xb8] sm:$0xff] %v223
  %269 = vst [vmem:[%s3 + $0xc0] sm:$0xff] %v227
  %270 = vst [vmem:[%s3 + $0xc8] sm:$0xff] %v229
  %271 = vst [vmem:[%s3 + $0xd0] sm:$0xff] %v231
  %272 = vst [vmem:[%s3 + $0xd8] sm:$0xff] %v233
  %273 = vst [vmem:[%s3 + $0xe0] sm:$0xff] %v237
  %274 = vst [vmem:[%s3 + $0xe8] sm:$0xff] %v239
  %275 = vst [vmem:[%s3 + $0xf0] sm:$0xff] %v241
  %276 = vst [vmem:[%s3 + $0xf8] sm:$0xff] %v243
  // Predicated region
  $region14: #{_lambda_.46} parent=0 // pred_check
    _
  $region15: #{_lambda_.46} parent=0 // pred_check_branch
    %278 = sbr.rel (0) target = $region17
  $region16: #{_lambda_.46} parent=0 // pred_region
    _
  $region17: #{_lambda_.46} parent=0 // pred_fallthru
    _
  // Predicated region
  $region18: #{_lambda_.46} parent=0 // pred_check
    _
  $region19: #{_lambda_.46} parent=0 // pred_check_branch
    %280 = sbr.rel (0) target = $region21
  $region20: #{_lambda_.46} parent=0 // pred_region
    _
  $region21: #{_lambda_.46} parent=0 // pred_fallthru
    _

// kernel: _lambda_.47
$region0: #{_lambda_.47}
  #allocation0 [shape = 'u32[]', space=smem, size = 0x4, offset = 0x4, fixed_abs, tag = 'smem constant byte address 0x4 - core index']
  #allocation1 [shape = 'u32[144,128]{1,0:T(1,128)}', space=vmem, size = 0x12000, scoped, tag = 'internal scratch']
  %s0 = inlined_call_operand.vmem [shape: f32[128,144], index: 0, kind: input, shape index: {}]
  %s1 = inlined_call_operand.vmem [shape: f32[128,9], index: 1, kind: input, shape index: {}]
  %s2 = inlined_call_operand.vmem [shape: f32[128,16], index: 2, kind: output, shape index: {}]
  %s3 = sld [smem:[#allocation0]]
  $region18: #{_lambda_.47} parent=0
    _
  %s5 = ssub.s32 1, %s3
  %s6 = scalar_select 0, %s5, %s3
  // Predicated region
  $region2: #{_lambda_.47} parent=0 // pred_check
    _
  $region3: #{_lambda_.47} parent=0 // pred_check_branch
    %8 = sbr.rel (0) target = $region5
  $region4: #{_lambda_.47} parent=0 // pred_region
    _
  $region5: #{_lambda_.47} parent=0 // pred_fallthru
    _
  // Predicated region
  $region6: #{_lambda_.47} parent=0 // pred_check
    _
  $region7: #{_lambda_.47} parent=0 // pred_check_branch
    %10 = sbr.rel (0) target = $region9
  $region8: #{_lambda_.47} parent=0 // pred_region
    _
  $region9: #{_lambda_.47} parent=0 // pred_fallthru
    _
  %v11 = vld [vmem:[%s0] sm:$0xff]
  %v12 = vld [vmem:[%s0 + $0x8] sm:$0xff]
  %v13 = vld [vmem:[%s0 + $0x10] sm:$0xff]
  %v14 = vld [vmem:[%s0 + $0x18] sm:$0xff]
  %v15 = vld [vmem:[%s0 + $0x20] sm:$0xff]
  %v16 = vld [vmem:[%s0 + $0x28] sm:$0xff]
  %v17 = vld [vmem:[%s0 + $0x30] sm:$0xff]
  %v18 = vld [vmem:[%s0 + $0x38] sm:$0xff]
  %v19 = vld [vmem:[%s0 + $0x40] sm:$0xff]
  %v20 = vld [vmem:[%s0 + $0x48] sm:$0xff]
  %v21 = vld [vmem:[%s0 + $0x50] sm:$0xff]
  %v22 = vld [vmem:[%s0 + $0x58] sm:$0xff]
  %v23 = vld [vmem:[%s0 + $0x60] sm:$0xff]
  %v24 = vld [vmem:[%s0 + $0x68] sm:$0xff]
  %v25 = vld [vmem:[%s0 + $0x70] sm:$0xff]
  %v26 = vld [vmem:[%s0 + $0x78] sm:$0xff]
  %v27 = vld [vmem:[%s0 + $0x80] sm:$0xff]
  %v28 = vld [vmem:[%s0 + $0x88] sm:$0xff]
  %v29 = vld [vmem:[%s0 + $0x90] sm:$0xff]
  %v30 = vld [vmem:[%s0 + $0x98] sm:$0xff]
  %v31 = vld [vmem:[%s0 + $0xa0] sm:$0xff]
  %v32 = vld [vmem:[%s0 + $0xa8] sm:$0xff]
  %v33 = vld [vmem:[%s0 + $0xb0] sm:$0xff]
  %v34 = vld [vmem:[%s0 + $0xb8] sm:$0xff]
  %v35 = vld [vmem:[%s0 + $0xc0] sm:$0xff]
  %v36 = vld [vmem:[%s0 + $0xc8] sm:$0xff]
  %v37 = vld [vmem:[%s0 + $0xd0] sm:$0xff]
  %v38 = vld [vmem:[%s0 + $0xd8] sm:$0xff]
  %v39 = vld [vmem:[%s0 + $0xe0] sm:$0xff]
  %v40 = vld [vmem:[%s0 + $0xe8] sm:$0xff]
  %v41 = vld [vmem:[%s0 + $0xf0] sm:$0xff]
  %v42 = vld [vmem:[%s0 + $0xf8] sm:$0xff]
  %v43 = vld [vmem:[%s1] sm:$0xff]
  %v44 = vld [vmem:[%s1 + $0x8] sm:$0xff]
  %v45 = vld [vmem:[%s1 + $0x10] sm:$0xff]
  %v46 = vld [vmem:[%s1 + $0x18] sm:$0xff]
  %v47 = vld [vmem:[%s1 + $0x20] sm:$0xff]
  %v48 = vld [vmem:[%s1 + $0x28] sm:$0xff]
  %v49 = vld [vmem:[%s1 + $0x30] sm:$0xff]
  %v50 = vld [vmem:[%s1 + $0x38] sm:$0xff]
  %v51 = vld [vmem:[%s1 + $0x40] sm:$0xff]
  %v52 = vld [vmem:[%s1 + $0x48] sm:$0xff]
  %v53 = vld [vmem:[%s1 + $0x50] sm:$0xff]
  %v54 = vld [vmem:[%s1 + $0x58] sm:$0xff]
  %v55 = vld [vmem:[%s1 + $0x60] sm:$0xff]
  %v56 = vld [vmem:[%s1 + $0x68] sm:$0xff]
  %v57 = vld [vmem:[%s1 + $0x70] sm:$0xff]
  %v58 = vld [vmem:[%s1 + $0x78] sm:$0xff]
  %75 = vrot.lane.b32.xlu0 %v11, 112
  %v76 = vpop.permute.xlu0 %75
  %77 = vrot.lane.b32.xlu0 %v13, 112
  %v78 = vpop.permute.xlu0 %77
  %79 = vrot.lane.b32.xlu0 %v15, 112
  %v80 = vpop.permute.xlu0 %79
  %81 = vrot.lane.b32.xlu0 %v17, 112
  %v82 = vpop.permute.xlu0 %81
  %83 = vrot.lane.b32.xlu0 %v19, 112
  %v84 = vpop.permute.xlu0 %83
  %85 = vrot.lane.b32.xlu0 %v21, 112
  %v86 = vpop.permute.xlu0 %85
  %87 = vrot.lane.b32.xlu0 %v23, 112
  %v88 = vpop.permute.xlu0 %87
  %89 = vrot.lane.b32.xlu0 %v25, 112
  %v90 = vpop.permute.xlu0 %89
  %91 = vrot.lane.b32.xlu0 %v27, 112
  %v92 = vpop.permute.xlu0 %91
  %93 = vrot.lane.b32.xlu0 %v29, 112
  %v94 = vpop.permute.xlu0 %93
  %95 = vrot.lane.b32.xlu0 %v31, 112
  %v96 = vpop.permute.xlu0 %95
  %97 = vrot.lane.b32.xlu0 %v33, 112
  %v98 = vpop.permute.xlu0 %97
  %99 = vrot.lane.b32.xlu0 %v35, 112
  %v100 = vpop.permute.xlu0 %99
  %101 = vrot.lane.b32.xlu0 %v37, 112
  %v102 = vpop.permute.xlu0 %101
  %103 = vrot.lane.b32.xlu0 %v39, 112
  %v104 = vpop.permute.xlu0 %103
  %105 = vrot.lane.b32.xlu0 %v41, 112
  %v106 = vpop.permute.xlu0 %105
  %v123 = vmax.f32 %v11, %v76
  %v124 = vmax.f32 %v13, %v78
  %v125 = vmax.f32 %v15, %v80
  %v126 = vmax.f32 %v17, %v82
  %v127 = vmax.f32 %v19, %v84
  %v128 = vmax.f32 %v21, %v86
  %v129 = vmax.f32 %v23, %v88
  %v130 = vmax.f32 %v25, %v90
  %v131 = vmax.f32 %v27, %v92
  %v132 = vmax.f32 %v29, %v94
  %v133 = vmax.f32 %v31, %v96
  %v134 = vmax.f32 %v33, %v98
  %v135 = vmax.f32 %v35, %v100
  %v136 = vmax.f32 %v37, %v102
  %v137 = vmax.f32 %v39, %v104
  %v138 = vmax.f32 %v41, %v106
  %139 = vrot.lane.b32.xlu0 %v11, 96
  %v140 = vpop.permute.xlu0 %139
  %141 = vrot.lane.b32.xlu0 %v13, 96
  %v142 = vpop.permute.xlu0 %141
  %143 = vrot.lane.b32.xlu0 %v15, 96
  %v144 = vpop.permute.xlu0 %143
  %145 = vrot.lane.b32.xlu0 %v17, 96
  %v146 = vpop.permute.xlu0 %145
  %147 = vrot.lane.b32.xlu0 %v19, 96
  %v148 = vpop.permute.xlu0 %147
  %149 = vrot.lane.b32.xlu0 %v21, 96
  %v150 = vpop.permute.xlu0 %149
  %151 = vrot.lane.b32.xlu0 %v23, 96
  %v152 = vpop.permute.xlu0 %151
  %153 = vrot.lane.b32.xlu0 %v25, 96
  %v154 = vpop.permute.xlu0 %153
  %155 = vrot.lane.b32.xlu0 %v27, 96
  %v156 = vpop.permute.xlu0 %155
  %157 = vrot.lane.b32.xlu0 %v29, 96
  %v158 = vpop.permute.xlu0 %157
  %159 = vrot.lane.b32.xlu0 %v31, 96
  %v160 = vpop.permute.xlu0 %159
  %161 = vrot.lane.b32.xlu0 %v33, 96
  %v162 = vpop.permute.xlu0 %161
  %163 = vrot.lane.b32.xlu0 %v35, 96
  %v164 = vpop.permute.xlu0 %163
  %165 = vrot.lane.b32.xlu0 %v37, 96
  %v166 = vpop.permute.xlu0 %165
  %167 = vrot.lane.b32.xlu0 %v39, 96
  %v168 = vpop.permute.xlu0 %167
  %169 = vrot.lane.b32.xlu0 %v41, 96
  %v170 = vpop.permute.xlu0 %169
  %v187 = vmax.f32 %v123, %v140
  %v188 = vmax.f32 %v124, %v142
  %v189 = vmax.f32 %v125, %v144
  %v190 = vmax.f32 %v126, %v146
  %v191 = vmax.f32 %v127, %v148
  %v192 = vmax.f32 %v128, %v150
  %v193 = vmax.f32 %v129, %v152
  %v194 = vmax.f32 %v130, %v154
  %v195 = vmax.f32 %v131, %v156
  %v196 = vmax.f32 %v132, %v158
  %v197 = vmax.f32 %v133, %v160
  %v198 = vmax.f32 %v134, %v162
  %v199 = vmax.f32 %v135, %v164
  %v200 = vmax.f32 %v136, %v166
  %v201 = vmax.f32 %v137, %v168
  %v202 = vmax.f32 %v138, %v170
  %203 = vrot.lane.b32.xlu0 %v11, 80
  %v204 = vpop.permute.xlu0 %203
  %205 = vrot.lane.b32.xlu0 %v13, 80
  %v206 = vpop.permute.xlu0 %205
  %207 = vrot.lane.b32.xlu0 %v15, 80
  %v208 = vpop.permute.xlu0 %207
  %209 = vrot.lane.b32.xlu0 %v17, 80
  %v210 = vpop.permute.xlu0 %209
  %211 = vrot.lane.b32.xlu0 %v19, 80
  %v212 = vpop.permute.xlu0 %211
  %213 = vrot.lane.b32.xlu0 %v21, 80
  %v214 = vpop.permute.xlu0 %213
  %215 = vrot.lane.b32.xlu0 %v23, 80
  %v216 = vpop.permute.xlu0 %215
  %217 = vrot.lane.b32.xlu0 %v25, 80
  %v218 = vpop.permute.xlu0 %217
  %219 = vrot.lane.b32.xlu0 %v27, 80
  %v220 = vpop.permute.xlu0 %219
  %221 = vrot.lane.b32.xlu0 %v29, 80
  %v222 = vpop.permute.xlu0 %221
  %223 = vrot.lane.b32.xlu0 %v31, 80
  %v224 = vpop.permute.xlu0 %223
  %225 = vrot.lane.b32.xlu0 %v33, 80
  %v226 = vpop.permute.xlu0 %225
  %227 = vrot.lane.b32.xlu0 %v35, 80
  %v228 = vpop.permute.xlu0 %227
  %229 = vrot.lane.b32.xlu0 %v37, 80
  %v230 = vpop.permute.xlu0 %229
  %231 = vrot.lane.b32.xlu0 %v39, 80
  %v232 = vpop.permute.xlu0 %231
  %233 = vrot.lane.b32.xlu0 %v41, 80
  %v234 = vpop.permute.xlu0 %233
  %v251 = vmax.f32 %v187, %v204
  %v252 = vmax.f32 %v188, %v206
  %v253 = vmax.f32 %v189, %v208
  %v254 = vmax.f32 %v190, %v210
  %v255 = vmax.f32 %v191, %v212
  %v256 = vmax.f32 %v192, %v214
  %v257 = vmax.f32 %v193, %v216
  %v258 = vmax.f32 %v194, %v218
  %v259 = vmax.f32 %v195, %v220
  %v260 = vmax.f32 %v196, %v222
  %v261 = vmax.f32 %v197, %v224
  %v262 = vmax.f32 %v198, %v226
  %v263 = vmax.f32 %v199, %v228
  %v264 = vmax.f32 %v200, %v230
  %v265 = vmax.f32 %v201, %v232
  %v266 = vmax.f32 %v202, %v234
  %267 = vrot.lane.b32.xlu0 %v11, 64
  %v268 = vpop.permute.xlu0 %267
  %269 = vrot.lane.b32.xlu0 %v13, 64
  %v270 = vpop.permute.xlu0 %269
  %271 = vrot.lane.b32.xlu0 %v15, 64
  %v272 = vpop.permute.xlu0 %271
  %273 = vrot.lane.b32.xlu0 %v17, 64
  %v274 = vpop.permute.xlu0 %273
  %275 = vrot.lane.b32.xlu0 %v19, 64
  %v276 = vpop.permute.xlu0 %275
  %277 = vrot.lane.b32.xlu0 %v21, 64
  %v278 = vpop.permute.xlu0 %277
  %279 = vrot.lane.b32.xlu0 %v23, 64
  %v280 = vpop.permute.xlu0 %279
  %281 = vrot.lane.b32.xlu0 %v25, 64
  %v282 = vpop.permute.xlu0 %281
  %283 = vrot.lane.b32.xlu0 %v27, 64
  %v284 = vpop.permute.xlu0 %283
  %285 = vrot.lane.b32.xlu0 %v29, 64
  %v286 = vpop.permute.xlu0 %285
  %287 = vrot.lane.b32.xlu0 %v31, 64
  %v288 = vpop.permute.xlu0 %287
  %289 = vrot.lane.b32.xlu0 %v33, 64
  %v290 = vpop.permute.xlu0 %289
  %291 = vrot.lane.b32.xlu0 %v35, 64
  %v292 = vpop.permute.xlu0 %291
  %293 = vrot.lane.b32.xlu0 %v37, 64
  %v294 = vpop.permute.xlu0 %293
  %295 = vrot.lane.b32.xlu0 %v39, 64
  %v296 = vpop.permute.xlu0 %295
  %297 = vrot.lane.b32.xlu0 %v41, 64
  %v298 = vpop.permute.xlu0 %297
  %v315 = vmax.f32 %v251, %v268
  %v316 = vmax.f32 %v252, %v270
  %v317 = vmax.f32 %v253, %v272
  %v318 = vmax.f32 %v254, %v274
  %v319 = vmax.f32 %v255, %v276
  %v320 = vmax.f32 %v256, %v278
  %v321 = vmax.f32 %v257, %v280
  %v322 = vmax.f32 %v258, %v282
  %v323 = vmax.f32 %v259, %v284
  %v324 = vmax.f32 %v260, %v286
  %v325 = vmax.f32 %v261, %v288
  %v326 = vmax.f32 %v262, %v290
  %v327 = vmax.f32 %v263, %v292
  %v328 = vmax.f32 %v264, %v294
  %v329 = vmax.f32 %v265, %v296
  %v330 = vmax.f32 %v266, %v298
  %331 = vrot.lane.b32.xlu0 %v11, 48
  %v332 = vpop.permute.xlu0 %331
  %333 = vrot.lane.b32.xlu0 %v13, 48
  %v334 = vpop.permute.xlu0 %333
  %335 = vrot.lane.b32.xlu0 %v15, 48
  %v336 = vpop.permute.xlu0 %335
  %337 = vrot.lane.b32.xlu0 %v17, 48
  %v338 = vpop.permute.xlu0 %337
  %339 = vrot.lane.b32.xlu0 %v19, 48
  %v340 = vpop.permute.xlu0 %339
  %341 = vrot.lane.b32.xlu0 %v21, 48
  %v342 = vpop.permute.xlu0 %341
  %343 = vrot.lane.b32.xlu0 %v23, 48
  %v344 = vpop.permute.xlu0 %343
  %345 = vrot.lane.b32.xlu0 %v25, 48
  %v346 = vpop.permute.xlu0 %345
  %347 = vrot.lane.b32.xlu0 %v27, 48
  %v348 = vpop.permute.xlu0 %347
  %349 = vrot.lane.b32.xlu0 %v29, 48
  %v350 = vpop.permute.xlu0 %349
  %351 = vrot.lane.b32.xlu0 %v31, 48
  %v352 = vpop.permute.xlu0 %351
  %353 = vrot.lane.b32.xlu0 %v33, 48
  %v354 = vpop.permute.xlu0 %353
  %355 = vrot.lane.b32.xlu0 %v35, 48
  %v356 = vpop.permute.xlu0 %355
  %357 = vrot.lane.b32.xlu0 %v37, 48
  %v358 = vpop.permute.xlu0 %357
  %359 = vrot.lane.b32.xlu0 %v39, 48
  %v360 = vpop.permute.xlu0 %359
  %361 = vrot.lane.b32.xlu0 %v41, 48
  %v362 = vpop.permute.xlu0 %361
  %v379 = vmax.f32 %v315, %v332
  %v380 = vmax.f32 %v316, %v334
  %v381 = vmax.f32 %v317, %v336
  %v382 = vmax.f32 %v318, %v338
  %v383 = vmax.f32 %v319, %v340
  %v384 = vmax.f32 %v320, %v342
  %v385 = vmax.f32 %v321, %v344
  %v386 = vmax.f32 %v322, %v346
  %v387 = vmax.f32 %v323, %v348
  %v388 = vmax.f32 %v324, %v350
  %v389 = vmax.f32 %v325, %v352
  %v390 = vmax.f32 %v326, %v354
  %v391 = vmax.f32 %v327, %v356
  %v392 = vmax.f32 %v328, %v358
  %v393 = vmax.f32 %v329, %v360
  %v394 = vmax.f32 %v330, %v362
  %395 = vrot.lane.b32.xlu0 %v11, 32
  %v396 = vpop.permute.xlu0 %395
  %397 = vrot.lane.b32.xlu0 %v13, 32
  %v398 = vpop.permute.xlu0 %397
  %399 = vrot.lane.b32.xlu0 %v15, 32
  %v400 = vpop.permute.xlu0 %399
  %401 = vrot.lane.b32.xlu0 %v17, 32
  %v402 = vpop.permute.xlu0 %401
  %403 = vrot.lane.b32.xlu0 %v19, 32
  %v404 = vpop.permute.xlu0 %403
  %405 = vrot.lane.b32.xlu0 %v21, 32
  %v406 = vpop.permute.xlu0 %405
  %407 = vrot.lane.b32.xlu0 %v23, 32
  %v408 = vpop.permute.xlu0 %407
  %409 = vrot.lane.b32.xlu0 %v25, 32
  %v410 = vpop.permute.xlu0 %409
  %411 = vrot.lane.b32.xlu0 %v27, 32
  %v412 = vpop.permute.xlu0 %411
  %413 = vrot.lane.b32.xlu0 %v29, 32
  %v414 = vpop.permute.xlu0 %413
  %415 = vrot.lane.b32.xlu0 %v31, 32
  %v416 = vpop.permute.xlu0 %415
  %417 = vrot.lane.b32.xlu0 %v33, 32
  %v418 = vpop.permute.xlu0 %417
  %419 = vrot.lane.b32.xlu0 %v35, 32
  %v420 = vpop.permute.xlu0 %419
  %421 = vrot.lane.b32.xlu0 %v37, 32
  %v422 = vpop.permute.xlu0 %421
  %423 = vrot.lane.b32.xlu0 %v39, 32
  %v424 = vpop.permute.xlu0 %423
  %425 = vrot.lane.b32.xlu0 %v41, 32
  %v426 = vpop.permute.xlu0 %425
  %v443 = vmax.f32 %v379, %v396
  %v444 = vmax.f32 %v380, %v398
  %v445 = vmax.f32 %v381, %v400
  %v446 = vmax.f32 %v382, %v402
  %v447 = vmax.f32 %v383, %v404
  %v448 = vmax.f32 %v384, %v406
  %v449 = vmax.f32 %v385, %v408
  %v450 = vmax.f32 %v386, %v410
  %v451 = vmax.f32 %v387, %v412
  %v452 = vmax.f32 %v388, %v414
  %v453 = vmax.f32 %v389, %v416
  %v454 = vmax.f32 %v390, %v418
  %v455 = vmax.f32 %v391, %v420
  %v456 = vmax.f32 %v392, %v422
  %v457 = vmax.f32 %v393, %v424
  %v458 = vmax.f32 %v394, %v426
  %459 = vrot.lane.b32.xlu0 %v11, 16
  %v460 = vpop.permute.xlu0 %459
  %461 = vrot.lane.b32.xlu0 %v13, 16
  %v462 = vpop.permute.xlu0 %461
  %463 = vrot.lane.b32.xlu0 %v15, 16
  %v464 = vpop.permute.xlu0 %463
  %465 = vrot.lane.b32.xlu0 %v17, 16
  %v466 = vpop.permute.xlu0 %465
  %467 = vrot.lane.b32.xlu0 %v19, 16
  %v468 = vpop.permute.xlu0 %467
  %469 = vrot.lane.b32.xlu0 %v21, 16
  %v470 = vpop.permute.xlu0 %469
  %471 = vrot.lane.b32.xlu0 %v23, 16
  %v472 = vpop.permute.xlu0 %471
  %473 = vrot.lane.b32.xlu0 %v25, 16
  %v474 = vpop.permute.xlu0 %473
  %475 = vrot.lane.b32.xlu0 %v27, 16
  %v476 = vpop.permute.xlu0 %475
  %477 = vrot.lane.b32.xlu0 %v29, 16
  %v478 = vpop.permute.xlu0 %477
  %479 = vrot.lane.b32.xlu0 %v31, 16
  %v480 = vpop.permute.xlu0 %479
  %481 = vrot.lane.b32.xlu0 %v33, 16
  %v482 = vpop.permute.xlu0 %481
  %483 = vrot.lane.b32.xlu0 %v35, 16
  %v484 = vpop.permute.xlu0 %483
  %485 = vrot.lane.b32.xlu0 %v37, 16
  %v486 = vpop.permute.xlu0 %485
  %487 = vrot.lane.b32.xlu0 %v39, 16
  %v488 = vpop.permute.xlu0 %487
  %489 = vrot.lane.b32.xlu0 %v41, 16
  %v490 = vpop.permute.xlu0 %489
  %v507 = vmax.f32 %v443, %v460
  %v508 = vmax.f32 %v444, %v462
  %v509 = vmax.f32 %v445, %v464
  %v510 = vmax.f32 %v446, %v466
  %v511 = vmax.f32 %v447, %v468
  %v512 = vmax.f32 %v448, %v470
  %v513 = vmax.f32 %v449, %v472
  %v514 = vmax.f32 %v450, %v474
  %v515 = vmax.f32 %v451, %v476
  %v516 = vmax.f32 %v452, %v478
  %v517 = vmax.f32 %v453, %v480
  %v518 = vmax.f32 %v454, %v482
  %v519 = vmax.f32 %v455, %v484
  %v520 = vmax.f32 %v456, %v486
  %v521 = vmax.f32 %v457, %v488
  %v522 = vmax.f32 %v458, %v490
  %v523 = vmax.f32 %v507, %v12
  %v524 = vmax.f32 %v508, %v14
  %v525 = vmax.f32 %v509, %v16
  %v526 = vmax.f32 %v510, %v18
  %v527 = vmax.f32 %v511, %v20
  %v528 = vmax.f32 %v512, %v22
  %v529 = vmax.f32 %v513, %v24
  %v530 = vmax.f32 %v514, %v26
  %v531 = vmax.f32 %v515, %v28
  %v532 = vmax.f32 %v516, %v30
  %v533 = vmax.f32 %v517, %v32
  %v534 = vmax.f32 %v518, %v34
  %v535 = vmax.f32 %v519, %v36
  %v536 = vmax.f32 %v520, %v38
  %v537 = vmax.f32 %v521, %v40
  %v538 = vmax.f32 %v522, %v42
  %v539 = vsub.f32 %v11, %v523
  %v540 = vsub.f32 %v13, %v524
  %v541 = vsub.f32 %v15, %v525
  %v542 = vsub.f32 %v17, %v526
  %v543 = vsub.f32 %v19, %v527
  %v544 = vsub.f32 %v21, %v528
  %v545 = vsub.f32 %v23, %v529
  %v546 = vsub.f32 %v25, %v530
  %v547 = vsub.f32 %v27, %v531
  %v548 = vsub.f32 %v29, %v532
  %v549 = vsub.f32 %v31, %v533
  %v550 = vsub.f32 %v33, %v534
  %v551 = vsub.f32 %v35, %v535
  %v552 = vsub.f32 %v37, %v536
  %v553 = vsub.f32 %v39, %v537
  %v554 = vsub.f32 %v41, %v538
  %v555 = vmul.f32 %v539, 1.442695
  %v556 = vpow.pop %v555
  %v557 = vmul.f32 %v540, 1.442695
  %v558 = vpow.pop %v557
  %v559 = vmul.f32 %v541, 1.442695
  %v560 = vpow.pop %v559
  %v561 = vmul.f32 %v542, 1.442695
  %v562 = vpow.pop %v561
  %v563 = vmul.f32 %v543, 1.442695
  %v564 = vpow.pop %v563
  %v565 = vmul.f32 %v544, 1.442695
  %v566 = vpow.pop %v565
  %v567 = vmul.f32 %v545, 1.442695
  %v568 = vpow.pop %v567
  %v569 = vmul.f32 %v546, 1.442695
  %v570 = vpow.pop %v569
  %v571 = vmul.f32 %v547, 1.442695
  %v572 = vpow.pop %v571
  %v573 = vmul.f32 %v548, 1.442695
  %v574 = vpow.pop %v573
  %v575 = vmul.f32 %v549, 1.442695
  %v576 = vpow.pop %v575
  %v577 = vmul.f32 %v550, 1.442695
  %v578 = vpow.pop %v577
  %v579 = vmul.f32 %v551, 1.442695
  %v580 = vpow.pop %v579
  %v581 = vmul.f32 %v552, 1.442695
  %v582 = vpow.pop %v581
  %v583 = vmul.f32 %v553, 1.442695
  %v584 = vpow.pop %v583
  %v585 = vmul.f32 %v554, 1.442695
  %v586 = vpow.pop %v585
  %v587 = vadd.f32 %v556, 0.0
  %v588 = vadd.f32 %v558, 0.0
  %v589 = vadd.f32 %v560, 0.0
  %v590 = vadd.f32 %v562, 0.0
  %v591 = vadd.f32 %v564, 0.0
  %v592 = vadd.f32 %v566, 0.0
  %v593 = vadd.f32 %v568, 0.0
  %v594 = vadd.f32 %v570, 0.0
  %v595 = vadd.f32 %v572, 0.0
  %v596 = vadd.f32 %v574, 0.0
  %v597 = vadd.f32 %v576, 0.0
  %v598 = vadd.f32 %v578, 0.0
  %v599 = vadd.f32 %v580, 0.0
  %v600 = vadd.f32 %v582, 0.0
  %v601 = vadd.f32 %v584, 0.0
  %v602 = vadd.f32 %v586, 0.0
  %604 = vset.pattern.permute.xlu0 0
  %605 = vperm.xlu0 %604, %v43
  %v606 = vpop.permute.xlu0 %605
  %609 = vset.pattern.permute.xlu0 0
  %610 = vperm.xlu0 %609, %v44
  %v611 = vpop.permute.xlu0 %610
  %614 = vset.pattern.permute.xlu0 0
  %615 = vperm.xlu0 %614, %v45
  %v616 = vpop.permute.xlu0 %615
  %619 = vset.pattern.permute.xlu0 0
  %620 = vperm.xlu0 %619, %v46
  %v621 = vpop.permute.xlu0 %620
  %624 = vset.pattern.permute.xlu0 0
  %625 = vperm.xlu0 %624, %v47
  %v626 = vpop.permute.xlu0 %625
  %629 = vset.pattern.permute.xlu0 0
  %630 = vperm.xlu0 %629, %v48
  %v631 = vpop.permute.xlu0 %630
  %634 = vset.pattern.permute.xlu0 0
  %635 = vperm.xlu0 %634, %v49
  %v636 = vpop.permute.xlu0 %635
  %639 = vset.pattern.permute.xlu0 0
  %640 = vperm.xlu0 %639, %v50
  %v641 = vpop.permute.xlu0 %640
  %644 = vset.pattern.permute.xlu0 0
  %645 = vperm.xlu0 %644, %v51
  %v646 = vpop.permute.xlu0 %645
  %649 = vset.pattern.permute.xlu0 0
  %650 = vperm.xlu0 %649, %v52
  %v651 = vpop.permute.xlu0 %650
  %654 = vset.pattern.permute.xlu0 0
  %655 = vperm.xlu0 %654, %v53
  %v656 = vpop.permute.xlu0 %655
  %659 = vset.pattern.permute.xlu0 0
  %660 = vperm.xlu0 %659, %v54
  %v661 = vpop.permute.xlu0 %660
  %664 = vset.pattern.permute.xlu0 0
  %665 = vperm.xlu0 %664, %v55
  %v666 = vpop.permute.xlu0 %665
  %669 = vset.pattern.permute.xlu0 0
  %670 = vperm.xlu0 %669, %v56
  %v671 = vpop.permute.xlu0 %670
  %674 = vset.pattern.permute.xlu0 0
  %675 = vperm.xlu0 %674, %v57
  %v676 = vpop.permute.xlu0 %675
  %679 = vset.pattern.permute.xlu0 0
  %680 = vperm.xlu0 %679, %v58
  %v681 = vpop.permute.xlu0 %680
  %v683 = vmul.f32 %v556, %v606
  %v684 = vmul.f32 %v558, %v611
  %v685 = vmul.f32 %v560, %v616
  %v686 = vmul.f32 %v562, %v621
  %v687 = vmul.f32 %v564, %v626
  %v688 = vmul.f32 %v566, %v631
  %v689 = vmul.f32 %v568, %v636
  %v690 = vmul.f32 %v570, %v641
  %v691 = vmul.f32 %v572, %v646
  %v692 = vmul.f32 %v574, %v651
  %v693 = vmul.f32 %v576, %v656
  %v694 = vmul.f32 %v578, %v661
  %v695 = vmul.f32 %v580, %v666
  %v696 = vmul.f32 %v582, %v671
  %v697 = vmul.f32 %v584, %v676
  %v698 = vmul.f32 %v586, %v681
  %v699 = vadd.f32 %v683, 0.0
  %v700 = vadd.f32 %v684, 0.0
  %v701 = vadd.f32 %v685, 0.0
  %v702 = vadd.f32 %v686, 0.0
  %v703 = vadd.f32 %v687, 0.0
  %v704 = vadd.f32 %v688, 0.0
  %v705 = vadd.f32 %v689, 0.0
  %v706 = vadd.f32 %v690, 0.0
  %v707 = vadd.f32 %v691, 0.0
  %v708 = vadd.f32 %v692, 0.0
  %v709 = vadd.f32 %v693, 0.0
  %v710 = vadd.f32 %v694, 0.0
  %v711 = vadd.f32 %v695, 0.0
  %v712 = vadd.f32 %v696, 0.0
  %v713 = vadd.f32 %v697, 0.0
  %v714 = vadd.f32 %v698, 0.0
  %731 = vrot.lane.b32.xlu0 %v523, 16
  %v732 = vpop.permute.xlu0 %731
  %733 = vrot.lane.b32.xlu0 %v524, 16
  %v734 = vpop.permute.xlu0 %733
  %735 = vrot.lane.b32.xlu0 %v525, 16
  %v736 = vpop.permute.xlu0 %735
  %737 = vrot.lane.b32.xlu0 %v526, 16
  %v738 = vpop.permute.xlu0 %737
  %739 = vrot.lane.b32.xlu0 %v527, 16
  %v740 = vpop.permute.xlu0 %739
  %741 = vrot.lane.b32.xlu0 %v528, 16
  %v742 = vpop.permute.xlu0 %741
  %743 = vrot.lane.b32.xlu0 %v529, 16
  %v744 = vpop.permute.xlu0 %743
  %745 = vrot.lane.b32.xlu0 %v530, 16
  %v746 = vpop.permute.xlu0 %745
  %747 = vrot.lane.b32.xlu0 %v531, 16
  %v748 = vpop.permute.xlu0 %747
  %749 = vrot.lane.b32.xlu0 %v532, 16
  %v750 = vpop.permute.xlu0 %749
  %751 = vrot.lane.b32.xlu0 %v533, 16
  %v752 = vpop.permute.xlu0 %751
  %753 = vrot.lane.b32.xlu0 %v534, 16
  %v754 = vpop.permute.xlu0 %753
  %755 = vrot.lane.b32.xlu0 %v535, 16
  %v756 = vpop.permute.xlu0 %755
  %757 = vrot.lane.b32.xlu0 %v536, 16
  %v758 = vpop.permute.xlu0 %757
  %759 = vrot.lane.b32.xlu0 %v537, 16
  %v760 = vpop.permute.xlu0 %759
  %761 = vrot.lane.b32.xlu0 %v538, 16
  %v762 = vpop.permute.xlu0 %761
  %v779 = vsub.f32 %v11, %v732
  %v780 = vsub.f32 %v13, %v734
  %v781 = vsub.f32 %v15, %v736
  %v782 = vsub.f32 %v17, %v738
  %v783 = vsub.f32 %v19, %v740
  %v784 = vsub.f32 %v21, %v742
  %v785 = vsub.f32 %v23, %v744
  %v786 = vsub.f32 %v25, %v746
  %v787 = vsub.f32 %v27, %v748
  %v788 = vsub.f32 %v29, %v750
  %v789 = vsub.f32 %v31, %v752
  %v790 = vsub.f32 %v33, %v754
  %v791 = vsub.f32 %v35, %v756
  %v792 = vsub.f32 %v37, %v758
  %v793 = vsub.f32 %v39, %v760
  %v794 = vsub.f32 %v41, %v762
  %v795 = vmul.f32 %v779, 1.442695
  %v796 = vpow.pop %v795
  %v797 = vmul.f32 %v780, 1.442695
  %v798 = vpow.pop %v797
  %v799 = vmul.f32 %v781, 1.442695
  %v800 = vpow.pop %v799
  %v801 = vmul.f32 %v782, 1.442695
  %v802 = vpow.pop %v801
  %v803 = vmul.f32 %v783, 1.442695
  %v804 = vpow.pop %v803
  %v805 = vmul.f32 %v784, 1.442695
  %v806 = vpow.pop %v805
  %v807 = vmul.f32 %v785, 1.442695
  %v808 = vpow.pop %v807
  %v809 = vmul.f32 %v786, 1.442695
  %v810 = vpow.pop %v809
  %v811 = vmul.f32 %v787, 1.442695
  %v812 = vpow.pop %v811
  %v813 = vmul.f32 %v788, 1.442695
  %v814 = vpow.pop %v813
  %v815 = vmul.f32 %v789, 1.442695
  %v816 = vpow.pop %v815
  %v817 = vmul.f32 %v790, 1.442695
  %v818 = vpow.pop %v817
  %v819 = vmul.f32 %v791, 1.442695
  %v820 = vpow.pop %v819
  %v821 = vmul.f32 %v792, 1.442695
  %v822 = vpow.pop %v821
  %v823 = vmul.f32 %v793, 1.442695
  %v824 = vpow.pop %v823
  %v825 = vmul.f32 %v794, 1.442695
  %v826 = vpow.pop %v825
  %843 = vrot.lane.b32.xlu0 %v796, 112
  %v844 = vpop.permute.xlu0 %843
  %845 = vrot.lane.b32.xlu0 %v798, 112
  %v846 = vpop.permute.xlu0 %845
  %847 = vrot.lane.b32.xlu0 %v800, 112
  %v848 = vpop.permute.xlu0 %847
  %849 = vrot.lane.b32.xlu0 %v802, 112
  %v850 = vpop.permute.xlu0 %849
  %851 = vrot.lane.b32.xlu0 %v804, 112
  %v852 = vpop.permute.xlu0 %851
  %853 = vrot.lane.b32.xlu0 %v806, 112
  %v854 = vpop.permute.xlu0 %853
  %855 = vrot.lane.b32.xlu0 %v808, 112
  %v856 = vpop.permute.xlu0 %855
  %857 = vrot.lane.b32.xlu0 %v810, 112
  %v858 = vpop.permute.xlu0 %857
  %859 = vrot.lane.b32.xlu0 %v812, 112
  %v860 = vpop.permute.xlu0 %859
  %861 = vrot.lane.b32.xlu0 %v814, 112
  %v862 = vpop.permute.xlu0 %861
  %863 = vrot.lane.b32.xlu0 %v816, 112
  %v864 = vpop.permute.xlu0 %863
  %865 = vrot.lane.b32.xlu0 %v818, 112
  %v866 = vpop.permute.xlu0 %865
  %867 = vrot.lane.b32.xlu0 %v820, 112
  %v868 = vpop.permute.xlu0 %867
  %869 = vrot.lane.b32.xlu0 %v822, 112
  %v870 = vpop.permute.xlu0 %869
  %871 = vrot.lane.b32.xlu0 %v824, 112
  %v872 = vpop.permute.xlu0 %871
  %873 = vrot.lane.b32.xlu0 %v826, 112
  %v874 = vpop.permute.xlu0 %873
  %v891 = vadd.f32 %v587, %v844
  %v892 = vadd.f32 %v588, %v846
  %v893 = vadd.f32 %v589, %v848
  %v894 = vadd.f32 %v590, %v850
  %v895 = vadd.f32 %v591, %v852
  %v896 = vadd.f32 %v592, %v854
  %v897 = vadd.f32 %v593, %v856
  %v898 = vadd.f32 %v594, %v858
  %v899 = vadd.f32 %v595, %v860
  %v900 = vadd.f32 %v596, %v862
  %v901 = vadd.f32 %v597, %v864
  %v902 = vadd.f32 %v598, %v866
  %v903 = vadd.f32 %v599, %v868
  %v904 = vadd.f32 %v600, %v870
  %v905 = vadd.f32 %v601, %v872
  %v906 = vadd.f32 %v602, %v874
  %907 = vset.pattern.permute.xlu0 1
  %908 = vperm.xlu0 %907, %v43
  %v909 = vpop.permute.xlu0 %908
  %911 = vset.pattern.permute.xlu0 1
  %912 = vperm.xlu0 %911, %v44
  %v913 = vpop.permute.xlu0 %912
  %915 = vset.pattern.permute.xlu0 1
  %916 = vperm.xlu0 %915, %v45
  %v917 = vpop.permute.xlu0 %916
  %919 = vset.pattern.permute.xlu0 1
  %920 = vperm.xlu0 %919, %v46
  %v921 = vpop.permute.xlu0 %920
  %923 = vset.pattern.permute.xlu0 1
  %924 = vperm.xlu0 %923, %v47
  %v925 = vpop.permute.xlu0 %924
  %927 = vset.pattern.permute.xlu0 1
  %928 = vperm.xlu0 %927, %v48
  %v929 = vpop.permute.xlu0 %928
  %931 = vset.pattern.permute.xlu0 1
  %932 = vperm.xlu0 %931, %v49
  %v933 = vpop.permute.xlu0 %932
  %935 = vset.pattern.permute.xlu0 1
  %936 = vperm.xlu0 %935, %v50
  %v937 = vpop.permute.xlu0 %936
  %939 = vset.pattern.permute.xlu0 1
  %940 = vperm.xlu0 %939, %v51
  %v941 = vpop.permute.xlu0 %940
  %943 = vset.pattern.permute.xlu0 1
  %944 = vperm.xlu0 %943, %v52
  %v945 = vpop.permute.xlu0 %944
  %947 = vset.pattern.permute.xlu0 1
  %948 = vperm.xlu0 %947, %v53
  %v949 = vpop.permute.xlu0 %948
  %951 = vset.pattern.permute.xlu0 1
  %952 = vperm.xlu0 %951, %v54
  %v953 = vpop.permute.xlu0 %952
  %955 = vset.pattern.permute.xlu0 1
  %956 = vperm.xlu0 %955, %v55
  %v957 = vpop.permute.xlu0 %956
  %959 = vset.pattern.permute.xlu0 1
  %960 = vperm.xlu0 %959, %v56
  %v961 = vpop.permute.xlu0 %960
  %963 = vset.pattern.permute.xlu0 1
  %964 = vperm.xlu0 %963, %v57
  %v965 = vpop.permute.xlu0 %964
  %967 = vset.pattern.permute.xlu0 1
  %968 = vperm.xlu0 %967, %v58
  %v969 = vpop.permute.xlu0 %968
  %v971 = vmul.f32 %v796, %v909
  %v972 = vmul.f32 %v798, %v913
  %v973 = vmul.f32 %v800, %v917
  %v974 = vmul.f32 %v802, %v921
  %v975 = vmul.f32 %v804, %v925
  %v976 = vmul.f32 %v806, %v929
  %v977 = vmul.f32 %v808, %v933
  %v978 = vmul.f32 %v810, %v937
  %v979 = vmul.f32 %v812, %v941
  %v980 = vmul.f32 %v814, %v945
  %v981 = vmul.f32 %v816, %v949
  %v982 = vmul.f32 %v818, %v953
  %v983 = vmul.f32 %v820, %v957
  %v984 = vmul.f32 %v822, %v961
  %v985 = vmul.f32 %v824, %v965
  %v986 = vmul.f32 %v826, %v969
  %1003 = vrot.lane.b32.xlu0 %v971, 112
  %v1004 = vpop.permute.xlu0 %1003
  %1005 = vrot.lane.b32.xlu0 %v972, 112
  %v1006 = vpop.permute.xlu0 %1005
  %1007 = vrot.lane.b32.xlu0 %v973, 112
  %v1008 = vpop.permute.xlu0 %1007
  %1009 = vrot.lane.b32.xlu0 %v974, 112
  %v1010 = vpop.permute.xlu0 %1009
  %1011 = vrot.lane.b32.xlu0 %v975, 112
  %v1012 = vpop.permute.xlu0 %1011
  %1013 = vrot.lane.b32.xlu0 %v976, 112
  %v1014 = vpop.permute.xlu0 %1013
  %1015 = vrot.lane.b32.xlu0 %v977, 112
  %v1016 = vpop.permute.xlu0 %1015
  %1017 = vrot.lane.b32.xlu0 %v978, 112
  %v1018 = vpop.permute.xlu0 %1017
  %1019 = vrot.lane.b32.xlu0 %v979, 112
  %v1020 = vpop.permute.xlu0 %1019
  %1021 = vrot.lane.b32.xlu0 %v980, 112
  %v1022 = vpop.permute.xlu0 %1021
  %1023 = vrot.lane.b32.xlu0 %v981, 112
  %v1024 = vpop.permute.xlu0 %1023
  %1025 = vrot.lane.b32.xlu0 %v982, 112
  %v1026 = vpop.permute.xlu0 %1025
  %1027 = vrot.lane.b32.xlu0 %v983, 112
  %v1028 = vpop.permute.xlu0 %1027
  %1029 = vrot.lane.b32.xlu0 %v984, 112
  %v1030 = vpop.permute.xlu0 %1029
  %1031 = vrot.lane.b32.xlu0 %v985, 112
  %v1032 = vpop.permute.xlu0 %1031
  %1033 = vrot.lane.b32.xlu0 %v986, 112
  %v1034 = vpop.permute.xlu0 %1033
  %v1051 = vadd.f32 %v699, %v1004
  %v1052 = vadd.f32 %v700, %v1006
  %v1053 = vadd.f32 %v701, %v1008
  %v1054 = vadd.f32 %v702, %v1010
  %v1055 = vadd.f32 %v703, %v1012
  %v1056 = vadd.f32 %v704, %v1014
  %v1057 = vadd.f32 %v705, %v1016
  %v1058 = vadd.f32 %v706, %v1018
  %v1059 = vadd.f32 %v707, %v1020
  %v1060 = vadd.f32 %v708, %v1022
  %v1061 = vadd.f32 %v709, %v1024
  %v1062 = vadd.f32 %v710, %v1026
  %v1063 = vadd.f32 %v711, %v1028
  %v1064 = vadd.f32 %v712, %v1030
  %v1065 = vadd.f32 %v713, %v1032
  %v1066 = vadd.f32 %v714, %v1034
  %1067 = vrot.lane.b32.xlu0 %v523, 32
  %v1068 = vpop.permute.xlu0 %1067
  %1069 = vrot.lane.b32.xlu0 %v524, 32
  %v1070 = vpop.permute.xlu0 %1069
  %1071 = vrot.lane.b32.xlu0 %v525, 32
  %v1072 = vpop.permute.xlu0 %1071
  %1073 = vrot.lane.b32.xlu0 %v526, 32
  %v1074 = vpop.permute.xlu0 %1073
  %1075 = vrot.lane.b32.xlu0 %v527, 32
  %v1076 = vpop.permute.xlu0 %1075
  %1077 = vrot.lane.b32.xlu0 %v528, 32
  %v1078 = vpop.permute.xlu0 %1077
  %1079 = vrot.lane.b32.xlu0 %v529, 32
  %v1080 = vpop.permute.xlu0 %1079
  %1081 = vrot.lane.b32.xlu0 %v530, 32
  %v1082 = vpop.permute.xlu0 %1081
  %1083 = vrot.lane.b32.xlu0 %v531, 32
  %v1084 = vpop.permute.xlu0 %1083
  %1085 = vrot.lane.b32.xlu0 %v532, 32
  %v1086 = vpop.permute.xlu0 %1085
  %1087 = vrot.lane.b32.xlu0 %v533, 32
  %v1088 = vpop.permute.xlu0 %1087
  %1089 = vrot.lane.b32.xlu0 %v534, 32
  %v1090 = vpop.permute.xlu0 %1089
  %1091 = vrot.lane.b32.xlu0 %v535, 32
  %v1092 = vpop.permute.xlu0 %1091
  %1093 = vrot.lane.b32.xlu0 %v536, 32
  %v1094 = vpop.permute.xlu0 %1093
  %1095 = vrot.lane.b32.xlu0 %v537, 32
  %v1096 = vpop.permute.xlu0 %1095
  %1097 = vrot.lane.b32.xlu0 %v538, 32
  %v1098 = vpop.permute.xlu0 %1097
  %v1115 = vsub.f32 %v11, %v1068
  %v1116 = vsub.f32 %v13, %v1070
  %v1117 = vsub.f32 %v15, %v1072
  %v1118 = vsub.f32 %v17, %v1074
  %v1119 = vsub.f32 %v19, %v1076
  %v1120 = vsub.f32 %v21, %v1078
  %v1121 = vsub.f32 %v23, %v1080
  %v1122 = vsub.f32 %v25, %v1082
  %v1123 = vsub.f32 %v27, %v1084
  %v1124 = vsub.f32 %v29, %v1086
  %v1125 = vsub.f32 %v31, %v1088
  %v1126 = vsub.f32 %v33, %v1090
  %v1127 = vsub.f32 %v35, %v1092
  %v1128 = vsub.f32 %v37, %v1094
  %v1129 = vsub.f32 %v39, %v1096
  %v1130 = vsub.f32 %v41, %v1098
  %v1131 = vmul.f32 %v1115, 1.442695
  %v1132 = vpow.pop %v1131
  %v1133 = vmul.f32 %v1116, 1.442695
  %v1134 = vpow.pop %v1133
  %v1135 = vmul.f32 %v1117, 1.442695
  %v1136 = vpow.pop %v1135
  %v1137 = vmul.f32 %v1118, 1.442695
  %v1138 = vpow.pop %v1137
  %v1139 = vmul.f32 %v1119, 1.442695
  %v1140 = vpow.pop %v1139
  %v1141 = vmul.f32 %v1120, 1.442695
  %v1142 = vpow.pop %v1141
  %v1143 = vmul.f32 %v1121, 1.442695
  %v1144 = vpow.pop %v1143
  %v1145 = vmul.f32 %v1122, 1.442695
  %v1146 = vpow.pop %v1145
  %v1147 = vmul.f32 %v1123, 1.442695
  %v1148 = vpow.pop %v1147
  %v1149 = vmul.f32 %v1124, 1.442695
  %v1150 = vpow.pop %v1149
  %v1151 = vmul.f32 %v1125, 1.442695
  %v1152 = vpow.pop %v1151
  %v1153 = vmul.f32 %v1126, 1.442695
  %v1154 = vpow.pop %v1153
  %v1155 = vmul.f32 %v1127, 1.442695
  %v1156 = vpow.pop %v1155
  %v1157 = vmul.f32 %v1128, 1.442695
  %v1158 = vpow.pop %v1157
  %v1159 = vmul.f32 %v1129, 1.442695
  %v1160 = vpow.pop %v1159
  %v1161 = vmul.f32 %v1130, 1.442695
  %v1162 = vpow.pop %v1161
  %1179 = vrot.lane.b32.xlu0 %v1132, 96
  %v1180 = vpop.permute.xlu0 %1179
  %1181 = vrot.lane.b32.xlu0 %v1134, 96
  %v1182 = vpop.permute.xlu0 %1181
  %1183 = vrot.lane.b32.xlu0 %v1136, 96
  %v1184 = vpop.permute.xlu0 %1183
  %1185 = vrot.lane.b32.xlu0 %v1138, 96
  %v1186 = vpop.permute.xlu0 %1185
  %1187 = vrot.lane.b32.xlu0 %v1140, 96
  %v1188 = vpop.permute.xlu0 %1187
  %1189 = vrot.lane.b32.xlu0 %v1142, 96
  %v1190 = vpop.permute.xlu0 %1189
  %1191 = vrot.lane.b32.xlu0 %v1144, 96
  %v1192 = vpop.permute.xlu0 %1191
  %1193 = vrot.lane.b32.xlu0 %v1146, 96
  %v1194 = vpop.permute.xlu0 %1193
  %1195 = vrot.lane.b32.xlu0 %v1148, 96
  %v1196 = vpop.permute.xlu0 %1195
  %1197 = vrot.lane.b32.xlu0 %v1150, 96
  %v1198 = vpop.permute.xlu0 %1197
  %1199 = vrot.lane.b32.xlu0 %v1152, 96
  %v1200 = vpop.permute.xlu0 %1199
  %1201 = vrot.lane.b32.xlu0 %v1154, 96
  %v1202 = vpop.permute.xlu0 %1201
  %1203 = vrot.lane.b32.xlu0 %v1156, 96
  %v1204 = vpop.permute.xlu0 %1203
  %1205 = vrot.lane.b32.xlu0 %v1158, 96
  %v1206 = vpop.permute.xlu0 %1205
  %1207 = vrot.lane.b32.xlu0 %v1160, 96
  %v1208 = vpop.permute.xlu0 %1207
  %1209 = vrot.lane.b32.xlu0 %v1162, 96
  %v1210 = vpop.permute.xlu0 %1209
  %v1227 = vadd.f32 %v891, %v1180
  %v1228 = vadd.f32 %v892, %v1182
  %v1229 = vadd.f32 %v893, %v1184
  %v1230 = vadd.f32 %v894, %v1186
  %v1231 = vadd.f32 %v895, %v1188
  %v1232 = vadd.f32 %v896, %v1190
  %v1233 = vadd.f32 %v897, %v1192
  %v1234 = vadd.f32 %v898, %v1194
  %v1235 = vadd.f32 %v899, %v1196
  %v1236 = vadd.f32 %v900, %v1198
  %v1237 = vadd.f32 %v901, %v1200
  %v1238 = vadd.f32 %v902, %v1202
  %v1239 = vadd.f32 %v903, %v1204
  %v1240 = vadd.f32 %v904, %v1206
  %v1241 = vadd.f32 %v905, %v1208
  %v1242 = vadd.f32 %v906, %v1210
  %1243 = vset.pattern.permute.xlu0 2
  %1244 = vperm.xlu0 %1243, %v43
  %v1245 = vpop.permute.xlu0 %1244
  %1247 = vset.pattern.permute.xlu0 2
  %1248 = vperm.xlu0 %1247, %v44
  %v1249 = vpop.permute.xlu0 %1248
  %1251 = vset.pattern.permute.xlu0 2
  %1252 = vperm.xlu0 %1251, %v45
  %v1253 = vpop.permute.xlu0 %1252
  %1255 = vset.pattern.permute.xlu0 2
  %1256 = vperm.xlu0 %1255, %v46
  %v1257 = vpop.permute.xlu0 %1256
  %1259 = vset.pattern.permute.xlu0 2
  %1260 = vperm.xlu0 %1259, %v47
  %v1261 = vpop.permute.xlu0 %1260
  %1263 = vset.pattern.permute.xlu0 2
  %1264 = vperm.xlu0 %1263, %v48
  %v1265 = vpop.permute.xlu0 %1264
  %1267 = vset.pattern.permute.xlu0 2
  %1268 = vperm.xlu0 %1267, %v49
  %v1269 = vpop.permute.xlu0 %1268
  %1271 = vset.pattern.permute.xlu0 2
  %1272 = vperm.xlu0 %1271, %v50
  %v1273 = vpop.permute.xlu0 %1272
  %1275 = vset.pattern.permute.xlu0 2
  %1276 = vperm.xlu0 %1275, %v51
  %v1277 = vpop.permute.xlu0 %1276
  %1279 = vset.pattern.permute.xlu0 2
  %1280 = vperm.xlu0 %1279, %v52
  %v1281 = vpop.permute.xlu0 %1280
  %1283 = vset.pattern.permute.xlu0 2
  %1284 = vperm.xlu0 %1283, %v53
  %v1285 = vpop.permute.xlu0 %1284
  %1287 = vset.pattern.permute.xlu0 2
  %1288 = vperm.xlu0 %1287, %v54
  %v1289 = vpop.permute.xlu0 %1288
  %1291 = vset.pattern.permute.xlu0 2
  %1292 = vperm.xlu0 %1291, %v55
  %v1293 = vpop.permute.xlu0 %1292
  %1295 = vset.pattern.permute.xlu0 2
  %1296 = vperm.xlu0 %1295, %v56
  %v1297 = vpop.permute.xlu0 %1296
  %1299 = vset.pattern.permute.xlu0 2
  %1300 = vperm.xlu0 %1299, %v57
  %v1301 = vpop.permute.xlu0 %1300
  %1303 = vset.pattern.permute.xlu0 2
  %1304 = vperm.xlu0 %1303, %v58
  %v1305 = vpop.permute.xlu0 %1304
  %v1307 = vmul.f32 %v1132, %v1245
  %v1308 = vmul.f32 %v1134, %v1249
  %v1309 = vmul.f32 %v1136, %v1253
  %v1310 = vmul.f32 %v1138, %v1257
  %v1311 = vmul.f32 %v1140, %v1261
  %v1312 = vmul.f32 %v1142, %v1265
  %v1313 = vmul.f32 %v1144, %v1269
  %v1314 = vmul.f32 %v1146, %v1273
  %v1315 = vmul.f32 %v1148, %v1277
  %v1316 = vmul.f32 %v1150, %v1281
  %v1317 = vmul.f32 %v1152, %v1285
  %v1318 = vmul.f32 %v1154, %v1289
  %v1319 = vmul.f32 %v1156, %v1293
  %v1320 = vmul.f32 %v1158, %v1297
  %v1321 = vmul.f32 %v1160, %v1301
  %v1322 = vmul.f32 %v1162, %v1305
  %1339 = vrot.lane.b32.xlu0 %v1307, 96
  %v1340 = vpop.permute.xlu0 %1339
  %1341 = vrot.lane.b32.xlu0 %v1308, 96
  %v1342 = vpop.permute.xlu0 %1341
  %1343 = vrot.lane.b32.xlu0 %v1309, 96
  %v1344 = vpop.permute.xlu0 %1343
  %1345 = vrot.lane.b32.xlu0 %v1310, 96
  %v1346 = vpop.permute.xlu0 %1345
  %1347 = vrot.lane.b32.xlu0 %v1311, 96
  %v1348 = vpop.permute.xlu0 %1347
  %1349 = vrot.lane.b32.xlu0 %v1312, 96
  %v1350 = vpop.permute.xlu0 %1349
  %1351 = vrot.lane.b32.xlu0 %v1313, 96
  %v1352 = vpop.permute.xlu0 %1351
  %1353 = vrot.lane.b32.xlu0 %v1314, 96
  %v1354 = vpop.permute.xlu0 %1353
  %1355 = vrot.lane.b32.xlu0 %v1315, 96
  %v1356 = vpop.permute.xlu0 %1355
  %1357 = vrot.lane.b32.xlu0 %v1316, 96
  %v1358 = vpop.permute.xlu0 %1357
  %1359 = vrot.lane.b32.xlu0 %v1317, 96
  %v1360 = vpop.permute.xlu0 %1359
  %1361 = vrot.lane.b32.xlu0 %v1318, 96
  %v1362 = vpop.permute.xlu0 %1361
  %1363 = vrot.lane.b32.xlu0 %v1319, 96
  %v1364 = vpop.permute.xlu0 %1363
  %1365 = vrot.lane.b32.xlu0 %v1320, 96
  %v1366 = vpop.permute.xlu0 %1365
  %1367 = vrot.lane.b32.xlu0 %v1321, 96
  %v1368 = vpop.permute.xlu0 %1367
  %1369 = vrot.lane.b32.xlu0 %v1322, 96
  %v1370 = vpop.permute.xlu0 %1369
  %v1387 = vadd.f32 %v1051, %v1340
  %v1388 = vadd.f32 %v1052, %v1342
  %v1389 = vadd.f32 %v1053, %v1344
  %v1390 = vadd.f32 %v1054, %v1346
  %v1391 = vadd.f32 %v1055, %v1348
  %v1392 = vadd.f32 %v1056, %v1350
  %v1393 = vadd.f32 %v1057, %v1352
  %v1394 = vadd.f32 %v1058, %v1354
  %v1395 = vadd.f32 %v1059, %v1356
  %v1396 = vadd.f32 %v1060, %v1358
  %v1397 = vadd.f32 %v1061, %v1360
  %v1398 = vadd.f32 %v1062, %v1362
  %v1399 = vadd.f32 %v1063, %v1364
  %v1400 = vadd.f32 %v1064, %v1366
  %v1401 = vadd.f32 %v1065, %v1368
  %v1402 = vadd.f32 %v1066, %v1370
  %1403 = vrot.lane.b32.xlu0 %v523, 48
  %v1404 = vpop.permute.xlu0 %1403
  %1405 = vrot.lane.b32.xlu0 %v524, 48
  %v1406 = vpop.permute.xlu0 %1405
  %1407 = vrot.lane.b32.xlu0 %v525, 48
  %v1408 = vpop.permute.xlu0 %1407
  %1409 = vrot.lane.b32.xlu0 %v526, 48
  %v1410 = vpop.permute.xlu0 %1409
  %1411 = vrot.lane.b32.xlu0 %v527, 48
  %v1412 = vpop.permute.xlu0 %1411
  %1413 = vrot.lane.b32.xlu0 %v528, 48
  %v1414 = vpop.permute.xlu0 %1413
  %1415 = vrot.lane.b32.xlu0 %v529, 48
  %v1416 = vpop.permute.xlu0 %1415
  %1417 = vrot.lane.b32.xlu0 %v530, 48
  %v1418 = vpop.permute.xlu0 %1417
  %1419 = vrot.lane.b32.xlu0 %v531, 48
  %v1420 = vpop.permute.xlu0 %1419
  %1421 = vrot.lane.b32.xlu0 %v532, 48
  %v1422 = vpop.permute.xlu0 %1421
  %1423 = vrot.lane.b32.xlu0 %v533, 48
  %v1424 = vpop.permute.xlu0 %1423
  %1425 = vrot.lane.b32.xlu0 %v534, 48
  %v1426 = vpop.permute.xlu0 %1425
  %1427 = vrot.lane.b32.xlu0 %v535, 48
  %v1428 = vpop.permute.xlu0 %1427
  %1429 = vrot.lane.b32.xlu0 %v536, 48
  %v1430 = vpop.permute.xlu0 %1429
  %1431 = vrot.lane.b32.xlu0 %v537, 48
  %v1432 = vpop.permute.xlu0 %1431
  %1433 = vrot.lane.b32.xlu0 %v538, 48
  %v1434 = vpop.permute.xlu0 %1433
  %v1451 = vsub.f32 %v11, %v1404
  %v1452 = vsub.f32 %v13, %v1406
  %v1453 = vsub.f32 %v15, %v1408
  %v1454 = vsub.f32 %v17, %v1410
  %v1455 = vsub.f32 %v19, %v1412
  %v1456 = vsub.f32 %v21, %v1414
  %v1457 = vsub.f32 %v23, %v1416
  %v1458 = vsub.f32 %v25, %v1418
  %v1459 = vsub.f32 %v27, %v1420
  %v1460 = vsub.f32 %v29, %v1422
  %v1461 = vsub.f32 %v31, %v1424
  %v1462 = vsub.f32 %v33, %v1426
  %v1463 = vsub.f32 %v35, %v1428
  %v1464 = vsub.f32 %v37, %v1430
  %v1465 = vsub.f32 %v39, %v1432
  %v1466 = vsub.f32 %v41, %v1434
  %v1467 = vmul.f32 %v1451, 1.442695
  %v1468 = vpow.pop %v1467
  %v1469 = vmul.f32 %v1452, 1.442695
  %v1470 = vpow.pop %v1469
  %v1471 = vmul.f32 %v1453, 1.442695
  %v1472 = vpow.pop %v1471
  %v1473 = vmul.f32 %v1454, 1.442695
  %v1474 = vpow.pop %v1473
  %v1475 = vmul.f32 %v1455, 1.442695
  %v1476 = vpow.pop %v1475
  %v1477 = vmul.f32 %v1456, 1.442695
  %v1478 = vpow.pop %v1477
  %v1479 = vmul.f32 %v1457, 1.442695
  %v1480 = vpow.pop %v1479
  %v1481 = vmul.f32 %v1458, 1.442695
  %v1482 = vpow.pop %v1481
  %v1483 = vmul.f32 %v1459, 1.442695
  %v1484 = vpow.pop %v1483
  %v1485 = vmul.f32 %v1460, 1.442695
  %v1486 = vpow.pop %v1485
  %v1487 = vmul.f32 %v1461, 1.442695
  %v1488 = vpow.pop %v1487
  %v1489 = vmul.f32 %v1462, 1.442695
  %v1490 = vpow.pop %v1489
  %v1491 = vmul.f32 %v1463, 1.442695
  %v1492 = vpow.pop %v1491
  %v1493 = vmul.f32 %v1464, 1.442695
  %v1494 = vpow.pop %v1493
  %v1495 = vmul.f32 %v1465, 1.442695
  %v1496 = vpow.pop %v1495
  %v1497 = vmul.f32 %v1466, 1.442695
  %v1498 = vpow.pop %v1497
  %1515 = vrot.lane.b32.xlu0 %v1468, 80
  %v1516 = vpop.permute.xlu0 %1515
  %1517 = vrot.lane.b32.xlu0 %v1470, 80
  %v1518 = vpop.permute.xlu0 %1517
  %1519 = vrot.lane.b32.xlu0 %v1472, 80
  %v1520 = vpop.permute.xlu0 %1519
  %1521 = vrot.lane.b32.xlu0 %v1474, 80
  %v1522 = vpop.permute.xlu0 %1521
  %1523 = vrot.lane.b32.xlu0 %v1476, 80
  %v1524 = vpop.permute.xlu0 %1523
  %1525 = vrot.lane.b32.xlu0 %v1478, 80
  %v1526 = vpop.permute.xlu0 %1525
  %1527 = vrot.lane.b32.xlu0 %v1480, 80
  %v1528 = vpop.permute.xlu0 %1527
  %1529 = vrot.lane.b32.xlu0 %v1482, 80
  %v1530 = vpop.permute.xlu0 %1529
  %1531 = vrot.lane.b32.xlu0 %v1484, 80
  %v1532 = vpop.permute.xlu0 %1531
  %1533 = vrot.lane.b32.xlu0 %v1486, 80
  %v1534 = vpop.permute.xlu0 %1533
  %1535 = vrot.lane.b32.xlu0 %v1488, 80
  %v1536 = vpop.permute.xlu0 %1535
  %1537 = vrot.lane.b32.xlu0 %v1490, 80
  %v1538 = vpop.permute.xlu0 %1537
  %1539 = vrot.lane.b32.xlu0 %v1492, 80
  %v1540 = vpop.permute.xlu0 %1539
  %1541 = vrot.lane.b32.xlu0 %v1494, 80
  %v1542 = vpop.permute.xlu0 %1541
  %1543 = vrot.lane.b32.xlu0 %v1496, 80
  %v1544 = vpop.permute.xlu0 %1543
  %1545 = vrot.lane.b32.xlu0 %v1498, 80
  %v1546 = vpop.permute.xlu0 %1545
  %v1563 = vadd.f32 %v1227, %v1516
  %v1564 = vadd.f32 %v1228, %v1518
  %v1565 = vadd.f32 %v1229, %v1520
  %v1566 = vadd.f32 %v1230, %v1522
  %v1567 = vadd.f32 %v1231, %v1524
  %v1568 = vadd.f32 %v1232, %v1526
  %v1569 = vadd.f32 %v1233, %v1528
  %v1570 = vadd.f32 %v1234, %v1530
  %v1571 = vadd.f32 %v1235, %v1532
  %v1572 = vadd.f32 %v1236, %v1534
  %v1573 = vadd.f32 %v1237, %v1536
  %v1574 = vadd.f32 %v1238, %v1538
  %v1575 = vadd.f32 %v1239, %v1540
  %v1576 = vadd.f32 %v1240, %v1542
  %v1577 = vadd.f32 %v1241, %v1544
  %v1578 = vadd.f32 %v1242, %v1546
  %1579 = vset.pattern.permute.xlu0 3
  %1580 = vperm.xlu0 %1579, %v43
  %v1581 = vpop.permute.xlu0 %1580
  %1583 = vset.pattern.permute.xlu0 3
  %1584 = vperm.xlu0 %1583, %v44
  %v1585 = vpop.permute.xlu0 %1584
  %1587 = vset.pattern.permute.xlu0 3
  %1588 = vperm.xlu0 %1587, %v45
  %v1589 = vpop.permute.xlu0 %1588
  %1591 = vset.pattern.permute.xlu0 3
  %1592 = vperm.xlu0 %1591, %v46
  %v1593 = vpop.permute.xlu0 %1592
  %1595 = vset.pattern.permute.xlu0 3
  %1596 = vperm.xlu0 %1595, %v47
  %v1597 = vpop.permute.xlu0 %1596
  %1599 = vset.pattern.permute.xlu0 3
  %1600 = vperm.xlu0 %1599, %v48
  %v1601 = vpop.permute.xlu0 %1600
  %1603 = vset.pattern.permute.xlu0 3
  %1604 = vperm.xlu0 %1603, %v49
  %v1605 = vpop.permute.xlu0 %1604
  %1607 = vset.pattern.permute.xlu0 3
  %1608 = vperm.xlu0 %1607, %v50
  %v1609 = vpop.permute.xlu0 %1608
  %1611 = vset.pattern.permute.xlu0 3
  %1612 = vperm.xlu0 %1611, %v51
  %v1613 = vpop.permute.xlu0 %1612
  %1615 = vset.pattern.permute.xlu0 3
  %1616 = vperm.xlu0 %1615, %v52
  %v1617 = vpop.permute.xlu0 %1616
  %1619 = vset.pattern.permute.xlu0 3
  %1620 = vperm.xlu0 %1619, %v53
  %v1621 = vpop.permute.xlu0 %1620
  %1623 = vset.pattern.permute.xlu0 3
  %1624 = vperm.xlu0 %1623, %v54
  %v1625 = vpop.permute.xlu0 %1624
  %1627 = vset.pattern.permute.xlu0 3
  %1628 = vperm.xlu0 %1627, %v55
  %v1629 = vpop.permute.xlu0 %1628
  %1631 = vset.pattern.permute.xlu0 3
  %1632 = vperm.xlu0 %1631, %v56
  %v1633 = vpop.permute.xlu0 %1632
  %1635 = vset.pattern.permute.xlu0 3
  %1636 = vperm.xlu0 %1635, %v57
  %v1637 = vpop.permute.xlu0 %1636
  %1639 = vset.pattern.permute.xlu0 3
  %1640 = vperm.xlu0 %1639, %v58
  %v1641 = vpop.permute.xlu0 %1640
  %v1643 = vmul.f32 %v1468, %v1581
  %v1644 = vmul.f32 %v1470, %v1585
  %v1645 = vmul.f32 %v1472, %v1589
  %v1646 = vmul.f32 %v1474, %v1593
  %v1647 = vmul.f32 %v1476, %v1597
  %v1648 = vmul.f32 %v1478, %v1601
  %v1649 = vmul.f32 %v1480, %v1605
  %v1650 = vmul.f32 %v1482, %v1609
  %v1651 = vmul.f32 %v1484, %v1613
  %v1652 = vmul.f32 %v1486, %v1617
  %v1653 = vmul.f32 %v1488, %v1621
  %v1654 = vmul.f32 %v1490, %v1625
  %v1655 = vmul.f32 %v1492, %v1629
  %v1656 = vmul.f32 %v1494, %v1633
  %v1657 = vmul.f32 %v1496, %v1637
  %v1658 = vmul.f32 %v1498, %v1641
  %1675 = vrot.lane.b32.xlu0 %v1643, 80
  %v1676 = vpop.permute.xlu0 %1675
  %1677 = vrot.lane.b32.xlu0 %v1644, 80
  %v1678 = vpop.permute.xlu0 %1677
  %1679 = vrot.lane.b32.xlu0 %v1645, 80
  %v1680 = vpop.permute.xlu0 %1679
  %1681 = vrot.lane.b32.xlu0 %v1646, 80
  %v1682 = vpop.permute.xlu0 %1681
  %1683 = vrot.lane.b32.xlu0 %v1647, 80
  %v1684 = vpop.permute.xlu0 %1683
  %1685 = vrot.lane.b32.xlu0 %v1648, 80
  %v1686 = vpop.permute.xlu0 %1685
  %1687 = vrot.lane.b32.xlu0 %v1649, 80
  %v1688 = vpop.permute.xlu0 %1687
  %1689 = vrot.lane.b32.xlu0 %v1650, 80
  %v1690 = vpop.permute.xlu0 %1689
  %1691 = vrot.lane.b32.xlu0 %v1651, 80
  %v1692 = vpop.permute.xlu0 %1691
  %1693 = vrot.lane.b32.xlu0 %v1652, 80
  %v1694 = vpop.permute.xlu0 %1693
  %1695 = vrot.lane.b32.xlu0 %v1653, 80
  %v1696 = vpop.permute.xlu0 %1695
  %1697 = vrot.lane.b32.xlu0 %v1654, 80
  %v1698 = vpop.permute.xlu0 %1697
  %1699 = vrot.lane.b32.xlu0 %v1655, 80
  %v1700 = vpop.permute.xlu0 %1699
  %1701 = vrot.lane.b32.xlu0 %v1656, 80
  %v1702 = vpop.permute.xlu0 %1701
  %1703 = vrot.lane.b32.xlu0 %v1657, 80
  %v1704 = vpop.permute.xlu0 %1703
  %1705 = vrot.lane.b32.xlu0 %v1658, 80
  %v1706 = vpop.permute.xlu0 %1705
  %v1723 = vadd.f32 %v1387, %v1676
  %v1724 = vadd.f32 %v1388, %v1678
  %v1725 = vadd.f32 %v1389, %v1680
  %v1726 = vadd.f32 %v1390, %v1682
  %v1727 = vadd.f32 %v1391, %v1684
  %v1728 = vadd.f32 %v1392, %v1686
  %v1729 = vadd.f32 %v1393, %v1688
  %v1730 = vadd.f32 %v1394, %v1690
  %v1731 = vadd.f32 %v1395, %v1692
  %v1732 = vadd.f32 %v1396, %v1694
  %v1733 = vadd.f32 %v1397, %v1696
  %v1734 = vadd.f32 %v1398, %v1698
  %v1735 = vadd.f32 %v1399, %v1700
  %v1736 = vadd.f32 %v1400, %v1702
  %v1737 = vadd.f32 %v1401, %v1704
  %v1738 = vadd.f32 %v1402, %v1706
  %1739 = vrot.lane.b32.xlu0 %v523, 64
  %v1740 = vpop.permute.xlu0 %1739
  %1741 = vrot.lane.b32.xlu0 %v524, 64
  %v1742 = vpop.permute.xlu0 %1741
  %1743 = vrot.lane.b32.xlu0 %v525, 64
  %v1744 = vpop.permute.xlu0 %1743
  %1745 = vrot.lane.b32.xlu0 %v526, 64
  %v1746 = vpop.permute.xlu0 %1745
  %1747 = vrot.lane.b32.xlu0 %v527, 64
  %v1748 = vpop.permute.xlu0 %1747
  %1749 = vrot.lane.b32.xlu0 %v528, 64
  %v1750 = vpop.permute.xlu0 %1749
  %1751 = vrot.lane.b32.xlu0 %v529, 64
  %v1752 = vpop.permute.xlu0 %1751
  %1753 = vrot.lane.b32.xlu0 %v530, 64
  %v1754 = vpop.permute.xlu0 %1753
  %1755 = vrot.lane.b32.xlu0 %v531, 64
  %v1756 = vpop.permute.xlu0 %1755
  %1757 = vrot.lane.b32.xlu0 %v532, 64
  %v1758 = vpop.permute.xlu0 %1757
  %1759 = vrot.lane.b32.xlu0 %v533, 64
  %v1760 = vpop.permute.xlu0 %1759
  %1761 = vrot.lane.b32.xlu0 %v534, 64
  %v1762 = vpop.permute.xlu0 %1761
  %1763 = vrot.lane.b32.xlu0 %v535, 64
  %v1764 = vpop.permute.xlu0 %1763
  %1765 = vrot.lane.b32.xlu0 %v536, 64
  %v1766 = vpop.permute.xlu0 %1765
  %1767 = vrot.lane.b32.xlu0 %v537, 64
  %v1768 = vpop.permute.xlu0 %1767
  %1769 = vrot.lane.b32.xlu0 %v538, 64
  %v1770 = vpop.permute.xlu0 %1769
  %v1787 = vsub.f32 %v11, %v1740
  %v1788 = vsub.f32 %v13, %v1742
  %v1789 = vsub.f32 %v15, %v1744
  %v1790 = vsub.f32 %v17, %v1746
  %v1791 = vsub.f32 %v19, %v1748
  %v1792 = vsub.f32 %v21, %v1750
  %v1793 = vsub.f32 %v23, %v1752
  %v1794 = vsub.f32 %v25, %v1754
  %v1795 = vsub.f32 %v27, %v1756
  %v1796 = vsub.f32 %v29, %v1758
  %v1797 = vsub.f32 %v31, %v1760
  %v1798 = vsub.f32 %v33, %v1762
  %v1799 = vsub.f32 %v35, %v1764
  %v1800 = vsub.f32 %v37, %v1766
  %v1801 = vsub.f32 %v39, %v1768
  %v1802 = vsub.f32 %v41, %v1770
  %v1803 = vmul.f32 %v1787, 1.442695
  %v1804 = vpow.pop %v1803
  %v1805 = vmul.f32 %v1788, 1.442695
  %v1806 = vpow.pop %v1805
  %v1807 = vmul.f32 %v1789, 1.442695
  %v1808 = vpow.pop %v1807
  %v1809 = vmul.f32 %v1790, 1.442695
  %v1810 = vpow.pop %v1809
  %v1811 = vmul.f32 %v1791, 1.442695
  %v1812 = vpow.pop %v1811
  %v1813 = vmul.f32 %v1792, 1.442695
  %v1814 = vpow.pop %v1813
  %v1815 = vmul.f32 %v1793, 1.442695
  %v1816 = vpow.pop %v1815
  %v1817 = vmul.f32 %v1794, 1.442695
  %v1818 = vpow.pop %v1817
  %v1819 = vmul.f32 %v1795, 1.442695
  %v1820 = vpow.pop %v1819
  %v1821 = vmul.f32 %v1796, 1.442695
  %v1822 = vpow.pop %v1821
  %v1823 = vmul.f32 %v1797, 1.442695
  %v1824 = vpow.pop %v1823
  %v1825 = vmul.f32 %v1798, 1.442695
  %v1826 = vpow.pop %v1825
  %v1827 = vmul.f32 %v1799, 1.442695
  %v1828 = vpow.pop %v1827
  %v1829 = vmul.f32 %v1800, 1.442695
  %v1830 = vpow.pop %v1829
  %v1831 = vmul.f32 %v1801, 1.442695
  %v1832 = vpow.pop %v1831
  %v1833 = vmul.f32 %v1802, 1.442695
  %v1834 = vpow.pop %v1833
  %1851 = vrot.lane.b32.xlu0 %v1804, 64
  %v1852 = vpop.permute.xlu0 %1851
  %1853 = vrot.lane.b32.xlu0 %v1806, 64
  %v1854 = vpop.permute.xlu0 %1853
  %1855 = vrot.lane.b32.xlu0 %v1808, 64
  %v1856 = vpop.permute.xlu0 %1855
  %1857 = vrot.lane.b32.xlu0 %v1810, 64
  %v1858 = vpop.permute.xlu0 %1857
  %1859 = vrot.lane.b32.xlu0 %v1812, 64
  %v1860 = vpop.permute.xlu0 %1859
  %1861 = vrot.lane.b32.xlu0 %v1814, 64
  %v1862 = vpop.permute.xlu0 %1861
  %1863 = vrot.lane.b32.xlu0 %v1816, 64
  %v1864 = vpop.permute.xlu0 %1863
  %1865 = vrot.lane.b32.xlu0 %v1818, 64
  %v1866 = vpop.permute.xlu0 %1865
  %1867 = vrot.lane.b32.xlu0 %v1820, 64
  %v1868 = vpop.permute.xlu0 %1867
  %1869 = vrot.lane.b32.xlu0 %v1822, 64
  %v1870 = vpop.permute.xlu0 %1869
  %1871 = vrot.lane.b32.xlu0 %v1824, 64
  %v1872 = vpop.permute.xlu0 %1871
  %1873 = vrot.lane.b32.xlu0 %v1826, 64
  %v1874 = vpop.permute.xlu0 %1873
  %1875 = vrot.lane.b32.xlu0 %v1828, 64
  %v1876 = vpop.permute.xlu0 %1875
  %1877 = vrot.lane.b32.xlu0 %v1830, 64
  %v1878 = vpop.permute.xlu0 %1877
  %1879 = vrot.lane.b32.xlu0 %v1832, 64
  %v1880 = vpop.permute.xlu0 %1879
  %1881 = vrot.lane.b32.xlu0 %v1834, 64
  %v1882 = vpop.permute.xlu0 %1881
  %v1899 = vadd.f32 %v1563, %v1852
  %v1900 = vadd.f32 %v1564, %v1854
  %v1901 = vadd.f32 %v1565, %v1856
  %v1902 = vadd.f32 %v1566, %v1858
  %v1903 = vadd.f32 %v1567, %v1860
  %v1904 = vadd.f32 %v1568, %v1862
  %v1905 = vadd.f32 %v1569, %v1864
  %v1906 = vadd.f32 %v1570, %v1866
  %v1907 = vadd.f32 %v1571, %v1868
  %v1908 = vadd.f32 %v1572, %v1870
  %v1909 = vadd.f32 %v1573, %v1872
  %v1910 = vadd.f32 %v1574, %v1874
  %v1911 = vadd.f32 %v1575, %v1876
  %v1912 = vadd.f32 %v1576, %v1878
  %v1913 = vadd.f32 %v1577, %v1880
  %v1914 = vadd.f32 %v1578, %v1882
  %1915 = vset.pattern.permute.xlu0 4
  %1916 = vperm.xlu0 %1915, %v43
  %v1917 = vpop.permute.xlu0 %1916
  %1919 = vset.pattern.permute.xlu0 4
  %1920 = vperm.xlu0 %1919, %v44
  %v1921 = vpop.permute.xlu0 %1920
  %1923 = vset.pattern.permute.xlu0 4
  %1924 = vperm.xlu0 %1923, %v45
  %v1925 = vpop.permute.xlu0 %1924
  %1927 = vset.pattern.permute.xlu0 4
  %1928 = vperm.xlu0 %1927, %v46
  %v1929 = vpop.permute.xlu0 %1928
  %1931 = vset.pattern.permute.xlu0 4
  %1932 = vperm.xlu0 %1931, %v47
  %v1933 = vpop.permute.xlu0 %1932
  %1935 = vset.pattern.permute.xlu0 4
  %1936 = vperm.xlu0 %1935, %v48
  %v1937 = vpop.permute.xlu0 %1936
  %1939 = vset.pattern.permute.xlu0 4
  %1940 = vperm.xlu0 %1939, %v49
  %v1941 = vpop.permute.xlu0 %1940
  %1943 = vset.pattern.permute.xlu0 4
  %1944 = vperm.xlu0 %1943, %v50
  %v1945 = vpop.permute.xlu0 %1944
  %1947 = vset.pattern.permute.xlu0 4
  %1948 = vperm.xlu0 %1947, %v51
  %v1949 = vpop.permute.xlu0 %1948
  %1951 = vset.pattern.permute.xlu0 4
  %1952 = vperm.xlu0 %1951, %v52
  %v1953 = vpop.permute.xlu0 %1952
  %1955 = vset.pattern.permute.xlu0 4
  %1956 = vperm.xlu0 %1955, %v53
  %v1957 = vpop.permute.xlu0 %1956
  %1959 = vset.pattern.permute.xlu0 4
  %1960 = vperm.xlu0 %1959, %v54
  %v1961 = vpop.permute.xlu0 %1960
  %1963 = vset.pattern.permute.xlu0 4
  %1964 = vperm.xlu0 %1963, %v55
  %v1965 = vpop.permute.xlu0 %1964
  %1967 = vset.pattern.permute.xlu0 4
  %1968 = vperm.xlu0 %1967, %v56
  %v1969 = vpop.permute.xlu0 %1968
  %1971 = vset.pattern.permute.xlu0 4
  %1972 = vperm.xlu0 %1971, %v57
  %v1973 = vpop.permute.xlu0 %1972
  %1975 = vset.pattern.permute.xlu0 4
  %1976 = vperm.xlu0 %1975, %v58
  %v1977 = vpop.permute.xlu0 %1976
  %v1979 = vmul.f32 %v1804, %v1917
  %v1980 = vmul.f32 %v1806, %v1921
  %v1981 = vmul.f32 %v1808, %v1925
  %v1982 = vmul.f32 %v1810, %v1929
  %v1983 = vmul.f32 %v1812, %v1933
  %v1984 = vmul.f32 %v1814, %v1937
  %v1985 = vmul.f32 %v1816, %v1941
  %v1986 = vmul.f32 %v1818, %v1945
  %v1987 = vmul.f32 %v1820, %v1949
  %v1988 = vmul.f32 %v1822, %v1953
  %v1989 = vmul.f32 %v1824, %v1957
  %v1990 = vmul.f32 %v1826, %v1961
  %v1991 = vmul.f32 %v1828, %v1965
  %v1992 = vmul.f32 %v1830, %v1969
  %v1993 = vmul.f32 %v1832, %v1973
  %v1994 = vmul.f32 %v1834, %v1977
  %2011 = vrot.lane.b32.xlu0 %v1979, 64
  %v2012 = vpop.permute.xlu0 %2011
  %2013 = vrot.lane.b32.xlu0 %v1980, 64
  %v2014 = vpop.permute.xlu0 %2013
  %2015 = vrot.lane.b32.xlu0 %v1981, 64
  %v2016 = vpop.permute.xlu0 %2015
  %2017 = vrot.lane.b32.xlu0 %v1982, 64
  %v2018 = vpop.permute.xlu0 %2017
  %2019 = vrot.lane.b32.xlu0 %v1983, 64
  %v2020 = vpop.permute.xlu0 %2019
  %2021 = vrot.lane.b32.xlu0 %v1984, 64
  %v2022 = vpop.permute.xlu0 %2021
  %2023 = vrot.lane.b32.xlu0 %v1985, 64
  %v2024 = vpop.permute.xlu0 %2023
  %2025 = vrot.lane.b32.xlu0 %v1986, 64
  %v2026 = vpop.permute.xlu0 %2025
  %2027 = vrot.lane.b32.xlu0 %v1987, 64
  %v2028 = vpop.permute.xlu0 %2027
  %2029 = vrot.lane.b32.xlu0 %v1988, 64
  %v2030 = vpop.permute.xlu0 %2029
  %2031 = vrot.lane.b32.xlu0 %v1989, 64
  %v2032 = vpop.permute.xlu0 %2031
  %2033 = vrot.lane.b32.xlu0 %v1990, 64
  %v2034 = vpop.permute.xlu0 %2033
  %2035 = vrot.lane.b32.xlu0 %v1991, 64
  %v2036 = vpop.permute.xlu0 %2035
  %2037 = vrot.lane.b32.xlu0 %v1992, 64
  %v2038 = vpop.permute.xlu0 %2037
  %2039 = vrot.lane.b32.xlu0 %v1993, 64
  %v2040 = vpop.permute.xlu0 %2039
  %2041 = vrot.lane.b32.xlu0 %v1994, 64
  %v2042 = vpop.permute.xlu0 %2041
  %v2059 = vadd.f32 %v1723, %v2012
  %v2060 = vadd.f32 %v1724, %v2014
  %v2061 = vadd.f32 %v1725, %v2016
  %v2062 = vadd.f32 %v1726, %v2018
  %v2063 = vadd.f32 %v1727, %v2020
  %v2064 = vadd.f32 %v1728, %v2022
  %v2065 = vadd.f32 %v1729, %v2024
  %v2066 = vadd.f32 %v1730, %v2026
  %v2067 = vadd.f32 %v1731, %v2028
  %v2068 = vadd.f32 %v1732, %v2030
  %v2069 = vadd.f32 %v1733, %v2032
  %v2070 = vadd.f32 %v1734, %v2034
  %v2071 = vadd.f32 %v1735, %v2036
  %v2072 = vadd.f32 %v1736, %v2038
  %v2073 = vadd.f32 %v1737, %v2040
  %v2074 = vadd.f32 %v1738, %v2042
  %2075 = vrot.lane.b32.xlu0 %v523, 80
  %v2076 = vpop.permute.xlu0 %2075
  %2077 = vrot.lane.b32.xlu0 %v524, 80
  %v2078 = vpop.permute.xlu0 %2077
  %2079 = vrot.lane.b32.xlu0 %v525, 80
  %v2080 = vpop.permute.xlu0 %2079
  %2081 = vrot.lane.b32.xlu0 %v526, 80
  %v2082 = vpop.permute.xlu0 %2081
  %2083 = vrot.lane.b32.xlu0 %v527, 80
  %v2084 = vpop.permute.xlu0 %2083
  %2085 = vrot.lane.b32.xlu0 %v528, 80
  %v2086 = vpop.permute.xlu0 %2085
  %2087 = vrot.lane.b32.xlu0 %v529, 80
  %v2088 = vpop.permute.xlu0 %2087
  %2089 = vrot.lane.b32.xlu0 %v530, 80
  %v2090 = vpop.permute.xlu0 %2089
  %2091 = vrot.lane.b32.xlu0 %v531, 80
  %v2092 = vpop.permute.xlu0 %2091
  %2093 = vrot.lane.b32.xlu0 %v532, 80
  %v2094 = vpop.permute.xlu0 %2093
  %2095 = vrot.lane.b32.xlu0 %v533, 80
  %v2096 = vpop.permute.xlu0 %2095
  %2097 = vrot.lane.b32.xlu0 %v534, 80
  %v2098 = vpop.permute.xlu0 %2097
  %2099 = vrot.lane.b32.xlu0 %v535, 80
  %v2100 = vpop.permute.xlu0 %2099
  %2101 = vrot.lane.b32.xlu0 %v536, 80
  %v2102 = vpop.permute.xlu0 %2101
  %2103 = vrot.lane.b32.xlu0 %v537, 80
  %v2104 = vpop.permute.xlu0 %2103
  %2105 = vrot.lane.b32.xlu0 %v538, 80
  %v2106 = vpop.permute.xlu0 %2105
  %v2123 = vsub.f32 %v11, %v2076
  %v2124 = vsub.f32 %v13, %v2078
  %v2125 = vsub.f32 %v15, %v2080
  %v2126 = vsub.f32 %v17, %v2082
  %v2127 = vsub.f32 %v19, %v2084
  %v2128 = vsub.f32 %v21, %v2086
  %v2129 = vsub.f32 %v23, %v2088
  %v2130 = vsub.f32 %v25, %v2090
  %v2131 = vsub.f32 %v27, %v2092
  %v2132 = vsub.f32 %v29, %v2094
  %v2133 = vsub.f32 %v31, %v2096
  %v2134 = vsub.f32 %v33, %v2098
  %v2135 = vsub.f32 %v35, %v2100
  %v2136 = vsub.f32 %v37, %v2102
  %v2137 = vsub.f32 %v39, %v2104
  %v2138 = vsub.f32 %v41, %v2106
  %v2139 = vmul.f32 %v2123, 1.442695
  %v2140 = vpow.pop %v2139
  %v2141 = vmul.f32 %v2124, 1.442695
  %v2142 = vpow.pop %v2141
  %v2143 = vmul.f32 %v2125, 1.442695
  %v2144 = vpow.pop %v2143
  %v2145 = vmul.f32 %v2126, 1.442695
  %v2146 = vpow.pop %v2145
  %v2147 = vmul.f32 %v2127, 1.442695
  %v2148 = vpow.pop %v2147
  %v2149 = vmul.f32 %v2128, 1.442695
  %v2150 = vpow.pop %v2149
  %v2151 = vmul.f32 %v2129, 1.442695
  %v2152 = vpow.pop %v2151
  %v2153 = vmul.f32 %v2130, 1.442695
  %v2154 = vpow.pop %v2153
  %v2155 = vmul.f32 %v2131, 1.442695
  %v2156 = vpow.pop %v2155
  %v2157 = vmul.f32 %v2132, 1.442695
  %v2158 = vpow.pop %v2157
  %v2159 = vmul.f32 %v2133, 1.442695
  %v2160 = vpow.pop %v2159
  %v2161 = vmul.f32 %v2134, 1.442695
  %v2162 = vpow.pop %v2161
  %v2163 = vmul.f32 %v2135, 1.442695
  %v2164 = vpow.pop %v2163
  %v2165 = vmul.f32 %v2136, 1.442695
  %v2166 = vpow.pop %v2165
  %v2167 = vmul.f32 %v2137, 1.442695
  %v2168 = vpow.pop %v2167
  %v2169 = vmul.f32 %v2138, 1.442695
  %v2170 = vpow.pop %v2169
  %2187 = vrot.lane.b32.xlu0 %v2140, 48
  %v2188 = vpop.permute.xlu0 %2187
  %2189 = vrot.lane.b32.xlu0 %v2142, 48
  %v2190 = vpop.permute.xlu0 %2189
  %2191 = vrot.lane.b32.xlu0 %v2144, 48
  %v2192 = vpop.permute.xlu0 %2191
  %2193 = vrot.lane.b32.xlu0 %v2146, 48
  %v2194 = vpop.permute.xlu0 %2193
  %2195 = vrot.lane.b32.xlu0 %v2148, 48
  %v2196 = vpop.permute.xlu0 %2195
  %2197 = vrot.lane.b32.xlu0 %v2150, 48
  %v2198 = vpop.permute.xlu0 %2197
  %2199 = vrot.lane.b32.xlu0 %v2152, 48
  %v2200 = vpop.permute.xlu0 %2199
  %2201 = vrot.lane.b32.xlu0 %v2154, 48
  %v2202 = vpop.permute.xlu0 %2201
  %2203 = vrot.lane.b32.xlu0 %v2156, 48
  %v2204 = vpop.permute.xlu0 %2203
  %2205 = vrot.lane.b32.xlu0 %v2158, 48
  %v2206 = vpop.permute.xlu0 %2205
  %2207 = vrot.lane.b32.xlu0 %v2160, 48
  %v2208 = vpop.permute.xlu0 %2207
  %2209 = vrot.lane.b32.xlu0 %v2162, 48
  %v2210 = vpop.permute.xlu0 %2209
  %2211 = vrot.lane.b32.xlu0 %v2164, 48
  %v2212 = vpop.permute.xlu0 %2211
  %2213 = vrot.lane.b32.xlu0 %v2166, 48
  %v2214 = vpop.permute.xlu0 %2213
  %2215 = vrot.lane.b32.xlu0 %v2168, 48
  %v2216 = vpop.permute.xlu0 %2215
  %2217 = vrot.lane.b32.xlu0 %v2170, 48
  %v2218 = vpop.permute.xlu0 %2217
  %v2235 = vadd.f32 %v1899, %v2188
  %v2236 = vadd.f32 %v1900, %v2190
  %v2237 = vadd.f32 %v1901, %v2192
  %v2238 = vadd.f32 %v1902, %v2194
  %v2239 = vadd.f32 %v1903, %v2196
  %v2240 = vadd.f32 %v1904, %v2198
  %v2241 = vadd.f32 %v1905, %v2200
  %v2242 = vadd.f32 %v1906, %v2202
  %v2243 = vadd.f32 %v1907, %v2204
  %v2244 = vadd.f32 %v1908, %v2206
  %v2245 = vadd.f32 %v1909, %v2208
  %v2246 = vadd.f32 %v1910, %v2210
  %v2247 = vadd.f32 %v1911, %v2212
  %v2248 = vadd.f32 %v1912, %v2214
  %v2249 = vadd.f32 %v1913, %v2216
  %v2250 = vadd.f32 %v1914, %v2218
  %2251 = vset.pattern.permute.xlu0 5
  %2252 = vperm.xlu0 %2251, %v43
  %v2253 = vpop.permute.xlu0 %2252
  %2255 = vset.pattern.permute.xlu0 5
  %2256 = vperm.xlu0 %2255, %v44
  %v2257 = vpop.permute.xlu0 %2256
  %2259 = vset.pattern.permute.xlu0 5
  %2260 = vperm.xlu0 %2259, %v45
  %v2261 = vpop.permute.xlu0 %2260
  %2263 = vset.pattern.permute.xlu0 5
  %2264 = vperm.xlu0 %2263, %v46
  %v2265 = vpop.permute.xlu0 %2264
  %2267 = vset.pattern.permute.xlu0 5
  %2268 = vperm.xlu0 %2267, %v47
  %v2269 = vpop.permute.xlu0 %2268
  %2271 = vset.pattern.permute.xlu0 5
  %2272 = vperm.xlu0 %2271, %v48
  %v2273 = vpop.permute.xlu0 %2272
  %2275 = vset.pattern.permute.xlu0 5
  %2276 = vperm.xlu0 %2275, %v49
  %v2277 = vpop.permute.xlu0 %2276
  %2279 = vset.pattern.permute.xlu0 5
  %2280 = vperm.xlu0 %2279, %v50
  %v2281 = vpop.permute.xlu0 %2280
  %2283 = vset.pattern.permute.xlu0 5
  %2284 = vperm.xlu0 %2283, %v51
  %v2285 = vpop.permute.xlu0 %2284
  %2287 = vset.pattern.permute.xlu0 5
  %2288 = vperm.xlu0 %2287, %v52
  %v2289 = vpop.permute.xlu0 %2288
  %2291 = vset.pattern.permute.xlu0 5
  %2292 = vperm.xlu0 %2291, %v53
  %v2293 = vpop.permute.xlu0 %2292
  %2295 = vset.pattern.permute.xlu0 5
  %2296 = vperm.xlu0 %2295, %v54
  %v2297 = vpop.permute.xlu0 %2296
  %2299 = vset.pattern.permute.xlu0 5
  %2300 = vperm.xlu0 %2299, %v55
  %v2301 = vpop.permute.xlu0 %2300
  %2303 = vset.pattern.permute.xlu0 5
  %2304 = vperm.xlu0 %2303, %v56
  %v2305 = vpop.permute.xlu0 %2304
  %2307 = vset.pattern.permute.xlu0 5
  %2308 = vperm.xlu0 %2307, %v57
  %v2309 = vpop.permute.xlu0 %2308
  %2311 = vset.pattern.permute.xlu0 5
  %2312 = vperm.xlu0 %2311, %v58
  %v2313 = vpop.permute.xlu0 %2312
  %v2315 = vmul.f32 %v2140, %v2253
  %v2316 = vmul.f32 %v2142, %v2257
  %v2317 = vmul.f32 %v2144, %v2261
  %v2318 = vmul.f32 %v2146, %v2265
  %v2319 = vmul.f32 %v2148, %v2269
  %v2320 = vmul.f32 %v2150, %v2273
  %v2321 = vmul.f32 %v2152, %v2277
  %v2322 = vmul.f32 %v2154, %v2281
  %v2323 = vmul.f32 %v2156, %v2285
  %v2324 = vmul.f32 %v2158, %v2289
  %v2325 = vmul.f32 %v2160, %v2293
  %v2326 = vmul.f32 %v2162, %v2297
  %v2327 = vmul.f32 %v2164, %v2301
  %v2328 = vmul.f32 %v2166, %v2305
  %v2329 = vmul.f32 %v2168, %v2309
  %v2330 = vmul.f32 %v2170, %v2313
  %2347 = vrot.lane.b32.xlu0 %v2315, 48
  %v2348 = vpop.permute.xlu0 %2347
  %2349 = vrot.lane.b32.xlu0 %v2316, 48
  %v2350 = vpop.permute.xlu0 %2349
  %2351 = vrot.lane.b32.xlu0 %v2317, 48
  %v2352 = vpop.permute.xlu0 %2351
  %2353 = vrot.lane.b32.xlu0 %v2318, 48
  %v2354 = vpop.permute.xlu0 %2353
  %2355 = vrot.lane.b32.xlu0 %v2319, 48
  %v2356 = vpop.permute.xlu0 %2355
  %2357 = vrot.lane.b32.xlu0 %v2320, 48
  %v2358 = vpop.permute.xlu0 %2357
  %2359 = vrot.lane.b32.xlu0 %v2321, 48
  %v2360 = vpop.permute.xlu0 %2359
  %2361 = vrot.lane.b32.xlu0 %v2322, 48
  %v2362 = vpop.permute.xlu0 %2361
  %2363 = vrot.lane.b32.xlu0 %v2323, 48
  %v2364 = vpop.permute.xlu0 %2363
  %2365 = vrot.lane.b32.xlu0 %v2324, 48
  %v2366 = vpop.permute.xlu0 %2365
  %2367 = vrot.lane.b32.xlu0 %v2325, 48
  %v2368 = vpop.permute.xlu0 %2367
  %2369 = vrot.lane.b32.xlu0 %v2326, 48
  %v2370 = vpop.permute.xlu0 %2369
  %2371 = vrot.lane.b32.xlu0 %v2327, 48
  %v2372 = vpop.permute.xlu0 %2371
  %2373 = vrot.lane.b32.xlu0 %v2328, 48
  %v2374 = vpop.permute.xlu0 %2373
  %2375 = vrot.lane.b32.xlu0 %v2329, 48
  %v2376 = vpop.permute.xlu0 %2375
  %2377 = vrot.lane.b32.xlu0 %v2330, 48
  %v2378 = vpop.permute.xlu0 %2377
  %v2395 = vadd.f32 %v2059, %v2348
  %v2396 = vadd.f32 %v2060, %v2350
  %v2397 = vadd.f32 %v2061, %v2352
  %v2398 = vadd.f32 %v2062, %v2354
  %v2399 = vadd.f32 %v2063, %v2356
  %v2400 = vadd.f32 %v2064, %v2358
  %v2401 = vadd.f32 %v2065, %v2360
  %v2402 = vadd.f32 %v2066, %v2362
  %v2403 = vadd.f32 %v2067, %v2364
  %v2404 = vadd.f32 %v2068, %v2366
  %v2405 = vadd.f32 %v2069, %v2368
  %v2406 = vadd.f32 %v2070, %v2370
  %v2407 = vadd.f32 %v2071, %v2372
  %v2408 = vadd.f32 %v2072, %v2374
  %v2409 = vadd.f32 %v2073, %v2376
  %v2410 = vadd.f32 %v2074, %v2378
  %2411 = vrot.lane.b32.xlu0 %v523, 96
  %v2412 = vpop.permute.xlu0 %2411
  %2413 = vrot.lane.b32.xlu0 %v524, 96
  %v2414 = vpop.permute.xlu0 %2413
  %2415 = vrot.lane.b32.xlu0 %v525, 96
  %v2416 = vpop.permute.xlu0 %2415
  %2417 = vrot.lane.b32.xlu0 %v526, 96
  %v2418 = vpop.permute.xlu0 %2417
  %2419 = vrot.lane.b32.xlu0 %v527, 96
  %v2420 = vpop.permute.xlu0 %2419
  %2421 = vrot.lane.b32.xlu0 %v528, 96
  %v2422 = vpop.permute.xlu0 %2421
  %2423 = vrot.lane.b32.xlu0 %v529, 96
  %v2424 = vpop.permute.xlu0 %2423
  %2425 = vrot.lane.b32.xlu0 %v530, 96
  %v2426 = vpop.permute.xlu0 %2425
  %2427 = vrot.lane.b32.xlu0 %v531, 96
  %v2428 = vpop.permute.xlu0 %2427
  %2429 = vrot.lane.b32.xlu0 %v532, 96
  %v2430 = vpop.permute.xlu0 %2429
  %2431 = vrot.lane.b32.xlu0 %v533, 96
  %v2432 = vpop.permute.xlu0 %2431
  %2433 = vrot.lane.b32.xlu0 %v534, 96
  %v2434 = vpop.permute.xlu0 %2433
  %2435 = vrot.lane.b32.xlu0 %v535, 96
  %v2436 = vpop.permute.xlu0 %2435
  %2437 = vrot.lane.b32.xlu0 %v536, 96
  %v2438 = vpop.permute.xlu0 %2437
  %2439 = vrot.lane.b32.xlu0 %v537, 96
  %v2440 = vpop.permute.xlu0 %2439
  %2441 = vrot.lane.b32.xlu0 %v538, 96
  %v2442 = vpop.permute.xlu0 %2441
  %v2459 = vsub.f32 %v11, %v2412
  %v2460 = vsub.f32 %v13, %v2414
  %v2461 = vsub.f32 %v15, %v2416
  %v2462 = vsub.f32 %v17, %v2418
  %v2463 = vsub.f32 %v19, %v2420
  %v2464 = vsub.f32 %v21, %v2422
  %v2465 = vsub.f32 %v23, %v2424
  %v2466 = vsub.f32 %v25, %v2426
  %v2467 = vsub.f32 %v27, %v2428
  %v2468 = vsub.f32 %v29, %v2430
  %v2469 = vsub.f32 %v31, %v2432
  %v2470 = vsub.f32 %v33, %v2434
  %v2471 = vsub.f32 %v35, %v2436
  %v2472 = vsub.f32 %v37, %v2438
  %v2473 = vsub.f32 %v39, %v2440
  %v2474 = vsub.f32 %v41, %v2442
  %v2475 = vmul.f32 %v2459, 1.442695
  %v2476 = vpow.pop %v2475
  %v2477 = vmul.f32 %v2460, 1.442695
  %v2478 = vpow.pop %v2477
  %v2479 = vmul.f32 %v2461, 1.442695
  %v2480 = vpow.pop %v2479
  %v2481 = vmul.f32 %v2462, 1.442695
  %v2482 = vpow.pop %v2481
  %v2483 = vmul.f32 %v2463, 1.442695
  %v2484 = vpow.pop %v2483
  %v2485 = vmul.f32 %v2464, 1.442695
  %v2486 = vpow.pop %v2485
  %v2487 = vmul.f32 %v2465, 1.442695
  %v2488 = vpow.pop %v2487
  %v2489 = vmul.f32 %v2466, 1.442695
  %v2490 = vpow.pop %v2489
  %v2491 = vmul.f32 %v2467, 1.442695
  %v2492 = vpow.pop %v2491
  %v2493 = vmul.f32 %v2468, 1.442695
  %v2494 = vpow.pop %v2493
  %v2495 = vmul.f32 %v2469, 1.442695
  %v2496 = vpow.pop %v2495
  %v2497 = vmul.f32 %v2470, 1.442695
  %v2498 = vpow.pop %v2497
  %v2499 = vmul.f32 %v2471, 1.442695
  %v2500 = vpow.pop %v2499
  %v2501 = vmul.f32 %v2472, 1.442695
  %v2502 = vpow.pop %v2501
  %v2503 = vmul.f32 %v2473, 1.442695
  %v2504 = vpow.pop %v2503
  %v2505 = vmul.f32 %v2474, 1.442695
  %v2506 = vpow.pop %v2505
  %2523 = vrot.lane.b32.xlu0 %v2476, 32
  %v2524 = vpop.permute.xlu0 %2523
  %2525 = vrot.lane.b32.xlu0 %v2478, 32
  %v2526 = vpop.permute.xlu0 %2525
  %2527 = vrot.lane.b32.xlu0 %v2480, 32
  %v2528 = vpop.permute.xlu0 %2527
  %2529 = vrot.lane.b32.xlu0 %v2482, 32
  %v2530 = vpop.permute.xlu0 %2529
  %2531 = vrot.lane.b32.xlu0 %v2484, 32
  %v2532 = vpop.permute.xlu0 %2531
  %2533 = vrot.lane.b32.xlu0 %v2486, 32
  %v2534 = vpop.permute.xlu0 %2533
  %2535 = vrot.lane.b32.xlu0 %v2488, 32
  %v2536 = vpop.permute.xlu0 %2535
  %2537 = vrot.lane.b32.xlu0 %v2490, 32
  %v2538 = vpop.permute.xlu0 %2537
  %2539 = vrot.lane.b32.xlu0 %v2492, 32
  %v2540 = vpop.permute.xlu0 %2539
  %2541 = vrot.lane.b32.xlu0 %v2494, 32
  %v2542 = vpop.permute.xlu0 %2541
  %2543 = vrot.lane.b32.xlu0 %v2496, 32
  %v2544 = vpop.permute.xlu0 %2543
  %2545 = vrot.lane.b32.xlu0 %v2498, 32
  %v2546 = vpop.permute.xlu0 %2545
  %2547 = vrot.lane.b32.xlu0 %v2500, 32
  %v2548 = vpop.permute.xlu0 %2547
  %2549 = vrot.lane.b32.xlu0 %v2502, 32
  %v2550 = vpop.permute.xlu0 %2549
  %2551 = vrot.lane.b32.xlu0 %v2504, 32
  %v2552 = vpop.permute.xlu0 %2551
  %2553 = vrot.lane.b32.xlu0 %v2506, 32
  %v2554 = vpop.permute.xlu0 %2553
  %v2571 = vadd.f32 %v2235, %v2524
  %v2572 = vadd.f32 %v2236, %v2526
  %v2573 = vadd.f32 %v2237, %v2528
  %v2574 = vadd.f32 %v2238, %v2530
  %v2575 = vadd.f32 %v2239, %v2532
  %v2576 = vadd.f32 %v2240, %v2534
  %v2577 = vadd.f32 %v2241, %v2536
  %v2578 = vadd.f32 %v2242, %v2538
  %v2579 = vadd.f32 %v2243, %v2540
  %v2580 = vadd.f32 %v2244, %v2542
  %v2581 = vadd.f32 %v2245, %v2544
  %v2582 = vadd.f32 %v2246, %v2546
  %v2583 = vadd.f32 %v2247, %v2548
  %v2584 = vadd.f32 %v2248, %v2550
  %v2585 = vadd.f32 %v2249, %v2552
  %v2586 = vadd.f32 %v2250, %v2554
  %2587 = vset.pattern.permute.xlu0 6
  %2588 = vperm.xlu0 %2587, %v43
  %v2589 = vpop.permute.xlu0 %2588
  %2591 = vset.pattern.permute.xlu0 6
  %2592 = vperm.xlu0 %2591, %v44
  %v2593 = vpop.permute.xlu0 %2592
  %2595 = vset.pattern.permute.xlu0 6
  %2596 = vperm.xlu0 %2595, %v45
  %v2597 = vpop.permute.xlu0 %2596
  %2599 = vset.pattern.permute.xlu0 6
  %2600 = vperm.xlu0 %2599, %v46
  %v2601 = vpop.permute.xlu0 %2600
  %2603 = vset.pattern.permute.xlu0 6
  %2604 = vperm.xlu0 %2603, %v47
  %v2605 = vpop.permute.xlu0 %2604
  %2607 = vset.pattern.permute.xlu0 6
  %2608 = vperm.xlu0 %2607, %v48
  %v2609 = vpop.permute.xlu0 %2608
  %2611 = vset.pattern.permute.xlu0 6
  %2612 = vperm.xlu0 %2611, %v49
  %v2613 = vpop.permute.xlu0 %2612
  %2615 = vset.pattern.permute.xlu0 6
  %2616 = vperm.xlu0 %2615, %v50
  %v2617 = vpop.permute.xlu0 %2616
  %2619 = vset.pattern.permute.xlu0 6
  %2620 = vperm.xlu0 %2619, %v51
  %v2621 = vpop.permute.xlu0 %2620
  %2623 = vset.pattern.permute.xlu0 6
  %2624 = vperm.xlu0 %2623, %v52
  %v2625 = vpop.permute.xlu0 %2624
  %2627 = vset.pattern.permute.xlu0 6
  %2628 = vperm.xlu0 %2627, %v53
  %v2629 = vpop.permute.xlu0 %2628
  %2631 = vset.pattern.permute.xlu0 6
  %2632 = vperm.xlu0 %2631, %v54
  %v2633 = vpop.permute.xlu0 %2632
  %2635 = vset.pattern.permute.xlu0 6
  %2636 = vperm.xlu0 %2635, %v55
  %v2637 = vpop.permute.xlu0 %2636
  %2639 = vset.pattern.permute.xlu0 6
  %2640 = vperm.xlu0 %2639, %v56
  %v2641 = vpop.permute.xlu0 %2640
  %2643 = vset.pattern.permute.xlu0 6
  %2644 = vperm.xlu0 %2643, %v57
  %v2645 = vpop.permute.xlu0 %2644
  %2647 = vset.pattern.permute.xlu0 6
  %2648 = vperm.xlu0 %2647, %v58
  %v2649 = vpop.permute.xlu0 %2648
  %v2651 = vmul.f32 %v2476, %v2589
  %v2652 = vmul.f32 %v2478, %v2593
  %v2653 = vmul.f32 %v2480, %v2597
  %v2654 = vmul.f32 %v2482, %v2601
  %v2655 = vmul.f32 %v2484, %v2605
  %v2656 = vmul.f32 %v2486, %v2609
  %v2657 = vmul.f32 %v2488, %v2613
  %v2658 = vmul.f32 %v2490, %v2617
  %v2659 = vmul.f32 %v2492, %v2621
  %v2660 = vmul.f32 %v2494, %v2625
  %v2661 = vmul.f32 %v2496, %v2629
  %v2662 = vmul.f32 %v2498, %v2633
  %v2663 = vmul.f32 %v2500, %v2637
  %v2664 = vmul.f32 %v2502, %v2641
  %v2665 = vmul.f32 %v2504, %v2645
  %v2666 = vmul.f32 %v2506, %v2649
  %2683 = vrot.lane.b32.xlu0 %v2651, 32
  %v2684 = vpop.permute.xlu0 %2683
  %2685 = vrot.lane.b32.xlu0 %v2652, 32
  %v2686 = vpop.permute.xlu0 %2685
  %2687 = vrot.lane.b32.xlu0 %v2653, 32
  %v2688 = vpop.permute.xlu0 %2687
  %2689 = vrot.lane.b32.xlu0 %v2654, 32
  %v2690 = vpop.permute.xlu0 %2689
  %2691 = vrot.lane.b32.xlu0 %v2655, 32
  %v2692 = vpop.permute.xlu0 %2691
  %2693 = vrot.lane.b32.xlu0 %v2656, 32
  %v2694 = vpop.permute.xlu0 %2693
  %2695 = vrot.lane.b32.xlu0 %v2657, 32
  %v2696 = vpop.permute.xlu0 %2695
  %2697 = vrot.lane.b32.xlu0 %v2658, 32
  %v2698 = vpop.permute.xlu0 %2697
  %2699 = vrot.lane.b32.xlu0 %v2659, 32
  %v2700 = vpop.permute.xlu0 %2699
  %2701 = vrot.lane.b32.xlu0 %v2660, 32
  %v2702 = vpop.permute.xlu0 %2701
  %2703 = vrot.lane.b32.xlu0 %v2661, 32
  %v2704 = vpop.permute.xlu0 %2703
  %2705 = vrot.lane.b32.xlu0 %v2662, 32
  %v2706 = vpop.permute.xlu0 %2705
  %2707 = vrot.lane.b32.xlu0 %v2663, 32
  %v2708 = vpop.permute.xlu0 %2707
  %2709 = vrot.lane.b32.xlu0 %v2664, 32
  %v2710 = vpop.permute.xlu0 %2709
  %2711 = vrot.lane.b32.xlu0 %v2665, 32
  %v2712 = vpop.permute.xlu0 %2711
  %2713 = vrot.lane.b32.xlu0 %v2666, 32
  %v2714 = vpop.permute.xlu0 %2713
  %v2731 = vadd.f32 %v2395, %v2684
  %v2732 = vadd.f32 %v2396, %v2686
  %v2733 = vadd.f32 %v2397, %v2688
  %v2734 = vadd.f32 %v2398, %v2690
  %v2735 = vadd.f32 %v2399, %v2692
  %v2736 = vadd.f32 %v2400, %v2694
  %v2737 = vadd.f32 %v2401, %v2696
  %v2738 = vadd.f32 %v2402, %v2698
  %v2739 = vadd.f32 %v2403, %v2700
  %v2740 = vadd.f32 %v2404, %v2702
  %v2741 = vadd.f32 %v2405, %v2704
  %v2742 = vadd.f32 %v2406, %v2706
  %v2743 = vadd.f32 %v2407, %v2708
  %v2744 = vadd.f32 %v2408, %v2710
  %v2745 = vadd.f32 %v2409, %v2712
  %v2746 = vadd.f32 %v2410, %v2714
  %2747 = vrot.lane.b32.xlu0 %v523, 112
  %v2748 = vpop.permute.xlu0 %2747
  %2749 = vrot.lane.b32.xlu0 %v524, 112
  %v2750 = vpop.permute.xlu0 %2749
  %2751 = vrot.lane.b32.xlu0 %v525, 112
  %v2752 = vpop.permute.xlu0 %2751
  %2753 = vrot.lane.b32.xlu0 %v526, 112
  %v2754 = vpop.permute.xlu0 %2753
  %2755 = vrot.lane.b32.xlu0 %v527, 112
  %v2756 = vpop.permute.xlu0 %2755
  %2757 = vrot.lane.b32.xlu0 %v528, 112
  %v2758 = vpop.permute.xlu0 %2757
  %2759 = vrot.lane.b32.xlu0 %v529, 112
  %v2760 = vpop.permute.xlu0 %2759
  %2761 = vrot.lane.b32.xlu0 %v530, 112
  %v2762 = vpop.permute.xlu0 %2761
  %2763 = vrot.lane.b32.xlu0 %v531, 112
  %v2764 = vpop.permute.xlu0 %2763
  %2765 = vrot.lane.b32.xlu0 %v532, 112
  %v2766 = vpop.permute.xlu0 %2765
  %2767 = vrot.lane.b32.xlu0 %v533, 112
  %v2768 = vpop.permute.xlu0 %2767
  %2769 = vrot.lane.b32.xlu0 %v534, 112
  %v2770 = vpop.permute.xlu0 %2769
  %2771 = vrot.lane.b32.xlu0 %v535, 112
  %v2772 = vpop.permute.xlu0 %2771
  %2773 = vrot.lane.b32.xlu0 %v536, 112
  %v2774 = vpop.permute.xlu0 %2773
  %2775 = vrot.lane.b32.xlu0 %v537, 112
  %v2776 = vpop.permute.xlu0 %2775
  %2777 = vrot.lane.b32.xlu0 %v538, 112
  %v2778 = vpop.permute.xlu0 %2777
  %v2795 = vsub.f32 %v11, %v2748
  %v2796 = vsub.f32 %v13, %v2750
  %v2797 = vsub.f32 %v15, %v2752
  %v2798 = vsub.f32 %v17, %v2754
  %v2799 = vsub.f32 %v19, %v2756
  %v2800 = vsub.f32 %v21, %v2758
  %v2801 = vsub.f32 %v23, %v2760
  %v2802 = vsub.f32 %v25, %v2762
  %v2803 = vsub.f32 %v27, %v2764
  %v2804 = vsub.f32 %v29, %v2766
  %v2805 = vsub.f32 %v31, %v2768
  %v2806 = vsub.f32 %v33, %v2770
  %v2807 = vsub.f32 %v35, %v2772
  %v2808 = vsub.f32 %v37, %v2774
  %v2809 = vsub.f32 %v39, %v2776
  %v2810 = vsub.f32 %v41, %v2778
  %v2811 = vmul.f32 %v2795, 1.442695
  %v2812 = vpow.pop %v2811
  %v2813 = vmul.f32 %v2796, 1.442695
  %v2814 = vpow.pop %v2813
  %v2815 = vmul.f32 %v2797, 1.442695
  %v2816 = vpow.pop %v2815
  %v2817 = vmul.f32 %v2798, 1.442695
  %v2818 = vpow.pop %v2817
  %v2819 = vmul.f32 %v2799, 1.442695
  %v2820 = vpow.pop %v2819
  %v2821 = vmul.f32 %v2800, 1.442695
  %v2822 = vpow.pop %v2821
  %v2823 = vmul.f32 %v2801, 1.442695
  %v2824 = vpow.pop %v2823
  %v2825 = vmul.f32 %v2802, 1.442695
  %v2826 = vpow.pop %v2825
  %v2827 = vmul.f32 %v2803, 1.442695
  %v2828 = vpow.pop %v2827
  %v2829 = vmul.f32 %v2804, 1.442695
  %v2830 = vpow.pop %v2829
  %v2831 = vmul.f32 %v2805, 1.442695
  %v2832 = vpow.pop %v2831
  %v2833 = vmul.f32 %v2806, 1.442695
  %v2834 = vpow.pop %v2833
  %v2835 = vmul.f32 %v2807, 1.442695
  %v2836 = vpow.pop %v2835
  %v2837 = vmul.f32 %v2808, 1.442695
  %v2838 = vpow.pop %v2837
  %v2839 = vmul.f32 %v2809, 1.442695
  %v2840 = vpow.pop %v2839
  %v2841 = vmul.f32 %v2810, 1.442695
  %v2842 = vpow.pop %v2841
  %2859 = vrot.lane.b32.xlu0 %v2812, 16
  %v2860 = vpop.permute.xlu0 %2859
  %2861 = vrot.lane.b32.xlu0 %v2814, 16
  %v2862 = vpop.permute.xlu0 %2861
  %2863 = vrot.lane.b32.xlu0 %v2816, 16
  %v2864 = vpop.permute.xlu0 %2863
  %2865 = vrot.lane.b32.xlu0 %v2818, 16
  %v2866 = vpop.permute.xlu0 %2865
  %2867 = vrot.lane.b32.xlu0 %v2820, 16
  %v2868 = vpop.permute.xlu0 %2867
  %2869 = vrot.lane.b32.xlu0 %v2822, 16
  %v2870 = vpop.permute.xlu0 %2869
  %2871 = vrot.lane.b32.xlu0 %v2824, 16
  %v2872 = vpop.permute.xlu0 %2871
  %2873 = vrot.lane.b32.xlu0 %v2826, 16
  %v2874 = vpop.permute.xlu0 %2873
  %2875 = vrot.lane.b32.xlu0 %v2828, 16
  %v2876 = vpop.permute.xlu0 %2875
  %2877 = vrot.lane.b32.xlu0 %v2830, 16
  %v2878 = vpop.permute.xlu0 %2877
  %2879 = vrot.lane.b32.xlu0 %v2832, 16
  %v2880 = vpop.permute.xlu0 %2879
  %2881 = vrot.lane.b32.xlu0 %v2834, 16
  %v2882 = vpop.permute.xlu0 %2881
  %2883 = vrot.lane.b32.xlu0 %v2836, 16
  %v2884 = vpop.permute.xlu0 %2883
  %2885 = vrot.lane.b32.xlu0 %v2838, 16
  %v2886 = vpop.permute.xlu0 %2885
  %2887 = vrot.lane.b32.xlu0 %v2840, 16
  %v2888 = vpop.permute.xlu0 %2887
  %2889 = vrot.lane.b32.xlu0 %v2842, 16
  %v2890 = vpop.permute.xlu0 %2889
  %v2907 = vadd.f32 %v2571, %v2860
  %v2908 = vadd.f32 %v2572, %v2862
  %v2909 = vadd.f32 %v2573, %v2864
  %v2910 = vadd.f32 %v2574, %v2866
  %v2911 = vadd.f32 %v2575, %v2868
  %v2912 = vadd.f32 %v2576, %v2870
  %v2913 = vadd.f32 %v2577, %v2872
  %v2914 = vadd.f32 %v2578, %v2874
  %v2915 = vadd.f32 %v2579, %v2876
  %v2916 = vadd.f32 %v2580, %v2878
  %v2917 = vadd.f32 %v2581, %v2880
  %v2918 = vadd.f32 %v2582, %v2882
  %v2919 = vadd.f32 %v2583, %v2884
  %v2920 = vadd.f32 %v2584, %v2886
  %v2921 = vadd.f32 %v2585, %v2888
  %v2922 = vadd.f32 %v2586, %v2890
  %2923 = vset.pattern.permute.xlu0 7
  %2924 = vperm.xlu0 %2923, %v43
  %v2925 = vpop.permute.xlu0 %2924
  %2927 = vset.pattern.permute.xlu0 7
  %2928 = vperm.xlu0 %2927, %v44
  %v2929 = vpop.permute.xlu0 %2928
  %2931 = vset.pattern.permute.xlu0 7
  %2932 = vperm.xlu0 %2931, %v45
  %v2933 = vpop.permute.xlu0 %2932
  %2935 = vset.pattern.permute.xlu0 7
  %2936 = vperm.xlu0 %2935, %v46
  %v2937 = vpop.permute.xlu0 %2936
  %2939 = vset.pattern.permute.xlu0 7
  %2940 = vperm.xlu0 %2939, %v47
  %v2941 = vpop.permute.xlu0 %2940
  %2943 = vset.pattern.permute.xlu0 7
  %2944 = vperm.xlu0 %2943, %v48
  %v2945 = vpop.permute.xlu0 %2944
  %2947 = vset.pattern.permute.xlu0 7
  %2948 = vperm.xlu0 %2947, %v49
  %v2949 = vpop.permute.xlu0 %2948
  %2951 = vset.pattern.permute.xlu0 7
  %2952 = vperm.xlu0 %2951, %v50
  %v2953 = vpop.permute.xlu0 %2952
  %2955 = vset.pattern.permute.xlu0 7
  %2956 = vperm.xlu0 %2955, %v51
  %v2957 = vpop.permute.xlu0 %2956
  %2959 = vset.pattern.permute.xlu0 7
  %2960 = vperm.xlu0 %2959, %v52
  %v2961 = vpop.permute.xlu0 %2960
  %2963 = vset.pattern.permute.xlu0 7
  %2964 = vperm.xlu0 %2963, %v53
  %v2965 = vpop.permute.xlu0 %2964
  %2967 = vset.pattern.permute.xlu0 7
  %2968 = vperm.xlu0 %2967, %v54
  %v2969 = vpop.permute.xlu0 %2968
  %2971 = vset.pattern.permute.xlu0 7
  %2972 = vperm.xlu0 %2971, %v55
  %v2973 = vpop.permute.xlu0 %2972
  %2975 = vset.pattern.permute.xlu0 7
  %2976 = vperm.xlu0 %2975, %v56
  %v2977 = vpop.permute.xlu0 %2976
  %2979 = vset.pattern.permute.xlu0 7
  %2980 = vperm.xlu0 %2979, %v57
  %v2981 = vpop.permute.xlu0 %2980
  %2983 = vset.pattern.permute.xlu0 7
  %2984 = vperm.xlu0 %2983, %v58
  %v2985 = vpop.permute.xlu0 %2984
  %v2987 = vmul.f32 %v2812, %v2925
  %v2988 = vmul.f32 %v2814, %v2929
  %v2989 = vmul.f32 %v2816, %v2933
  %v2990 = vmul.f32 %v2818, %v2937
  %v2991 = vmul.f32 %v2820, %v2941
  %v2992 = vmul.f32 %v2822, %v2945
  %v2993 = vmul.f32 %v2824, %v2949
  %v2994 = vmul.f32 %v2826, %v2953
  %v2995 = vmul.f32 %v2828, %v2957
  %v2996 = vmul.f32 %v2830, %v2961
  %v2997 = vmul.f32 %v2832, %v2965
  %v2998 = vmul.f32 %v2834, %v2969
  %v2999 = vmul.f32 %v2836, %v2973
  %v3000 = vmul.f32 %v2838, %v2977
  %v3001 = vmul.f32 %v2840, %v2981
  %v3002 = vmul.f32 %v2842, %v2985
  %3019 = vrot.lane.b32.xlu0 %v2987, 16
  %v3020 = vpop.permute.xlu0 %3019
  %3021 = vrot.lane.b32.xlu0 %v2988, 16
  %v3022 = vpop.permute.xlu0 %3021
  %3023 = vrot.lane.b32.xlu0 %v2989, 16
  %v3024 = vpop.permute.xlu0 %3023
  %3025 = vrot.lane.b32.xlu0 %v2990, 16
  %v3026 = vpop.permute.xlu0 %3025
  %3027 = vrot.lane.b32.xlu0 %v2991, 16
  %v3028 = vpop.permute.xlu0 %3027
  %3029 = vrot.lane.b32.xlu0 %v2992, 16
  %v3030 = vpop.permute.xlu0 %3029
  %3031 = vrot.lane.b32.xlu0 %v2993, 16
  %v3032 = vpop.permute.xlu0 %3031
  %3033 = vrot.lane.b32.xlu0 %v2994, 16
  %v3034 = vpop.permute.xlu0 %3033
  %3035 = vrot.lane.b32.xlu0 %v2995, 16
  %v3036 = vpop.permute.xlu0 %3035
  %3037 = vrot.lane.b32.xlu0 %v2996, 16
  %v3038 = vpop.permute.xlu0 %3037
  %3039 = vrot.lane.b32.xlu0 %v2997, 16
  %v3040 = vpop.permute.xlu0 %3039
  %3041 = vrot.lane.b32.xlu0 %v2998, 16
  %v3042 = vpop.permute.xlu0 %3041
  %3043 = vrot.lane.b32.xlu0 %v2999, 16
  %v3044 = vpop.permute.xlu0 %3043
  %3045 = vrot.lane.b32.xlu0 %v3000, 16
  %v3046 = vpop.permute.xlu0 %3045
  %3047 = vrot.lane.b32.xlu0 %v3001, 16
  %v3048 = vpop.permute.xlu0 %3047
  %3049 = vrot.lane.b32.xlu0 %v3002, 16
  %v3050 = vpop.permute.xlu0 %3049
  %v3067 = vadd.f32 %v2731, %v3020
  %v3068 = vadd.f32 %v2732, %v3022
  %v3069 = vadd.f32 %v2733, %v3024
  %v3070 = vadd.f32 %v2734, %v3026
  %v3071 = vadd.f32 %v2735, %v3028
  %v3072 = vadd.f32 %v2736, %v3030
  %v3073 = vadd.f32 %v2737, %v3032
  %v3074 = vadd.f32 %v2738, %v3034
  %v3075 = vadd.f32 %v2739, %v3036
  %v3076 = vadd.f32 %v2740, %v3038
  %v3077 = vadd.f32 %v2741, %v3040
  %v3078 = vadd.f32 %v2742, %v3042
  %v3079 = vadd.f32 %v2743, %v3044
  %v3080 = vadd.f32 %v2744, %v3046
  %v3081 = vadd.f32 %v2745, %v3048
  %v3082 = vadd.f32 %v2746, %v3050
  %v3083 = vsub.f32 %v12, %v523
  %v3084 = vsub.f32 %v14, %v524
  %v3085 = vsub.f32 %v16, %v525
  %v3086 = vsub.f32 %v18, %v526
  %v3087 = vsub.f32 %v20, %v527
  %v3088 = vsub.f32 %v22, %v528
  %v3089 = vsub.f32 %v24, %v529
  %v3090 = vsub.f32 %v26, %v530
  %v3091 = vsub.f32 %v28, %v531
  %v3092 = vsub.f32 %v30, %v532
  %v3093 = vsub.f32 %v32, %v533
  %v3094 = vsub.f32 %v34, %v534
  %v3095 = vsub.f32 %v36, %v535
  %v3096 = vsub.f32 %v38, %v536
  %v3097 = vsub.f32 %v40, %v537
  %v3098 = vsub.f32 %v42, %v538
  %v3099 = vmul.f32 %v3083, 1.442695
  %v3100 = vpow.pop %v3099
  %v3101 = vmul.f32 %v3084, 1.442695
  %v3102 = vpow.pop %v3101
  %v3103 = vmul.f32 %v3085, 1.442695
  %v3104 = vpow.pop %v3103
  %v3105 = vmul.f32 %v3086, 1.442695
  %v3106 = vpow.pop %v3105
  %v3107 = vmul.f32 %v3087, 1.442695
  %v3108 = vpow.pop %v3107
  %v3109 = vmul.f32 %v3088, 1.442695
  %v3110 = vpow.pop %v3109
  %v3111 = vmul.f32 %v3089, 1.442695
  %v3112 = vpow.pop %v3111
  %v3113 = vmul.f32 %v3090, 1.442695
  %v3114 = vpow.pop %v3113
  %v3115 = vmul.f32 %v3091, 1.442695
  %v3116 = vpow.pop %v3115
  %v3117 = vmul.f32 %v3092, 1.442695
  %v3118 = vpow.pop %v3117
  %v3119 = vmul.f32 %v3093, 1.442695
  %v3120 = vpow.pop %v3119
  %v3121 = vmul.f32 %v3094, 1.442695
  %v3122 = vpow.pop %v3121
  %v3123 = vmul.f32 %v3095, 1.442695
  %v3124 = vpow.pop %v3123
  %v3125 = vmul.f32 %v3096, 1.442695
  %v3126 = vpow.pop %v3125
  %v3127 = vmul.f32 %v3097, 1.442695
  %v3128 = vpow.pop %v3127
  %v3129 = vmul.f32 %v3098, 1.442695
  %v3130 = vpow.pop %v3129
  %v3131 = vadd.f32 %v2907, %v3100
  %v3132 = vadd.f32 %v2908, %v3102
  %v3133 = vadd.f32 %v2909, %v3104
  %v3134 = vadd.f32 %v2910, %v3106
  %v3135 = vadd.f32 %v2911, %v3108
  %v3136 = vadd.f32 %v2912, %v3110
  %v3137 = vadd.f32 %v2913, %v3112
  %v3138 = vadd.f32 %v2914, %v3114
  %v3139 = vadd.f32 %v2915, %v3116
  %v3140 = vadd.f32 %v2916, %v3118
  %v3141 = vadd.f32 %v2917, %v3120
  %v3142 = vadd.f32 %v2918, %v3122
  %v3143 = vadd.f32 %v2919, %v3124
  %v3144 = vadd.f32 %v2920, %v3126
  %v3145 = vadd.f32 %v2921, %v3128
  %v3146 = vadd.f32 %v2922, %v3130
  %3147 = vset.pattern.permute.xlu0 8
  %3148 = vperm.xlu0 %3147, %v43
  %v3149 = vpop.permute.xlu0 %3148
  %3151 = vset.pattern.permute.xlu0 8
  %3152 = vperm.xlu0 %3151, %v44
  %v3153 = vpop.permute.xlu0 %3152
  %3155 = vset.pattern.permute.xlu0 8
  %3156 = vperm.xlu0 %3155, %v45
  %v3157 = vpop.permute.xlu0 %3156
  %3159 = vset.pattern.permute.xlu0 8
  %3160 = vperm.xlu0 %3159, %v46
  %v3161 = vpop.permute.xlu0 %3160
  %3163 = vset.pattern.permute.xlu0 8
  %3164 = vperm.xlu0 %3163, %v47
  %v3165 = vpop.permute.xlu0 %3164
  %3167 = vset.pattern.permute.xlu0 8
  %3168 = vperm.xlu0 %3167, %v48
  %v3169 = vpop.permute.xlu0 %3168
  %3171 = vset.pattern.permute.xlu0 8
  %3172 = vperm.xlu0 %3171, %v49
  %v3173 = vpop.permute.xlu0 %3172
  %3175 = vset.pattern.permute.xlu0 8
  %3176 = vperm.xlu0 %3175, %v50
  %v3177 = vpop.permute.xlu0 %3176
  %3179 = vset.pattern.permute.xlu0 8
  %3180 = vperm.xlu0 %3179, %v51
  %v3181 = vpop.permute.xlu0 %3180
  %3183 = vset.pattern.permute.xlu0 8
  %3184 = vperm.xlu0 %3183, %v52
  %v3185 = vpop.permute.xlu0 %3184
  %3187 = vset.pattern.permute.xlu0 8
  %3188 = vperm.xlu0 %3187, %v53
  %v3189 = vpop.permute.xlu0 %3188
  %3191 = vset.pattern.permute.xlu0 8
  %3192 = vperm.xlu0 %3191, %v54
  %v3193 = vpop.permute.xlu0 %3192
  %3195 = vset.pattern.permute.xlu0 8
  %3196 = vperm.xlu0 %3195, %v55
  %v3197 = vpop.permute.xlu0 %3196
  %3199 = vset.pattern.permute.xlu0 8
  %3200 = vperm.xlu0 %3199, %v56
  %v3201 = vpop.permute.xlu0 %3200
  %3203 = vset.pattern.permute.xlu0 8
  %3204 = vperm.xlu0 %3203, %v57
  %v3205 = vpop.permute.xlu0 %3204
  %3207 = vset.pattern.permute.xlu0 8
  %3208 = vperm.xlu0 %3207, %v58
  %v3209 = vpop.permute.xlu0 %3208
  %v3211 = vmul.f32 %v3100, %v3149
  %v3212 = vmul.f32 %v3102, %v3153
  %v3213 = vmul.f32 %v3104, %v3157
  %v3214 = vmul.f32 %v3106, %v3161
  %v3215 = vmul.f32 %v3108, %v3165
  %v3216 = vmul.f32 %v3110, %v3169
  %v3217 = vmul.f32 %v3112, %v3173
  %v3218 = vmul.f32 %v3114, %v3177
  %v3219 = vmul.f32 %v3116, %v3181
  %v3220 = vmul.f32 %v3118, %v3185
  %v3221 = vmul.f32 %v3120, %v3189
  %v3222 = vmul.f32 %v3122, %v3193
  %v3223 = vmul.f32 %v3124, %v3197
  %v3224 = vmul.f32 %v3126, %v3201
  %v3225 = vmul.f32 %v3128, %v3205
  %v3226 = vmul.f32 %v3130, %v3209
  %v3227 = vadd.f32 %v3067, %v3211
  %v3228 = vadd.f32 %v3068, %v3212
  %v3229 = vadd.f32 %v3069, %v3213
  %v3230 = vadd.f32 %v3070, %v3214
  %v3231 = vadd.f32 %v3071, %v3215
  %v3232 = vadd.f32 %v3072, %v3216
  %v3233 = vadd.f32 %v3073, %v3217
  %v3234 = vadd.f32 %v3074, %v3218
  %v3235 = vadd.f32 %v3075, %v3219
  %v3236 = vadd.f32 %v3076, %v3220
  %v3237 = vadd.f32 %v3077, %v3221
  %v3238 = vadd.f32 %v3078, %v3222
  %v3239 = vadd.f32 %v3079, %v3223
  %v3240 = vadd.f32 %v3080, %v3224
  %v3241 = vadd.f32 %v3081, %v3225
  %v3242 = vadd.f32 %v3082, %v3226
  %v3243 = vrcp.pop %v3131
  %v3244 = vrcp.pop %v3132
  %v3245 = vrcp.pop %v3133
  %v3246 = vrcp.pop %v3134
  %v3247 = vrcp.pop %v3135
  %v3248 = vrcp.pop %v3136
  %v3249 = vrcp.pop %v3137
  %v3250 = vrcp.pop %v3138
  %v3251 = vrcp.pop %v3139
  %v3252 = vrcp.pop %v3140
  %v3253 = vrcp.pop %v3141
  %v3254 = vrcp.pop %v3142
  %v3255 = vrcp.pop %v3143
  %v3256 = vrcp.pop %v3144
  %v3257 = vrcp.pop %v3145
  %v3258 = vrcp.pop %v3146
  %v3259 = vmul.f32 %v3227, %v3243
  %v3260 = vmul.f32 %v3228, %v3244
  %v3261 = vmul.f32 %v3229, %v3245
  %v3262 = vmul.f32 %v3230, %v3246
  %v3263 = vmul.f32 %v3231, %v3247
  %v3264 = vmul.f32 %v3232, %v3248
  %v3265 = vmul.f32 %v3233, %v3249
  %v3266 = vmul.f32 %v3234, %v3250
  %v3267 = vmul.f32 %v3235, %v3251
  %v3268 = vmul.f32 %v3236, %v3252
  %v3269 = vmul.f32 %v3237, %v3253
  %v3270 = vmul.f32 %v3238, %v3254
  %v3271 = vmul.f32 %v3239, %v3255
  %v3272 = vmul.f32 %v3240, %v3256
  %v3273 = vmul.f32 %v3241, %v3257
  %v3274 = vmul.f32 %v3242, %v3258
  %vm3275 = vcmask 130048
  %3276 = vst.msk [vmem:[%s2] sm:$0xff] %vm3275, %v3259
  %3277 = vst.msk [vmem:[%s2 + $0x8] sm:$0xff] %vm3275, %v3260
  %3278 = vst.msk [vmem:[%s2 + $0x10] sm:$0xff] %vm3275, %v3261
  %3279 = vst.msk [vmem:[%s2 + $0x18] sm:$0xff] %vm3275, %v3262
  %3280 = vst.msk [vmem:[%s2 + $0x20] sm:$0xff] %vm3275, %v3263
  %3281 = vst.msk [vmem:[%s2 + $0x28] sm:$0xff] %vm3275, %v3264
  %3282 = vst.msk [vmem:[%s2 + $0x30] sm:$0xff] %vm3275, %v3265
  %3283 = vst.msk [vmem:[%s2 + $0x38] sm:$0xff] %vm3275, %v3266
  %3284 = vst.msk [vmem:[%s2 + $0x40] sm:$0xff] %vm3275, %v3267
  %3285 = vst.msk [vmem:[%s2 + $0x48] sm:$0xff] %vm3275, %v3268
  %3286 = vst.msk [vmem:[%s2 + $0x50] sm:$0xff] %vm3275, %v3269
  %3287 = vst.msk [vmem:[%s2 + $0x58] sm:$0xff] %vm3275, %v3270
  %3288 = vst.msk [vmem:[%s2 + $0x60] sm:$0xff] %vm3275, %v3271
  %3289 = vst.msk [vmem:[%s2 + $0x68] sm:$0xff] %vm3275, %v3272
  %3290 = vst.msk [vmem:[%s2 + $0x70] sm:$0xff] %vm3275, %v3273
  %3291 = vst.msk [vmem:[%s2 + $0x78] sm:$0xff] %vm3275, %v3274
  // Predicated region
  $region10: #{_lambda_.47} parent=0 // pred_check
    _
  $region11: #{_lambda_.47} parent=0 // pred_check_branch
    %3293 = sbr.rel (0) target = $region13
  $region12: #{_lambda_.47} parent=0 // pred_region
    _
  $region13: #{_lambda_.47} parent=0 // pred_fallthru
    _
  // Predicated region
  $region14: #{_lambda_.47} parent=0 // pred_check
    _
  $region15: #{_lambda_.47} parent=0 // pred_check_branch
    %3295 = sbr.rel (0) target = $region17
  $region16: #{_lambda_.47} parent=0 // pred_region
    _
  $region17: #{_lambda_.47} parent=0 // pred_fallthru
    _

</llo_original>
